<compile_context>
chip_gen: v7x
topology: tpu7x:2x2x1
jax: 0.10.0
libtpu: 0.0.40
codegen_flags: <defaults>
</compile_context>

<pallas_src>
import functools

import jax
import jax.numpy as jnp
from jax import lax
from jax.experimental import pallas as pl
from jax.experimental.pallas import tpu as pltpu

_LANE = 128


def _round_up(x, m):
    return (x + m - 1) // m * m


def _padded_bytes(shape, dtype):
    """Approximate VMEM footprint of a buffer, accounting for (sublane, lane) tiling."""
    itemsize = jnp.dtype(dtype).itemsize
    dims = list(shape)
    dims[-1] = _round_up(dims[-1], _LANE)
    if len(dims) >= 2:
        dims[-2] = _round_up(dims[-2], 8 * (4 // itemsize))
    n = 1
    for d in dims:
        n *= d
    return n * itemsize


# ----------------------------------------------------------------------------------------
# Kernels
# ----------------------------------------------------------------------------------------
def _build_patch(x_ref, patch_ref, *, K, TDo, Ho, Wo, Cin):
    """im2col: fill patch_ref (TM, CKp) with columns ordered (kd, kh, kw, ci).

    Lane-density fix: the K kw-taps of each (kd, kh) group are concatenated in registers
    and written with a single K*Cin-wide store instead of K separate Cin-wide masked
    writes.  Each tap slice is reshaped by merging leading dims only (no cross-lane
    relayout).  The zero tail (CKp - CK columns) rides along with the last group's store.
    Every iteration ends in its store, which bounds the live temporaries.
    """
    TM = TDo * Ho * Wo
    CK = K * K * K * Cin
    CKp = patch_ref.shape[1]
    for kd in range(K):
        for kh in range(K):
            pieces = [
                x_ref[0, kd:kd + TDo, kh:kh + Ho, kw:kw + Wo, :].reshape(TM, Cin)
                for kw in range(K)
            ]
            g = kd * K + kh
            if g == K * K - 1 and CKp > CK:
                pieces.append(jnp.zeros((TM, CKp - CK), patch_ref.dtype))
            block = pieces[0] if len(pieces) == 1 else jnp.concatenate(pieces, axis=1)
            start = g * K * Cin
            patch_ref[:, start:start + block.shape[1]] = block


def _conv_tile_t(x_ref, wt_ref, patch_ref, *, K, TDo, Ho, Wo, Cin):
    """One MXU matmul per tile, emitted already transposed: returns (Cp, TM) f32.

    wt_ref holds the weight pre-transposed to (Cp, CKp); contracting dim 1 of both
    operands (rhs-transposed matmul) yields (Cp, TM) straight from the MXU, so no
    (M, Cp) f32 output transpose is ever needed.
    """
    _build_patch(x_ref, patch_ref, K=K, TDo=TDo, Ho=Ho, Wo=Wo, Cin=Cin)
    return lax.dot_general(
        wt_ref[...], patch_ref[...],
        dimension_numbers=(((1,), (1,)), ((), ())),
        preferred_element_type=jnp.float32)


def _stats_kernel(x_ref, wt_ref, stats_ref, patch_ref, *, K, TDo, Ho, Wo, Cin):
    """Pass 1 (recompute mode): conv for one (sample, D-tile); emit BN partial stats."""
    acc_t = _conv_tile_t(x_ref, wt_ref, patch_ref, K=K, TDo=TDo, Ho=Ho, Wo=Wo, Cin=Cin)
    mu = jnp.mean(acc_t, axis=1, keepdims=True)              # (Cp, 1)
    d = acc_t - mu
    stats_ref[0, :, 0:1] = mu
    stats_ref[0, :, 1:2] = jnp.sum(d * d, axis=1, keepdims=True)


def _stats_store_kernel(x_ref, wt_ref, stats_ref, conv_ref, patch_ref,
                        *, K, TDo, Ho, Wo, Cin, Cout):
    """Pass 1 (store_conv mode): also spill the channels-first conv output (v5e path)."""
    acc_t = _conv_tile_t(x_ref, wt_ref, patch_ref, K=K, TDo=TDo, Ho=Ho, Wo=Wo, Cin=Cin)
    mu = jnp.mean(acc_t, axis=1, keepdims=True)
    d = acc_t - mu
    stats_ref[0, :, 0:1] = mu
    stats_ref[0, :, 1:2] = jnp.sum(d * d, axis=1, keepdims=True)
    conv_ref[0] = acc_t[:Cout, :].astype(conv_ref.dtype)


def _recompute_bn_relu_kernel(x_ref, wt_ref, scale_ref, shift_ref, o_ref, patch_ref,
                              *, K, TDo, Ho, Wo, Cin, Cout):
    """Pass 2 (recompute mode): conv recompute + folded BN affine + ReLU, (Cout, TM) store."""
    acc_t = _conv_tile_t(x_ref, wt_ref, patch_ref, K=K, TDo=TDo, Ho=Ho, Wo=Wo, Cin=Cin)
    out = jnp.maximum(acc_t * scale_ref[...] + shift_ref[...], 0.0)   # (Cp, TM) f32
    o_ref[0] = out[:Cout, :].astype(o_ref.dtype)


def _affine_relu_kernel(conv_ref, scale_ref, shift_ref, o_ref, *, Cout):
    """Pass 2 (store_conv mode): pure elementwise affine + ReLU over the stored conv."""
    y = conv_ref[0].astype(jnp.float32)                               # (Cout, TM)
    out = jnp.maximum(y * scale_ref[0:Cout, :] + shift_ref[0:Cout, :], 0.0)
    o_ref[0] = out.astype(o_ref.dtype)


# ----------------------------------------------------------------------------------------
# Wrapper
# ----------------------------------------------------------------------------------------
def conv3d_bn_relu(x_ncdhw, weight, bias, gamma, beta, *, stride=1, eps=1e-5,
                   compute_dtype=jnp.bfloat16, out_dtype=jnp.float32,
                   store_conv=False, d_tile=None, vmem_budget_bytes=48 << 20):
    """Forward pass of Conv3dBnRel. x_ncdhw: (N, Cin, D, H, W) -> (N, Cout, D, H, W)."""
    # TODO(synk): stride > 1 down-sampling not implemented (module default is stride=1).
    assert stride == 1, "only stride=1 supported in this Pallas implementation"
    Cout, Cin, K, K2, K3 = weight.shape
    assert K == K2 == K3 and K % 2 == 1, "odd cubic kernels only (padding = (K-1)//2)"
    pad = (K - 1) // 2
    N, Cin_x, D, H, W = x_ncdhw.shape
    assert Cin_x == Cin
    Ho, Wo = H, W                                       # 'same' padding, stride 1
    Dp, Hp, Wp = D + 2 * pad, H + 2 * pad, W + 2 * pad

    CK = K * K * K * Cin
    CKp = _round_up(CK, _LANE)                          # MXU-aligned contraction dim
    Cp = _round_up(Cout, 8)                             # sublane-aligned channel rows

    def per_step_bytes(td):
        tdp = td + 2 * pad
        tm = td * Ho * Wo
        b = 2 * _padded_bytes((tdp, Hp, Wp, Cin), compute_dtype)     # x block (dbl-buffered)
        b += _padded_bytes((tm, CKp), compute_dtype)                 # patch scratch
        b += 2 * _padded_bytes((Cp, CKp), compute_dtype)             # transposed weight
        b += 2 * _padded_bytes((Cout, tm), out_dtype)                # output block
        if store_conv:
            b += 2 * _padded_bytes((Cout, tm), compute_dtype)        # stored conv block
        return b + (2 << 20)

    # D-axis tiling with a (K-1)/2 halo so the per-step working set fits the VMEM budget
    # (v7x has only 64 MiB).  Each tile contributes TD*H*W (a multiple of 128) output
    # rows, so the channels-first store stays unmasked / lane-dense.
    if d_tile is None:
        cands = [d for d in range(D, 0, -1) if D % d == 0 and (d * Ho * Wo) % _LANE == 0]
        assert cands, "need some divisor TD of D with TD*H*W % 128 == 0"
        TD = next((d for d in cands if per_step_bytes(d) <= vmem_budget_bytes), cands[-1])
    else:
        TD = int(d_tile)
        assert D % TD == 0 and (TD * Ho * Wo) % _LANE == 0
    nT = D // TD
    TDp = TD + 2 * pad
    TM = TD * Ho * Wo
    M = D * Ho * Wo
    G = N * nT
    vmem_limit = int(min(100 << 20, max(24 << 20, 1.3 * per_step_bytes(TD))))

    # --- wrapper-side glue (XLA) ----------------------------------------------------------
    # NCDHW -> NDHWC, zero-pad spatial dims, pre-slice overlapping (halo) D tiles.
    x = jnp.transpose(x_ncdhw, (0, 2, 3, 4, 1)).astype(compute_dtype)
    xp = jnp.pad(x, ((0, 0), (pad, pad), (pad, pad), (pad, pad), (0, 0)))
    xt = jnp.concatenate(
        [xp[:, t * TD:t * TD + TDp][:, None] for t in range(nT)], axis=1
    ).reshape(G, TDp, Hp, Wp, Cin)
    # Weight pre-transposed to (Cp, CKp): rows = out channels, lanes = (kd, kh, kw, ci),
    # zero-filled padding rows/columns.
    w_flat = jnp.transpose(weight, (2, 3, 4, 1, 0)).reshape(CK, Cout)
    w_t = jnp.pad(w_flat.T, ((0, Cp - Cout), (0, CKp - CK))).astype(compute_dtype)
    # Conv bias cancels exactly under training-mode BN ((y+b)-mean(y+b) == y-mean(y),
    # var unchanged), so it is dropped from both passes entirely.
    del bias

    x_spec = pl.BlockSpec((1, TDp, Hp, Wp, Cin), lambda g: (g, 0, 0, 0, 0))
    wt_spec = pl.BlockSpec((Cp, CKp), lambda g: (0, 0))
    col_spec = pl.BlockSpec((Cp, 1), lambda g: (0, 0))
    patch_scratch = pltpu.VMEM((TM, CKp), compute_dtype)
    cparams = pltpu.CompilerParams(dimension_semantics=("parallel",),
                                   vmem_limit_bytes=vmem_limit)
    kern_kw = dict(K=K, TDo=TD, Ho=Ho, Wo=Wo, Cin=Cin)

    # --- pass 1: conv -> per-(sample, D-tile) BN partial statistics ------------------------
    if store_conv:
        stats, conv_t = pl.pallas_call(
            functools.partial(_stats_store_kernel, Cout=Cout, **kern_kw),
            out_shape=(jax.ShapeDtypeStruct((G, Cp, 2), jnp.float32),
                       jax.ShapeDtypeStruct((G, Cout, TM), compute_dtype)),
            grid=(G,),
            in_specs=[x_spec, wt_spec],
            out_specs=(pl.BlockSpec((1, Cp, 2), lambda g: (g, 0, 0)),
                       pl.BlockSpec((1, Cout, TM), lambda g: (g, 0, 0))),
            scratch_shapes=[patch_scratch],
            compiler_params=cparams,
        )(xt, w_t)
    else:
        stats = pl.pallas_call(
            functools.partial(_stats_kernel, **kern_kw),
            out_shape=jax.ShapeDtypeStruct((G, Cp, 2), jnp.float32),
            grid=(G,),
            in_specs=[x_spec, wt_spec],
            out_specs=pl.BlockSpec((1, Cp, 2), lambda g: (g, 0, 0)),
            scratch_shapes=[patch_scratch],
            compiler_params=cparams,
        )(xt, w_t)
        conv_t = None

    # --- glue: Chan parallel-variance combine, fold BN into per-channel scale/shift --------
    mu_g = stats[:, :Cout, 0]                           # (G, Cout) per-tile means
    m2_g = stats[:, :Cout, 1]                           # (G, Cout) centered sum-of-squares
    mean = jnp.mean(mu_g, axis=0)                       # equal counts (TM) per tile
    m2 = jnp.sum(m2_g, axis=0) + TM * jnp.sum((mu_g - mean) ** 2, axis=0)
    var = m2 / (N * M)                                  # biased variance (BN training mode)
    scale = gamma.astype(jnp.float32) * lax.rsqrt(var + eps)
    shift = beta.astype(jnp.float32) - mean * scale
    scale_p = jnp.pad(scale, (0, Cp - Cout)).reshape(Cp, 1)
    shift_p = jnp.pad(shift, (0, Cp - Cout)).reshape(Cp, 1)

    out_shape = jax.ShapeDtypeStruct((N, Cout, M), out_dtype)
    out_spec = pl.BlockSpec((1, Cout, TM), lambda g: (g // nT, 0, g % nT))

    # --- pass 2: folded BN affine + ReLU, channels-first lane-dense store ------------------
    if store_conv:
        out_cf = pl.pallas_call(
            functools.partial(_affine_relu_kernel, Cout=Cout),
            out_shape=out_shape,
            grid=(G,),
            in_specs=[pl.BlockSpec((1, Cout, TM), lambda g: (g, 0, 0)), col_spec, col_spec],
            out_specs=out_spec,
            compiler_params=cparams,
        )(conv_t, scale_p, shift_p)
    else:
        out_cf = pl.pallas_call(
            functools.partial(_recompute_bn_relu_kernel, Cout=Cout, **kern_kw),
            out_shape=out_shape,
            grid=(G,),
            in_specs=[x_spec, wt_spec, col_spec, col_spec],
            out_specs=out_spec,
            scratch_shapes=[patch_scratch],
            compiler_params=cparams,
        )(xt, w_t, scale_p, shift_p)

    # Already channels-first: (N, Cout, D*H*W) -> (N, Cout, D, H, W) is a free reshape.
    return out_cf.reshape(N, Cout, D, Ho, Wo)


# ----------------------------------------------------------------------------------------
# Reference + self-test
# ----------------------------------------------------------------------------------------
def _reference(x, weight, bias, gamma, beta, eps=1e-5):
    """Plain-JAX reference of Conv3dBnRel forward (training-mode BN), NCDHW, any odd K."""
    K = weight.shape[-1]
    pad = (K - 1) // 2
    y = lax.conv_general_dilated(
        x, weight, window_strides=(1, 1, 1),
        padding=((pad, pad),) * 3,
        dimension_numbers=("NCDHW", "OIDHW", "NCDHW"))
    y = y + bias.reshape(1, -1, 1, 1, 1)
    mean = jnp.mean(y, axis=(0, 2, 3, 4), keepdims=True)
    var = jnp.mean((y - mean) ** 2, axis=(0, 2, 3, 4), keepdims=True)
    yn = (y - mean) * lax.rsqrt(var + eps)
    yn = yn * gamma.reshape(1, -1, 1, 1, 1) + beta.reshape(1, -1, 1, 1, 1)
    return jnp.maximum(yn, 0.0)


if __name__ == "__main__":
    key = jax.random.PRNGKey(0)
    kx1, kp1, kx2, kp2 = jax.random.split(key, 4)

    def make_params(kp, cin, cout, k):
        kw, kb, kg, kbt = jax.random.split(kp, 4)
        fan_in = cin * k ** 3
        bound = 1.0 / (fan_in ** 0.5)
        weight = jax.random.uniform(kw, (cout, cin, k, k, k), jnp.float32, -bound, bound)
        bias = jax.random.uniform(kb, (cout,), jnp.float32, -bound, bound)
        gamma = 1.0 + 0.1 * jax.random.normal(kg, (cout,), jnp.float32)
        beta = 0.1 * jax.random.normal(kbt, (cout,), jnp.float32)
        return weight, bias, gamma, beta

    def check(name, out, ref, rtol, atol):
        assert out.shape == ref.shape, (name, out.shape, ref.shape)
        err = float(jnp.max(jnp.abs(out - ref)))
        if not bool(jnp.allclose(out, ref, rtol=rtol, atol=atol)):
            raise AssertionError(f"{name}: mismatch vs reference, max abs err = {err:e}")

    # Case 1: K=3 (the module's common configuration).
    N, Cin, Cout, D, H, W, K = 2, 4, 8, 8, 8, 8, 3
    x = jax.random.normal(kx1, (N, Cin, D, H, W), jnp.float32)
    weight, bias, gamma, beta = make_params(kp1, Cin, Cout, K)
    ref = _reference(x, weight, bias, gamma, beta)

    # f32 MXU operands, single D tile, recompute pass-2: strict check.
    out = jax.block_until_ready(
        conv3d_bn_relu(x, weight, bias, gamma, beta, compute_dtype=jnp.float32))
    check("f32", out, ref, 1e-4, 1e-4)

    # f32, forced D-axis tiling with halo (2 tiles): strict check of the tiled path.
    out = jax.block_until_ready(
        conv3d_bn_relu(x, weight, bias, gamma, beta, compute_dtype=jnp.float32, d_tile=4))
    check("f32-dtile", out, ref, 1e-4, 1e-4)

    # f32, stored conv output (v5e-style pass 2 = pure affine+ReLU): strict check.
    out = jax.block_until_ready(
        conv3d_bn_relu(x, weight, bias, gamma, beta, compute_dtype=jnp.float32,
                       store_conv=True))
    check("f32-store", out, ref, 1e-4, 1e-4)

    # Default bf16 MXU operands (v6e/v7x fast path), f32 accumulation: loose tolerance.
    out = jax.block_until_ready(conv3d_bn_relu(x, weight, bias, gamma, beta))
    check("bf16", out, ref, 1e-1, 1e-1)

    # Case 2: K=5 (general odd kernel), f32 strict.
    N2, Cin2, Cout2, D2, H2, W2, K5 = 1, 2, 4, 4, 8, 8, 5
    x2 = jax.random.normal(kx2, (N2, Cin2, D2, H2, W2), jnp.float32)
    weight2, bias2, gamma2, beta2 = make_params(kp2, Cin2, Cout2, K5)
    ref2 = _reference(x2, weight2, bias2, gamma2, beta2)
    out2 = jax.block_until_ready(
        conv3d_bn_relu(x2, weight2, bias2, gamma2, beta2, compute_dtype=jnp.float32))
    check("f32-k5", out2, ref2, 1e-4, 1e-4)

    print("KERNEL_OK")
</pallas_src>

<mosaic_0001>
module attributes {stable_mosaic.version = 11 : i64} {
  func.func @_stats_kernel(%arg0: i32, %arg1: memref<1x10x10x10x4xf32, #tpu.memory_space<vmem>>, %arg2: memref<8x128xf32, #tpu.memory_space<vmem>>, %arg3: memref<1x8x2xf32, #tpu.memory_space<vmem>>, %arg4: memref<512x128xf32, #tpu.memory_space<vmem>>) attributes {dimension_semantics = [#tpu.dimension_semantics<parallel>], iteration_bounds = array<i64: 2>, scalar_prefetch = 0 : i64, scratch_operands = 1 : i64, tpu.core_type = #tpu.core_type<tc>, window_params = [{transform_indices = @transform_0, window_bounds = array<i64: 1, 10, 10, 10, 4>}, {pipeline_mode = #tpu.pipeline_mode<synchronous>, transform_indices = @transform_1, window_bounds = array<i64: 8, 128>}, {transform_indices = @transform_2, window_bounds = array<i64: 1, 8, 2>}]} {
    %c0 = arith.constant 0 : index
    %c0_0 = arith.constant 0 : index
    %c0_1 = arith.constant 0 : index
    %c0_2 = arith.constant 0 : index
    %c0_3 = arith.constant 0 : index
    %0 = vector.load %arg1[%c0, %c0_0, %c0_1, %c0_2, %c0_3] : memref<1x10x10x10x4xf32, #tpu.memory_space<vmem>>, vector<1x8x8x8x4xf32>
    %1 = vector.shape_cast %0 : vector<1x8x8x8x4xf32> to vector<8x8x8x4xf32>
    %2 = vector.shape_cast %1 : vector<8x8x8x4xf32> to vector<512x4xf32>
    %c0_4 = arith.constant 0 : index
    %c0_5 = arith.constant 0 : index
    %c0_6 = arith.constant 0 : index
    %c1 = arith.constant 1 : index
    %c0_7 = arith.constant 0 : index
    %3 = vector.load %arg1[%c0_4, %c0_5, %c0_6, %c1, %c0_7] : memref<1x10x10x10x4xf32, #tpu.memory_space<vmem>>, vector<1x8x8x8x4xf32>
    %4 = vector.shape_cast %3 : vector<1x8x8x8x4xf32> to vector<8x8x8x4xf32>
    %5 = vector.shape_cast %4 : vector<8x8x8x4xf32> to vector<512x4xf32>
    %c0_8 = arith.constant 0 : index
    %c0_9 = arith.constant 0 : index
    %c0_10 = arith.constant 0 : index
    %c2 = arith.constant 2 : index
    %c0_11 = arith.constant 0 : index
    %6 = vector.load %arg1[%c0_8, %c0_9, %c0_10, %c2, %c0_11] : memref<1x10x10x10x4xf32, #tpu.memory_space<vmem>>, vector<1x8x8x8x4xf32>
    %7 = vector.shape_cast %6 : vector<1x8x8x8x4xf32> to vector<8x8x8x4xf32>
    %8 = vector.shape_cast %7 : vector<8x8x8x4xf32> to vector<512x4xf32>
    %9 = tpu.concatenate %2, %5, %8 in 1 : vector<512x4xf32>, vector<512x4xf32>, vector<512x4xf32> -> vector<512x12xf32>
    %c0_12 = arith.constant 0 : index
    %c0_13 = arith.constant 0 : index
    %10 = vector.load %arg4[%c0_12, %c0_13] : memref<512x128xf32, #tpu.memory_space<vmem>>, vector<512x12xf32>
    tpu.vector_store %arg4[%c0_12, %c0_13], %9 {strides = array<i32>} : memref<512x128xf32, #tpu.memory_space<vmem>>, vector<512x12xf32>,
    %c0_14 = arith.constant 0 : index
    %c0_15 = arith.constant 0 : index
    %c1_16 = arith.constant 1 : index
    %c0_17 = arith.constant 0 : index
    %c0_18 = arith.constant 0 : index
    %11 = vector.load %arg1[%c0_14, %c0_15, %c1_16, %c0_17, %c0_18] : memref<1x10x10x10x4xf32, #tpu.memory_space<vmem>>, vector<1x8x8x8x4xf32>
    %12 = vector.shape_cast %11 : vector<1x8x8x8x4xf32> to vector<8x8x8x4xf32>
    %13 = vector.shape_cast %12 : vector<8x8x8x4xf32> to vector<512x4xf32>
    %c0_19 = arith.constant 0 : index
    %c0_20 = arith.constant 0 : index
    %c1_21 = arith.constant 1 : index
    %c1_22 = arith.constant 1 : index
    %c0_23 = arith.constant 0 : index
    %14 = vector.load %arg1[%c0_19, %c0_20, %c1_21, %c1_22, %c0_23] : memref<1x10x10x10x4xf32, #tpu.memory_space<vmem>>, vector<1x8x8x8x4xf32>
    %15 = vector.shape_cast %14 : vector<1x8x8x8x4xf32> to vector<8x8x8x4xf32>
    %16 = vector.shape_cast %15 : vector<8x8x8x4xf32> to vector<512x4xf32>
    %c0_24 = arith.constant 0 : index
    %c0_25 = arith.constant 0 : index
    %c1_26 = arith.constant 1 : index
    %c2_27 = arith.constant 2 : index
    %c0_28 = arith.constant 0 : index
    %17 = vector.load %arg1[%c0_24, %c0_25, %c1_26, %c2_27, %c0_28] : memref<1x10x10x10x4xf32, #tpu.memory_space<vmem>>, vector<1x8x8x8x4xf32>
    %18 = vector.shape_cast %17 : vector<1x8x8x8x4xf32> to vector<8x8x8x4xf32>
    %19 = vector.shape_cast %18 : vector<8x8x8x4xf32> to vector<512x4xf32>
    %20 = tpu.concatenate %13, %16, %19 in 1 : vector<512x4xf32>, vector<512x4xf32>, vector<512x4xf32> -> vector<512x12xf32>
    %c0_29 = arith.constant 0 : index
    %c12 = arith.constant 12 : index
    %21 = vector.load %arg4[%c0_29, %c12] : memref<512x128xf32, #tpu.memory_space<vmem>>, vector<512x12xf32>
    tpu.vector_store %arg4[%c0_29, %c12], %20 {strides = array<i32>} : memref<512x128xf32, #tpu.memory_space<vmem>>, vector<512x12xf32>,
    %c0_30 = arith.constant 0 : index
    %c0_31 = arith.constant 0 : index
    %c2_32 = arith.constant 2 : index
    %c0_33 = arith.constant 0 : index
    %c0_34 = arith.constant 0 : index
    %22 = vector.load %arg1[%c0_30, %c0_31, %c2_32, %c0_33, %c0_34] : memref<1x10x10x10x4xf32, #tpu.memory_space<vmem>>, vector<1x8x8x8x4xf32>
    %23 = vector.shape_cast %22 : vector<1x8x8x8x4xf32> to vector<8x8x8x4xf32>
    %24 = vector.shape_cast %23 : vector<8x8x8x4xf32> to vector<512x4xf32>
    %c0_35 = arith.constant 0 : index
    %c0_36 = arith.constant 0 : index
    %c2_37 = arith.constant 2 : index
    %c1_38 = arith.constant 1 : index
    %c0_39 = arith.constant 0 : index
    %25 = vector.load %arg1[%c0_35, %c0_36, %c2_37, %c1_38, %c0_39] : memref<1x10x10x10x4xf32, #tpu.memory_space<vmem>>, vector<1x8x8x8x4xf32>
    %26 = vector.shape_cast %25 : vector<1x8x8x8x4xf32> to vector<8x8x8x4xf32>
    %27 = vector.shape_cast %26 : vector<8x8x8x4xf32> to vector<512x4xf32>
    %c0_40 = arith.constant 0 : index
    %c0_41 = arith.constant 0 : index
    %c2_42 = arith.constant 2 : index
    %c2_43 = arith.constant 2 : index
    %c0_44 = arith.constant 0 : index
    %28 = vector.load %arg1[%c0_40, %c0_41, %c2_42, %c2_43, %c0_44] : memref<1x10x10x10x4xf32, #tpu.memory_space<vmem>>, vector<1x8x8x8x4xf32>
    %29 = vector.shape_cast %28 : vector<1x8x8x8x4xf32> to vector<8x8x8x4xf32>
    %30 = vector.shape_cast %29 : vector<8x8x8x4xf32> to vector<512x4xf32>
    %31 = tpu.concatenate %24, %27, %30 in 1 : vector<512x4xf32>, vector<512x4xf32>, vector<512x4xf32> -> vector<512x12xf32>
    %c0_45 = arith.constant 0 : index
    %c24 = arith.constant 24 : index
    %32 = vector.load %arg4[%c0_45, %c24] : memref<512x128xf32, #tpu.memory_space<vmem>>, vector<512x12xf32>
    tpu.vector_store %arg4[%c0_45, %c24], %31 {strides = array<i32>} : memref<512x128xf32, #tpu.memory_space<vmem>>, vector<512x12xf32>,
    %c0_46 = arith.constant 0 : index
    %c1_47 = arith.constant 1 : index
    %c0_48 = arith.constant 0 : index
    %c0_49 = arith.constant 0 : index
    %c0_50 = arith.constant 0 : index
    %33 = vector.load %arg1[%c0_46, %c1_47, %c0_48, %c0_49, %c0_50] : memref<1x10x10x10x4xf32, #tpu.memory_space<vmem>>, vector<1x8x8x8x4xf32>
    %34 = vector.shape_cast %33 : vector<1x8x8x8x4xf32> to vector<8x8x8x4xf32>
    %35 = vector.shape_cast %34 : vector<8x8x8x4xf32> to vector<512x4xf32>
    %c0_51 = arith.constant 0 : index
    %c1_52 = arith.constant 1 : index
    %c0_53 = arith.constant 0 : index
    %c1_54 = arith.constant 1 : index
    %c0_55 = arith.constant 0 : index
    %36 = vector.load %arg1[%c0_51, %c1_52, %c0_53, %c1_54, %c0_55] : memref<1x10x10x10x4xf32, #tpu.memory_space<vmem>>, vector<1x8x8x8x4xf32>
    %37 = vector.shape_cast %36 : vector<1x8x8x8x4xf32> to vector<8x8x8x4xf32>
    %38 = vector.shape_cast %37 : vector<8x8x8x4xf32> to vector<512x4xf32>
    %c0_56 = arith.constant 0 : index
    %c1_57 = arith.constant 1 : index
    %c0_58 = arith.constant 0 : index
    %c2_59 = arith.constant 2 : index
    %c0_60 = arith.constant 0 : index
    %39 = vector.load %arg1[%c0_56, %c1_57, %c0_58, %c2_59, %c0_60] : memref<1x10x10x10x4xf32, #tpu.memory_space<vmem>>, vector<1x8x8x8x4xf32>
    %40 = vector.shape_cast %39 : vector<1x8x8x8x4xf32> to vector<8x8x8x4xf32>
    %41 = vector.shape_cast %40 : vector<8x8x8x4xf32> to vector<512x4xf32>
    %42 = tpu.concatenate %35, %38, %41 in 1 : vector<512x4xf32>, vector<512x4xf32>, vector<512x4xf32> -> vector<512x12xf32>
    %c0_61 = arith.constant 0 : index
    %c36 = arith.constant 36 : index
    %43 = vector.load %arg4[%c0_61, %c36] : memref<512x128xf32, #tpu.memory_space<vmem>>, vector<512x12xf32>
    tpu.vector_store %arg4[%c0_61, %c36], %42 {strides = array<i32>} : memref<512x128xf32, #tpu.memory_space<vmem>>, vector<512x12xf32>,
    %c0_62 = arith.constant 0 : index
    %c1_63 = arith.constant 1 : index
    %c1_64 = arith.constant 1 : index
    %c0_65 = arith.constant 0 : index
    %c0_66 = arith.constant 0 : index
    %44 = vector.load %arg1[%c0_62, %c1_63, %c1_64, %c0_65, %c0_66] : memref<1x10x10x10x4xf32, #tpu.memory_space<vmem>>, vector<1x8x8x8x4xf32>
    %45 = vector.shape_cast %44 : vector<1x8x8x8x4xf32> to vector<8x8x8x4xf32>
    %46 = vector.shape_cast %45 : vector<8x8x8x4xf32> to vector<512x4xf32>
    %c0_67 = arith.constant 0 : index
    %c1_68 = arith.constant 1 : index
    %c1_69 = arith.constant 1 : index
    %c1_70 = arith.constant 1 : index
    %c0_71 = arith.constant 0 : index
    %47 = vector.load %arg1[%c0_67, %c1_68, %c1_69, %c1_70, %c0_71] : memref<1x10x10x10x4xf32, #tpu.memory_space<vmem>>, vector<1x8x8x8x4xf32>
    %48 = vector.shape_cast %47 : vector<1x8x8x8x4xf32> to vector<8x8x8x4xf32>
    %49 = vector.shape_cast %48 : vector<8x8x8x4xf32> to vector<512x4xf32>
    %c0_72 = arith.constant 0 : index
    %c1_73 = arith.constant 1 : index
    %c1_74 = arith.constant 1 : index
    %c2_75 = arith.constant 2 : index
    %c0_76 = arith.constant 0 : index
    %50 = vector.load %arg1[%c0_72, %c1_73, %c1_74, %c2_75, %c0_76] : memref<1x10x10x10x4xf32, #tpu.memory_space<vmem>>, vector<1x8x8x8x4xf32>
    %51 = vector.shape_cast %50 : vector<1x8x8x8x4xf32> to vector<8x8x8x4xf32>
    %52 = vector.shape_cast %51 : vector<8x8x8x4xf32> to vector<512x4xf32>
    %53 = tpu.concatenate %46, %49, %52 in 1 : vector<512x4xf32>, vector<512x4xf32>, vector<512x4xf32> -> vector<512x12xf32>
    %c0_77 = arith.constant 0 : index
    %c48 = arith.constant 48 : index
    %54 = vector.load %arg4[%c0_77, %c48] : memref<512x128xf32, #tpu.memory_space<vmem>>, vector<512x12xf32>
    tpu.vector_store %arg4[%c0_77, %c48], %53 {strides = array<i32>} : memref<512x128xf32, #tpu.memory_space<vmem>>, vector<512x12xf32>,
    %c0_78 = arith.constant 0 : index
    %c1_79 = arith.constant 1 : index
    %c2_80 = arith.constant 2 : index
    %c0_81 = arith.constant 0 : index
    %c0_82 = arith.constant 0 : index
    %55 = vector.load %arg1[%c0_78, %c1_79, %c2_80, %c0_81, %c0_82] : memref<1x10x10x10x4xf32, #tpu.memory_space<vmem>>, vector<1x8x8x8x4xf32>
    %56 = vector.shape_cast %55 : vector<1x8x8x8x4xf32> to vector<8x8x8x4xf32>
    %57 = vector.shape_cast %56 : vector<8x8x8x4xf32> to vector<512x4xf32>
    %c0_83 = arith.constant 0 : index
    %c1_84 = arith.constant 1 : index
    %c2_85 = arith.constant 2 : index
    %c1_86 = arith.constant 1 : index
    %c0_87 = arith.constant 0 : index
    %58 = vector.load %arg1[%c0_83, %c1_84, %c2_85, %c1_86, %c0_87] : memref<1x10x10x10x4xf32, #tpu.memory_space<vmem>>, vector<1x8x8x8x4xf32>
    %59 = vector.shape_cast %58 : vector<1x8x8x8x4xf32> to vector<8x8x8x4xf32>
    %60 = vector.shape_cast %59 : vector<8x8x8x4xf32> to vector<512x4xf32>
    %c0_88 = arith.constant 0 : index
    %c1_89 = arith.constant 1 : index
    %c2_90 = arith.constant 2 : index
    %c2_91 = arith.constant 2 : index
    %c0_92 = arith.constant 0 : index
    %61 = vector.load %arg1[%c0_88, %c1_89, %c2_90, %c2_91, %c0_92] : memref<1x10x10x10x4xf32, #tpu.memory_space<vmem>>, vector<1x8x8x8x4xf32>
    %62 = vector.shape_cast %61 : vector<1x8x8x8x4xf32> to vector<8x8x8x4xf32>
    %63 = vector.shape_cast %62 : vector<8x8x8x4xf32> to vector<512x4xf32>
    %64 = tpu.concatenate %57, %60, %63 in 1 : vector<512x4xf32>, vector<512x4xf32>, vector<512x4xf32> -> vector<512x12xf32>
    %c0_93 = arith.constant 0 : index
    %c60 = arith.constant 60 : index
    %65 = vector.load %arg4[%c0_93, %c60] : memref<512x128xf32, #tpu.memory_space<vmem>>, vector<512x12xf32>
    tpu.vector_store %arg4[%c0_93, %c60], %64 {strides = array<i32>} : memref<512x128xf32, #tpu.memory_space<vmem>>, vector<512x12xf32>,
    %c0_94 = arith.constant 0 : index
    %c2_95 = arith.constant 2 : index
    %c0_96 = arith.constant 0 : index
    %c0_97 = arith.constant 0 : index
    %c0_98 = arith.constant 0 : index
    %66 = vector.load %arg1[%c0_94, %c2_95, %c0_96, %c0_97, %c0_98] : memref<1x10x10x10x4xf32, #tpu.memory_space<vmem>>, vector<1x8x8x8x4xf32>
    %67 = vector.shape_cast %66 : vector<1x8x8x8x4xf32> to vector<8x8x8x4xf32>
    %68 = vector.shape_cast %67 : vector<8x8x8x4xf32> to vector<512x4xf32>
    %c0_99 = arith.constant 0 : index
    %c2_100 = arith.constant 2 : index
    %c0_101 = arith.constant 0 : index
    %c1_102 = arith.constant 1 : index
    %c0_103 = arith.constant 0 : index
    %69 = vector.load %arg1[%c0_99, %c2_100, %c0_101, %c1_102, %c0_103] : memref<1x10x10x10x4xf32, #tpu.memory_space<vmem>>, vector<1x8x8x8x4xf32>
    %70 = vector.shape_cast %69 : vector<1x8x8x8x4xf32> to vector<8x8x8x4xf32>
    %71 = vector.shape_cast %70 : vector<8x8x8x4xf32> to vector<512x4xf32>
    %c0_104 = arith.constant 0 : index
    %c2_105 = arith.constant 2 : index
    %c0_106 = arith.constant 0 : index
    %c2_107 = arith.constant 2 : index
    %c0_108 = arith.constant 0 : index
    %72 = vector.load %arg1[%c0_104, %c2_105, %c0_106, %c2_107, %c0_108] : memref<1x10x10x10x4xf32, #tpu.memory_space<vmem>>, vector<1x8x8x8x4xf32>
    %73 = vector.shape_cast %72 : vector<1x8x8x8x4xf32> to vector<8x8x8x4xf32>
    %74 = vector.shape_cast %73 : vector<8x8x8x4xf32> to vector<512x4xf32>
    %75 = tpu.concatenate %68, %71, %74 in 1 : vector<512x4xf32>, vector<512x4xf32>, vector<512x4xf32> -> vector<512x12xf32>
    %c0_109 = arith.constant 0 : index
    %c72 = arith.constant 72 : index
    %76 = vector.load %arg4[%c0_109, %c72] : memref<512x128xf32, #tpu.memory_space<vmem>>, vector<512x12xf32>
    tpu.vector_store %arg4[%c0_109, %c72], %75 {strides = array<i32>} : memref<512x128xf32, #tpu.memory_space<vmem>>, vector<512x12xf32>,
    %c0_110 = arith.constant 0 : index
    %c2_111 = arith.constant 2 : index
    %c1_112 = arith.constant 1 : index
    %c0_113 = arith.constant 0 : index
    %c0_114 = arith.constant 0 : index
    %77 = vector.load %arg1[%c0_110, %c2_111, %c1_112, %c0_113, %c0_114] : memref<1x10x10x10x4xf32, #tpu.memory_space<vmem>>, vector<1x8x8x8x4xf32>
    %78 = vector.shape_cast %77 : vector<1x8x8x8x4xf32> to vector<8x8x8x4xf32>
    %79 = vector.shape_cast %78 : vector<8x8x8x4xf32> to vector<512x4xf32>
    %c0_115 = arith.constant 0 : index
    %c2_116 = arith.constant 2 : index
    %c1_117 = arith.constant 1 : index
    %c1_118 = arith.constant 1 : index
    %c0_119 = arith.constant 0 : index
    %80 = vector.load %arg1[%c0_115, %c2_116, %c1_117, %c1_118, %c0_119] : memref<1x10x10x10x4xf32, #tpu.memory_space<vmem>>, vector<1x8x8x8x4xf32>
    %81 = vector.shape_cast %80 : vector<1x8x8x8x4xf32> to vector<8x8x8x4xf32>
    %82 = vector.shape_cast %81 : vector<8x8x8x4xf32> to vector<512x4xf32>
    %c0_120 = arith.constant 0 : index
    %c2_121 = arith.constant 2 : index
    %c1_122 = arith.constant 1 : index
    %c2_123 = arith.constant 2 : index
    %c0_124 = arith.constant 0 : index
    %83 = vector.load %arg1[%c0_120, %c2_121, %c1_122, %c2_123, %c0_124] : memref<1x10x10x10x4xf32, #tpu.memory_space<vmem>>, vector<1x8x8x8x4xf32>
    %84 = vector.shape_cast %83 : vector<1x8x8x8x4xf32> to vector<8x8x8x4xf32>
    %85 = vector.shape_cast %84 : vector<8x8x8x4xf32> to vector<512x4xf32>
    %86 = tpu.concatenate %79, %82, %85 in 1 : vector<512x4xf32>, vector<512x4xf32>, vector<512x4xf32> -> vector<512x12xf32>
    %c0_125 = arith.constant 0 : index
    %c84 = arith.constant 84 : index
    %87 = vector.load %arg4[%c0_125, %c84] : memref<512x128xf32, #tpu.memory_space<vmem>>, vector<512x12xf32>
    tpu.vector_store %arg4[%c0_125, %c84], %86 {strides = array<i32>} : memref<512x128xf32, #tpu.memory_space<vmem>>, vector<512x12xf32>,
    %c0_126 = arith.constant 0 : index
    %c2_127 = arith.constant 2 : index
    %c2_128 = arith.constant 2 : index
    %c0_129 = arith.constant 0 : index
    %c0_130 = arith.constant 0 : index
    %88 = vector.load %arg1[%c0_126, %c2_127, %c2_128, %c0_129, %c0_130] : memref<1x10x10x10x4xf32, #tpu.memory_space<vmem>>, vector<1x8x8x8x4xf32>
    %89 = vector.shape_cast %88 : vector<1x8x8x8x4xf32> to vector<8x8x8x4xf32>
    %90 = vector.shape_cast %89 : vector<8x8x8x4xf32> to vector<512x4xf32>
    %c0_131 = arith.constant 0 : index
    %c2_132 = arith.constant 2 : index
    %c2_133 = arith.constant 2 : index
    %c1_134 = arith.constant 1 : index
    %c0_135 = arith.constant 0 : index
    %91 = vector.load %arg1[%c0_131, %c2_132, %c2_133, %c1_134, %c0_135] : memref<1x10x10x10x4xf32, #tpu.memory_space<vmem>>, vector<1x8x8x8x4xf32>
    %92 = vector.shape_cast %91 : vector<1x8x8x8x4xf32> to vector<8x8x8x4xf32>
    %93 = vector.shape_cast %92 : vector<8x8x8x4xf32> to vector<512x4xf32>
    %c0_136 = arith.constant 0 : index
    %c2_137 = arith.constant 2 : index
    %c2_138 = arith.constant 2 : index
    %c2_139 = arith.constant 2 : index
    %c0_140 = arith.constant 0 : index
    %94 = vector.load %arg1[%c0_136, %c2_137, %c2_138, %c2_139, %c0_140] : memref<1x10x10x10x4xf32, #tpu.memory_space<vmem>>, vector<1x8x8x8x4xf32>
    %95 = vector.shape_cast %94 : vector<1x8x8x8x4xf32> to vector<8x8x8x4xf32>
    %96 = vector.shape_cast %95 : vector<8x8x8x4xf32> to vector<512x4xf32>
    %cst = arith.constant 0.000000e+00 : f32
    %97 = vector.broadcast %cst : f32 to vector<512x20xf32>
    %98 = tpu.concatenate %90, %93, %96, %97 in 1 : vector<512x4xf32>, vector<512x4xf32>, vector<512x4xf32>, vector<512x20xf32> -> vector<512x32xf32>
    %c0_141 = arith.constant 0 : index
    %c96 = arith.constant 96 : index
    %99 = vector.load %arg4[%c0_141, %c96] : memref<512x128xf32, #tpu.memory_space<vmem>>, vector<512x32xf32>
    tpu.vector_store %arg4[%c0_141, %c96], %98 {strides = array<i32>} : memref<512x128xf32, #tpu.memory_space<vmem>>, vector<512x32xf32>,
    %c0_142 = arith.constant 0 : index
    %c0_143 = arith.constant 0 : index
    %100 = vector.load %arg2[%c0_142, %c0_143] : memref<8x128xf32, #tpu.memory_space<vmem>>, vector<8x128xf32>
    %c0_144 = arith.constant 0 : index
    %c0_145 = arith.constant 0 : index
    %101 = vector.load %arg4[%c0_144, %c0_145] : memref<512x128xf32, #tpu.memory_space<vmem>>, vector<512x128xf32>
    %cst_146 = arith.constant dense<0.000000e+00> : vector<8x512xf32>
    %102 = tpu.matmul %100, %101, %cst_146 {dimension_numbers = #tpu.dot_dimension_numbers<[1], [1], [0], [0], [0, 0, 1, 0], [], []>} : vector<8x128xf32>, vector<512x128xf32>, vector<8x512xf32> -> vector<8x512xf32>
    %cst_147 = arith.constant dense<0.000000e+00> : vector<8xf32>
    %103 = vector.multi_reduction <add>, %102, %cst_147 [1] : vector<8x512xf32> to vector<8xf32>
    %104 = vector.shape_cast %103 : vector<8xf32> to vector<8x1xf32>
    %cst_148 = arith.constant 5.120000e+02 : f32
    %105 = vector.broadcast %cst_148 : f32 to vector<8x1xf32>
    %106 = arith.divf %104, %105 : vector<8x1xf32>
    %107 = vector.broadcast %106 : vector<8x1xf32> to vector<8x512xf32>
    %108 = arith.subf %102, %107 : vector<8x512xf32>
    %c0_149 = arith.constant 0 : index
    %c0_150 = arith.constant 0 : index
    %c0_151 = arith.constant 0 : index
    %109 = vector.load %arg3[%c0_149, %c0_150, %c0_151] : memref<1x8x2xf32, #tpu.memory_space<vmem>>, vector<1x8x1xf32>
    %110 = vector.shape_cast %109 : vector<1x8x1xf32> to vector<8x1xf32>
    %111 = vector.shape_cast %106 : vector<8x1xf32> to vector<1x8x1xf32>
    tpu.vector_store %arg3[%c0_149, %c0_150, %c0_151], %111 {strides = array<i32>} : memref<1x8x2xf32, #tpu.memory_space<vmem>>, vector<1x8x1xf32>,
    %112 = arith.mulf %108, %108 : vector<8x512xf32>
    %cst_152 = arith.constant dense<0.000000e+00> : vector<8xf32>
    %113 = vector.multi_reduction <add>, %112, %cst_152 [1] : vector<8x512xf32> to vector<8xf32>
    %114 = vector.shape_cast %113 : vector<8xf32> to vector<8x1xf32>
    %c0_153 = arith.constant 0 : index
    %c0_154 = arith.constant 0 : index
    %c1_155 = arith.constant 1 : index
    %115 = vector.load %arg3[%c0_153, %c0_154, %c1_155] : memref<1x8x2xf32, #tpu.memory_space<vmem>>, vector<1x8x1xf32>
    %116 = vector.shape_cast %115 : vector<1x8x1xf32> to vector<8x1xf32>
    %117 = vector.shape_cast %114 : vector<8x1xf32> to vector<1x8x1xf32>
    tpu.vector_store %arg3[%c0_153, %c0_154, %c1_155], %117 {strides = array<i32>} : memref<1x8x2xf32, #tpu.memory_space<vmem>>, vector<1x8x1xf32>,
    return
  }
  func.func @transform_0(%arg0: i32) -> (i32, i32, i32, i32, i32) {
    %c0_i32 = arith.constant 0 : i32
    %c0_i32_0 = arith.constant 0 : i32
    %c0_i32_1 = arith.constant 0 : i32
    %c0_i32_2 = arith.constant 0 : i32
    %c0_i32_3 = arith.constant 0 : i32
    return %arg0, %c0_i32, %c0_i32_0, %c0_i32_1, %c0_i32_2 : i32, i32, i32, i32, i32
  }
  func.func @transform_1(%arg0: i32) -> (i32, i32) {
    %c0_i32 = arith.constant 0 : i32
    %c0_i32_0 = arith.constant 0 : i32
    %c0_i32_1 = arith.constant 0 : i32
    return %c0_i32, %c0_i32_0 : i32, i32
  }
  func.func @transform_2(%arg0: i32) -> (i32, i32, i32) {
    %c0_i32 = arith.constant 0 : i32
    %c0_i32_0 = arith.constant 0 : i32
    %c0_i32_1 = arith.constant 0 : i32
    return %arg0, %c0_i32, %c0_i32_0 : i32, i32, i32
  }
}

</mosaic_0001>

<llo_original>
// kernel: tpu_custom_call.1
$region0: #{tpu_custom_call.1}
  #allocation0 [shape = 'u32[]', space=smem, size = 0x4, offset = 0x4, fixed_abs, tag = 'smem constant byte address 0x4 - core index']
  #allocation1 [shape = 'u32[144,128]{1,0:T(1,128)}', space=vmem, size = 0x12000, scoped, tag = 'internal scratch']
  #allocation2 [shape = 'f32[512,128]{1,0:T(8,128)}', space=vmem, size = 0x40000, scoped, tag = 'scratch operand']
  %s0 = inlined_call_operand.vmem [shape: f32[2,10,10,10,4], index: 0, kind: input, shape index: {}]
  %s1 = inlined_call_operand.vmem [shape: f32[8,128], index: 1, kind: input, shape index: {}]
  %s2 = inlined_call_operand.vmem [shape: f32[2,8,2], index: 2, kind: output, shape index: {}]
  %s3 = sld [smem:[#allocation0]]
  $region41: #{tpu_custom_call.1} parent=0
    _
  %s5 = ssub.s32 1, %s3
  %s6 = scalar_select 0, %s5, %s3
  loop: start=0, step=1, limit=4
  $region2: #{tpu_custom_call.1} parent=0 // loop_pre_header
    _
  $region3: #{tpu_custom_call.1} parent=0 // loop_header
    %s8 = sphi 0, %s12
    %p9 = scmp.ge.s32.totalorder %s8, 4
    %s18 = sphi 0, %s20
    %s21 = sphi 0, %s18
    %s22 = sphi 0, %s21
    %s38 = sphi 0, %s22
    %s42 = sphi 0, %s42
    %s44 = sphi 0, %s42
    %s45 = sphi 0, %s44
    %s59 = sphi 0, %s45
    %s65 = sphi 0, %s67
    %s68 = sphi 0, %s65
    %s69 = sphi 0, %s68
    %s85 = sphi 0, %s69
  $region4: #{tpu_custom_call.1} parent=0 // loop_header_branch
    %11 = sbr.rel (%p9) target = $region8
  $region5: #{tpu_custom_call.1} parent=0 // loop_body
    %s13 = ssub.s32 %s8, 1
    %s14 = ssub.s32 %s8, 2
    %s15 = sadd.s32 %s8, 1
    %s16 = ssub.s32 %s8, %s15
    %p17 = scmp.eq.s32.totalorder %s16, 0
    %s19 = sadd.s32 %s18, 1
    %s20 = scalar_select %p17, %s18, %s19
    %p23 = pneg %p17
    %p24 = scmp.eq.s32.totalorder %s8, 1
    %p25 = por %p23, %p24
    %p26 = scmp.ne.s32.totalorder %s18, %s21
    %p27 = scmp.eq.s32.totalorder %s8, 0
    %p28 = por %p26, %p27
    %p29 = scmp.ne.s32.totalorder %s18, %s21
    %p30 = scmp.eq.s32.totalorder %s13, 1
    %p31 = por %p29, %p30
    %p32 = scmp.ne.s32.totalorder %s21, %s22
    %p33 = scmp.eq.s32.totalorder %s13, 0
    %p34 = por %p32, %p33
    %p35 = scmp.ne.s32.totalorder %s21, %s22
    %p36 = scmp.eq.s32.totalorder %s14, 1
    %p37 = por %p35, %p36
    %p39 = scmp.ne.s32.totalorder %s22, %s38
    %p40 = scmp.eq.s32.totalorder %s14, 0
    %p41 = por %p39, %p40
    %s43 = sadd.s32 %s42, 1
    %p46 = scmp.eq.s32.totalorder %s8, 1
    %p47 = scmp.ne.s32.totalorder %s42, %s44
    %p48 = scmp.eq.s32.totalorder %s8, 0
    %p49 = por %p47, %p48
    %p50 = scmp.ne.s32.totalorder %s42, %s44
    %p51 = scmp.eq.s32.totalorder %s13, 1
    %p52 = por %p50, %p51
    %p53 = scmp.ne.s32.totalorder %s44, %s45
    %p54 = scmp.eq.s32.totalorder %s13, 0
    %p55 = por %p53, %p54
    %p56 = scmp.ne.s32.totalorder %s44, %s45
    %p57 = scmp.eq.s32.totalorder %s14, 1
    %p58 = por %p56, %p57
    %p60 = scmp.ne.s32.totalorder %s45, %s59
    %p61 = scmp.eq.s32.totalorder %s14, 0
    %p62 = por %p60, %p61
    %s63 = ssub.s32 %s8, %s15
    %p64 = scmp.eq.s32.totalorder %s63, 0
    %s66 = sadd.s32 %s65, 1
    %s67 = scalar_select %p64, %s65, %s66
    %p70 = pneg %p64
    %p71 = scmp.eq.s32.totalorder %s8, 1
    %p72 = por %p70, %p71
    %p73 = scmp.ne.s32.totalorder %s65, %s68
    %p74 = scmp.eq.s32.totalorder %s8, 0
    %p75 = por %p73, %p74
    %p76 = scmp.ne.s32.totalorder %s65, %s68
    %p77 = scmp.eq.s32.totalorder %s13, 1
    %p78 = por %p76, %p77
    %p79 = scmp.ne.s32.totalorder %s68, %s69
    %p80 = scmp.eq.s32.totalorder %s13, 0
    %p81 = por %p79, %p80
    %p82 = scmp.ne.s32.totalorder %s68, %s69
    %p83 = scmp.eq.s32.totalorder %s14, 1
    %p84 = por %p82, %p83
    %p86 = scmp.ne.s32.totalorder %s69, %s85
    %p87 = scmp.eq.s32.totalorder %s14, 0
    %p88 = por %p86, %p87
    %p89 = scmp.le.s32.totalorder 1, %s8
    %p90 = scmp.lt.s32.totalorder %s8, 3
    %p91 = pnand %p89, %p90
    %p92 = pneg %p91
    // Predicated region
    $region9: #{tpu_custom_call.1} parent=5 // pred_check
      _
    $region10: #{tpu_custom_call.1} parent=5 // pred_check_branch
      %94 = sbr.rel (%p91) target = $region12
    $region11: #{tpu_custom_call.1} parent=5 // pred_region
      %s95 = ssub.s32 %s8, 1
      // Predicated region
      $region13: #{tpu_custom_call.1} parent=11 // pred_check
        %p96 = pneg %p55
      $region14: #{tpu_custom_call.1} parent=11 // pred_check_branch
        %98 = sbr.rel (%p96) target = $region16
      $region15: #{tpu_custom_call.1} parent=11 // pred_region
        _
      $region16: #{tpu_custom_call.1} parent=11 // pred_fallthru
        _
    $region12: #{tpu_custom_call.1} parent=5 // pred_fallthru
      _
    %p99 = scmp.lt.s32.totalorder %s8, 2
    // Predicated region
    $region17: #{tpu_custom_call.1} parent=5 // pred_check
      %p100 = pneg %p99
    $region18: #{tpu_custom_call.1} parent=5 // pred_check_branch
      %102 = sbr.rel (%p100) target = $region20
    $region19: #{tpu_custom_call.1} parent=5 // pred_region
      // Predicated region
      $region21: #{tpu_custom_call.1} parent=19 // pred_check
        %p103 = pneg %p28
      $region22: #{tpu_custom_call.1} parent=19 // pred_check_branch
        %105 = sbr.rel (%p103) target = $region24
      $region23: #{tpu_custom_call.1} parent=19 // pred_region
        %p106 = scmp.lt.s32.totalorder %s8, 1
        %s107 = scalar_select %p106, %s8, 1
        %s108 = smul.addr %s107, 200
        %s109 = smul.addr %s108, 8
        %s110 = scalar_lea.vmem %s0, %s109
      $region24: #{tpu_custom_call.1} parent=19 // pred_fallthru
        _
    $region20: #{tpu_custom_call.1} parent=5 // pred_fallthru
      _
    %p111 = scmp.le.s32.totalorder 1, %s8
    %p112 = scmp.lt.s32.totalorder %s8, 3
    %p113 = pnand %p111, %p112
    %p114 = pneg %p113
    // Predicated region
    $region25: #{tpu_custom_call.1} parent=5 // pred_check
      _
    $region26: #{tpu_custom_call.1} parent=5 // pred_check_branch
      %116 = sbr.rel (%p113) target = $region28
    $region27: #{tpu_custom_call.1} parent=5 // pred_region
      %s117 = ssub.s32 %s8, 1
      %p118 = scmp.lt.s32.totalorder %s13, 1
      %s119 = scalar_select %p118, %s13, 1
      %s120 = smul.addr %s119, 200
      %s121 = smul.addr %s120, 8
      %s122 = scalar_lea.vmem %s0, %s121
      %p123 = pneg %p34
      %p124 = pneg %p31
      %p125 = pneg %p55
      %p126 = pneg %p52
      %p127 = pneg %p81
      %p128 = pneg %p78
      %p129 = scmp.lt.s32.totalorder %s13, 1
      %s130 = scalar_select %p129, %s13, 1
      %s131 = smul.addr %s130, 8
      %s132 = scalar_lea.vmem %s2, %s131
      %p133 = scmp.lt.s32.totalorder %s13, 1
      %s134 = scalar_select %p133, %s13, 1
      %s135 = smul.addr %s134, 200
      %s136 = smul.addr %s135, 8
      %s137 = scalar_lea.vmem %s0, %s136
      %p138 = scmp.lt.s32.totalorder %s13, 1
      %s139 = scalar_select %p138, %s13, 1
      %s140 = smul.addr %s139, 8
      %s141 = scalar_lea.vmem %s2, %s140
      %v142 = vld [vmem:[%s137] sm:$0xff]
      %v143 = vld [vmem:[%s137 + $0x10] sm:$0xff]
      %v144 = vld [vmem:[%s137 + $0x20] sm:$0xff]
      %v145 = vld [vmem:[%s137 + $0x30] sm:$0xff]
      %v146 = vld [vmem:[%s137 + $0x40] sm:$0xff]
      %v147 = vld [vmem:[%s137 + $0x50] sm:$0xff]
      %v148 = vld [vmem:[%s137 + $0x60] sm:$0xff]
      %v149 = vld [vmem:[%s137 + $0x70] sm:$0xff]
      %v150 = vld [vmem:[%s137 + $0xa0] sm:$0xff]
      %v151 = vld [vmem:[%s137 + $0xb0] sm:$0xff]
      %v152 = vld [vmem:[%s137 + $0xc0] sm:$0xff]
      %v153 = vld [vmem:[%s137 + $0xd0] sm:$0xff]
      %v154 = vld [vmem:[%s137 + $0xe0] sm:$0xff]
      %v155 = vld [vmem:[%s137 + $0xf0] sm:$0xff]
      %v156 = vld [vmem:[%s137 + $0x100] sm:$0xff]
      %v157 = vld [vmem:[%s137 + $0x110] sm:$0xff]
      %v158 = vld [vmem:[%s137 + $0x140] sm:$0xff]
      %v159 = vld [vmem:[%s137 + $0x150] sm:$0xff]
      %v160 = vld [vmem:[%s137 + $0x160] sm:$0xff]
      %v161 = vld [vmem:[%s137 + $0x170] sm:$0xff]
      %v162 = vld [vmem:[%s137 + $0x180] sm:$0xff]
      %v163 = vld [vmem:[%s137 + $0x190] sm:$0xff]
      %v164 = vld [vmem:[%s137 + $0x1a0] sm:$0xff]
      %v165 = vld [vmem:[%s137 + $0x1b0] sm:$0xff]
      %v166 = vld [vmem:[%s137 + $0x1e0] sm:$0xff]
      %v167 = vld [vmem:[%s137 + $0x1f0] sm:$0xff]
      %v168 = vld [vmem:[%s137 + $0x200] sm:$0xff]
      %v169 = vld [vmem:[%s137 + $0x210] sm:$0xff]
      %v170 = vld [vmem:[%s137 + $0x220] sm:$0xff]
      %v171 = vld [vmem:[%s137 + $0x230] sm:$0xff]
      %v172 = vld [vmem:[%s137 + $0x240] sm:$0xff]
      %v173 = vld [vmem:[%s137 + $0x250] sm:$0xff]
      %v174 = vld [vmem:[%s137 + $0x280] sm:$0xff]
      %v175 = vld [vmem:[%s137 + $0x290] sm:$0xff]
      %v176 = vld [vmem:[%s137 + $0x2a0] sm:$0xff]
      %v177 = vld [vmem:[%s137 + $0x2b0] sm:$0xff]
      %v178 = vld [vmem:[%s137 + $0x2c0] sm:$0xff]
      %v179 = vld [vmem:[%s137 + $0x2d0] sm:$0xff]
      %v180 = vld [vmem:[%s137 + $0x2e0] sm:$0xff]
      %v181 = vld [vmem:[%s137 + $0x2f0] sm:$0xff]
      %v182 = vld [vmem:[%s137 + $0x320] sm:$0xff]
      %v183 = vld [vmem:[%s137 + $0x330] sm:$0xff]
      %v184 = vld [vmem:[%s137 + $0x340] sm:$0xff]
      %v185 = vld [vmem:[%s137 + $0x350] sm:$0xff]
      %v186 = vld [vmem:[%s137 + $0x360] sm:$0xff]
      %v187 = vld [vmem:[%s137 + $0x370] sm:$0xff]
      %v188 = vld [vmem:[%s137 + $0x380] sm:$0xff]
      %v189 = vld [vmem:[%s137 + $0x390] sm:$0xff]
      %v190 = vld [vmem:[%s137 + $0x3c0] sm:$0xff]
      %v191 = vld [vmem:[%s137 + $0x3d0] sm:$0xff]
      %v192 = vld [vmem:[%s137 + $0x3e0] sm:$0xff]
      %v193 = vld [vmem:[%s137 + $0x3f0] sm:$0xff]
      %v194 = vld [vmem:[%s137 + $0x400] sm:$0xff]
      %v195 = vld [vmem:[%s137 + $0x410] sm:$0xff]
      %v196 = vld [vmem:[%s137 + $0x420] sm:$0xff]
      %v197 = vld [vmem:[%s137 + $0x430] sm:$0xff]
      %v198 = vld [vmem:[%s137 + $0x460] sm:$0xff]
      %v199 = vld [vmem:[%s137 + $0x470] sm:$0xff]
      %v200 = vld [vmem:[%s137 + $0x480] sm:$0xff]
      %v201 = vld [vmem:[%s137 + $0x490] sm:$0xff]
      %v202 = vld [vmem:[%s137 + $0x4a0] sm:$0xff]
      %v203 = vld [vmem:[%s137 + $0x4b0] sm:$0xff]
      %v204 = vld [vmem:[%s137 + $0x4c0] sm:$0xff]
      %v205 = vld [vmem:[%s137 + $0x4d0] sm:$0xff]
      %v206 = vld [vmem:[%s137 + $0x1] sm:$0xff]
      %v207 = vld [vmem:[%s137 + $0x11] sm:$0xff]
      %v208 = vld [vmem:[%s137 + $0x21] sm:$0xff]
      %v209 = vld [vmem:[%s137 + $0x31] sm:$0xff]
      %v210 = vld [vmem:[%s137 + $0x41] sm:$0xff]
      %v211 = vld [vmem:[%s137 + $0x51] sm:$0xff]
      %v212 = vld [vmem:[%s137 + $0x61] sm:$0xff]
      %v213 = vld [vmem:[%s137 + $0x71] sm:$0xff]
      %v214 = vld [vmem:[%s137 + $0xa1] sm:$0xff]
      %v215 = vld [vmem:[%s137 + $0xb1] sm:$0xff]
      %v216 = vld [vmem:[%s137 + $0xc1] sm:$0xff]
      %v217 = vld [vmem:[%s137 + $0xd1] sm:$0xff]
      %v218 = vld [vmem:[%s137 + $0xe1] sm:$0xff]
      %v219 = vld [vmem:[%s137 + $0xf1] sm:$0xff]
      %v220 = vld [vmem:[%s137 + $0x101] sm:$0xff]
      %v221 = vld [vmem:[%s137 + $0x111] sm:$0xff]
      %v222 = vld [vmem:[%s137 + $0x141] sm:$0xff]
      %v223 = vld [vmem:[%s137 + $0x151] sm:$0xff]
      %v224 = vld [vmem:[%s137 + $0x161] sm:$0xff]
      %v225 = vld [vmem:[%s137 + $0x171] sm:$0xff]
      %v226 = vld [vmem:[%s137 + $0x181] sm:$0xff]
      %v227 = vld [vmem:[%s137 + $0x191] sm:$0xff]
      %v228 = vld [vmem:[%s137 + $0x1a1] sm:$0xff]
      %v229 = vld [vmem:[%s137 + $0x1b1] sm:$0xff]
      %v230 = vld [vmem:[%s137 + $0x1e1] sm:$0xff]
      %v231 = vld [vmem:[%s137 + $0x1f1] sm:$0xff]
      %v232 = vld [vmem:[%s137 + $0x201] sm:$0xff]
      %v233 = vld [vmem:[%s137 + $0x211] sm:$0xff]
      %v234 = vld [vmem:[%s137 + $0x221] sm:$0xff]
      %v235 = vld [vmem:[%s137 + $0x231] sm:$0xff]
      %v236 = vld [vmem:[%s137 + $0x241] sm:$0xff]
      %v237 = vld [vmem:[%s137 + $0x251] sm:$0xff]
      %v238 = vld [vmem:[%s137 + $0x281] sm:$0xff]
      %v239 = vld [vmem:[%s137 + $0x291] sm:$0xff]
      %v240 = vld [vmem:[%s137 + $0x2a1] sm:$0xff]
      %v241 = vld [vmem:[%s137 + $0x2b1] sm:$0xff]
      %v242 = vld [vmem:[%s137 + $0x2c1] sm:$0xff]
      %v243 = vld [vmem:[%s137 + $0x2d1] sm:$0xff]
      %v244 = vld [vmem:[%s137 + $0x2e1] sm:$0xff]
      %v245 = vld [vmem:[%s137 + $0x2f1] sm:$0xff]
      %v246 = vld [vmem:[%s137 + $0x321] sm:$0xff]
      %v247 = vld [vmem:[%s137 + $0x331] sm:$0xff]
      %v248 = vld [vmem:[%s137 + $0x341] sm:$0xff]
      %v249 = vld [vmem:[%s137 + $0x351] sm:$0xff]
      %v250 = vld [vmem:[%s137 + $0x361] sm:$0xff]
      %v251 = vld [vmem:[%s137 + $0x371] sm:$0xff]
      %v252 = vld [vmem:[%s137 + $0x381] sm:$0xff]
      %v253 = vld [vmem:[%s137 + $0x391] sm:$0xff]
      %v254 = vld [vmem:[%s137 + $0x3c1] sm:$0xff]
      %v255 = vld [vmem:[%s137 + $0x3d1] sm:$0xff]
      %v256 = vld [vmem:[%s137 + $0x3e1] sm:$0xff]
      %v257 = vld [vmem:[%s137 + $0x3f1] sm:$0xff]
      %v258 = vld [vmem:[%s137 + $0x401] sm:$0xff]
      %v259 = vld [vmem:[%s137 + $0x411] sm:$0xff]
      %v260 = vld [vmem:[%s137 + $0x421] sm:$0xff]
      %v261 = vld [vmem:[%s137 + $0x431] sm:$0xff]
      %v262 = vld [vmem:[%s137 + $0x461] sm:$0xff]
      %v263 = vld [vmem:[%s137 + $0x471] sm:$0xff]
      %v264 = vld [vmem:[%s137 + $0x481] sm:$0xff]
      %v265 = vld [vmem:[%s137 + $0x491] sm:$0xff]
      %v266 = vld [vmem:[%s137 + $0x4a1] sm:$0xff]
      %v267 = vld [vmem:[%s137 + $0x4b1] sm:$0xff]
      %v268 = vld [vmem:[%s137 + $0x4c1] sm:$0xff]
      %v269 = vld [vmem:[%s137 + $0x4d1] sm:$0xff]
      %v270 = vld [vmem:[%s137 + $0x2] sm:$0xff]
      %v271 = vld [vmem:[%s137 + $0x12] sm:$0xff]
      %v272 = vld [vmem:[%s137 + $0x22] sm:$0xff]
      %v273 = vld [vmem:[%s137 + $0x32] sm:$0xff]
      %v274 = vld [vmem:[%s137 + $0x42] sm:$0xff]
      %v275 = vld [vmem:[%s137 + $0x52] sm:$0xff]
      %v276 = vld [vmem:[%s137 + $0x62] sm:$0xff]
      %v277 = vld [vmem:[%s137 + $0x72] sm:$0xff]
      %v278 = vld [vmem:[%s137 + $0xa2] sm:$0xff]
      %v279 = vld [vmem:[%s137 + $0xb2] sm:$0xff]
      %v280 = vld [vmem:[%s137 + $0xc2] sm:$0xff]
      %v281 = vld [vmem:[%s137 + $0xd2] sm:$0xff]
      %v282 = vld [vmem:[%s137 + $0xe2] sm:$0xff]
      %v283 = vld [vmem:[%s137 + $0xf2] sm:$0xff]
      %v284 = vld [vmem:[%s137 + $0x102] sm:$0xff]
      %v285 = vld [vmem:[%s137 + $0x112] sm:$0xff]
      %v286 = vld [vmem:[%s137 + $0x142] sm:$0xff]
      %v287 = vld [vmem:[%s137 + $0x152] sm:$0xff]
      %v288 = vld [vmem:[%s137 + $0x162] sm:$0xff]
      %v289 = vld [vmem:[%s137 + $0x172] sm:$0xff]
      %v290 = vld [vmem:[%s137 + $0x182] sm:$0xff]
      %v291 = vld [vmem:[%s137 + $0x192] sm:$0xff]
      %v292 = vld [vmem:[%s137 + $0x1a2] sm:$0xff]
      %v293 = vld [vmem:[%s137 + $0x1b2] sm:$0xff]
      %v294 = vld [vmem:[%s137 + $0x1e2] sm:$0xff]
      %v295 = vld [vmem:[%s137 + $0x1f2] sm:$0xff]
      %v296 = vld [vmem:[%s137 + $0x202] sm:$0xff]
      %v297 = vld [vmem:[%s137 + $0x212] sm:$0xff]
      %v298 = vld [vmem:[%s137 + $0x222] sm:$0xff]
      %v299 = vld [vmem:[%s137 + $0x232] sm:$0xff]
      %v300 = vld [vmem:[%s137 + $0x242] sm:$0xff]
      %v301 = vld [vmem:[%s137 + $0x252] sm:$0xff]
      %v302 = vld [vmem:[%s137 + $0x282] sm:$0xff]
      %v303 = vld [vmem:[%s137 + $0x292] sm:$0xff]
      %v304 = vld [vmem:[%s137 + $0x2a2] sm:$0xff]
      %v305 = vld [vmem:[%s137 + $0x2b2] sm:$0xff]
      %v306 = vld [vmem:[%s137 + $0x2c2] sm:$0xff]
      %v307 = vld [vmem:[%s137 + $0x2d2] sm:$0xff]
      %v308 = vld [vmem:[%s137 + $0x2e2] sm:$0xff]
      %v309 = vld [vmem:[%s137 + $0x2f2] sm:$0xff]
      %v310 = vld [vmem:[%s137 + $0x322] sm:$0xff]
      %v311 = vld [vmem:[%s137 + $0x332] sm:$0xff]
      %v312 = vld [vmem:[%s137 + $0x342] sm:$0xff]
      %v313 = vld [vmem:[%s137 + $0x352] sm:$0xff]
      %v314 = vld [vmem:[%s137 + $0x362] sm:$0xff]
      %v315 = vld [vmem:[%s137 + $0x372] sm:$0xff]
      %v316 = vld [vmem:[%s137 + $0x382] sm:$0xff]
      %v317 = vld [vmem:[%s137 + $0x392] sm:$0xff]
      %v318 = vld [vmem:[%s137 + $0x3c2] sm:$0xff]
      %v319 = vld [vmem:[%s137 + $0x3d2] sm:$0xff]
      %v320 = vld [vmem:[%s137 + $0x3e2] sm:$0xff]
      %v321 = vld [vmem:[%s137 + $0x3f2] sm:$0xff]
      %v322 = vld [vmem:[%s137 + $0x402] sm:$0xff]
      %v323 = vld [vmem:[%s137 + $0x412] sm:$0xff]
      %v324 = vld [vmem:[%s137 + $0x422] sm:$0xff]
      %v325 = vld [vmem:[%s137 + $0x432] sm:$0xff]
      %v326 = vld [vmem:[%s137 + $0x462] sm:$0xff]
      %v327 = vld [vmem:[%s137 + $0x472] sm:$0xff]
      %v328 = vld [vmem:[%s137 + $0x482] sm:$0xff]
      %v329 = vld [vmem:[%s137 + $0x492] sm:$0xff]
      %v330 = vld [vmem:[%s137 + $0x4a2] sm:$0xff]
      %v331 = vld [vmem:[%s137 + $0x4b2] sm:$0xff]
      %v332 = vld [vmem:[%s137 + $0x4c2] sm:$0xff]
      %v333 = vld [vmem:[%s137 + $0x4d2] sm:$0xff]
      %398 = vrot.lane.b32.xlu0 %v206, 4
      %v399 = vpop.permute.xlu0 %398
      %400 = vrot.lane.b32.xlu0 %v207, 4
      %v401 = vpop.permute.xlu0 %400
      %402 = vrot.lane.b32.xlu0 %v208, 4
      %v403 = vpop.permute.xlu0 %402
      %404 = vrot.lane.b32.xlu0 %v209, 4
      %v405 = vpop.permute.xlu0 %404
      %406 = vrot.lane.b32.xlu0 %v210, 4
      %v407 = vpop.permute.xlu0 %406
      %408 = vrot.lane.b32.xlu0 %v211, 4
      %v409 = vpop.permute.xlu0 %408
      %410 = vrot.lane.b32.xlu0 %v212, 4
      %v411 = vpop.permute.xlu0 %410
      %412 = vrot.lane.b32.xlu0 %v213, 4
      %v413 = vpop.permute.xlu0 %412
      %414 = vrot.lane.b32.xlu0 %v214, 4
      %v415 = vpop.permute.xlu0 %414
      %416 = vrot.lane.b32.xlu0 %v215, 4
      %v417 = vpop.permute.xlu0 %416
      %418 = vrot.lane.b32.xlu0 %v216, 4
      %v419 = vpop.permute.xlu0 %418
      %420 = vrot.lane.b32.xlu0 %v217, 4
      %v421 = vpop.permute.xlu0 %420
      %422 = vrot.lane.b32.xlu0 %v218, 4
      %v423 = vpop.permute.xlu0 %422
      %424 = vrot.lane.b32.xlu0 %v219, 4
      %v425 = vpop.permute.xlu0 %424
      %426 = vrot.lane.b32.xlu0 %v220, 4
      %v427 = vpop.permute.xlu0 %426
      %428 = vrot.lane.b32.xlu0 %v221, 4
      %v429 = vpop.permute.xlu0 %428
      %430 = vrot.lane.b32.xlu0 %v222, 4
      %v431 = vpop.permute.xlu0 %430
      %432 = vrot.lane.b32.xlu0 %v223, 4
      %v433 = vpop.permute.xlu0 %432
      %434 = vrot.lane.b32.xlu0 %v224, 4
      %v435 = vpop.permute.xlu0 %434
      %436 = vrot.lane.b32.xlu0 %v225, 4
      %v437 = vpop.permute.xlu0 %436
      %438 = vrot.lane.b32.xlu0 %v226, 4
      %v439 = vpop.permute.xlu0 %438
      %440 = vrot.lane.b32.xlu0 %v227, 4
      %v441 = vpop.permute.xlu0 %440
      %442 = vrot.lane.b32.xlu0 %v228, 4
      %v443 = vpop.permute.xlu0 %442
      %444 = vrot.lane.b32.xlu0 %v229, 4
      %v445 = vpop.permute.xlu0 %444
      %446 = vrot.lane.b32.xlu0 %v230, 4
      %v447 = vpop.permute.xlu0 %446
      %448 = vrot.lane.b32.xlu0 %v231, 4
      %v449 = vpop.permute.xlu0 %448
      %450 = vrot.lane.b32.xlu0 %v232, 4
      %v451 = vpop.permute.xlu0 %450
      %452 = vrot.lane.b32.xlu0 %v233, 4
      %v453 = vpop.permute.xlu0 %452
      %454 = vrot.lane.b32.xlu0 %v234, 4
      %v455 = vpop.permute.xlu0 %454
      %456 = vrot.lane.b32.xlu0 %v235, 4
      %v457 = vpop.permute.xlu0 %456
      %458 = vrot.lane.b32.xlu0 %v236, 4
      %v459 = vpop.permute.xlu0 %458
      %460 = vrot.lane.b32.xlu0 %v237, 4
      %v461 = vpop.permute.xlu0 %460
      %462 = vrot.lane.b32.xlu0 %v238, 4
      %v463 = vpop.permute.xlu0 %462
      %464 = vrot.lane.b32.xlu0 %v239, 4
      %v465 = vpop.permute.xlu0 %464
      %466 = vrot.lane.b32.xlu0 %v240, 4
      %v467 = vpop.permute.xlu0 %466
      %468 = vrot.lane.b32.xlu0 %v241, 4
      %v469 = vpop.permute.xlu0 %468
      %470 = vrot.lane.b32.xlu0 %v242, 4
      %v471 = vpop.permute.xlu0 %470
      %472 = vrot.lane.b32.xlu0 %v243, 4
      %v473 = vpop.permute.xlu0 %472
      %474 = vrot.lane.b32.xlu0 %v244, 4
      %v475 = vpop.permute.xlu0 %474
      %476 = vrot.lane.b32.xlu0 %v245, 4
      %v477 = vpop.permute.xlu0 %476
      %478 = vrot.lane.b32.xlu0 %v246, 4
      %v479 = vpop.permute.xlu0 %478
      %480 = vrot.lane.b32.xlu0 %v247, 4
      %v481 = vpop.permute.xlu0 %480
      %482 = vrot.lane.b32.xlu0 %v248, 4
      %v483 = vpop.permute.xlu0 %482
      %484 = vrot.lane.b32.xlu0 %v249, 4
      %v485 = vpop.permute.xlu0 %484
      %486 = vrot.lane.b32.xlu0 %v250, 4
      %v487 = vpop.permute.xlu0 %486
      %488 = vrot.lane.b32.xlu0 %v251, 4
      %v489 = vpop.permute.xlu0 %488
      %490 = vrot.lane.b32.xlu0 %v252, 4
      %v491 = vpop.permute.xlu0 %490
      %492 = vrot.lane.b32.xlu0 %v253, 4
      %v493 = vpop.permute.xlu0 %492
      %494 = vrot.lane.b32.xlu0 %v254, 4
      %v495 = vpop.permute.xlu0 %494
      %496 = vrot.lane.b32.xlu0 %v255, 4
      %v497 = vpop.permute.xlu0 %496
      %498 = vrot.lane.b32.xlu0 %v256, 4
      %v499 = vpop.permute.xlu0 %498
      %500 = vrot.lane.b32.xlu0 %v257, 4
      %v501 = vpop.permute.xlu0 %500
      %502 = vrot.lane.b32.xlu0 %v258, 4
      %v503 = vpop.permute.xlu0 %502
      %504 = vrot.lane.b32.xlu0 %v259, 4
      %v505 = vpop.permute.xlu0 %504
      %506 = vrot.lane.b32.xlu0 %v260, 4
      %v507 = vpop.permute.xlu0 %506
      %508 = vrot.lane.b32.xlu0 %v261, 4
      %v509 = vpop.permute.xlu0 %508
      %510 = vrot.lane.b32.xlu0 %v262, 4
      %v511 = vpop.permute.xlu0 %510
      %512 = vrot.lane.b32.xlu0 %v263, 4
      %v513 = vpop.permute.xlu0 %512
      %514 = vrot.lane.b32.xlu0 %v264, 4
      %v515 = vpop.permute.xlu0 %514
      %516 = vrot.lane.b32.xlu0 %v265, 4
      %v517 = vpop.permute.xlu0 %516
      %518 = vrot.lane.b32.xlu0 %v266, 4
      %v519 = vpop.permute.xlu0 %518
      %520 = vrot.lane.b32.xlu0 %v267, 4
      %v521 = vpop.permute.xlu0 %520
      %522 = vrot.lane.b32.xlu0 %v268, 4
      %v523 = vpop.permute.xlu0 %522
      %524 = vrot.lane.b32.xlu0 %v269, 4
      %v525 = vpop.permute.xlu0 %524
      %654 = vrot.lane.b32.xlu0 %v270, 8
      %v655 = vpop.permute.xlu0 %654
      %656 = vrot.lane.b32.xlu0 %v271, 8
      %v657 = vpop.permute.xlu0 %656
      %658 = vrot.lane.b32.xlu0 %v272, 8
      %v659 = vpop.permute.xlu0 %658
      %660 = vrot.lane.b32.xlu0 %v273, 8
      %v661 = vpop.permute.xlu0 %660
      %662 = vrot.lane.b32.xlu0 %v274, 8
      %v663 = vpop.permute.xlu0 %662
      %664 = vrot.lane.b32.xlu0 %v275, 8
      %v665 = vpop.permute.xlu0 %664
      %666 = vrot.lane.b32.xlu0 %v276, 8
      %v667 = vpop.permute.xlu0 %666
      %668 = vrot.lane.b32.xlu0 %v277, 8
      %v669 = vpop.permute.xlu0 %668
      %670 = vrot.lane.b32.xlu0 %v278, 8
      %v671 = vpop.permute.xlu0 %670
      %672 = vrot.lane.b32.xlu0 %v279, 8
      %v673 = vpop.permute.xlu0 %672
      %674 = vrot.lane.b32.xlu0 %v280, 8
      %v675 = vpop.permute.xlu0 %674
      %676 = vrot.lane.b32.xlu0 %v281, 8
      %v677 = vpop.permute.xlu0 %676
      %678 = vrot.lane.b32.xlu0 %v282, 8
      %v679 = vpop.permute.xlu0 %678
      %680 = vrot.lane.b32.xlu0 %v283, 8
      %v681 = vpop.permute.xlu0 %680
      %682 = vrot.lane.b32.xlu0 %v284, 8
      %v683 = vpop.permute.xlu0 %682
      %684 = vrot.lane.b32.xlu0 %v285, 8
      %v685 = vpop.permute.xlu0 %684
      %686 = vrot.lane.b32.xlu0 %v286, 8
      %v687 = vpop.permute.xlu0 %686
      %688 = vrot.lane.b32.xlu0 %v287, 8
      %v689 = vpop.permute.xlu0 %688
      %690 = vrot.lane.b32.xlu0 %v288, 8
      %v691 = vpop.permute.xlu0 %690
      %692 = vrot.lane.b32.xlu0 %v289, 8
      %v693 = vpop.permute.xlu0 %692
      %694 = vrot.lane.b32.xlu0 %v290, 8
      %v695 = vpop.permute.xlu0 %694
      %696 = vrot.lane.b32.xlu0 %v291, 8
      %v697 = vpop.permute.xlu0 %696
      %698 = vrot.lane.b32.xlu0 %v292, 8
      %v699 = vpop.permute.xlu0 %698
      %700 = vrot.lane.b32.xlu0 %v293, 8
      %v701 = vpop.permute.xlu0 %700
      %702 = vrot.lane.b32.xlu0 %v294, 8
      %v703 = vpop.permute.xlu0 %702
      %704 = vrot.lane.b32.xlu0 %v295, 8
      %v705 = vpop.permute.xlu0 %704
      %706 = vrot.lane.b32.xlu0 %v296, 8
      %v707 = vpop.permute.xlu0 %706
      %708 = vrot.lane.b32.xlu0 %v297, 8
      %v709 = vpop.permute.xlu0 %708
      %710 = vrot.lane.b32.xlu0 %v298, 8
      %v711 = vpop.permute.xlu0 %710
      %712 = vrot.lane.b32.xlu0 %v299, 8
      %v713 = vpop.permute.xlu0 %712
      %714 = vrot.lane.b32.xlu0 %v300, 8
      %v715 = vpop.permute.xlu0 %714
      %716 = vrot.lane.b32.xlu0 %v301, 8
      %v717 = vpop.permute.xlu0 %716
      %718 = vrot.lane.b32.xlu0 %v302, 8
      %v719 = vpop.permute.xlu0 %718
      %720 = vrot.lane.b32.xlu0 %v303, 8
      %v721 = vpop.permute.xlu0 %720
      %722 = vrot.lane.b32.xlu0 %v304, 8
      %v723 = vpop.permute.xlu0 %722
      %724 = vrot.lane.b32.xlu0 %v305, 8
      %v725 = vpop.permute.xlu0 %724
      %726 = vrot.lane.b32.xlu0 %v306, 8
      %v727 = vpop.permute.xlu0 %726
      %728 = vrot.lane.b32.xlu0 %v307, 8
      %v729 = vpop.permute.xlu0 %728
      %730 = vrot.lane.b32.xlu0 %v308, 8
      %v731 = vpop.permute.xlu0 %730
      %732 = vrot.lane.b32.xlu0 %v309, 8
      %v733 = vpop.permute.xlu0 %732
      %734 = vrot.lane.b32.xlu0 %v310, 8
      %v735 = vpop.permute.xlu0 %734
      %736 = vrot.lane.b32.xlu0 %v311, 8
      %v737 = vpop.permute.xlu0 %736
      %738 = vrot.lane.b32.xlu0 %v312, 8
      %v739 = vpop.permute.xlu0 %738
      %740 = vrot.lane.b32.xlu0 %v313, 8
      %v741 = vpop.permute.xlu0 %740
      %742 = vrot.lane.b32.xlu0 %v314, 8
      %v743 = vpop.permute.xlu0 %742
      %744 = vrot.lane.b32.xlu0 %v315, 8
      %v745 = vpop.permute.xlu0 %744
      %746 = vrot.lane.b32.xlu0 %v316, 8
      %v747 = vpop.permute.xlu0 %746
      %748 = vrot.lane.b32.xlu0 %v317, 8
      %v749 = vpop.permute.xlu0 %748
      %750 = vrot.lane.b32.xlu0 %v318, 8
      %v751 = vpop.permute.xlu0 %750
      %752 = vrot.lane.b32.xlu0 %v319, 8
      %v753 = vpop.permute.xlu0 %752
      %754 = vrot.lane.b32.xlu0 %v320, 8
      %v755 = vpop.permute.xlu0 %754
      %756 = vrot.lane.b32.xlu0 %v321, 8
      %v757 = vpop.permute.xlu0 %756
      %758 = vrot.lane.b32.xlu0 %v322, 8
      %v759 = vpop.permute.xlu0 %758
      %760 = vrot.lane.b32.xlu0 %v323, 8
      %v761 = vpop.permute.xlu0 %760
      %762 = vrot.lane.b32.xlu0 %v324, 8
      %v763 = vpop.permute.xlu0 %762
      %764 = vrot.lane.b32.xlu0 %v325, 8
      %v765 = vpop.permute.xlu0 %764
      %766 = vrot.lane.b32.xlu0 %v326, 8
      %v767 = vpop.permute.xlu0 %766
      %768 = vrot.lane.b32.xlu0 %v327, 8
      %v769 = vpop.permute.xlu0 %768
      %770 = vrot.lane.b32.xlu0 %v328, 8
      %v771 = vpop.permute.xlu0 %770
      %772 = vrot.lane.b32.xlu0 %v329, 8
      %v773 = vpop.permute.xlu0 %772
      %774 = vrot.lane.b32.xlu0 %v330, 8
      %v775 = vpop.permute.xlu0 %774
      %776 = vrot.lane.b32.xlu0 %v331, 8
      %v777 = vpop.permute.xlu0 %776
      %778 = vrot.lane.b32.xlu0 %v332, 8
      %v779 = vpop.permute.xlu0 %778
      %780 = vrot.lane.b32.xlu0 %v333, 8
      %v781 = vpop.permute.xlu0 %780
      %vm846 = vcmask 31744
      %v847 = vsel %vm846, %v142, %v399
      %v848 = vsel %vm846, %v143, %v401
      %v849 = vsel %vm846, %v144, %v403
      %v850 = vsel %vm846, %v145, %v405
      %v851 = vsel %vm846, %v146, %v407
      %v852 = vsel %vm846, %v147, %v409
      %v853 = vsel %vm846, %v148, %v411
      %v854 = vsel %vm846, %v149, %v413
      %v855 = vsel %vm846, %v150, %v415
      %v856 = vsel %vm846, %v151, %v417
      %v857 = vsel %vm846, %v152, %v419
      %v858 = vsel %vm846, %v153, %v421
      %v859 = vsel %vm846, %v154, %v423
      %v860 = vsel %vm846, %v155, %v425
      %v861 = vsel %vm846, %v156, %v427
      %v862 = vsel %vm846, %v157, %v429
      %v863 = vsel %vm846, %v158, %v431
      %v864 = vsel %vm846, %v159, %v433
      %v865 = vsel %vm846, %v160, %v435
      %v866 = vsel %vm846, %v161, %v437
      %v867 = vsel %vm846, %v162, %v439
      %v868 = vsel %vm846, %v163, %v441
      %v869 = vsel %vm846, %v164, %v443
      %v870 = vsel %vm846, %v165, %v445
      %v871 = vsel %vm846, %v166, %v447
      %v872 = vsel %vm846, %v167, %v449
      %v873 = vsel %vm846, %v168, %v451
      %v874 = vsel %vm846, %v169, %v453
      %v875 = vsel %vm846, %v170, %v455
      %v876 = vsel %vm846, %v171, %v457
      %v877 = vsel %vm846, %v172, %v459
      %v878 = vsel %vm846, %v173, %v461
      %v879 = vsel %vm846, %v174, %v463
      %v880 = vsel %vm846, %v175, %v465
      %v881 = vsel %vm846, %v176, %v467
      %v882 = vsel %vm846, %v177, %v469
      %v883 = vsel %vm846, %v178, %v471
      %v884 = vsel %vm846, %v179, %v473
      %v885 = vsel %vm846, %v180, %v475
      %v886 = vsel %vm846, %v181, %v477
      %v887 = vsel %vm846, %v182, %v479
      %v888 = vsel %vm846, %v183, %v481
      %v889 = vsel %vm846, %v184, %v483
      %v890 = vsel %vm846, %v185, %v485
      %v891 = vsel %vm846, %v186, %v487
      %v892 = vsel %vm846, %v187, %v489
      %v893 = vsel %vm846, %v188, %v491
      %v894 = vsel %vm846, %v189, %v493
      %v895 = vsel %vm846, %v190, %v495
      %v896 = vsel %vm846, %v191, %v497
      %v897 = vsel %vm846, %v192, %v499
      %v898 = vsel %vm846, %v193, %v501
      %v899 = vsel %vm846, %v194, %v503
      %v900 = vsel %vm846, %v195, %v505
      %v901 = vsel %vm846, %v196, %v507
      %v902 = vsel %vm846, %v197, %v509
      %v903 = vsel %vm846, %v198, %v511
      %v904 = vsel %vm846, %v199, %v513
      %v905 = vsel %vm846, %v200, %v515
      %v906 = vsel %vm846, %v201, %v517
      %v907 = vsel %vm846, %v202, %v519
      %v908 = vsel %vm846, %v203, %v521
      %v909 = vsel %vm846, %v204, %v523
      %v910 = vsel %vm846, %v205, %v525
      %vm911 = vcmask 64512
      %v912 = vsel %vm911, %v847, %v655
      %v913 = vsel %vm911, %v848, %v657
      %v914 = vsel %vm911, %v849, %v659
      %v915 = vsel %vm911, %v850, %v661
      %v916 = vsel %vm911, %v851, %v663
      %v917 = vsel %vm911, %v852, %v665
      %v918 = vsel %vm911, %v853, %v667
      %v919 = vsel %vm911, %v854, %v669
      %v920 = vsel %vm911, %v855, %v671
      %v921 = vsel %vm911, %v856, %v673
      %v922 = vsel %vm911, %v857, %v675
      %v923 = vsel %vm911, %v858, %v677
      %v924 = vsel %vm911, %v859, %v679
      %v925 = vsel %vm911, %v860, %v681
      %v926 = vsel %vm911, %v861, %v683
      %v927 = vsel %vm911, %v862, %v685
      %v928 = vsel %vm911, %v863, %v687
      %v929 = vsel %vm911, %v864, %v689
      %v930 = vsel %vm911, %v865, %v691
      %v931 = vsel %vm911, %v866, %v693
      %v932 = vsel %vm911, %v867, %v695
      %v933 = vsel %vm911, %v868, %v697
      %v934 = vsel %vm911, %v869, %v699
      %v935 = vsel %vm911, %v870, %v701
      %v936 = vsel %vm911, %v871, %v703
      %v937 = vsel %vm911, %v872, %v705
      %v938 = vsel %vm911, %v873, %v707
      %v939 = vsel %vm911, %v874, %v709
      %v940 = vsel %vm911, %v875, %v711
      %v941 = vsel %vm911, %v876, %v713
      %v942 = vsel %vm911, %v877, %v715
      %v943 = vsel %vm911, %v878, %v717
      %v944 = vsel %vm911, %v879, %v719
      %v945 = vsel %vm911, %v880, %v721
      %v946 = vsel %vm911, %v881, %v723
      %v947 = vsel %vm911, %v882, %v725
      %v948 = vsel %vm911, %v883, %v727
      %v949 = vsel %vm911, %v884, %v729
      %v950 = vsel %vm911, %v885, %v731
      %v951 = vsel %vm911, %v886, %v733
      %v952 = vsel %vm911, %v887, %v735
      %v953 = vsel %vm911, %v888, %v737
      %v954 = vsel %vm911, %v889, %v739
      %v955 = vsel %vm911, %v890, %v741
      %v956 = vsel %vm911, %v891, %v743
      %v957 = vsel %vm911, %v892, %v745
      %v958 = vsel %vm911, %v893, %v747
      %v959 = vsel %vm911, %v894, %v749
      %v960 = vsel %vm911, %v895, %v751
      %v961 = vsel %vm911, %v896, %v753
      %v962 = vsel %vm911, %v897, %v755
      %v963 = vsel %vm911, %v898, %v757
      %v964 = vsel %vm911, %v899, %v759
      %v965 = vsel %vm911, %v900, %v761
      %v966 = vsel %vm911, %v901, %v763
      %v967 = vsel %vm911, %v902, %v765
      %v968 = vsel %vm911, %v903, %v767
      %v969 = vsel %vm911, %v904, %v769
      %v970 = vsel %vm911, %v905, %v771
      %v971 = vsel %vm911, %v906, %v773
      %v972 = vsel %vm911, %v907, %v775
      %v973 = vsel %vm911, %v908, %v777
      %v974 = vsel %vm911, %v909, %v779
      %v975 = vsel %vm911, %v910, %v781
      %vm976 = vcmask 97280
      %977 = vst.msk [vmem:[#allocation2] sm:$0xff] %vm976, %v912
      %978 = vst.msk [vmem:[#allocation2 + $0x8] sm:$0xff] %vm976, %v913
      %979 = vst.msk [vmem:[#allocation2 + $0x10] sm:$0xff] %vm976, %v914
      %980 = vst.msk [vmem:[#allocation2 + $0x18] sm:$0xff] %vm976, %v915
      %981 = vst.msk [vmem:[#allocation2 + $0x20] sm:$0xff] %vm976, %v916
      %982 = vst.msk [vmem:[#allocation2 + $0x28] sm:$0xff] %vm976, %v917
      %983 = vst.msk [vmem:[#allocation2 + $0x30] sm:$0xff] %vm976, %v918
      %984 = vst.msk [vmem:[#allocation2 + $0x38] sm:$0xff] %vm976, %v919
      %985 = vst.msk [vmem:[#allocation2 + $0x40] sm:$0xff] %vm976, %v920
      %986 = vst.msk [vmem:[#allocation2 + $0x48] sm:$0xff] %vm976, %v921
      %987 = vst.msk [vmem:[#allocation2 + $0x50] sm:$0xff] %vm976, %v922
      %988 = vst.msk [vmem:[#allocation2 + $0x58] sm:$0xff] %vm976, %v923
      %989 = vst.msk [vmem:[#allocation2 + $0x60] sm:$0xff] %vm976, %v924
      %990 = vst.msk [vmem:[#allocation2 + $0x68] sm:$0xff] %vm976, %v925
      %991 = vst.msk [vmem:[#allocation2 + $0x70] sm:$0xff] %vm976, %v926
      %992 = vst.msk [vmem:[#allocation2 + $0x78] sm:$0xff] %vm976, %v927
      %993 = vst.msk [vmem:[#allocation2 + $0x80] sm:$0xff] %vm976, %v928
      %994 = vst.msk [vmem:[#allocation2 + $0x88] sm:$0xff] %vm976, %v929
      %995 = vst.msk [vmem:[#allocation2 + $0x90] sm:$0xff] %vm976, %v930
      %996 = vst.msk [vmem:[#allocation2 + $0x98] sm:$0xff] %vm976, %v931
      %997 = vst.msk [vmem:[#allocation2 + $0xa0] sm:$0xff] %vm976, %v932
      %998 = vst.msk [vmem:[#allocation2 + $0xa8] sm:$0xff] %vm976, %v933
      %999 = vst.msk [vmem:[#allocation2 + $0xb0] sm:$0xff] %vm976, %v934
      %1000 = vst.msk [vmem:[#allocation2 + $0xb8] sm:$0xff] %vm976, %v935
      %1001 = vst.msk [vmem:[#allocation2 + $0xc0] sm:$0xff] %vm976, %v936
      %1002 = vst.msk [vmem:[#allocation2 + $0xc8] sm:$0xff] %vm976, %v937
      %1003 = vst.msk [vmem:[#allocation2 + $0xd0] sm:$0xff] %vm976, %v938
      %1004 = vst.msk [vmem:[#allocation2 + $0xd8] sm:$0xff] %vm976, %v939
      %1005 = vst.msk [vmem:[#allocation2 + $0xe0] sm:$0xff] %vm976, %v940
      %1006 = vst.msk [vmem:[#allocation2 + $0xe8] sm:$0xff] %vm976, %v941
      %1007 = vst.msk [vmem:[#allocation2 + $0xf0] sm:$0xff] %vm976, %v942
      %1008 = vst.msk [vmem:[#allocation2 + $0xf8] sm:$0xff] %vm976, %v943
      %1009 = vst.msk [vmem:[#allocation2 + $0x100] sm:$0xff] %vm976, %v944
      %1010 = vst.msk [vmem:[#allocation2 + $0x108] sm:$0xff] %vm976, %v945
      %1011 = vst.msk [vmem:[#allocation2 + $0x110] sm:$0xff] %vm976, %v946
      %1012 = vst.msk [vmem:[#allocation2 + $0x118] sm:$0xff] %vm976, %v947
      %1013 = vst.msk [vmem:[#allocation2 + $0x120] sm:$0xff] %vm976, %v948
      %1014 = vst.msk [vmem:[#allocation2 + $0x128] sm:$0xff] %vm976, %v949
      %1015 = vst.msk [vmem:[#allocation2 + $0x130] sm:$0xff] %vm976, %v950
      %1016 = vst.msk [vmem:[#allocation2 + $0x138] sm:$0xff] %vm976, %v951
      %1017 = vst.msk [vmem:[#allocation2 + $0x140] sm:$0xff] %vm976, %v952
      %1018 = vst.msk [vmem:[#allocation2 + $0x148] sm:$0xff] %vm976, %v953
      %1019 = vst.msk [vmem:[#allocation2 + $0x150] sm:$0xff] %vm976, %v954
      %1020 = vst.msk [vmem:[#allocation2 + $0x158] sm:$0xff] %vm976, %v955
      %1021 = vst.msk [vmem:[#allocation2 + $0x160] sm:$0xff] %vm976, %v956
      %1022 = vst.msk [vmem:[#allocation2 + $0x168] sm:$0xff] %vm976, %v957
      %1023 = vst.msk [vmem:[#allocation2 + $0x170] sm:$0xff] %vm976, %v958
      %1024 = vst.msk [vmem:[#allocation2 + $0x178] sm:$0xff] %vm976, %v959
      %1025 = vst.msk [vmem:[#allocation2 + $0x180] sm:$0xff] %vm976, %v960
      %1026 = vst.msk [vmem:[#allocation2 + $0x188] sm:$0xff] %vm976, %v961
      %1027 = vst.msk [vmem:[#allocation2 + $0x190] sm:$0xff] %vm976, %v962
      %1028 = vst.msk [vmem:[#allocation2 + $0x198] sm:$0xff] %vm976, %v963
      %1029 = vst.msk [vmem:[#allocation2 + $0x1a0] sm:$0xff] %vm976, %v964
      %1030 = vst.msk [vmem:[#allocation2 + $0x1a8] sm:$0xff] %vm976, %v965
      %1031 = vst.msk [vmem:[#allocation2 + $0x1b0] sm:$0xff] %vm976, %v966
      %1032 = vst.msk [vmem:[#allocation2 + $0x1b8] sm:$0xff] %vm976, %v967
      %1033 = vst.msk [vmem:[#allocation2 + $0x1c0] sm:$0xff] %vm976, %v968
      %1034 = vst.msk [vmem:[#allocation2 + $0x1c8] sm:$0xff] %vm976, %v969
      %1035 = vst.msk [vmem:[#allocation2 + $0x1d0] sm:$0xff] %vm976, %v970
      %1036 = vst.msk [vmem:[#allocation2 + $0x1d8] sm:$0xff] %vm976, %v971
      %1037 = vst.msk [vmem:[#allocation2 + $0x1e0] sm:$0xff] %vm976, %v972
      %1038 = vst.msk [vmem:[#allocation2 + $0x1e8] sm:$0xff] %vm976, %v973
      %1039 = vst.msk [vmem:[#allocation2 + $0x1f0] sm:$0xff] %vm976, %v974
      %1040 = vst.msk [vmem:[#allocation2 + $0x1f8] sm:$0xff] %vm976, %v975
      %s1041 = scalar_lea.vmem %s137, 16
      %v1042 = vld [vmem:[%s1041] sm:$0xff]
      %v1043 = vld [vmem:[%s1041 + $0x10] sm:$0xff]
      %v1044 = vld [vmem:[%s1041 + $0x20] sm:$0xff]
      %v1045 = vld [vmem:[%s1041 + $0x30] sm:$0xff]
      %v1046 = vld [vmem:[%s1041 + $0x40] sm:$0xff]
      %v1047 = vld [vmem:[%s1041 + $0x50] sm:$0xff]
      %v1048 = vld [vmem:[%s1041 + $0x60] sm:$0xff]
      %v1049 = vld [vmem:[%s1041 + $0x70] sm:$0xff]
      %v1050 = vld [vmem:[%s1041 + $0xa0] sm:$0xff]
      %v1051 = vld [vmem:[%s1041 + $0xb0] sm:$0xff]
      %v1052 = vld [vmem:[%s1041 + $0xc0] sm:$0xff]
      %v1053 = vld [vmem:[%s1041 + $0xd0] sm:$0xff]
      %v1054 = vld [vmem:[%s1041 + $0xe0] sm:$0xff]
      %v1055 = vld [vmem:[%s1041 + $0xf0] sm:$0xff]
      %v1056 = vld [vmem:[%s1041 + $0x100] sm:$0xff]
      %v1057 = vld [vmem:[%s1041 + $0x110] sm:$0xff]
      %v1058 = vld [vmem:[%s1041 + $0x140] sm:$0xff]
      %v1059 = vld [vmem:[%s1041 + $0x150] sm:$0xff]
      %v1060 = vld [vmem:[%s1041 + $0x160] sm:$0xff]
      %v1061 = vld [vmem:[%s1041 + $0x170] sm:$0xff]
      %v1062 = vld [vmem:[%s1041 + $0x180] sm:$0xff]
      %v1063 = vld [vmem:[%s1041 + $0x190] sm:$0xff]
      %v1064 = vld [vmem:[%s1041 + $0x1a0] sm:$0xff]
      %v1065 = vld [vmem:[%s1041 + $0x1b0] sm:$0xff]
      %v1066 = vld [vmem:[%s1041 + $0x1e0] sm:$0xff]
      %v1067 = vld [vmem:[%s1041 + $0x1f0] sm:$0xff]
      %v1068 = vld [vmem:[%s1041 + $0x200] sm:$0xff]
      %v1069 = vld [vmem:[%s1041 + $0x210] sm:$0xff]
      %v1070 = vld [vmem:[%s1041 + $0x220] sm:$0xff]
      %v1071 = vld [vmem:[%s1041 + $0x230] sm:$0xff]
      %v1072 = vld [vmem:[%s1041 + $0x240] sm:$0xff]
      %v1073 = vld [vmem:[%s1041 + $0x250] sm:$0xff]
      %v1074 = vld [vmem:[%s1041 + $0x280] sm:$0xff]
      %v1075 = vld [vmem:[%s1041 + $0x290] sm:$0xff]
      %v1076 = vld [vmem:[%s1041 + $0x2a0] sm:$0xff]
      %v1077 = vld [vmem:[%s1041 + $0x2b0] sm:$0xff]
      %v1078 = vld [vmem:[%s1041 + $0x2c0] sm:$0xff]
      %v1079 = vld [vmem:[%s1041 + $0x2d0] sm:$0xff]
      %v1080 = vld [vmem:[%s1041 + $0x2e0] sm:$0xff]
      %v1081 = vld [vmem:[%s1041 + $0x2f0] sm:$0xff]
      %v1082 = vld [vmem:[%s1041 + $0x320] sm:$0xff]
      %v1083 = vld [vmem:[%s1041 + $0x330] sm:$0xff]
      %v1084 = vld [vmem:[%s1041 + $0x340] sm:$0xff]
      %v1085 = vld [vmem:[%s1041 + $0x350] sm:$0xff]
      %v1086 = vld [vmem:[%s1041 + $0x360] sm:$0xff]
      %v1087 = vld [vmem:[%s1041 + $0x370] sm:$0xff]
      %v1088 = vld [vmem:[%s1041 + $0x380] sm:$0xff]
      %v1089 = vld [vmem:[%s1041 + $0x390] sm:$0xff]
      %v1090 = vld [vmem:[%s1041 + $0x3c0] sm:$0xff]
      %v1091 = vld [vmem:[%s1041 + $0x3d0] sm:$0xff]
      %v1092 = vld [vmem:[%s1041 + $0x3e0] sm:$0xff]
      %v1093 = vld [vmem:[%s1041 + $0x3f0] sm:$0xff]
      %v1094 = vld [vmem:[%s1041 + $0x400] sm:$0xff]
      %v1095 = vld [vmem:[%s1041 + $0x410] sm:$0xff]
      %v1096 = vld [vmem:[%s1041 + $0x420] sm:$0xff]
      %v1097 = vld [vmem:[%s1041 + $0x430] sm:$0xff]
      %v1098 = vld [vmem:[%s1041 + $0x460] sm:$0xff]
      %v1099 = vld [vmem:[%s1041 + $0x470] sm:$0xff]
      %v1100 = vld [vmem:[%s1041 + $0x480] sm:$0xff]
      %v1101 = vld [vmem:[%s1041 + $0x490] sm:$0xff]
      %v1102 = vld [vmem:[%s1041 + $0x4a0] sm:$0xff]
      %v1103 = vld [vmem:[%s1041 + $0x4b0] sm:$0xff]
      %v1104 = vld [vmem:[%s1041 + $0x4c0] sm:$0xff]
      %v1105 = vld [vmem:[%s1041 + $0x4d0] sm:$0xff]
      %v1106 = vld [vmem:[%s1041 + $0x1] sm:$0xff]
      %v1107 = vld [vmem:[%s1041 + $0x11] sm:$0xff]
      %v1108 = vld [vmem:[%s1041 + $0x21] sm:$0xff]
      %v1109 = vld [vmem:[%s1041 + $0x31] sm:$0xff]
      %v1110 = vld [vmem:[%s1041 + $0x41] sm:$0xff]
      %v1111 = vld [vmem:[%s1041 + $0x51] sm:$0xff]
      %v1112 = vld [vmem:[%s1041 + $0x61] sm:$0xff]
      %v1113 = vld [vmem:[%s1041 + $0x71] sm:$0xff]
      %v1114 = vld [vmem:[%s1041 + $0xa1] sm:$0xff]
      %v1115 = vld [vmem:[%s1041 + $0xb1] sm:$0xff]
      %v1116 = vld [vmem:[%s1041 + $0xc1] sm:$0xff]
      %v1117 = vld [vmem:[%s1041 + $0xd1] sm:$0xff]
      %v1118 = vld [vmem:[%s1041 + $0xe1] sm:$0xff]
      %v1119 = vld [vmem:[%s1041 + $0xf1] sm:$0xff]
      %v1120 = vld [vmem:[%s1041 + $0x101] sm:$0xff]
      %v1121 = vld [vmem:[%s1041 + $0x111] sm:$0xff]
      %v1122 = vld [vmem:[%s1041 + $0x141] sm:$0xff]
      %v1123 = vld [vmem:[%s1041 + $0x151] sm:$0xff]
      %v1124 = vld [vmem:[%s1041 + $0x161] sm:$0xff]
      %v1125 = vld [vmem:[%s1041 + $0x171] sm:$0xff]
      %v1126 = vld [vmem:[%s1041 + $0x181] sm:$0xff]
      %v1127 = vld [vmem:[%s1041 + $0x191] sm:$0xff]
      %v1128 = vld [vmem:[%s1041 + $0x1a1] sm:$0xff]
      %v1129 = vld [vmem:[%s1041 + $0x1b1] sm:$0xff]
      %v1130 = vld [vmem:[%s1041 + $0x1e1] sm:$0xff]
      %v1131 = vld [vmem:[%s1041 + $0x1f1] sm:$0xff]
      %v1132 = vld [vmem:[%s1041 + $0x201] sm:$0xff]
      %v1133 = vld [vmem:[%s1041 + $0x211] sm:$0xff]
      %v1134 = vld [vmem:[%s1041 + $0x221] sm:$0xff]
      %v1135 = vld [vmem:[%s1041 + $0x231] sm:$0xff]
      %v1136 = vld [vmem:[%s1041 + $0x241] sm:$0xff]
      %v1137 = vld [vmem:[%s1041 + $0x251] sm:$0xff]
      %v1138 = vld [vmem:[%s1041 + $0x281] sm:$0xff]
      %v1139 = vld [vmem:[%s1041 + $0x291] sm:$0xff]
      %v1140 = vld [vmem:[%s1041 + $0x2a1] sm:$0xff]
      %v1141 = vld [vmem:[%s1041 + $0x2b1] sm:$0xff]
      %v1142 = vld [vmem:[%s1041 + $0x2c1] sm:$0xff]
      %v1143 = vld [vmem:[%s1041 + $0x2d1] sm:$0xff]
      %v1144 = vld [vmem:[%s1041 + $0x2e1] sm:$0xff]
      %v1145 = vld [vmem:[%s1041 + $0x2f1] sm:$0xff]
      %v1146 = vld [vmem:[%s1041 + $0x321] sm:$0xff]
      %v1147 = vld [vmem:[%s1041 + $0x331] sm:$0xff]
      %v1148 = vld [vmem:[%s1041 + $0x341] sm:$0xff]
      %v1149 = vld [vmem:[%s1041 + $0x351] sm:$0xff]
      %v1150 = vld [vmem:[%s1041 + $0x361] sm:$0xff]
      %v1151 = vld [vmem:[%s1041 + $0x371] sm:$0xff]
      %v1152 = vld [vmem:[%s1041 + $0x381] sm:$0xff]
      %v1153 = vld [vmem:[%s1041 + $0x391] sm:$0xff]
      %v1154 = vld [vmem:[%s1041 + $0x3c1] sm:$0xff]
      %v1155 = vld [vmem:[%s1041 + $0x3d1] sm:$0xff]
      %v1156 = vld [vmem:[%s1041 + $0x3e1] sm:$0xff]
      %v1157 = vld [vmem:[%s1041 + $0x3f1] sm:$0xff]
      %v1158 = vld [vmem:[%s1041 + $0x401] sm:$0xff]
      %v1159 = vld [vmem:[%s1041 + $0x411] sm:$0xff]
      %v1160 = vld [vmem:[%s1041 + $0x421] sm:$0xff]
      %v1161 = vld [vmem:[%s1041 + $0x431] sm:$0xff]
      %v1162 = vld [vmem:[%s1041 + $0x461] sm:$0xff]
      %v1163 = vld [vmem:[%s1041 + $0x471] sm:$0xff]
      %v1164 = vld [vmem:[%s1041 + $0x481] sm:$0xff]
      %v1165 = vld [vmem:[%s1041 + $0x491] sm:$0xff]
      %v1166 = vld [vmem:[%s1041 + $0x4a1] sm:$0xff]
      %v1167 = vld [vmem:[%s1041 + $0x4b1] sm:$0xff]
      %v1168 = vld [vmem:[%s1041 + $0x4c1] sm:$0xff]
      %v1169 = vld [vmem:[%s1041 + $0x4d1] sm:$0xff]
      %v1170 = vld [vmem:[%s1041 + $0x2] sm:$0xff]
      %v1171 = vld [vmem:[%s1041 + $0x12] sm:$0xff]
      %v1172 = vld [vmem:[%s1041 + $0x22] sm:$0xff]
      %v1173 = vld [vmem:[%s1041 + $0x32] sm:$0xff]
      %v1174 = vld [vmem:[%s1041 + $0x42] sm:$0xff]
      %v1175 = vld [vmem:[%s1041 + $0x52] sm:$0xff]
      %v1176 = vld [vmem:[%s1041 + $0x62] sm:$0xff]
      %v1177 = vld [vmem:[%s1041 + $0x72] sm:$0xff]
      %v1178 = vld [vmem:[%s1041 + $0xa2] sm:$0xff]
      %v1179 = vld [vmem:[%s1041 + $0xb2] sm:$0xff]
      %v1180 = vld [vmem:[%s1041 + $0xc2] sm:$0xff]
      %v1181 = vld [vmem:[%s1041 + $0xd2] sm:$0xff]
      %v1182 = vld [vmem:[%s1041 + $0xe2] sm:$0xff]
      %v1183 = vld [vmem:[%s1041 + $0xf2] sm:$0xff]
      %v1184 = vld [vmem:[%s1041 + $0x102] sm:$0xff]
      %v1185 = vld [vmem:[%s1041 + $0x112] sm:$0xff]
      %v1186 = vld [vmem:[%s1041 + $0x142] sm:$0xff]
      %v1187 = vld [vmem:[%s1041 + $0x152] sm:$0xff]
      %v1188 = vld [vmem:[%s1041 + $0x162] sm:$0xff]
      %v1189 = vld [vmem:[%s1041 + $0x172] sm:$0xff]
      %v1190 = vld [vmem:[%s1041 + $0x182] sm:$0xff]
      %v1191 = vld [vmem:[%s1041 + $0x192] sm:$0xff]
      %v1192 = vld [vmem:[%s1041 + $0x1a2] sm:$0xff]
      %v1193 = vld [vmem:[%s1041 + $0x1b2] sm:$0xff]
      %v1194 = vld [vmem:[%s1041 + $0x1e2] sm:$0xff]
      %v1195 = vld [vmem:[%s1041 + $0x1f2] sm:$0xff]
      %v1196 = vld [vmem:[%s1041 + $0x202] sm:$0xff]
      %v1197 = vld [vmem:[%s1041 + $0x212] sm:$0xff]
      %v1198 = vld [vmem:[%s1041 + $0x222] sm:$0xff]
      %v1199 = vld [vmem:[%s1041 + $0x232] sm:$0xff]
      %v1200 = vld [vmem:[%s1041 + $0x242] sm:$0xff]
      %v1201 = vld [vmem:[%s1041 + $0x252] sm:$0xff]
      %v1202 = vld [vmem:[%s1041 + $0x282] sm:$0xff]
      %v1203 = vld [vmem:[%s1041 + $0x292] sm:$0xff]
      %v1204 = vld [vmem:[%s1041 + $0x2a2] sm:$0xff]
      %v1205 = vld [vmem:[%s1041 + $0x2b2] sm:$0xff]
      %v1206 = vld [vmem:[%s1041 + $0x2c2] sm:$0xff]
      %v1207 = vld [vmem:[%s1041 + $0x2d2] sm:$0xff]
      %v1208 = vld [vmem:[%s1041 + $0x2e2] sm:$0xff]
      %v1209 = vld [vmem:[%s1041 + $0x2f2] sm:$0xff]
      %v1210 = vld [vmem:[%s1041 + $0x322] sm:$0xff]
      %v1211 = vld [vmem:[%s1041 + $0x332] sm:$0xff]
      %v1212 = vld [vmem:[%s1041 + $0x342] sm:$0xff]
      %v1213 = vld [vmem:[%s1041 + $0x352] sm:$0xff]
      %v1214 = vld [vmem:[%s1041 + $0x362] sm:$0xff]
      %v1215 = vld [vmem:[%s1041 + $0x372] sm:$0xff]
      %v1216 = vld [vmem:[%s1041 + $0x382] sm:$0xff]
      %v1217 = vld [vmem:[%s1041 + $0x392] sm:$0xff]
      %v1218 = vld [vmem:[%s1041 + $0x3c2] sm:$0xff]
      %v1219 = vld [vmem:[%s1041 + $0x3d2] sm:$0xff]
      %v1220 = vld [vmem:[%s1041 + $0x3e2] sm:$0xff]
      %v1221 = vld [vmem:[%s1041 + $0x3f2] sm:$0xff]
      %v1222 = vld [vmem:[%s1041 + $0x402] sm:$0xff]
      %v1223 = vld [vmem:[%s1041 + $0x412] sm:$0xff]
      %v1224 = vld [vmem:[%s1041 + $0x422] sm:$0xff]
      %v1225 = vld [vmem:[%s1041 + $0x432] sm:$0xff]
      %v1226 = vld [vmem:[%s1041 + $0x462] sm:$0xff]
      %v1227 = vld [vmem:[%s1041 + $0x472] sm:$0xff]
      %v1228 = vld [vmem:[%s1041 + $0x482] sm:$0xff]
      %v1229 = vld [vmem:[%s1041 + $0x492] sm:$0xff]
      %v1230 = vld [vmem:[%s1041 + $0x4a2] sm:$0xff]
      %v1231 = vld [vmem:[%s1041 + $0x4b2] sm:$0xff]
      %v1232 = vld [vmem:[%s1041 + $0x4c2] sm:$0xff]
      %v1233 = vld [vmem:[%s1041 + $0x4d2] sm:$0xff]
      %1298 = vrot.lane.b32.xlu0 %v1106, 4
      %v1299 = vpop.permute.xlu0 %1298
      %1300 = vrot.lane.b32.xlu0 %v1107, 4
      %v1301 = vpop.permute.xlu0 %1300
      %1302 = vrot.lane.b32.xlu0 %v1108, 4
      %v1303 = vpop.permute.xlu0 %1302
      %1304 = vrot.lane.b32.xlu0 %v1109, 4
      %v1305 = vpop.permute.xlu0 %1304
      %1306 = vrot.lane.b32.xlu0 %v1110, 4
      %v1307 = vpop.permute.xlu0 %1306
      %1308 = vrot.lane.b32.xlu0 %v1111, 4
      %v1309 = vpop.permute.xlu0 %1308
      %1310 = vrot.lane.b32.xlu0 %v1112, 4
      %v1311 = vpop.permute.xlu0 %1310
      %1312 = vrot.lane.b32.xlu0 %v1113, 4
      %v1313 = vpop.permute.xlu0 %1312
      %1314 = vrot.lane.b32.xlu0 %v1114, 4
      %v1315 = vpop.permute.xlu0 %1314
      %1316 = vrot.lane.b32.xlu0 %v1115, 4
      %v1317 = vpop.permute.xlu0 %1316
      %1318 = vrot.lane.b32.xlu0 %v1116, 4
      %v1319 = vpop.permute.xlu0 %1318
      %1320 = vrot.lane.b32.xlu0 %v1117, 4
      %v1321 = vpop.permute.xlu0 %1320
      %1322 = vrot.lane.b32.xlu0 %v1118, 4
      %v1323 = vpop.permute.xlu0 %1322
      %1324 = vrot.lane.b32.xlu0 %v1119, 4
      %v1325 = vpop.permute.xlu0 %1324
      %1326 = vrot.lane.b32.xlu0 %v1120, 4
      %v1327 = vpop.permute.xlu0 %1326
      %1328 = vrot.lane.b32.xlu0 %v1121, 4
      %v1329 = vpop.permute.xlu0 %1328
      %1330 = vrot.lane.b32.xlu0 %v1122, 4
      %v1331 = vpop.permute.xlu0 %1330
      %1332 = vrot.lane.b32.xlu0 %v1123, 4
      %v1333 = vpop.permute.xlu0 %1332
      %1334 = vrot.lane.b32.xlu0 %v1124, 4
      %v1335 = vpop.permute.xlu0 %1334
      %1336 = vrot.lane.b32.xlu0 %v1125, 4
      %v1337 = vpop.permute.xlu0 %1336
      %1338 = vrot.lane.b32.xlu0 %v1126, 4
      %v1339 = vpop.permute.xlu0 %1338
      %1340 = vrot.lane.b32.xlu0 %v1127, 4
      %v1341 = vpop.permute.xlu0 %1340
      %1342 = vrot.lane.b32.xlu0 %v1128, 4
      %v1343 = vpop.permute.xlu0 %1342
      %1344 = vrot.lane.b32.xlu0 %v1129, 4
      %v1345 = vpop.permute.xlu0 %1344
      %1346 = vrot.lane.b32.xlu0 %v1130, 4
      %v1347 = vpop.permute.xlu0 %1346
      %1348 = vrot.lane.b32.xlu0 %v1131, 4
      %v1349 = vpop.permute.xlu0 %1348
      %1350 = vrot.lane.b32.xlu0 %v1132, 4
      %v1351 = vpop.permute.xlu0 %1350
      %1352 = vrot.lane.b32.xlu0 %v1133, 4
      %v1353 = vpop.permute.xlu0 %1352
      %1354 = vrot.lane.b32.xlu0 %v1134, 4
      %v1355 = vpop.permute.xlu0 %1354
      %1356 = vrot.lane.b32.xlu0 %v1135, 4
      %v1357 = vpop.permute.xlu0 %1356
      %1358 = vrot.lane.b32.xlu0 %v1136, 4
      %v1359 = vpop.permute.xlu0 %1358
      %1360 = vrot.lane.b32.xlu0 %v1137, 4
      %v1361 = vpop.permute.xlu0 %1360
      %1362 = vrot.lane.b32.xlu0 %v1138, 4
      %v1363 = vpop.permute.xlu0 %1362
      %1364 = vrot.lane.b32.xlu0 %v1139, 4
      %v1365 = vpop.permute.xlu0 %1364
      %1366 = vrot.lane.b32.xlu0 %v1140, 4
      %v1367 = vpop.permute.xlu0 %1366
      %1368 = vrot.lane.b32.xlu0 %v1141, 4
      %v1369 = vpop.permute.xlu0 %1368
      %1370 = vrot.lane.b32.xlu0 %v1142, 4
      %v1371 = vpop.permute.xlu0 %1370
      %1372 = vrot.lane.b32.xlu0 %v1143, 4
      %v1373 = vpop.permute.xlu0 %1372
      %1374 = vrot.lane.b32.xlu0 %v1144, 4
      %v1375 = vpop.permute.xlu0 %1374
      %1376 = vrot.lane.b32.xlu0 %v1145, 4
      %v1377 = vpop.permute.xlu0 %1376
      %1378 = vrot.lane.b32.xlu0 %v1146, 4
      %v1379 = vpop.permute.xlu0 %1378
      %1380 = vrot.lane.b32.xlu0 %v1147, 4
      %v1381 = vpop.permute.xlu0 %1380
      %1382 = vrot.lane.b32.xlu0 %v1148, 4
      %v1383 = vpop.permute.xlu0 %1382
      %1384 = vrot.lane.b32.xlu0 %v1149, 4
      %v1385 = vpop.permute.xlu0 %1384
      %1386 = vrot.lane.b32.xlu0 %v1150, 4
      %v1387 = vpop.permute.xlu0 %1386
      %1388 = vrot.lane.b32.xlu0 %v1151, 4
      %v1389 = vpop.permute.xlu0 %1388
      %1390 = vrot.lane.b32.xlu0 %v1152, 4
      %v1391 = vpop.permute.xlu0 %1390
      %1392 = vrot.lane.b32.xlu0 %v1153, 4
      %v1393 = vpop.permute.xlu0 %1392
      %1394 = vrot.lane.b32.xlu0 %v1154, 4
      %v1395 = vpop.permute.xlu0 %1394
      %1396 = vrot.lane.b32.xlu0 %v1155, 4
      %v1397 = vpop.permute.xlu0 %1396
      %1398 = vrot.lane.b32.xlu0 %v1156, 4
      %v1399 = vpop.permute.xlu0 %1398
      %1400 = vrot.lane.b32.xlu0 %v1157, 4
      %v1401 = vpop.permute.xlu0 %1400
      %1402 = vrot.lane.b32.xlu0 %v1158, 4
      %v1403 = vpop.permute.xlu0 %1402
      %1404 = vrot.lane.b32.xlu0 %v1159, 4
      %v1405 = vpop.permute.xlu0 %1404
      %1406 = vrot.lane.b32.xlu0 %v1160, 4
      %v1407 = vpop.permute.xlu0 %1406
      %1408 = vrot.lane.b32.xlu0 %v1161, 4
      %v1409 = vpop.permute.xlu0 %1408
      %1410 = vrot.lane.b32.xlu0 %v1162, 4
      %v1411 = vpop.permute.xlu0 %1410
      %1412 = vrot.lane.b32.xlu0 %v1163, 4
      %v1413 = vpop.permute.xlu0 %1412
      %1414 = vrot.lane.b32.xlu0 %v1164, 4
      %v1415 = vpop.permute.xlu0 %1414
      %1416 = vrot.lane.b32.xlu0 %v1165, 4
      %v1417 = vpop.permute.xlu0 %1416
      %1418 = vrot.lane.b32.xlu0 %v1166, 4
      %v1419 = vpop.permute.xlu0 %1418
      %1420 = vrot.lane.b32.xlu0 %v1167, 4
      %v1421 = vpop.permute.xlu0 %1420
      %1422 = vrot.lane.b32.xlu0 %v1168, 4
      %v1423 = vpop.permute.xlu0 %1422
      %1424 = vrot.lane.b32.xlu0 %v1169, 4
      %v1425 = vpop.permute.xlu0 %1424
      %1554 = vrot.lane.b32.xlu0 %v1170, 8
      %v1555 = vpop.permute.xlu0 %1554
      %1556 = vrot.lane.b32.xlu0 %v1171, 8
      %v1557 = vpop.permute.xlu0 %1556
      %1558 = vrot.lane.b32.xlu0 %v1172, 8
      %v1559 = vpop.permute.xlu0 %1558
      %1560 = vrot.lane.b32.xlu0 %v1173, 8
      %v1561 = vpop.permute.xlu0 %1560
      %1562 = vrot.lane.b32.xlu0 %v1174, 8
      %v1563 = vpop.permute.xlu0 %1562
      %1564 = vrot.lane.b32.xlu0 %v1175, 8
      %v1565 = vpop.permute.xlu0 %1564
      %1566 = vrot.lane.b32.xlu0 %v1176, 8
      %v1567 = vpop.permute.xlu0 %1566
      %1568 = vrot.lane.b32.xlu0 %v1177, 8
      %v1569 = vpop.permute.xlu0 %1568
      %1570 = vrot.lane.b32.xlu0 %v1178, 8
      %v1571 = vpop.permute.xlu0 %1570
      %1572 = vrot.lane.b32.xlu0 %v1179, 8
      %v1573 = vpop.permute.xlu0 %1572
      %1574 = vrot.lane.b32.xlu0 %v1180, 8
      %v1575 = vpop.permute.xlu0 %1574
      %1576 = vrot.lane.b32.xlu0 %v1181, 8
      %v1577 = vpop.permute.xlu0 %1576
      %1578 = vrot.lane.b32.xlu0 %v1182, 8
      %v1579 = vpop.permute.xlu0 %1578
      %1580 = vrot.lane.b32.xlu0 %v1183, 8
      %v1581 = vpop.permute.xlu0 %1580
      %1582 = vrot.lane.b32.xlu0 %v1184, 8
      %v1583 = vpop.permute.xlu0 %1582
      %1584 = vrot.lane.b32.xlu0 %v1185, 8
      %v1585 = vpop.permute.xlu0 %1584
      %1586 = vrot.lane.b32.xlu0 %v1186, 8
      %v1587 = vpop.permute.xlu0 %1586
      %1588 = vrot.lane.b32.xlu0 %v1187, 8
      %v1589 = vpop.permute.xlu0 %1588
      %1590 = vrot.lane.b32.xlu0 %v1188, 8
      %v1591 = vpop.permute.xlu0 %1590
      %1592 = vrot.lane.b32.xlu0 %v1189, 8
      %v1593 = vpop.permute.xlu0 %1592
      %1594 = vrot.lane.b32.xlu0 %v1190, 8
      %v1595 = vpop.permute.xlu0 %1594
      %1596 = vrot.lane.b32.xlu0 %v1191, 8
      %v1597 = vpop.permute.xlu0 %1596
      %1598 = vrot.lane.b32.xlu0 %v1192, 8
      %v1599 = vpop.permute.xlu0 %1598
      %1600 = vrot.lane.b32.xlu0 %v1193, 8
      %v1601 = vpop.permute.xlu0 %1600
      %1602 = vrot.lane.b32.xlu0 %v1194, 8
      %v1603 = vpop.permute.xlu0 %1602
      %1604 = vrot.lane.b32.xlu0 %v1195, 8
      %v1605 = vpop.permute.xlu0 %1604
      %1606 = vrot.lane.b32.xlu0 %v1196, 8
      %v1607 = vpop.permute.xlu0 %1606
      %1608 = vrot.lane.b32.xlu0 %v1197, 8
      %v1609 = vpop.permute.xlu0 %1608
      %1610 = vrot.lane.b32.xlu0 %v1198, 8
      %v1611 = vpop.permute.xlu0 %1610
      %1612 = vrot.lane.b32.xlu0 %v1199, 8
      %v1613 = vpop.permute.xlu0 %1612
      %1614 = vrot.lane.b32.xlu0 %v1200, 8
      %v1615 = vpop.permute.xlu0 %1614
      %1616 = vrot.lane.b32.xlu0 %v1201, 8
      %v1617 = vpop.permute.xlu0 %1616
      %1618 = vrot.lane.b32.xlu0 %v1202, 8
      %v1619 = vpop.permute.xlu0 %1618
      %1620 = vrot.lane.b32.xlu0 %v1203, 8
      %v1621 = vpop.permute.xlu0 %1620
      %1622 = vrot.lane.b32.xlu0 %v1204, 8
      %v1623 = vpop.permute.xlu0 %1622
      %1624 = vrot.lane.b32.xlu0 %v1205, 8
      %v1625 = vpop.permute.xlu0 %1624
      %1626 = vrot.lane.b32.xlu0 %v1206, 8
      %v1627 = vpop.permute.xlu0 %1626
      %1628 = vrot.lane.b32.xlu0 %v1207, 8
      %v1629 = vpop.permute.xlu0 %1628
      %1630 = vrot.lane.b32.xlu0 %v1208, 8
      %v1631 = vpop.permute.xlu0 %1630
      %1632 = vrot.lane.b32.xlu0 %v1209, 8
      %v1633 = vpop.permute.xlu0 %1632
      %1634 = vrot.lane.b32.xlu0 %v1210, 8
      %v1635 = vpop.permute.xlu0 %1634
      %1636 = vrot.lane.b32.xlu0 %v1211, 8
      %v1637 = vpop.permute.xlu0 %1636
      %1638 = vrot.lane.b32.xlu0 %v1212, 8
      %v1639 = vpop.permute.xlu0 %1638
      %1640 = vrot.lane.b32.xlu0 %v1213, 8
      %v1641 = vpop.permute.xlu0 %1640
      %1642 = vrot.lane.b32.xlu0 %v1214, 8
      %v1643 = vpop.permute.xlu0 %1642
      %1644 = vrot.lane.b32.xlu0 %v1215, 8
      %v1645 = vpop.permute.xlu0 %1644
      %1646 = vrot.lane.b32.xlu0 %v1216, 8
      %v1647 = vpop.permute.xlu0 %1646
      %1648 = vrot.lane.b32.xlu0 %v1217, 8
      %v1649 = vpop.permute.xlu0 %1648
      %1650 = vrot.lane.b32.xlu0 %v1218, 8
      %v1651 = vpop.permute.xlu0 %1650
      %1652 = vrot.lane.b32.xlu0 %v1219, 8
      %v1653 = vpop.permute.xlu0 %1652
      %1654 = vrot.lane.b32.xlu0 %v1220, 8
      %v1655 = vpop.permute.xlu0 %1654
      %1656 = vrot.lane.b32.xlu0 %v1221, 8
      %v1657 = vpop.permute.xlu0 %1656
      %1658 = vrot.lane.b32.xlu0 %v1222, 8
      %v1659 = vpop.permute.xlu0 %1658
      %1660 = vrot.lane.b32.xlu0 %v1223, 8
      %v1661 = vpop.permute.xlu0 %1660
      %1662 = vrot.lane.b32.xlu0 %v1224, 8
      %v1663 = vpop.permute.xlu0 %1662
      %1664 = vrot.lane.b32.xlu0 %v1225, 8
      %v1665 = vpop.permute.xlu0 %1664
      %1666 = vrot.lane.b32.xlu0 %v1226, 8
      %v1667 = vpop.permute.xlu0 %1666
      %1668 = vrot.lane.b32.xlu0 %v1227, 8
      %v1669 = vpop.permute.xlu0 %1668
      %1670 = vrot.lane.b32.xlu0 %v1228, 8
      %v1671 = vpop.permute.xlu0 %1670
      %1672 = vrot.lane.b32.xlu0 %v1229, 8
      %v1673 = vpop.permute.xlu0 %1672
      %1674 = vrot.lane.b32.xlu0 %v1230, 8
      %v1675 = vpop.permute.xlu0 %1674
      %1676 = vrot.lane.b32.xlu0 %v1231, 8
      %v1677 = vpop.permute.xlu0 %1676
      %1678 = vrot.lane.b32.xlu0 %v1232, 8
      %v1679 = vpop.permute.xlu0 %1678
      %1680 = vrot.lane.b32.xlu0 %v1233, 8
      %v1681 = vpop.permute.xlu0 %1680
      %v1746 = vsel %vm846, %v1042, %v1299
      %v1747 = vsel %vm846, %v1043, %v1301
      %v1748 = vsel %vm846, %v1044, %v1303
      %v1749 = vsel %vm846, %v1045, %v1305
      %v1750 = vsel %vm846, %v1046, %v1307
      %v1751 = vsel %vm846, %v1047, %v1309
      %v1752 = vsel %vm846, %v1048, %v1311
      %v1753 = vsel %vm846, %v1049, %v1313
      %v1754 = vsel %vm846, %v1050, %v1315
      %v1755 = vsel %vm846, %v1051, %v1317
      %v1756 = vsel %vm846, %v1052, %v1319
      %v1757 = vsel %vm846, %v1053, %v1321
      %v1758 = vsel %vm846, %v1054, %v1323
      %v1759 = vsel %vm846, %v1055, %v1325
      %v1760 = vsel %vm846, %v1056, %v1327
      %v1761 = vsel %vm846, %v1057, %v1329
      %v1762 = vsel %vm846, %v1058, %v1331
      %v1763 = vsel %vm846, %v1059, %v1333
      %v1764 = vsel %vm846, %v1060, %v1335
      %v1765 = vsel %vm846, %v1061, %v1337
      %v1766 = vsel %vm846, %v1062, %v1339
      %v1767 = vsel %vm846, %v1063, %v1341
      %v1768 = vsel %vm846, %v1064, %v1343
      %v1769 = vsel %vm846, %v1065, %v1345
      %v1770 = vsel %vm846, %v1066, %v1347
      %v1771 = vsel %vm846, %v1067, %v1349
      %v1772 = vsel %vm846, %v1068, %v1351
      %v1773 = vsel %vm846, %v1069, %v1353
      %v1774 = vsel %vm846, %v1070, %v1355
      %v1775 = vsel %vm846, %v1071, %v1357
      %v1776 = vsel %vm846, %v1072, %v1359
      %v1777 = vsel %vm846, %v1073, %v1361
      %v1778 = vsel %vm846, %v1074, %v1363
      %v1779 = vsel %vm846, %v1075, %v1365
      %v1780 = vsel %vm846, %v1076, %v1367
      %v1781 = vsel %vm846, %v1077, %v1369
      %v1782 = vsel %vm846, %v1078, %v1371
      %v1783 = vsel %vm846, %v1079, %v1373
      %v1784 = vsel %vm846, %v1080, %v1375
      %v1785 = vsel %vm846, %v1081, %v1377
      %v1786 = vsel %vm846, %v1082, %v1379
      %v1787 = vsel %vm846, %v1083, %v1381
      %v1788 = vsel %vm846, %v1084, %v1383
      %v1789 = vsel %vm846, %v1085, %v1385
      %v1790 = vsel %vm846, %v1086, %v1387
      %v1791 = vsel %vm846, %v1087, %v1389
      %v1792 = vsel %vm846, %v1088, %v1391
      %v1793 = vsel %vm846, %v1089, %v1393
      %v1794 = vsel %vm846, %v1090, %v1395
      %v1795 = vsel %vm846, %v1091, %v1397
      %v1796 = vsel %vm846, %v1092, %v1399
      %v1797 = vsel %vm846, %v1093, %v1401
      %v1798 = vsel %vm846, %v1094, %v1403
      %v1799 = vsel %vm846, %v1095, %v1405
      %v1800 = vsel %vm846, %v1096, %v1407
      %v1801 = vsel %vm846, %v1097, %v1409
      %v1802 = vsel %vm846, %v1098, %v1411
      %v1803 = vsel %vm846, %v1099, %v1413
      %v1804 = vsel %vm846, %v1100, %v1415
      %v1805 = vsel %vm846, %v1101, %v1417
      %v1806 = vsel %vm846, %v1102, %v1419
      %v1807 = vsel %vm846, %v1103, %v1421
      %v1808 = vsel %vm846, %v1104, %v1423
      %v1809 = vsel %vm846, %v1105, %v1425
      %v1810 = vsel %vm911, %v1746, %v1555
      %v1811 = vsel %vm911, %v1747, %v1557
      %v1812 = vsel %vm911, %v1748, %v1559
      %v1813 = vsel %vm911, %v1749, %v1561
      %v1814 = vsel %vm911, %v1750, %v1563
      %v1815 = vsel %vm911, %v1751, %v1565
      %v1816 = vsel %vm911, %v1752, %v1567
      %v1817 = vsel %vm911, %v1753, %v1569
      %v1818 = vsel %vm911, %v1754, %v1571
      %v1819 = vsel %vm911, %v1755, %v1573
      %v1820 = vsel %vm911, %v1756, %v1575
      %v1821 = vsel %vm911, %v1757, %v1577
      %v1822 = vsel %vm911, %v1758, %v1579
      %v1823 = vsel %vm911, %v1759, %v1581
      %v1824 = vsel %vm911, %v1760, %v1583
      %v1825 = vsel %vm911, %v1761, %v1585
      %v1826 = vsel %vm911, %v1762, %v1587
      %v1827 = vsel %vm911, %v1763, %v1589
      %v1828 = vsel %vm911, %v1764, %v1591
      %v1829 = vsel %vm911, %v1765, %v1593
      %v1830 = vsel %vm911, %v1766, %v1595
      %v1831 = vsel %vm911, %v1767, %v1597
      %v1832 = vsel %vm911, %v1768, %v1599
      %v1833 = vsel %vm911, %v1769, %v1601
      %v1834 = vsel %vm911, %v1770, %v1603
      %v1835 = vsel %vm911, %v1771, %v1605
      %v1836 = vsel %vm911, %v1772, %v1607
      %v1837 = vsel %vm911, %v1773, %v1609
      %v1838 = vsel %vm911, %v1774, %v1611
      %v1839 = vsel %vm911, %v1775, %v1613
      %v1840 = vsel %vm911, %v1776, %v1615
      %v1841 = vsel %vm911, %v1777, %v1617
      %v1842 = vsel %vm911, %v1778, %v1619
      %v1843 = vsel %vm911, %v1779, %v1621
      %v1844 = vsel %vm911, %v1780, %v1623
      %v1845 = vsel %vm911, %v1781, %v1625
      %v1846 = vsel %vm911, %v1782, %v1627
      %v1847 = vsel %vm911, %v1783, %v1629
      %v1848 = vsel %vm911, %v1784, %v1631
      %v1849 = vsel %vm911, %v1785, %v1633
      %v1850 = vsel %vm911, %v1786, %v1635
      %v1851 = vsel %vm911, %v1787, %v1637
      %v1852 = vsel %vm911, %v1788, %v1639
      %v1853 = vsel %vm911, %v1789, %v1641
      %v1854 = vsel %vm911, %v1790, %v1643
      %v1855 = vsel %vm911, %v1791, %v1645
      %v1856 = vsel %vm911, %v1792, %v1647
      %v1857 = vsel %vm911, %v1793, %v1649
      %v1858 = vsel %vm911, %v1794, %v1651
      %v1859 = vsel %vm911, %v1795, %v1653
      %v1860 = vsel %vm911, %v1796, %v1655
      %v1861 = vsel %vm911, %v1797, %v1657
      %v1862 = vsel %vm911, %v1798, %v1659
      %v1863 = vsel %vm911, %v1799, %v1661
      %v1864 = vsel %vm911, %v1800, %v1663
      %v1865 = vsel %vm911, %v1801, %v1665
      %v1866 = vsel %vm911, %v1802, %v1667
      %v1867 = vsel %vm911, %v1803, %v1669
      %v1868 = vsel %vm911, %v1804, %v1671
      %v1869 = vsel %vm911, %v1805, %v1673
      %v1870 = vsel %vm911, %v1806, %v1675
      %v1871 = vsel %vm911, %v1807, %v1677
      %v1872 = vsel %vm911, %v1808, %v1679
      %v1873 = vsel %vm911, %v1809, %v1681
      %1938 = vrot.lane.b32.xlu0 %v1810, 12
      %v1939 = vpop.permute.xlu0 %1938
      %1940 = vrot.lane.b32.xlu0 %v1811, 12
      %v1941 = vpop.permute.xlu0 %1940
      %1942 = vrot.lane.b32.xlu0 %v1812, 12
      %v1943 = vpop.permute.xlu0 %1942
      %1944 = vrot.lane.b32.xlu0 %v1813, 12
      %v1945 = vpop.permute.xlu0 %1944
      %1946 = vrot.lane.b32.xlu0 %v1814, 12
      %v1947 = vpop.permute.xlu0 %1946
      %1948 = vrot.lane.b32.xlu0 %v1815, 12
      %v1949 = vpop.permute.xlu0 %1948
      %1950 = vrot.lane.b32.xlu0 %v1816, 12
      %v1951 = vpop.permute.xlu0 %1950
      %1952 = vrot.lane.b32.xlu0 %v1817, 12
      %v1953 = vpop.permute.xlu0 %1952
      %1954 = vrot.lane.b32.xlu0 %v1818, 12
      %v1955 = vpop.permute.xlu0 %1954
      %1956 = vrot.lane.b32.xlu0 %v1819, 12
      %v1957 = vpop.permute.xlu0 %1956
      %1958 = vrot.lane.b32.xlu0 %v1820, 12
      %v1959 = vpop.permute.xlu0 %1958
      %1960 = vrot.lane.b32.xlu0 %v1821, 12
      %v1961 = vpop.permute.xlu0 %1960
      %1962 = vrot.lane.b32.xlu0 %v1822, 12
      %v1963 = vpop.permute.xlu0 %1962
      %1964 = vrot.lane.b32.xlu0 %v1823, 12
      %v1965 = vpop.permute.xlu0 %1964
      %1966 = vrot.lane.b32.xlu0 %v1824, 12
      %v1967 = vpop.permute.xlu0 %1966
      %1968 = vrot.lane.b32.xlu0 %v1825, 12
      %v1969 = vpop.permute.xlu0 %1968
      %1970 = vrot.lane.b32.xlu0 %v1826, 12
      %v1971 = vpop.permute.xlu0 %1970
      %1972 = vrot.lane.b32.xlu0 %v1827, 12
      %v1973 = vpop.permute.xlu0 %1972
      %1974 = vrot.lane.b32.xlu0 %v1828, 12
      %v1975 = vpop.permute.xlu0 %1974
      %1976 = vrot.lane.b32.xlu0 %v1829, 12
      %v1977 = vpop.permute.xlu0 %1976
      %1978 = vrot.lane.b32.xlu0 %v1830, 12
      %v1979 = vpop.permute.xlu0 %1978
      %1980 = vrot.lane.b32.xlu0 %v1831, 12
      %v1981 = vpop.permute.xlu0 %1980
      %1982 = vrot.lane.b32.xlu0 %v1832, 12
      %v1983 = vpop.permute.xlu0 %1982
      %1984 = vrot.lane.b32.xlu0 %v1833, 12
      %v1985 = vpop.permute.xlu0 %1984
      %1986 = vrot.lane.b32.xlu0 %v1834, 12
      %v1987 = vpop.permute.xlu0 %1986
      %1988 = vrot.lane.b32.xlu0 %v1835, 12
      %v1989 = vpop.permute.xlu0 %1988
      %1990 = vrot.lane.b32.xlu0 %v1836, 12
      %v1991 = vpop.permute.xlu0 %1990
      %1992 = vrot.lane.b32.xlu0 %v1837, 12
      %v1993 = vpop.permute.xlu0 %1992
      %1994 = vrot.lane.b32.xlu0 %v1838, 12
      %v1995 = vpop.permute.xlu0 %1994
      %1996 = vrot.lane.b32.xlu0 %v1839, 12
      %v1997 = vpop.permute.xlu0 %1996
      %1998 = vrot.lane.b32.xlu0 %v1840, 12
      %v1999 = vpop.permute.xlu0 %1998
      %2000 = vrot.lane.b32.xlu0 %v1841, 12
      %v2001 = vpop.permute.xlu0 %2000
      %2002 = vrot.lane.b32.xlu0 %v1842, 12
      %v2003 = vpop.permute.xlu0 %2002
      %2004 = vrot.lane.b32.xlu0 %v1843, 12
      %v2005 = vpop.permute.xlu0 %2004
      %2006 = vrot.lane.b32.xlu0 %v1844, 12
      %v2007 = vpop.permute.xlu0 %2006
      %2008 = vrot.lane.b32.xlu0 %v1845, 12
      %v2009 = vpop.permute.xlu0 %2008
      %2010 = vrot.lane.b32.xlu0 %v1846, 12
      %v2011 = vpop.permute.xlu0 %2010
      %2012 = vrot.lane.b32.xlu0 %v1847, 12
      %v2013 = vpop.permute.xlu0 %2012
      %2014 = vrot.lane.b32.xlu0 %v1848, 12
      %v2015 = vpop.permute.xlu0 %2014
      %2016 = vrot.lane.b32.xlu0 %v1849, 12
      %v2017 = vpop.permute.xlu0 %2016
      %2018 = vrot.lane.b32.xlu0 %v1850, 12
      %v2019 = vpop.permute.xlu0 %2018
      %2020 = vrot.lane.b32.xlu0 %v1851, 12
      %v2021 = vpop.permute.xlu0 %2020
      %2022 = vrot.lane.b32.xlu0 %v1852, 12
      %v2023 = vpop.permute.xlu0 %2022
      %2024 = vrot.lane.b32.xlu0 %v1853, 12
      %v2025 = vpop.permute.xlu0 %2024
      %2026 = vrot.lane.b32.xlu0 %v1854, 12
      %v2027 = vpop.permute.xlu0 %2026
      %2028 = vrot.lane.b32.xlu0 %v1855, 12
      %v2029 = vpop.permute.xlu0 %2028
      %2030 = vrot.lane.b32.xlu0 %v1856, 12
      %v2031 = vpop.permute.xlu0 %2030
      %2032 = vrot.lane.b32.xlu0 %v1857, 12
      %v2033 = vpop.permute.xlu0 %2032
      %2034 = vrot.lane.b32.xlu0 %v1858, 12
      %v2035 = vpop.permute.xlu0 %2034
      %2036 = vrot.lane.b32.xlu0 %v1859, 12
      %v2037 = vpop.permute.xlu0 %2036
      %2038 = vrot.lane.b32.xlu0 %v1860, 12
      %v2039 = vpop.permute.xlu0 %2038
      %2040 = vrot.lane.b32.xlu0 %v1861, 12
      %v2041 = vpop.permute.xlu0 %2040
      %2042 = vrot.lane.b32.xlu0 %v1862, 12
      %v2043 = vpop.permute.xlu0 %2042
      %2044 = vrot.lane.b32.xlu0 %v1863, 12
      %v2045 = vpop.permute.xlu0 %2044
      %2046 = vrot.lane.b32.xlu0 %v1864, 12
      %v2047 = vpop.permute.xlu0 %2046
      %2048 = vrot.lane.b32.xlu0 %v1865, 12
      %v2049 = vpop.permute.xlu0 %2048
      %2050 = vrot.lane.b32.xlu0 %v1866, 12
      %v2051 = vpop.permute.xlu0 %2050
      %2052 = vrot.lane.b32.xlu0 %v1867, 12
      %v2053 = vpop.permute.xlu0 %2052
      %2054 = vrot.lane.b32.xlu0 %v1868, 12
      %v2055 = vpop.permute.xlu0 %2054
      %2056 = vrot.lane.b32.xlu0 %v1869, 12
      %v2057 = vpop.permute.xlu0 %2056
      %2058 = vrot.lane.b32.xlu0 %v1870, 12
      %v2059 = vpop.permute.xlu0 %2058
      %2060 = vrot.lane.b32.xlu0 %v1871, 12
      %v2061 = vpop.permute.xlu0 %2060
      %2062 = vrot.lane.b32.xlu0 %v1872, 12
      %v2063 = vpop.permute.xlu0 %2062
      %2064 = vrot.lane.b32.xlu0 %v1873, 12
      %v2065 = vpop.permute.xlu0 %2064
      %vm2130 = vcmask 195680
      %2131 = vst.msk [vmem:[#allocation2] sm:$0xff] %vm2130, %v1939
      %2132 = vst.msk [vmem:[#allocation2 + $0x8] sm:$0xff] %vm2130, %v1941
      %2133 = vst.msk [vmem:[#allocation2 + $0x10] sm:$0xff] %vm2130, %v1943
      %2134 = vst.msk [vmem:[#allocation2 + $0x18] sm:$0xff] %vm2130, %v1945
      %2135 = vst.msk [vmem:[#allocation2 + $0x20] sm:$0xff] %vm2130, %v1947
      %2136 = vst.msk [vmem:[#allocation2 + $0x28] sm:$0xff] %vm2130, %v1949
      %2137 = vst.msk [vmem:[#allocation2 + $0x30] sm:$0xff] %vm2130, %v1951
      %2138 = vst.msk [vmem:[#allocation2 + $0x38] sm:$0xff] %vm2130, %v1953
      %2139 = vst.msk [vmem:[#allocation2 + $0x40] sm:$0xff] %vm2130, %v1955
      %2140 = vst.msk [vmem:[#allocation2 + $0x48] sm:$0xff] %vm2130, %v1957
      %2141 = vst.msk [vmem:[#allocation2 + $0x50] sm:$0xff] %vm2130, %v1959
      %2142 = vst.msk [vmem:[#allocation2 + $0x58] sm:$0xff] %vm2130, %v1961
      %2143 = vst.msk [vmem:[#allocation2 + $0x60] sm:$0xff] %vm2130, %v1963
      %2144 = vst.msk [vmem:[#allocation2 + $0x68] sm:$0xff] %vm2130, %v1965
      %2145 = vst.msk [vmem:[#allocation2 + $0x70] sm:$0xff] %vm2130, %v1967
      %2146 = vst.msk [vmem:[#allocation2 + $0x78] sm:$0xff] %vm2130, %v1969
      %2147 = vst.msk [vmem:[#allocation2 + $0x80] sm:$0xff] %vm2130, %v1971
      %2148 = vst.msk [vmem:[#allocation2 + $0x88] sm:$0xff] %vm2130, %v1973
      %2149 = vst.msk [vmem:[#allocation2 + $0x90] sm:$0xff] %vm2130, %v1975
      %2150 = vst.msk [vmem:[#allocation2 + $0x98] sm:$0xff] %vm2130, %v1977
      %2151 = vst.msk [vmem:[#allocation2 + $0xa0] sm:$0xff] %vm2130, %v1979
      %2152 = vst.msk [vmem:[#allocation2 + $0xa8] sm:$0xff] %vm2130, %v1981
      %2153 = vst.msk [vmem:[#allocation2 + $0xb0] sm:$0xff] %vm2130, %v1983
      %2154 = vst.msk [vmem:[#allocation2 + $0xb8] sm:$0xff] %vm2130, %v1985
      %2155 = vst.msk [vmem:[#allocation2 + $0xc0] sm:$0xff] %vm2130, %v1987
      %2156 = vst.msk [vmem:[#allocation2 + $0xc8] sm:$0xff] %vm2130, %v1989
      %2157 = vst.msk [vmem:[#allocation2 + $0xd0] sm:$0xff] %vm2130, %v1991
      %2158 = vst.msk [vmem:[#allocation2 + $0xd8] sm:$0xff] %vm2130, %v1993
      %2159 = vst.msk [vmem:[#allocation2 + $0xe0] sm:$0xff] %vm2130, %v1995
      %2160 = vst.msk [vmem:[#allocation2 + $0xe8] sm:$0xff] %vm2130, %v1997
      %2161 = vst.msk [vmem:[#allocation2 + $0xf0] sm:$0xff] %vm2130, %v1999
      %2162 = vst.msk [vmem:[#allocation2 + $0xf8] sm:$0xff] %vm2130, %v2001
      %2163 = vst.msk [vmem:[#allocation2 + $0x100] sm:$0xff] %vm2130, %v2003
      %2164 = vst.msk [vmem:[#allocation2 + $0x108] sm:$0xff] %vm2130, %v2005
      %2165 = vst.msk [vmem:[#allocation2 + $0x110] sm:$0xff] %vm2130, %v2007
      %2166 = vst.msk [vmem:[#allocation2 + $0x118] sm:$0xff] %vm2130, %v2009
      %2167 = vst.msk [vmem:[#allocation2 + $0x120] sm:$0xff] %vm2130, %v2011
      %2168 = vst.msk [vmem:[#allocation2 + $0x128] sm:$0xff] %vm2130, %v2013
      %2169 = vst.msk [vmem:[#allocation2 + $0x130] sm:$0xff] %vm2130, %v2015
      %2170 = vst.msk [vmem:[#allocation2 + $0x138] sm:$0xff] %vm2130, %v2017
      %2171 = vst.msk [vmem:[#allocation2 + $0x140] sm:$0xff] %vm2130, %v2019
      %2172 = vst.msk [vmem:[#allocation2 + $0x148] sm:$0xff] %vm2130, %v2021
      %2173 = vst.msk [vmem:[#allocation2 + $0x150] sm:$0xff] %vm2130, %v2023
      %2174 = vst.msk [vmem:[#allocation2 + $0x158] sm:$0xff] %vm2130, %v2025
      %2175 = vst.msk [vmem:[#allocation2 + $0x160] sm:$0xff] %vm2130, %v2027
      %2176 = vst.msk [vmem:[#allocation2 + $0x168] sm:$0xff] %vm2130, %v2029
      %2177 = vst.msk [vmem:[#allocation2 + $0x170] sm:$0xff] %vm2130, %v2031
      %2178 = vst.msk [vmem:[#allocation2 + $0x178] sm:$0xff] %vm2130, %v2033
      %2179 = vst.msk [vmem:[#allocation2 + $0x180] sm:$0xff] %vm2130, %v2035
      %2180 = vst.msk [vmem:[#allocation2 + $0x188] sm:$0xff] %vm2130, %v2037
      %2181 = vst.msk [vmem:[#allocation2 + $0x190] sm:$0xff] %vm2130, %v2039
      %2182 = vst.msk [vmem:[#allocation2 + $0x198] sm:$0xff] %vm2130, %v2041
      %2183 = vst.msk [vmem:[#allocation2 + $0x1a0] sm:$0xff] %vm2130, %v2043
      %2184 = vst.msk [vmem:[#allocation2 + $0x1a8] sm:$0xff] %vm2130, %v2045
      %2185 = vst.msk [vmem:[#allocation2 + $0x1b0] sm:$0xff] %vm2130, %v2047
      %2186 = vst.msk [vmem:[#allocation2 + $0x1b8] sm:$0xff] %vm2130, %v2049
      %2187 = vst.msk [vmem:[#allocation2 + $0x1c0] sm:$0xff] %vm2130, %v2051
      %2188 = vst.msk [vmem:[#allocation2 + $0x1c8] sm:$0xff] %vm2130, %v2053
      %2189 = vst.msk [vmem:[#allocation2 + $0x1d0] sm:$0xff] %vm2130, %v2055
      %2190 = vst.msk [vmem:[#allocation2 + $0x1d8] sm:$0xff] %vm2130, %v2057
      %2191 = vst.msk [vmem:[#allocation2 + $0x1e0] sm:$0xff] %vm2130, %v2059
      %2192 = vst.msk [vmem:[#allocation2 + $0x1e8] sm:$0xff] %vm2130, %v2061
      %2193 = vst.msk [vmem:[#allocation2 + $0x1f0] sm:$0xff] %vm2130, %v2063
      %2194 = vst.msk [vmem:[#allocation2 + $0x1f8] sm:$0xff] %vm2130, %v2065
      %s2195 = scalar_lea.vmem %s137, 32
      %v2196 = vld [vmem:[%s2195] sm:$0xff]
      %v2197 = vld [vmem:[%s2195 + $0x10] sm:$0xff]
      %v2198 = vld [vmem:[%s2195 + $0x20] sm:$0xff]
      %v2199 = vld [vmem:[%s2195 + $0x30] sm:$0xff]
      %v2200 = vld [vmem:[%s2195 + $0x40] sm:$0xff]
      %v2201 = vld [vmem:[%s2195 + $0x50] sm:$0xff]
      %v2202 = vld [vmem:[%s2195 + $0x60] sm:$0xff]
      %v2203 = vld [vmem:[%s2195 + $0x70] sm:$0xff]
      %v2204 = vld [vmem:[%s2195 + $0xa0] sm:$0xff]
      %v2205 = vld [vmem:[%s2195 + $0xb0] sm:$0xff]
      %v2206 = vld [vmem:[%s2195 + $0xc0] sm:$0xff]
      %v2207 = vld [vmem:[%s2195 + $0xd0] sm:$0xff]
      %v2208 = vld [vmem:[%s2195 + $0xe0] sm:$0xff]
      %v2209 = vld [vmem:[%s2195 + $0xf0] sm:$0xff]
      %v2210 = vld [vmem:[%s2195 + $0x100] sm:$0xff]
      %v2211 = vld [vmem:[%s2195 + $0x110] sm:$0xff]
      %v2212 = vld [vmem:[%s2195 + $0x140] sm:$0xff]
      %v2213 = vld [vmem:[%s2195 + $0x150] sm:$0xff]
      %v2214 = vld [vmem:[%s2195 + $0x160] sm:$0xff]
      %v2215 = vld [vmem:[%s2195 + $0x170] sm:$0xff]
      %v2216 = vld [vmem:[%s2195 + $0x180] sm:$0xff]
      %v2217 = vld [vmem:[%s2195 + $0x190] sm:$0xff]
      %v2218 = vld [vmem:[%s2195 + $0x1a0] sm:$0xff]
      %v2219 = vld [vmem:[%s2195 + $0x1b0] sm:$0xff]
      %v2220 = vld [vmem:[%s2195 + $0x1e0] sm:$0xff]
      %v2221 = vld [vmem:[%s2195 + $0x1f0] sm:$0xff]
      %v2222 = vld [vmem:[%s2195 + $0x200] sm:$0xff]
      %v2223 = vld [vmem:[%s2195 + $0x210] sm:$0xff]
      %v2224 = vld [vmem:[%s2195 + $0x220] sm:$0xff]
      %v2225 = vld [vmem:[%s2195 + $0x230] sm:$0xff]
      %v2226 = vld [vmem:[%s2195 + $0x240] sm:$0xff]
      %v2227 = vld [vmem:[%s2195 + $0x250] sm:$0xff]
      %v2228 = vld [vmem:[%s2195 + $0x280] sm:$0xff]
      %v2229 = vld [vmem:[%s2195 + $0x290] sm:$0xff]
      %v2230 = vld [vmem:[%s2195 + $0x2a0] sm:$0xff]
      %v2231 = vld [vmem:[%s2195 + $0x2b0] sm:$0xff]
      %v2232 = vld [vmem:[%s2195 + $0x2c0] sm:$0xff]
      %v2233 = vld [vmem:[%s2195 + $0x2d0] sm:$0xff]
      %v2234 = vld [vmem:[%s2195 + $0x2e0] sm:$0xff]
      %v2235 = vld [vmem:[%s2195 + $0x2f0] sm:$0xff]
      %v2236 = vld [vmem:[%s2195 + $0x320] sm:$0xff]
      %v2237 = vld [vmem:[%s2195 + $0x330] sm:$0xff]
      %v2238 = vld [vmem:[%s2195 + $0x340] sm:$0xff]
      %v2239 = vld [vmem:[%s2195 + $0x350] sm:$0xff]
      %v2240 = vld [vmem:[%s2195 + $0x360] sm:$0xff]
      %v2241 = vld [vmem:[%s2195 + $0x370] sm:$0xff]
      %v2242 = vld [vmem:[%s2195 + $0x380] sm:$0xff]
      %v2243 = vld [vmem:[%s2195 + $0x390] sm:$0xff]
      %v2244 = vld [vmem:[%s2195 + $0x3c0] sm:$0xff]
      %v2245 = vld [vmem:[%s2195 + $0x3d0] sm:$0xff]
      %v2246 = vld [vmem:[%s2195 + $0x3e0] sm:$0xff]
      %v2247 = vld [vmem:[%s2195 + $0x3f0] sm:$0xff]
      %v2248 = vld [vmem:[%s2195 + $0x400] sm:$0xff]
      %v2249 = vld [vmem:[%s2195 + $0x410] sm:$0xff]
      %v2250 = vld [vmem:[%s2195 + $0x420] sm:$0xff]
      %v2251 = vld [vmem:[%s2195 + $0x430] sm:$0xff]
      %v2252 = vld [vmem:[%s2195 + $0x460] sm:$0xff]
      %v2253 = vld [vmem:[%s2195 + $0x470] sm:$0xff]
      %v2254 = vld [vmem:[%s2195 + $0x480] sm:$0xff]
      %v2255 = vld [vmem:[%s2195 + $0x490] sm:$0xff]
      %v2256 = vld [vmem:[%s2195 + $0x4a0] sm:$0xff]
      %v2257 = vld [vmem:[%s2195 + $0x4b0] sm:$0xff]
      %v2258 = vld [vmem:[%s2195 + $0x4c0] sm:$0xff]
      %v2259 = vld [vmem:[%s2195 + $0x4d0] sm:$0xff]
      %v2260 = vld [vmem:[%s2195 + $0x1] sm:$0xff]
      %v2261 = vld [vmem:[%s2195 + $0x11] sm:$0xff]
      %v2262 = vld [vmem:[%s2195 + $0x21] sm:$0xff]
      %v2263 = vld [vmem:[%s2195 + $0x31] sm:$0xff]
      %v2264 = vld [vmem:[%s2195 + $0x41] sm:$0xff]
      %v2265 = vld [vmem:[%s2195 + $0x51] sm:$0xff]
      %v2266 = vld [vmem:[%s2195 + $0x61] sm:$0xff]
      %v2267 = vld [vmem:[%s2195 + $0x71] sm:$0xff]
      %v2268 = vld [vmem:[%s2195 + $0xa1] sm:$0xff]
      %v2269 = vld [vmem:[%s2195 + $0xb1] sm:$0xff]
      %v2270 = vld [vmem:[%s2195 + $0xc1] sm:$0xff]
      %v2271 = vld [vmem:[%s2195 + $0xd1] sm:$0xff]
      %v2272 = vld [vmem:[%s2195 + $0xe1] sm:$0xff]
      %v2273 = vld [vmem:[%s2195 + $0xf1] sm:$0xff]
      %v2274 = vld [vmem:[%s2195 + $0x101] sm:$0xff]
      %v2275 = vld [vmem:[%s2195 + $0x111] sm:$0xff]
      %v2276 = vld [vmem:[%s2195 + $0x141] sm:$0xff]
      %v2277 = vld [vmem:[%s2195 + $0x151] sm:$0xff]
      %v2278 = vld [vmem:[%s2195 + $0x161] sm:$0xff]
      %v2279 = vld [vmem:[%s2195 + $0x171] sm:$0xff]
      %v2280 = vld [vmem:[%s2195 + $0x181] sm:$0xff]
      %v2281 = vld [vmem:[%s2195 + $0x191] sm:$0xff]
      %v2282 = vld [vmem:[%s2195 + $0x1a1] sm:$0xff]
      %v2283 = vld [vmem:[%s2195 + $0x1b1] sm:$0xff]
      %v2284 = vld [vmem:[%s2195 + $0x1e1] sm:$0xff]
      %v2285 = vld [vmem:[%s2195 + $0x1f1] sm:$0xff]
      %v2286 = vld [vmem:[%s2195 + $0x201] sm:$0xff]
      %v2287 = vld [vmem:[%s2195 + $0x211] sm:$0xff]
      %v2288 = vld [vmem:[%s2195 + $0x221] sm:$0xff]
      %v2289 = vld [vmem:[%s2195 + $0x231] sm:$0xff]
      %v2290 = vld [vmem:[%s2195 + $0x241] sm:$0xff]
      %v2291 = vld [vmem:[%s2195 + $0x251] sm:$0xff]
      %v2292 = vld [vmem:[%s2195 + $0x281] sm:$0xff]
      %v2293 = vld [vmem:[%s2195 + $0x291] sm:$0xff]
      %v2294 = vld [vmem:[%s2195 + $0x2a1] sm:$0xff]
      %v2295 = vld [vmem:[%s2195 + $0x2b1] sm:$0xff]
      %v2296 = vld [vmem:[%s2195 + $0x2c1] sm:$0xff]
      %v2297 = vld [vmem:[%s2195 + $0x2d1] sm:$0xff]
      %v2298 = vld [vmem:[%s2195 + $0x2e1] sm:$0xff]
      %v2299 = vld [vmem:[%s2195 + $0x2f1] sm:$0xff]
      %v2300 = vld [vmem:[%s2195 + $0x321] sm:$0xff]
      %v2301 = vld [vmem:[%s2195 + $0x331] sm:$0xff]
      %v2302 = vld [vmem:[%s2195 + $0x341] sm:$0xff]
      %v2303 = vld [vmem:[%s2195 + $0x351] sm:$0xff]
      %v2304 = vld [vmem:[%s2195 + $0x361] sm:$0xff]
      %v2305 = vld [vmem:[%s2195 + $0x371] sm:$0xff]
      %v2306 = vld [vmem:[%s2195 + $0x381] sm:$0xff]
      %v2307 = vld [vmem:[%s2195 + $0x391] sm:$0xff]
      %v2308 = vld [vmem:[%s2195 + $0x3c1] sm:$0xff]
      %v2309 = vld [vmem:[%s2195 + $0x3d1] sm:$0xff]
      %v2310 = vld [vmem:[%s2195 + $0x3e1] sm:$0xff]
      %v2311 = vld [vmem:[%s2195 + $0x3f1] sm:$0xff]
      %v2312 = vld [vmem:[%s2195 + $0x401] sm:$0xff]
      %v2313 = vld [vmem:[%s2195 + $0x411] sm:$0xff]
      %v2314 = vld [vmem:[%s2195 + $0x421] sm:$0xff]
      %v2315 = vld [vmem:[%s2195 + $0x431] sm:$0xff]
      %v2316 = vld [vmem:[%s2195 + $0x461] sm:$0xff]
      %v2317 = vld [vmem:[%s2195 + $0x471] sm:$0xff]
      %v2318 = vld [vmem:[%s2195 + $0x481] sm:$0xff]
      %v2319 = vld [vmem:[%s2195 + $0x491] sm:$0xff]
      %v2320 = vld [vmem:[%s2195 + $0x4a1] sm:$0xff]
      %v2321 = vld [vmem:[%s2195 + $0x4b1] sm:$0xff]
      %v2322 = vld [vmem:[%s2195 + $0x4c1] sm:$0xff]
      %v2323 = vld [vmem:[%s2195 + $0x4d1] sm:$0xff]
      %v2324 = vld [vmem:[%s2195 + $0x2] sm:$0xff]
      %v2325 = vld [vmem:[%s2195 + $0x12] sm:$0xff]
      %v2326 = vld [vmem:[%s2195 + $0x22] sm:$0xff]
      %v2327 = vld [vmem:[%s2195 + $0x32] sm:$0xff]
      %v2328 = vld [vmem:[%s2195 + $0x42] sm:$0xff]
      %v2329 = vld [vmem:[%s2195 + $0x52] sm:$0xff]
      %v2330 = vld [vmem:[%s2195 + $0x62] sm:$0xff]
      %v2331 = vld [vmem:[%s2195 + $0x72] sm:$0xff]
      %v2332 = vld [vmem:[%s2195 + $0xa2] sm:$0xff]
      %v2333 = vld [vmem:[%s2195 + $0xb2] sm:$0xff]
      %v2334 = vld [vmem:[%s2195 + $0xc2] sm:$0xff]
      %v2335 = vld [vmem:[%s2195 + $0xd2] sm:$0xff]
      %v2336 = vld [vmem:[%s2195 + $0xe2] sm:$0xff]
      %v2337 = vld [vmem:[%s2195 + $0xf2] sm:$0xff]
      %v2338 = vld [vmem:[%s2195 + $0x102] sm:$0xff]
      %v2339 = vld [vmem:[%s2195 + $0x112] sm:$0xff]
      %v2340 = vld [vmem:[%s2195 + $0x142] sm:$0xff]
      %v2341 = vld [vmem:[%s2195 + $0x152] sm:$0xff]
      %v2342 = vld [vmem:[%s2195 + $0x162] sm:$0xff]
      %v2343 = vld [vmem:[%s2195 + $0x172] sm:$0xff]
      %v2344 = vld [vmem:[%s2195 + $0x182] sm:$0xff]
      %v2345 = vld [vmem:[%s2195 + $0x192] sm:$0xff]
      %v2346 = vld [vmem:[%s2195 + $0x1a2] sm:$0xff]
      %v2347 = vld [vmem:[%s2195 + $0x1b2] sm:$0xff]
      %v2348 = vld [vmem:[%s2195 + $0x1e2] sm:$0xff]
      %v2349 = vld [vmem:[%s2195 + $0x1f2] sm:$0xff]
      %v2350 = vld [vmem:[%s2195 + $0x202] sm:$0xff]
      %v2351 = vld [vmem:[%s2195 + $0x212] sm:$0xff]
      %v2352 = vld [vmem:[%s2195 + $0x222] sm:$0xff]
      %v2353 = vld [vmem:[%s2195 + $0x232] sm:$0xff]
      %v2354 = vld [vmem:[%s2195 + $0x242] sm:$0xff]
      %v2355 = vld [vmem:[%s2195 + $0x252] sm:$0xff]
      %v2356 = vld [vmem:[%s2195 + $0x282] sm:$0xff]
      %v2357 = vld [vmem:[%s2195 + $0x292] sm:$0xff]
      %v2358 = vld [vmem:[%s2195 + $0x2a2] sm:$0xff]
      %v2359 = vld [vmem:[%s2195 + $0x2b2] sm:$0xff]
      %v2360 = vld [vmem:[%s2195 + $0x2c2] sm:$0xff]
      %v2361 = vld [vmem:[%s2195 + $0x2d2] sm:$0xff]
      %v2362 = vld [vmem:[%s2195 + $0x2e2] sm:$0xff]
      %v2363 = vld [vmem:[%s2195 + $0x2f2] sm:$0xff]
      %v2364 = vld [vmem:[%s2195 + $0x322] sm:$0xff]
      %v2365 = vld [vmem:[%s2195 + $0x332] sm:$0xff]
      %v2366 = vld [vmem:[%s2195 + $0x342] sm:$0xff]
      %v2367 = vld [vmem:[%s2195 + $0x352] sm:$0xff]
      %v2368 = vld [vmem:[%s2195 + $0x362] sm:$0xff]
      %v2369 = vld [vmem:[%s2195 + $0x372] sm:$0xff]
      %v2370 = vld [vmem:[%s2195 + $0x382] sm:$0xff]
      %v2371 = vld [vmem:[%s2195 + $0x392] sm:$0xff]
      %v2372 = vld [vmem:[%s2195 + $0x3c2] sm:$0xff]
      %v2373 = vld [vmem:[%s2195 + $0x3d2] sm:$0xff]
      %v2374 = vld [vmem:[%s2195 + $0x3e2] sm:$0xff]
      %v2375 = vld [vmem:[%s2195 + $0x3f2] sm:$0xff]
      %v2376 = vld [vmem:[%s2195 + $0x402] sm:$0xff]
      %v2377 = vld [vmem:[%s2195 + $0x412] sm:$0xff]
      %v2378 = vld [vmem:[%s2195 + $0x422] sm:$0xff]
      %v2379 = vld [vmem:[%s2195 + $0x432] sm:$0xff]
      %v2380 = vld [vmem:[%s2195 + $0x462] sm:$0xff]
      %v2381 = vld [vmem:[%s2195 + $0x472] sm:$0xff]
      %v2382 = vld [vmem:[%s2195 + $0x482] sm:$0xff]
      %v2383 = vld [vmem:[%s2195 + $0x492] sm:$0xff]
      %v2384 = vld [vmem:[%s2195 + $0x4a2] sm:$0xff]
      %v2385 = vld [vmem:[%s2195 + $0x4b2] sm:$0xff]
      %v2386 = vld [vmem:[%s2195 + $0x4c2] sm:$0xff]
      %v2387 = vld [vmem:[%s2195 + $0x4d2] sm:$0xff]
      %2452 = vrot.lane.b32.xlu0 %v2260, 4
      %v2453 = vpop.permute.xlu0 %2452
      %2454 = vrot.lane.b32.xlu0 %v2261, 4
      %v2455 = vpop.permute.xlu0 %2454
      %2456 = vrot.lane.b32.xlu0 %v2262, 4
      %v2457 = vpop.permute.xlu0 %2456
      %2458 = vrot.lane.b32.xlu0 %v2263, 4
      %v2459 = vpop.permute.xlu0 %2458
      %2460 = vrot.lane.b32.xlu0 %v2264, 4
      %v2461 = vpop.permute.xlu0 %2460
      %2462 = vrot.lane.b32.xlu0 %v2265, 4
      %v2463 = vpop.permute.xlu0 %2462
      %2464 = vrot.lane.b32.xlu0 %v2266, 4
      %v2465 = vpop.permute.xlu0 %2464
      %2466 = vrot.lane.b32.xlu0 %v2267, 4
      %v2467 = vpop.permute.xlu0 %2466
      %2468 = vrot.lane.b32.xlu0 %v2268, 4
      %v2469 = vpop.permute.xlu0 %2468
      %2470 = vrot.lane.b32.xlu0 %v2269, 4
      %v2471 = vpop.permute.xlu0 %2470
      %2472 = vrot.lane.b32.xlu0 %v2270, 4
      %v2473 = vpop.permute.xlu0 %2472
      %2474 = vrot.lane.b32.xlu0 %v2271, 4
      %v2475 = vpop.permute.xlu0 %2474
      %2476 = vrot.lane.b32.xlu0 %v2272, 4
      %v2477 = vpop.permute.xlu0 %2476
      %2478 = vrot.lane.b32.xlu0 %v2273, 4
      %v2479 = vpop.permute.xlu0 %2478
      %2480 = vrot.lane.b32.xlu0 %v2274, 4
      %v2481 = vpop.permute.xlu0 %2480
      %2482 = vrot.lane.b32.xlu0 %v2275, 4
      %v2483 = vpop.permute.xlu0 %2482
      %2484 = vrot.lane.b32.xlu0 %v2276, 4
      %v2485 = vpop.permute.xlu0 %2484
      %2486 = vrot.lane.b32.xlu0 %v2277, 4
      %v2487 = vpop.permute.xlu0 %2486
      %2488 = vrot.lane.b32.xlu0 %v2278, 4
      %v2489 = vpop.permute.xlu0 %2488
      %2490 = vrot.lane.b32.xlu0 %v2279, 4
      %v2491 = vpop.permute.xlu0 %2490
      %2492 = vrot.lane.b32.xlu0 %v2280, 4
      %v2493 = vpop.permute.xlu0 %2492
      %2494 = vrot.lane.b32.xlu0 %v2281, 4
      %v2495 = vpop.permute.xlu0 %2494
      %2496 = vrot.lane.b32.xlu0 %v2282, 4
      %v2497 = vpop.permute.xlu0 %2496
      %2498 = vrot.lane.b32.xlu0 %v2283, 4
      %v2499 = vpop.permute.xlu0 %2498
      %2500 = vrot.lane.b32.xlu0 %v2284, 4
      %v2501 = vpop.permute.xlu0 %2500
      %2502 = vrot.lane.b32.xlu0 %v2285, 4
      %v2503 = vpop.permute.xlu0 %2502
      %2504 = vrot.lane.b32.xlu0 %v2286, 4
      %v2505 = vpop.permute.xlu0 %2504
      %2506 = vrot.lane.b32.xlu0 %v2287, 4
      %v2507 = vpop.permute.xlu0 %2506
      %2508 = vrot.lane.b32.xlu0 %v2288, 4
      %v2509 = vpop.permute.xlu0 %2508
      %2510 = vrot.lane.b32.xlu0 %v2289, 4
      %v2511 = vpop.permute.xlu0 %2510
      %2512 = vrot.lane.b32.xlu0 %v2290, 4
      %v2513 = vpop.permute.xlu0 %2512
      %2514 = vrot.lane.b32.xlu0 %v2291, 4
      %v2515 = vpop.permute.xlu0 %2514
      %2516 = vrot.lane.b32.xlu0 %v2292, 4
      %v2517 = vpop.permute.xlu0 %2516
      %2518 = vrot.lane.b32.xlu0 %v2293, 4
      %v2519 = vpop.permute.xlu0 %2518
      %2520 = vrot.lane.b32.xlu0 %v2294, 4
      %v2521 = vpop.permute.xlu0 %2520
      %2522 = vrot.lane.b32.xlu0 %v2295, 4
      %v2523 = vpop.permute.xlu0 %2522
      %2524 = vrot.lane.b32.xlu0 %v2296, 4
      %v2525 = vpop.permute.xlu0 %2524
      %2526 = vrot.lane.b32.xlu0 %v2297, 4
      %v2527 = vpop.permute.xlu0 %2526
      %2528 = vrot.lane.b32.xlu0 %v2298, 4
      %v2529 = vpop.permute.xlu0 %2528
      %2530 = vrot.lane.b32.xlu0 %v2299, 4
      %v2531 = vpop.permute.xlu0 %2530
      %2532 = vrot.lane.b32.xlu0 %v2300, 4
      %v2533 = vpop.permute.xlu0 %2532
      %2534 = vrot.lane.b32.xlu0 %v2301, 4
      %v2535 = vpop.permute.xlu0 %2534
      %2536 = vrot.lane.b32.xlu0 %v2302, 4
      %v2537 = vpop.permute.xlu0 %2536
      %2538 = vrot.lane.b32.xlu0 %v2303, 4
      %v2539 = vpop.permute.xlu0 %2538
      %2540 = vrot.lane.b32.xlu0 %v2304, 4
      %v2541 = vpop.permute.xlu0 %2540
      %2542 = vrot.lane.b32.xlu0 %v2305, 4
      %v2543 = vpop.permute.xlu0 %2542
      %2544 = vrot.lane.b32.xlu0 %v2306, 4
      %v2545 = vpop.permute.xlu0 %2544
      %2546 = vrot.lane.b32.xlu0 %v2307, 4
      %v2547 = vpop.permute.xlu0 %2546
      %2548 = vrot.lane.b32.xlu0 %v2308, 4
      %v2549 = vpop.permute.xlu0 %2548
      %2550 = vrot.lane.b32.xlu0 %v2309, 4
      %v2551 = vpop.permute.xlu0 %2550
      %2552 = vrot.lane.b32.xlu0 %v2310, 4
      %v2553 = vpop.permute.xlu0 %2552
      %2554 = vrot.lane.b32.xlu0 %v2311, 4
      %v2555 = vpop.permute.xlu0 %2554
      %2556 = vrot.lane.b32.xlu0 %v2312, 4
      %v2557 = vpop.permute.xlu0 %2556
      %2558 = vrot.lane.b32.xlu0 %v2313, 4
      %v2559 = vpop.permute.xlu0 %2558
      %2560 = vrot.lane.b32.xlu0 %v2314, 4
      %v2561 = vpop.permute.xlu0 %2560
      %2562 = vrot.lane.b32.xlu0 %v2315, 4
      %v2563 = vpop.permute.xlu0 %2562
      %2564 = vrot.lane.b32.xlu0 %v2316, 4
      %v2565 = vpop.permute.xlu0 %2564
      %2566 = vrot.lane.b32.xlu0 %v2317, 4
      %v2567 = vpop.permute.xlu0 %2566
      %2568 = vrot.lane.b32.xlu0 %v2318, 4
      %v2569 = vpop.permute.xlu0 %2568
      %2570 = vrot.lane.b32.xlu0 %v2319, 4
      %v2571 = vpop.permute.xlu0 %2570
      %2572 = vrot.lane.b32.xlu0 %v2320, 4
      %v2573 = vpop.permute.xlu0 %2572
      %2574 = vrot.lane.b32.xlu0 %v2321, 4
      %v2575 = vpop.permute.xlu0 %2574
      %2576 = vrot.lane.b32.xlu0 %v2322, 4
      %v2577 = vpop.permute.xlu0 %2576
      %2578 = vrot.lane.b32.xlu0 %v2323, 4
      %v2579 = vpop.permute.xlu0 %2578
      %2708 = vrot.lane.b32.xlu0 %v2324, 8
      %v2709 = vpop.permute.xlu0 %2708
      %2710 = vrot.lane.b32.xlu0 %v2325, 8
      %v2711 = vpop.permute.xlu0 %2710
      %2712 = vrot.lane.b32.xlu0 %v2326, 8
      %v2713 = vpop.permute.xlu0 %2712
      %2714 = vrot.lane.b32.xlu0 %v2327, 8
      %v2715 = vpop.permute.xlu0 %2714
      %2716 = vrot.lane.b32.xlu0 %v2328, 8
      %v2717 = vpop.permute.xlu0 %2716
      %2718 = vrot.lane.b32.xlu0 %v2329, 8
      %v2719 = vpop.permute.xlu0 %2718
      %2720 = vrot.lane.b32.xlu0 %v2330, 8
      %v2721 = vpop.permute.xlu0 %2720
      %2722 = vrot.lane.b32.xlu0 %v2331, 8
      %v2723 = vpop.permute.xlu0 %2722
      %2724 = vrot.lane.b32.xlu0 %v2332, 8
      %v2725 = vpop.permute.xlu0 %2724
      %2726 = vrot.lane.b32.xlu0 %v2333, 8
      %v2727 = vpop.permute.xlu0 %2726
      %2728 = vrot.lane.b32.xlu0 %v2334, 8
      %v2729 = vpop.permute.xlu0 %2728
      %2730 = vrot.lane.b32.xlu0 %v2335, 8
      %v2731 = vpop.permute.xlu0 %2730
      %2732 = vrot.lane.b32.xlu0 %v2336, 8
      %v2733 = vpop.permute.xlu0 %2732
      %2734 = vrot.lane.b32.xlu0 %v2337, 8
      %v2735 = vpop.permute.xlu0 %2734
      %2736 = vrot.lane.b32.xlu0 %v2338, 8
      %v2737 = vpop.permute.xlu0 %2736
      %2738 = vrot.lane.b32.xlu0 %v2339, 8
      %v2739 = vpop.permute.xlu0 %2738
      %2740 = vrot.lane.b32.xlu0 %v2340, 8
      %v2741 = vpop.permute.xlu0 %2740
      %2742 = vrot.lane.b32.xlu0 %v2341, 8
      %v2743 = vpop.permute.xlu0 %2742
      %2744 = vrot.lane.b32.xlu0 %v2342, 8
      %v2745 = vpop.permute.xlu0 %2744
      %2746 = vrot.lane.b32.xlu0 %v2343, 8
      %v2747 = vpop.permute.xlu0 %2746
      %2748 = vrot.lane.b32.xlu0 %v2344, 8
      %v2749 = vpop.permute.xlu0 %2748
      %2750 = vrot.lane.b32.xlu0 %v2345, 8
      %v2751 = vpop.permute.xlu0 %2750
      %2752 = vrot.lane.b32.xlu0 %v2346, 8
      %v2753 = vpop.permute.xlu0 %2752
      %2754 = vrot.lane.b32.xlu0 %v2347, 8
      %v2755 = vpop.permute.xlu0 %2754
      %2756 = vrot.lane.b32.xlu0 %v2348, 8
      %v2757 = vpop.permute.xlu0 %2756
      %2758 = vrot.lane.b32.xlu0 %v2349, 8
      %v2759 = vpop.permute.xlu0 %2758
      %2760 = vrot.lane.b32.xlu0 %v2350, 8
      %v2761 = vpop.permute.xlu0 %2760
      %2762 = vrot.lane.b32.xlu0 %v2351, 8
      %v2763 = vpop.permute.xlu0 %2762
      %2764 = vrot.lane.b32.xlu0 %v2352, 8
      %v2765 = vpop.permute.xlu0 %2764
      %2766 = vrot.lane.b32.xlu0 %v2353, 8
      %v2767 = vpop.permute.xlu0 %2766
      %2768 = vrot.lane.b32.xlu0 %v2354, 8
      %v2769 = vpop.permute.xlu0 %2768
      %2770 = vrot.lane.b32.xlu0 %v2355, 8
      %v2771 = vpop.permute.xlu0 %2770
      %2772 = vrot.lane.b32.xlu0 %v2356, 8
      %v2773 = vpop.permute.xlu0 %2772
      %2774 = vrot.lane.b32.xlu0 %v2357, 8
      %v2775 = vpop.permute.xlu0 %2774
      %2776 = vrot.lane.b32.xlu0 %v2358, 8
      %v2777 = vpop.permute.xlu0 %2776
      %2778 = vrot.lane.b32.xlu0 %v2359, 8
      %v2779 = vpop.permute.xlu0 %2778
      %2780 = vrot.lane.b32.xlu0 %v2360, 8
      %v2781 = vpop.permute.xlu0 %2780
      %2782 = vrot.lane.b32.xlu0 %v2361, 8
      %v2783 = vpop.permute.xlu0 %2782
      %2784 = vrot.lane.b32.xlu0 %v2362, 8
      %v2785 = vpop.permute.xlu0 %2784
      %2786 = vrot.lane.b32.xlu0 %v2363, 8
      %v2787 = vpop.permute.xlu0 %2786
      %2788 = vrot.lane.b32.xlu0 %v2364, 8
      %v2789 = vpop.permute.xlu0 %2788
      %2790 = vrot.lane.b32.xlu0 %v2365, 8
      %v2791 = vpop.permute.xlu0 %2790
      %2792 = vrot.lane.b32.xlu0 %v2366, 8
      %v2793 = vpop.permute.xlu0 %2792
      %2794 = vrot.lane.b32.xlu0 %v2367, 8
      %v2795 = vpop.permute.xlu0 %2794
      %2796 = vrot.lane.b32.xlu0 %v2368, 8
      %v2797 = vpop.permute.xlu0 %2796
      %2798 = vrot.lane.b32.xlu0 %v2369, 8
      %v2799 = vpop.permute.xlu0 %2798
      %2800 = vrot.lane.b32.xlu0 %v2370, 8
      %v2801 = vpop.permute.xlu0 %2800
      %2802 = vrot.lane.b32.xlu0 %v2371, 8
      %v2803 = vpop.permute.xlu0 %2802
      %2804 = vrot.lane.b32.xlu0 %v2372, 8
      %v2805 = vpop.permute.xlu0 %2804
      %2806 = vrot.lane.b32.xlu0 %v2373, 8
      %v2807 = vpop.permute.xlu0 %2806
      %2808 = vrot.lane.b32.xlu0 %v2374, 8
      %v2809 = vpop.permute.xlu0 %2808
      %2810 = vrot.lane.b32.xlu0 %v2375, 8
      %v2811 = vpop.permute.xlu0 %2810
      %2812 = vrot.lane.b32.xlu0 %v2376, 8
      %v2813 = vpop.permute.xlu0 %2812
      %2814 = vrot.lane.b32.xlu0 %v2377, 8
      %v2815 = vpop.permute.xlu0 %2814
      %2816 = vrot.lane.b32.xlu0 %v2378, 8
      %v2817 = vpop.permute.xlu0 %2816
      %2818 = vrot.lane.b32.xlu0 %v2379, 8
      %v2819 = vpop.permute.xlu0 %2818
      %2820 = vrot.lane.b32.xlu0 %v2380, 8
      %v2821 = vpop.permute.xlu0 %2820
      %2822 = vrot.lane.b32.xlu0 %v2381, 8
      %v2823 = vpop.permute.xlu0 %2822
      %2824 = vrot.lane.b32.xlu0 %v2382, 8
      %v2825 = vpop.permute.xlu0 %2824
      %2826 = vrot.lane.b32.xlu0 %v2383, 8
      %v2827 = vpop.permute.xlu0 %2826
      %2828 = vrot.lane.b32.xlu0 %v2384, 8
      %v2829 = vpop.permute.xlu0 %2828
      %2830 = vrot.lane.b32.xlu0 %v2385, 8
      %v2831 = vpop.permute.xlu0 %2830
      %2832 = vrot.lane.b32.xlu0 %v2386, 8
      %v2833 = vpop.permute.xlu0 %2832
      %2834 = vrot.lane.b32.xlu0 %v2387, 8
      %v2835 = vpop.permute.xlu0 %2834
      %v2900 = vsel %vm846, %v2196, %v2453
      %v2901 = vsel %vm846, %v2197, %v2455
      %v2902 = vsel %vm846, %v2198, %v2457
      %v2903 = vsel %vm846, %v2199, %v2459
      %v2904 = vsel %vm846, %v2200, %v2461
      %v2905 = vsel %vm846, %v2201, %v2463
      %v2906 = vsel %vm846, %v2202, %v2465
      %v2907 = vsel %vm846, %v2203, %v2467
      %v2908 = vsel %vm846, %v2204, %v2469
      %v2909 = vsel %vm846, %v2205, %v2471
      %v2910 = vsel %vm846, %v2206, %v2473
      %v2911 = vsel %vm846, %v2207, %v2475
      %v2912 = vsel %vm846, %v2208, %v2477
      %v2913 = vsel %vm846, %v2209, %v2479
      %v2914 = vsel %vm846, %v2210, %v2481
      %v2915 = vsel %vm846, %v2211, %v2483
      %v2916 = vsel %vm846, %v2212, %v2485
      %v2917 = vsel %vm846, %v2213, %v2487
      %v2918 = vsel %vm846, %v2214, %v2489
      %v2919 = vsel %vm846, %v2215, %v2491
      %v2920 = vsel %vm846, %v2216, %v2493
      %v2921 = vsel %vm846, %v2217, %v2495
      %v2922 = vsel %vm846, %v2218, %v2497
      %v2923 = vsel %vm846, %v2219, %v2499
      %v2924 = vsel %vm846, %v2220, %v2501
      %v2925 = vsel %vm846, %v2221, %v2503
      %v2926 = vsel %vm846, %v2222, %v2505
      %v2927 = vsel %vm846, %v2223, %v2507
      %v2928 = vsel %vm846, %v2224, %v2509
      %v2929 = vsel %vm846, %v2225, %v2511
      %v2930 = vsel %vm846, %v2226, %v2513
      %v2931 = vsel %vm846, %v2227, %v2515
      %v2932 = vsel %vm846, %v2228, %v2517
      %v2933 = vsel %vm846, %v2229, %v2519
      %v2934 = vsel %vm846, %v2230, %v2521
      %v2935 = vsel %vm846, %v2231, %v2523
      %v2936 = vsel %vm846, %v2232, %v2525
      %v2937 = vsel %vm846, %v2233, %v2527
      %v2938 = vsel %vm846, %v2234, %v2529
      %v2939 = vsel %vm846, %v2235, %v2531
      %v2940 = vsel %vm846, %v2236, %v2533
      %v2941 = vsel %vm846, %v2237, %v2535
      %v2942 = vsel %vm846, %v2238, %v2537
      %v2943 = vsel %vm846, %v2239, %v2539
      %v2944 = vsel %vm846, %v2240, %v2541
      %v2945 = vsel %vm846, %v2241, %v2543
      %v2946 = vsel %vm846, %v2242, %v2545
      %v2947 = vsel %vm846, %v2243, %v2547
      %v2948 = vsel %vm846, %v2244, %v2549
      %v2949 = vsel %vm846, %v2245, %v2551
      %v2950 = vsel %vm846, %v2246, %v2553
      %v2951 = vsel %vm846, %v2247, %v2555
      %v2952 = vsel %vm846, %v2248, %v2557
      %v2953 = vsel %vm846, %v2249, %v2559
      %v2954 = vsel %vm846, %v2250, %v2561
      %v2955 = vsel %vm846, %v2251, %v2563
      %v2956 = vsel %vm846, %v2252, %v2565
      %v2957 = vsel %vm846, %v2253, %v2567
      %v2958 = vsel %vm846, %v2254, %v2569
      %v2959 = vsel %vm846, %v2255, %v2571
      %v2960 = vsel %vm846, %v2256, %v2573
      %v2961 = vsel %vm846, %v2257, %v2575
      %v2962 = vsel %vm846, %v2258, %v2577
      %v2963 = vsel %vm846, %v2259, %v2579
      %v2964 = vsel %vm911, %v2900, %v2709
      %v2965 = vsel %vm911, %v2901, %v2711
      %v2966 = vsel %vm911, %v2902, %v2713
      %v2967 = vsel %vm911, %v2903, %v2715
      %v2968 = vsel %vm911, %v2904, %v2717
      %v2969 = vsel %vm911, %v2905, %v2719
      %v2970 = vsel %vm911, %v2906, %v2721
      %v2971 = vsel %vm911, %v2907, %v2723
      %v2972 = vsel %vm911, %v2908, %v2725
      %v2973 = vsel %vm911, %v2909, %v2727
      %v2974 = vsel %vm911, %v2910, %v2729
      %v2975 = vsel %vm911, %v2911, %v2731
      %v2976 = vsel %vm911, %v2912, %v2733
      %v2977 = vsel %vm911, %v2913, %v2735
      %v2978 = vsel %vm911, %v2914, %v2737
      %v2979 = vsel %vm911, %v2915, %v2739
      %v2980 = vsel %vm911, %v2916, %v2741
      %v2981 = vsel %vm911, %v2917, %v2743
      %v2982 = vsel %vm911, %v2918, %v2745
      %v2983 = vsel %vm911, %v2919, %v2747
      %v2984 = vsel %vm911, %v2920, %v2749
      %v2985 = vsel %vm911, %v2921, %v2751
      %v2986 = vsel %vm911, %v2922, %v2753
      %v2987 = vsel %vm911, %v2923, %v2755
      %v2988 = vsel %vm911, %v2924, %v2757
      %v2989 = vsel %vm911, %v2925, %v2759
      %v2990 = vsel %vm911, %v2926, %v2761
      %v2991 = vsel %vm911, %v2927, %v2763
      %v2992 = vsel %vm911, %v2928, %v2765
      %v2993 = vsel %vm911, %v2929, %v2767
      %v2994 = vsel %vm911, %v2930, %v2769
      %v2995 = vsel %vm911, %v2931, %v2771
      %v2996 = vsel %vm911, %v2932, %v2773
      %v2997 = vsel %vm911, %v2933, %v2775
      %v2998 = vsel %vm911, %v2934, %v2777
      %v2999 = vsel %vm911, %v2935, %v2779
      %v3000 = vsel %vm911, %v2936, %v2781
      %v3001 = vsel %vm911, %v2937, %v2783
      %v3002 = vsel %vm911, %v2938, %v2785
      %v3003 = vsel %vm911, %v2939, %v2787
      %v3004 = vsel %vm911, %v2940, %v2789
      %v3005 = vsel %vm911, %v2941, %v2791
      %v3006 = vsel %vm911, %v2942, %v2793
      %v3007 = vsel %vm911, %v2943, %v2795
      %v3008 = vsel %vm911, %v2944, %v2797
      %v3009 = vsel %vm911, %v2945, %v2799
      %v3010 = vsel %vm911, %v2946, %v2801
      %v3011 = vsel %vm911, %v2947, %v2803
      %v3012 = vsel %vm911, %v2948, %v2805
      %v3013 = vsel %vm911, %v2949, %v2807
      %v3014 = vsel %vm911, %v2950, %v2809
      %v3015 = vsel %vm911, %v2951, %v2811
      %v3016 = vsel %vm911, %v2952, %v2813
      %v3017 = vsel %vm911, %v2953, %v2815
      %v3018 = vsel %vm911, %v2954, %v2817
      %v3019 = vsel %vm911, %v2955, %v2819
      %v3020 = vsel %vm911, %v2956, %v2821
      %v3021 = vsel %vm911, %v2957, %v2823
      %v3022 = vsel %vm911, %v2958, %v2825
      %v3023 = vsel %vm911, %v2959, %v2827
      %v3024 = vsel %vm911, %v2960, %v2829
      %v3025 = vsel %vm911, %v2961, %v2831
      %v3026 = vsel %vm911, %v2962, %v2833
      %v3027 = vsel %vm911, %v2963, %v2835
      %3092 = vrot.lane.b32.xlu0 %v2964, 24
      %v3093 = vpop.permute.xlu0 %3092
      %3094 = vrot.lane.b32.xlu0 %v2965, 24
      %v3095 = vpop.permute.xlu0 %3094
      %3096 = vrot.lane.b32.xlu0 %v2966, 24
      %v3097 = vpop.permute.xlu0 %3096
      %3098 = vrot.lane.b32.xlu0 %v2967, 24
      %v3099 = vpop.permute.xlu0 %3098
      %3100 = vrot.lane.b32.xlu0 %v2968, 24
      %v3101 = vpop.permute.xlu0 %3100
      %3102 = vrot.lane.b32.xlu0 %v2969, 24
      %v3103 = vpop.permute.xlu0 %3102
      %3104 = vrot.lane.b32.xlu0 %v2970, 24
      %v3105 = vpop.permute.xlu0 %3104
      %3106 = vrot.lane.b32.xlu0 %v2971, 24
      %v3107 = vpop.permute.xlu0 %3106
      %3108 = vrot.lane.b32.xlu0 %v2972, 24
      %v3109 = vpop.permute.xlu0 %3108
      %3110 = vrot.lane.b32.xlu0 %v2973, 24
      %v3111 = vpop.permute.xlu0 %3110
      %3112 = vrot.lane.b32.xlu0 %v2974, 24
      %v3113 = vpop.permute.xlu0 %3112
      %3114 = vrot.lane.b32.xlu0 %v2975, 24
      %v3115 = vpop.permute.xlu0 %3114
      %3116 = vrot.lane.b32.xlu0 %v2976, 24
      %v3117 = vpop.permute.xlu0 %3116
      %3118 = vrot.lane.b32.xlu0 %v2977, 24
      %v3119 = vpop.permute.xlu0 %3118
      %3120 = vrot.lane.b32.xlu0 %v2978, 24
      %v3121 = vpop.permute.xlu0 %3120
      %3122 = vrot.lane.b32.xlu0 %v2979, 24
      %v3123 = vpop.permute.xlu0 %3122
      %3124 = vrot.lane.b32.xlu0 %v2980, 24
      %v3125 = vpop.permute.xlu0 %3124
      %3126 = vrot.lane.b32.xlu0 %v2981, 24
      %v3127 = vpop.permute.xlu0 %3126
      %3128 = vrot.lane.b32.xlu0 %v2982, 24
      %v3129 = vpop.permute.xlu0 %3128
      %3130 = vrot.lane.b32.xlu0 %v2983, 24
      %v3131 = vpop.permute.xlu0 %3130
      %3132 = vrot.lane.b32.xlu0 %v2984, 24
      %v3133 = vpop.permute.xlu0 %3132
      %3134 = vrot.lane.b32.xlu0 %v2985, 24
      %v3135 = vpop.permute.xlu0 %3134
      %3136 = vrot.lane.b32.xlu0 %v2986, 24
      %v3137 = vpop.permute.xlu0 %3136
      %3138 = vrot.lane.b32.xlu0 %v2987, 24
      %v3139 = vpop.permute.xlu0 %3138
      %3140 = vrot.lane.b32.xlu0 %v2988, 24
      %v3141 = vpop.permute.xlu0 %3140
      %3142 = vrot.lane.b32.xlu0 %v2989, 24
      %v3143 = vpop.permute.xlu0 %3142
      %3144 = vrot.lane.b32.xlu0 %v2990, 24
      %v3145 = vpop.permute.xlu0 %3144
      %3146 = vrot.lane.b32.xlu0 %v2991, 24
      %v3147 = vpop.permute.xlu0 %3146
      %3148 = vrot.lane.b32.xlu0 %v2992, 24
      %v3149 = vpop.permute.xlu0 %3148
      %3150 = vrot.lane.b32.xlu0 %v2993, 24
      %v3151 = vpop.permute.xlu0 %3150
      %3152 = vrot.lane.b32.xlu0 %v2994, 24
      %v3153 = vpop.permute.xlu0 %3152
      %3154 = vrot.lane.b32.xlu0 %v2995, 24
      %v3155 = vpop.permute.xlu0 %3154
      %3156 = vrot.lane.b32.xlu0 %v2996, 24
      %v3157 = vpop.permute.xlu0 %3156
      %3158 = vrot.lane.b32.xlu0 %v2997, 24
      %v3159 = vpop.permute.xlu0 %3158
      %3160 = vrot.lane.b32.xlu0 %v2998, 24
      %v3161 = vpop.permute.xlu0 %3160
      %3162 = vrot.lane.b32.xlu0 %v2999, 24
      %v3163 = vpop.permute.xlu0 %3162
      %3164 = vrot.lane.b32.xlu0 %v3000, 24
      %v3165 = vpop.permute.xlu0 %3164
      %3166 = vrot.lane.b32.xlu0 %v3001, 24
      %v3167 = vpop.permute.xlu0 %3166
      %3168 = vrot.lane.b32.xlu0 %v3002, 24
      %v3169 = vpop.permute.xlu0 %3168
      %3170 = vrot.lane.b32.xlu0 %v3003, 24
      %v3171 = vpop.permute.xlu0 %3170
      %3172 = vrot.lane.b32.xlu0 %v3004, 24
      %v3173 = vpop.permute.xlu0 %3172
      %3174 = vrot.lane.b32.xlu0 %v3005, 24
      %v3175 = vpop.permute.xlu0 %3174
      %3176 = vrot.lane.b32.xlu0 %v3006, 24
      %v3177 = vpop.permute.xlu0 %3176
      %3178 = vrot.lane.b32.xlu0 %v3007, 24
      %v3179 = vpop.permute.xlu0 %3178
      %3180 = vrot.lane.b32.xlu0 %v3008, 24
      %v3181 = vpop.permute.xlu0 %3180
      %3182 = vrot.lane.b32.xlu0 %v3009, 24
      %v3183 = vpop.permute.xlu0 %3182
      %3184 = vrot.lane.b32.xlu0 %v3010, 24
      %v3185 = vpop.permute.xlu0 %3184
      %3186 = vrot.lane.b32.xlu0 %v3011, 24
      %v3187 = vpop.permute.xlu0 %3186
      %3188 = vrot.lane.b32.xlu0 %v3012, 24
      %v3189 = vpop.permute.xlu0 %3188
      %3190 = vrot.lane.b32.xlu0 %v3013, 24
      %v3191 = vpop.permute.xlu0 %3190
      %3192 = vrot.lane.b32.xlu0 %v3014, 24
      %v3193 = vpop.permute.xlu0 %3192
      %3194 = vrot.lane.b32.xlu0 %v3015, 24
      %v3195 = vpop.permute.xlu0 %3194
      %3196 = vrot.lane.b32.xlu0 %v3016, 24
      %v3197 = vpop.permute.xlu0 %3196
      %3198 = vrot.lane.b32.xlu0 %v3017, 24
      %v3199 = vpop.permute.xlu0 %3198
      %3200 = vrot.lane.b32.xlu0 %v3018, 24
      %v3201 = vpop.permute.xlu0 %3200
      %3202 = vrot.lane.b32.xlu0 %v3019, 24
      %v3203 = vpop.permute.xlu0 %3202
      %3204 = vrot.lane.b32.xlu0 %v3020, 24
      %v3205 = vpop.permute.xlu0 %3204
      %3206 = vrot.lane.b32.xlu0 %v3021, 24
      %v3207 = vpop.permute.xlu0 %3206
      %3208 = vrot.lane.b32.xlu0 %v3022, 24
      %v3209 = vpop.permute.xlu0 %3208
      %3210 = vrot.lane.b32.xlu0 %v3023, 24
      %v3211 = vpop.permute.xlu0 %3210
      %3212 = vrot.lane.b32.xlu0 %v3024, 24
      %v3213 = vpop.permute.xlu0 %3212
      %3214 = vrot.lane.b32.xlu0 %v3025, 24
      %v3215 = vpop.permute.xlu0 %3214
      %3216 = vrot.lane.b32.xlu0 %v3026, 24
      %v3217 = vpop.permute.xlu0 %3216
      %3218 = vrot.lane.b32.xlu0 %v3027, 24
      %v3219 = vpop.permute.xlu0 %3218
      %vm3284 = vcmask 294080
      %3285 = vst.msk [vmem:[#allocation2] sm:$0xff] %vm3284, %v3093
      %3286 = vst.msk [vmem:[#allocation2 + $0x8] sm:$0xff] %vm3284, %v3095
      %3287 = vst.msk [vmem:[#allocation2 + $0x10] sm:$0xff] %vm3284, %v3097
      %3288 = vst.msk [vmem:[#allocation2 + $0x18] sm:$0xff] %vm3284, %v3099
      %3289 = vst.msk [vmem:[#allocation2 + $0x20] sm:$0xff] %vm3284, %v3101
      %3290 = vst.msk [vmem:[#allocation2 + $0x28] sm:$0xff] %vm3284, %v3103
      %3291 = vst.msk [vmem:[#allocation2 + $0x30] sm:$0xff] %vm3284, %v3105
      %3292 = vst.msk [vmem:[#allocation2 + $0x38] sm:$0xff] %vm3284, %v3107
      %3293 = vst.msk [vmem:[#allocation2 + $0x40] sm:$0xff] %vm3284, %v3109
      %3294 = vst.msk [vmem:[#allocation2 + $0x48] sm:$0xff] %vm3284, %v3111
      %3295 = vst.msk [vmem:[#allocation2 + $0x50] sm:$0xff] %vm3284, %v3113
      %3296 = vst.msk [vmem:[#allocation2 + $0x58] sm:$0xff] %vm3284, %v3115
      %3297 = vst.msk [vmem:[#allocation2 + $0x60] sm:$0xff] %vm3284, %v3117
      %3298 = vst.msk [vmem:[#allocation2 + $0x68] sm:$0xff] %vm3284, %v3119
      %3299 = vst.msk [vmem:[#allocation2 + $0x70] sm:$0xff] %vm3284, %v3121
      %3300 = vst.msk [vmem:[#allocation2 + $0x78] sm:$0xff] %vm3284, %v3123
      %3301 = vst.msk [vmem:[#allocation2 + $0x80] sm:$0xff] %vm3284, %v3125
      %3302 = vst.msk [vmem:[#allocation2 + $0x88] sm:$0xff] %vm3284, %v3127
      %3303 = vst.msk [vmem:[#allocation2 + $0x90] sm:$0xff] %vm3284, %v3129
      %3304 = vst.msk [vmem:[#allocation2 + $0x98] sm:$0xff] %vm3284, %v3131
      %3305 = vst.msk [vmem:[#allocation2 + $0xa0] sm:$0xff] %vm3284, %v3133
      %3306 = vst.msk [vmem:[#allocation2 + $0xa8] sm:$0xff] %vm3284, %v3135
      %3307 = vst.msk [vmem:[#allocation2 + $0xb0] sm:$0xff] %vm3284, %v3137
      %3308 = vst.msk [vmem:[#allocation2 + $0xb8] sm:$0xff] %vm3284, %v3139
      %3309 = vst.msk [vmem:[#allocation2 + $0xc0] sm:$0xff] %vm3284, %v3141
      %3310 = vst.msk [vmem:[#allocation2 + $0xc8] sm:$0xff] %vm3284, %v3143
      %3311 = vst.msk [vmem:[#allocation2 + $0xd0] sm:$0xff] %vm3284, %v3145
      %3312 = vst.msk [vmem:[#allocation2 + $0xd8] sm:$0xff] %vm3284, %v3147
      %3313 = vst.msk [vmem:[#allocation2 + $0xe0] sm:$0xff] %vm3284, %v3149
      %3314 = vst.msk [vmem:[#allocation2 + $0xe8] sm:$0xff] %vm3284, %v3151
      %3315 = vst.msk [vmem:[#allocation2 + $0xf0] sm:$0xff] %vm3284, %v3153
      %3316 = vst.msk [vmem:[#allocation2 + $0xf8] sm:$0xff] %vm3284, %v3155
      %3317 = vst.msk [vmem:[#allocation2 + $0x100] sm:$0xff] %vm3284, %v3157
      %3318 = vst.msk [vmem:[#allocation2 + $0x108] sm:$0xff] %vm3284, %v3159
      %3319 = vst.msk [vmem:[#allocation2 + $0x110] sm:$0xff] %vm3284, %v3161
      %3320 = vst.msk [vmem:[#allocation2 + $0x118] sm:$0xff] %vm3284, %v3163
      %3321 = vst.msk [vmem:[#allocation2 + $0x120] sm:$0xff] %vm3284, %v3165
      %3322 = vst.msk [vmem:[#allocation2 + $0x128] sm:$0xff] %vm3284, %v3167
      %3323 = vst.msk [vmem:[#allocation2 + $0x130] sm:$0xff] %vm3284, %v3169
      %3324 = vst.msk [vmem:[#allocation2 + $0x138] sm:$0xff] %vm3284, %v3171
      %3325 = vst.msk [vmem:[#allocation2 + $0x140] sm:$0xff] %vm3284, %v3173
      %3326 = vst.msk [vmem:[#allocation2 + $0x148] sm:$0xff] %vm3284, %v3175
      %3327 = vst.msk [vmem:[#allocation2 + $0x150] sm:$0xff] %vm3284, %v3177
      %3328 = vst.msk [vmem:[#allocation2 + $0x158] sm:$0xff] %vm3284, %v3179
      %3329 = vst.msk [vmem:[#allocation2 + $0x160] sm:$0xff] %vm3284, %v3181
      %3330 = vst.msk [vmem:[#allocation2 + $0x168] sm:$0xff] %vm3284, %v3183
      %3331 = vst.msk [vmem:[#allocation2 + $0x170] sm:$0xff] %vm3284, %v3185
      %3332 = vst.msk [vmem:[#allocation2 + $0x178] sm:$0xff] %vm3284, %v3187
      %3333 = vst.msk [vmem:[#allocation2 + $0x180] sm:$0xff] %vm3284, %v3189
      %3334 = vst.msk [vmem:[#allocation2 + $0x188] sm:$0xff] %vm3284, %v3191
      %3335 = vst.msk [vmem:[#allocation2 + $0x190] sm:$0xff] %vm3284, %v3193
      %3336 = vst.msk [vmem:[#allocation2 + $0x198] sm:$0xff] %vm3284, %v3195
      %3337 = vst.msk [vmem:[#allocation2 + $0x1a0] sm:$0xff] %vm3284, %v3197
      %3338 = vst.msk [vmem:[#allocation2 + $0x1a8] sm:$0xff] %vm3284, %v3199
      %3339 = vst.msk [vmem:[#allocation2 + $0x1b0] sm:$0xff] %vm3284, %v3201
      %3340 = vst.msk [vmem:[#allocation2 + $0x1b8] sm:$0xff] %vm3284, %v3203
      %3341 = vst.msk [vmem:[#allocation2 + $0x1c0] sm:$0xff] %vm3284, %v3205
      %3342 = vst.msk [vmem:[#allocation2 + $0x1c8] sm:$0xff] %vm3284, %v3207
      %3343 = vst.msk [vmem:[#allocation2 + $0x1d0] sm:$0xff] %vm3284, %v3209
      %3344 = vst.msk [vmem:[#allocation2 + $0x1d8] sm:$0xff] %vm3284, %v3211
      %3345 = vst.msk [vmem:[#allocation2 + $0x1e0] sm:$0xff] %vm3284, %v3213
      %3346 = vst.msk [vmem:[#allocation2 + $0x1e8] sm:$0xff] %vm3284, %v3215
      %3347 = vst.msk [vmem:[#allocation2 + $0x1f0] sm:$0xff] %vm3284, %v3217
      %3348 = vst.msk [vmem:[#allocation2 + $0x1f8] sm:$0xff] %vm3284, %v3219
      %s3349 = scalar_lea.vmem %s137, 160
      %v3350 = vld [vmem:[%s3349] sm:$0xff]
      %v3351 = vld [vmem:[%s3349 + $0x10] sm:$0xff]
      %v3352 = vld [vmem:[%s3349 + $0x20] sm:$0xff]
      %v3353 = vld [vmem:[%s3349 + $0x30] sm:$0xff]
      %v3354 = vld [vmem:[%s3349 + $0x40] sm:$0xff]
      %v3355 = vld [vmem:[%s3349 + $0x50] sm:$0xff]
      %v3356 = vld [vmem:[%s3349 + $0x60] sm:$0xff]
      %v3357 = vld [vmem:[%s3349 + $0x70] sm:$0xff]
      %v3358 = vld [vmem:[%s3349 + $0xa0] sm:$0xff]
      %v3359 = vld [vmem:[%s3349 + $0xb0] sm:$0xff]
      %v3360 = vld [vmem:[%s3349 + $0xc0] sm:$0xff]
      %v3361 = vld [vmem:[%s3349 + $0xd0] sm:$0xff]
      %v3362 = vld [vmem:[%s3349 + $0xe0] sm:$0xff]
      %v3363 = vld [vmem:[%s3349 + $0xf0] sm:$0xff]
      %v3364 = vld [vmem:[%s3349 + $0x100] sm:$0xff]
      %v3365 = vld [vmem:[%s3349 + $0x110] sm:$0xff]
      %v3366 = vld [vmem:[%s3349 + $0x140] sm:$0xff]
      %v3367 = vld [vmem:[%s3349 + $0x150] sm:$0xff]
      %v3368 = vld [vmem:[%s3349 + $0x160] sm:$0xff]
      %v3369 = vld [vmem:[%s3349 + $0x170] sm:$0xff]
      %v3370 = vld [vmem:[%s3349 + $0x180] sm:$0xff]
      %v3371 = vld [vmem:[%s3349 + $0x190] sm:$0xff]
      %v3372 = vld [vmem:[%s3349 + $0x1a0] sm:$0xff]
      %v3373 = vld [vmem:[%s3349 + $0x1b0] sm:$0xff]
      %v3374 = vld [vmem:[%s3349 + $0x1e0] sm:$0xff]
      %v3375 = vld [vmem:[%s3349 + $0x1f0] sm:$0xff]
      %v3376 = vld [vmem:[%s3349 + $0x200] sm:$0xff]
      %v3377 = vld [vmem:[%s3349 + $0x210] sm:$0xff]
      %v3378 = vld [vmem:[%s3349 + $0x220] sm:$0xff]
      %v3379 = vld [vmem:[%s3349 + $0x230] sm:$0xff]
      %v3380 = vld [vmem:[%s3349 + $0x240] sm:$0xff]
      %v3381 = vld [vmem:[%s3349 + $0x250] sm:$0xff]
      %v3382 = vld [vmem:[%s3349 + $0x280] sm:$0xff]
      %v3383 = vld [vmem:[%s3349 + $0x290] sm:$0xff]
      %v3384 = vld [vmem:[%s3349 + $0x2a0] sm:$0xff]
      %v3385 = vld [vmem:[%s3349 + $0x2b0] sm:$0xff]
      %v3386 = vld [vmem:[%s3349 + $0x2c0] sm:$0xff]
      %v3387 = vld [vmem:[%s3349 + $0x2d0] sm:$0xff]
      %v3388 = vld [vmem:[%s3349 + $0x2e0] sm:$0xff]
      %v3389 = vld [vmem:[%s3349 + $0x2f0] sm:$0xff]
      %v3390 = vld [vmem:[%s3349 + $0x320] sm:$0xff]
      %v3391 = vld [vmem:[%s3349 + $0x330] sm:$0xff]
      %v3392 = vld [vmem:[%s3349 + $0x340] sm:$0xff]
      %v3393 = vld [vmem:[%s3349 + $0x350] sm:$0xff]
      %v3394 = vld [vmem:[%s3349 + $0x360] sm:$0xff]
      %v3395 = vld [vmem:[%s3349 + $0x370] sm:$0xff]
      %v3396 = vld [vmem:[%s3349 + $0x380] sm:$0xff]
      %v3397 = vld [vmem:[%s3349 + $0x390] sm:$0xff]
      %v3398 = vld [vmem:[%s3349 + $0x3c0] sm:$0xff]
      %v3399 = vld [vmem:[%s3349 + $0x3d0] sm:$0xff]
      %v3400 = vld [vmem:[%s3349 + $0x3e0] sm:$0xff]
      %v3401 = vld [vmem:[%s3349 + $0x3f0] sm:$0xff]
      %v3402 = vld [vmem:[%s3349 + $0x400] sm:$0xff]
      %v3403 = vld [vmem:[%s3349 + $0x410] sm:$0xff]
      %v3404 = vld [vmem:[%s3349 + $0x420] sm:$0xff]
      %v3405 = vld [vmem:[%s3349 + $0x430] sm:$0xff]
      %v3406 = vld [vmem:[%s3349 + $0x460] sm:$0xff]
      %v3407 = vld [vmem:[%s3349 + $0x470] sm:$0xff]
      %v3408 = vld [vmem:[%s3349 + $0x480] sm:$0xff]
      %v3409 = vld [vmem:[%s3349 + $0x490] sm:$0xff]
      %v3410 = vld [vmem:[%s3349 + $0x4a0] sm:$0xff]
      %v3411 = vld [vmem:[%s3349 + $0x4b0] sm:$0xff]
      %v3412 = vld [vmem:[%s3349 + $0x4c0] sm:$0xff]
      %v3413 = vld [vmem:[%s3349 + $0x4d0] sm:$0xff]
      %v3414 = vld [vmem:[%s3349 + $0x1] sm:$0xff]
      %v3415 = vld [vmem:[%s3349 + $0x11] sm:$0xff]
      %v3416 = vld [vmem:[%s3349 + $0x21] sm:$0xff]
      %v3417 = vld [vmem:[%s3349 + $0x31] sm:$0xff]
      %v3418 = vld [vmem:[%s3349 + $0x41] sm:$0xff]
      %v3419 = vld [vmem:[%s3349 + $0x51] sm:$0xff]
      %v3420 = vld [vmem:[%s3349 + $0x61] sm:$0xff]
      %v3421 = vld [vmem:[%s3349 + $0x71] sm:$0xff]
      %v3422 = vld [vmem:[%s3349 + $0xa1] sm:$0xff]
      %v3423 = vld [vmem:[%s3349 + $0xb1] sm:$0xff]
      %v3424 = vld [vmem:[%s3349 + $0xc1] sm:$0xff]
      %v3425 = vld [vmem:[%s3349 + $0xd1] sm:$0xff]
      %v3426 = vld [vmem:[%s3349 + $0xe1] sm:$0xff]
      %v3427 = vld [vmem:[%s3349 + $0xf1] sm:$0xff]
      %v3428 = vld [vmem:[%s3349 + $0x101] sm:$0xff]
      %v3429 = vld [vmem:[%s3349 + $0x111] sm:$0xff]
      %v3430 = vld [vmem:[%s3349 + $0x141] sm:$0xff]
      %v3431 = vld [vmem:[%s3349 + $0x151] sm:$0xff]
      %v3432 = vld [vmem:[%s3349 + $0x161] sm:$0xff]
      %v3433 = vld [vmem:[%s3349 + $0x171] sm:$0xff]
      %v3434 = vld [vmem:[%s3349 + $0x181] sm:$0xff]
      %v3435 = vld [vmem:[%s3349 + $0x191] sm:$0xff]
      %v3436 = vld [vmem:[%s3349 + $0x1a1] sm:$0xff]
      %v3437 = vld [vmem:[%s3349 + $0x1b1] sm:$0xff]
      %v3438 = vld [vmem:[%s3349 + $0x1e1] sm:$0xff]
      %v3439 = vld [vmem:[%s3349 + $0x1f1] sm:$0xff]
      %v3440 = vld [vmem:[%s3349 + $0x201] sm:$0xff]
      %v3441 = vld [vmem:[%s3349 + $0x211] sm:$0xff]
      %v3442 = vld [vmem:[%s3349 + $0x221] sm:$0xff]
      %v3443 = vld [vmem:[%s3349 + $0x231] sm:$0xff]
      %v3444 = vld [vmem:[%s3349 + $0x241] sm:$0xff]
      %v3445 = vld [vmem:[%s3349 + $0x251] sm:$0xff]
      %v3446 = vld [vmem:[%s3349 + $0x281] sm:$0xff]
      %v3447 = vld [vmem:[%s3349 + $0x291] sm:$0xff]
      %v3448 = vld [vmem:[%s3349 + $0x2a1] sm:$0xff]
      %v3449 = vld [vmem:[%s3349 + $0x2b1] sm:$0xff]
      %v3450 = vld [vmem:[%s3349 + $0x2c1] sm:$0xff]
      %v3451 = vld [vmem:[%s3349 + $0x2d1] sm:$0xff]
      %v3452 = vld [vmem:[%s3349 + $0x2e1] sm:$0xff]
      %v3453 = vld [vmem:[%s3349 + $0x2f1] sm:$0xff]
      %v3454 = vld [vmem:[%s3349 + $0x321] sm:$0xff]
      %v3455 = vld [vmem:[%s3349 + $0x331] sm:$0xff]
      %v3456 = vld [vmem:[%s3349 + $0x341] sm:$0xff]
      %v3457 = vld [vmem:[%s3349 + $0x351] sm:$0xff]
      %v3458 = vld [vmem:[%s3349 + $0x361] sm:$0xff]
      %v3459 = vld [vmem:[%s3349 + $0x371] sm:$0xff]
      %v3460 = vld [vmem:[%s3349 + $0x381] sm:$0xff]
      %v3461 = vld [vmem:[%s3349 + $0x391] sm:$0xff]
      %v3462 = vld [vmem:[%s3349 + $0x3c1] sm:$0xff]
      %v3463 = vld [vmem:[%s3349 + $0x3d1] sm:$0xff]
      %v3464 = vld [vmem:[%s3349 + $0x3e1] sm:$0xff]
      %v3465 = vld [vmem:[%s3349 + $0x3f1] sm:$0xff]
      %v3466 = vld [vmem:[%s3349 + $0x401] sm:$0xff]
      %v3467 = vld [vmem:[%s3349 + $0x411] sm:$0xff]
      %v3468 = vld [vmem:[%s3349 + $0x421] sm:$0xff]
      %v3469 = vld [vmem:[%s3349 + $0x431] sm:$0xff]
      %v3470 = vld [vmem:[%s3349 + $0x461] sm:$0xff]
      %v3471 = vld [vmem:[%s3349 + $0x471] sm:$0xff]
      %v3472 = vld [vmem:[%s3349 + $0x481] sm:$0xff]
      %v3473 = vld [vmem:[%s3349 + $0x491] sm:$0xff]
      %v3474 = vld [vmem:[%s3349 + $0x4a1] sm:$0xff]
      %v3475 = vld [vmem:[%s3349 + $0x4b1] sm:$0xff]
      %v3476 = vld [vmem:[%s3349 + $0x4c1] sm:$0xff]
      %v3477 = vld [vmem:[%s3349 + $0x4d1] sm:$0xff]
      %v3478 = vld [vmem:[%s3349 + $0x2] sm:$0xff]
      %v3479 = vld [vmem:[%s3349 + $0x12] sm:$0xff]
      %v3480 = vld [vmem:[%s3349 + $0x22] sm:$0xff]
      %v3481 = vld [vmem:[%s3349 + $0x32] sm:$0xff]
      %v3482 = vld [vmem:[%s3349 + $0x42] sm:$0xff]
      %v3483 = vld [vmem:[%s3349 + $0x52] sm:$0xff]
      %v3484 = vld [vmem:[%s3349 + $0x62] sm:$0xff]
      %v3485 = vld [vmem:[%s3349 + $0x72] sm:$0xff]
      %v3486 = vld [vmem:[%s3349 + $0xa2] sm:$0xff]
      %v3487 = vld [vmem:[%s3349 + $0xb2] sm:$0xff]
      %v3488 = vld [vmem:[%s3349 + $0xc2] sm:$0xff]
      %v3489 = vld [vmem:[%s3349 + $0xd2] sm:$0xff]
      %v3490 = vld [vmem:[%s3349 + $0xe2] sm:$0xff]
      %v3491 = vld [vmem:[%s3349 + $0xf2] sm:$0xff]
      %v3492 = vld [vmem:[%s3349 + $0x102] sm:$0xff]
      %v3493 = vld [vmem:[%s3349 + $0x112] sm:$0xff]
      %v3494 = vld [vmem:[%s3349 + $0x142] sm:$0xff]
      %v3495 = vld [vmem:[%s3349 + $0x152] sm:$0xff]
      %v3496 = vld [vmem:[%s3349 + $0x162] sm:$0xff]
      %v3497 = vld [vmem:[%s3349 + $0x172] sm:$0xff]
      %v3498 = vld [vmem:[%s3349 + $0x182] sm:$0xff]
      %v3499 = vld [vmem:[%s3349 + $0x192] sm:$0xff]
      %v3500 = vld [vmem:[%s3349 + $0x1a2] sm:$0xff]
      %v3501 = vld [vmem:[%s3349 + $0x1b2] sm:$0xff]
      %v3502 = vld [vmem:[%s3349 + $0x1e2] sm:$0xff]
      %v3503 = vld [vmem:[%s3349 + $0x1f2] sm:$0xff]
      %v3504 = vld [vmem:[%s3349 + $0x202] sm:$0xff]
      %v3505 = vld [vmem:[%s3349 + $0x212] sm:$0xff]
      %v3506 = vld [vmem:[%s3349 + $0x222] sm:$0xff]
      %v3507 = vld [vmem:[%s3349 + $0x232] sm:$0xff]
      %v3508 = vld [vmem:[%s3349 + $0x242] sm:$0xff]
      %v3509 = vld [vmem:[%s3349 + $0x252] sm:$0xff]
      %v3510 = vld [vmem:[%s3349 + $0x282] sm:$0xff]
      %v3511 = vld [vmem:[%s3349 + $0x292] sm:$0xff]
      %v3512 = vld [vmem:[%s3349 + $0x2a2] sm:$0xff]
      %v3513 = vld [vmem:[%s3349 + $0x2b2] sm:$0xff]
      %v3514 = vld [vmem:[%s3349 + $0x2c2] sm:$0xff]
      %v3515 = vld [vmem:[%s3349 + $0x2d2] sm:$0xff]
      %v3516 = vld [vmem:[%s3349 + $0x2e2] sm:$0xff]
      %v3517 = vld [vmem:[%s3349 + $0x2f2] sm:$0xff]
      %v3518 = vld [vmem:[%s3349 + $0x322] sm:$0xff]
      %v3519 = vld [vmem:[%s3349 + $0x332] sm:$0xff]
      %v3520 = vld [vmem:[%s3349 + $0x342] sm:$0xff]
      %v3521 = vld [vmem:[%s3349 + $0x352] sm:$0xff]
      %v3522 = vld [vmem:[%s3349 + $0x362] sm:$0xff]
      %v3523 = vld [vmem:[%s3349 + $0x372] sm:$0xff]
      %v3524 = vld [vmem:[%s3349 + $0x382] sm:$0xff]
      %v3525 = vld [vmem:[%s3349 + $0x392] sm:$0xff]
      %v3526 = vld [vmem:[%s3349 + $0x3c2] sm:$0xff]
      %v3527 = vld [vmem:[%s3349 + $0x3d2] sm:$0xff]
      %v3528 = vld [vmem:[%s3349 + $0x3e2] sm:$0xff]
      %v3529 = vld [vmem:[%s3349 + $0x3f2] sm:$0xff]
      %v3530 = vld [vmem:[%s3349 + $0x402] sm:$0xff]
      %v3531 = vld [vmem:[%s3349 + $0x412] sm:$0xff]
      %v3532 = vld [vmem:[%s3349 + $0x422] sm:$0xff]
      %v3533 = vld [vmem:[%s3349 + $0x432] sm:$0xff]
      %v3534 = vld [vmem:[%s3349 + $0x462] sm:$0xff]
      %v3535 = vld [vmem:[%s3349 + $0x472] sm:$0xff]
      %v3536 = vld [vmem:[%s3349 + $0x482] sm:$0xff]
      %v3537 = vld [vmem:[%s3349 + $0x492] sm:$0xff]
      %v3538 = vld [vmem:[%s3349 + $0x4a2] sm:$0xff]
      %v3539 = vld [vmem:[%s3349 + $0x4b2] sm:$0xff]
      %v3540 = vld [vmem:[%s3349 + $0x4c2] sm:$0xff]
      %v3541 = vld [vmem:[%s3349 + $0x4d2] sm:$0xff]
      %3606 = vrot.lane.b32.xlu0 %v3414, 4
      %v3607 = vpop.permute.xlu0 %3606
      %3608 = vrot.lane.b32.xlu0 %v3415, 4
      %v3609 = vpop.permute.xlu0 %3608
      %3610 = vrot.lane.b32.xlu0 %v3416, 4
      %v3611 = vpop.permute.xlu0 %3610
      %3612 = vrot.lane.b32.xlu0 %v3417, 4
      %v3613 = vpop.permute.xlu0 %3612
      %3614 = vrot.lane.b32.xlu0 %v3418, 4
      %v3615 = vpop.permute.xlu0 %3614
      %3616 = vrot.lane.b32.xlu0 %v3419, 4
      %v3617 = vpop.permute.xlu0 %3616
      %3618 = vrot.lane.b32.xlu0 %v3420, 4
      %v3619 = vpop.permute.xlu0 %3618
      %3620 = vrot.lane.b32.xlu0 %v3421, 4
      %v3621 = vpop.permute.xlu0 %3620
      %3622 = vrot.lane.b32.xlu0 %v3422, 4
      %v3623 = vpop.permute.xlu0 %3622
      %3624 = vrot.lane.b32.xlu0 %v3423, 4
      %v3625 = vpop.permute.xlu0 %3624
      %3626 = vrot.lane.b32.xlu0 %v3424, 4
      %v3627 = vpop.permute.xlu0 %3626
      %3628 = vrot.lane.b32.xlu0 %v3425, 4
      %v3629 = vpop.permute.xlu0 %3628
      %3630 = vrot.lane.b32.xlu0 %v3426, 4
      %v3631 = vpop.permute.xlu0 %3630
      %3632 = vrot.lane.b32.xlu0 %v3427, 4
      %v3633 = vpop.permute.xlu0 %3632
      %3634 = vrot.lane.b32.xlu0 %v3428, 4
      %v3635 = vpop.permute.xlu0 %3634
      %3636 = vrot.lane.b32.xlu0 %v3429, 4
      %v3637 = vpop.permute.xlu0 %3636
      %3638 = vrot.lane.b32.xlu0 %v3430, 4
      %v3639 = vpop.permute.xlu0 %3638
      %3640 = vrot.lane.b32.xlu0 %v3431, 4
      %v3641 = vpop.permute.xlu0 %3640
      %3642 = vrot.lane.b32.xlu0 %v3432, 4
      %v3643 = vpop.permute.xlu0 %3642
      %3644 = vrot.lane.b32.xlu0 %v3433, 4
      %v3645 = vpop.permute.xlu0 %3644
      %3646 = vrot.lane.b32.xlu0 %v3434, 4
      %v3647 = vpop.permute.xlu0 %3646
      %3648 = vrot.lane.b32.xlu0 %v3435, 4
      %v3649 = vpop.permute.xlu0 %3648
      %3650 = vrot.lane.b32.xlu0 %v3436, 4
      %v3651 = vpop.permute.xlu0 %3650
      %3652 = vrot.lane.b32.xlu0 %v3437, 4
      %v3653 = vpop.permute.xlu0 %3652
      %3654 = vrot.lane.b32.xlu0 %v3438, 4
      %v3655 = vpop.permute.xlu0 %3654
      %3656 = vrot.lane.b32.xlu0 %v3439, 4
      %v3657 = vpop.permute.xlu0 %3656
      %3658 = vrot.lane.b32.xlu0 %v3440, 4
      %v3659 = vpop.permute.xlu0 %3658
      %3660 = vrot.lane.b32.xlu0 %v3441, 4
      %v3661 = vpop.permute.xlu0 %3660
      %3662 = vrot.lane.b32.xlu0 %v3442, 4
      %v3663 = vpop.permute.xlu0 %3662
      %3664 = vrot.lane.b32.xlu0 %v3443, 4
      %v3665 = vpop.permute.xlu0 %3664
      %3666 = vrot.lane.b32.xlu0 %v3444, 4
      %v3667 = vpop.permute.xlu0 %3666
      %3668 = vrot.lane.b32.xlu0 %v3445, 4
      %v3669 = vpop.permute.xlu0 %3668
      %3670 = vrot.lane.b32.xlu0 %v3446, 4
      %v3671 = vpop.permute.xlu0 %3670
      %3672 = vrot.lane.b32.xlu0 %v3447, 4
      %v3673 = vpop.permute.xlu0 %3672
      %3674 = vrot.lane.b32.xlu0 %v3448, 4
      %v3675 = vpop.permute.xlu0 %3674
      %3676 = vrot.lane.b32.xlu0 %v3449, 4
      %v3677 = vpop.permute.xlu0 %3676
      %3678 = vrot.lane.b32.xlu0 %v3450, 4
      %v3679 = vpop.permute.xlu0 %3678
      %3680 = vrot.lane.b32.xlu0 %v3451, 4
      %v3681 = vpop.permute.xlu0 %3680
      %3682 = vrot.lane.b32.xlu0 %v3452, 4
      %v3683 = vpop.permute.xlu0 %3682
      %3684 = vrot.lane.b32.xlu0 %v3453, 4
      %v3685 = vpop.permute.xlu0 %3684
      %3686 = vrot.lane.b32.xlu0 %v3454, 4
      %v3687 = vpop.permute.xlu0 %3686
      %3688 = vrot.lane.b32.xlu0 %v3455, 4
      %v3689 = vpop.permute.xlu0 %3688
      %3690 = vrot.lane.b32.xlu0 %v3456, 4
      %v3691 = vpop.permute.xlu0 %3690
      %3692 = vrot.lane.b32.xlu0 %v3457, 4
      %v3693 = vpop.permute.xlu0 %3692
      %3694 = vrot.lane.b32.xlu0 %v3458, 4
      %v3695 = vpop.permute.xlu0 %3694
      %3696 = vrot.lane.b32.xlu0 %v3459, 4
      %v3697 = vpop.permute.xlu0 %3696
      %3698 = vrot.lane.b32.xlu0 %v3460, 4
      %v3699 = vpop.permute.xlu0 %3698
      %3700 = vrot.lane.b32.xlu0 %v3461, 4
      %v3701 = vpop.permute.xlu0 %3700
      %3702 = vrot.lane.b32.xlu0 %v3462, 4
      %v3703 = vpop.permute.xlu0 %3702
      %3704 = vrot.lane.b32.xlu0 %v3463, 4
      %v3705 = vpop.permute.xlu0 %3704
      %3706 = vrot.lane.b32.xlu0 %v3464, 4
      %v3707 = vpop.permute.xlu0 %3706
      %3708 = vrot.lane.b32.xlu0 %v3465, 4
      %v3709 = vpop.permute.xlu0 %3708
      %3710 = vrot.lane.b32.xlu0 %v3466, 4
      %v3711 = vpop.permute.xlu0 %3710
      %3712 = vrot.lane.b32.xlu0 %v3467, 4
      %v3713 = vpop.permute.xlu0 %3712
      %3714 = vrot.lane.b32.xlu0 %v3468, 4
      %v3715 = vpop.permute.xlu0 %3714
      %3716 = vrot.lane.b32.xlu0 %v3469, 4
      %v3717 = vpop.permute.xlu0 %3716
      %3718 = vrot.lane.b32.xlu0 %v3470, 4
      %v3719 = vpop.permute.xlu0 %3718
      %3720 = vrot.lane.b32.xlu0 %v3471, 4
      %v3721 = vpop.permute.xlu0 %3720
      %3722 = vrot.lane.b32.xlu0 %v3472, 4
      %v3723 = vpop.permute.xlu0 %3722
      %3724 = vrot.lane.b32.xlu0 %v3473, 4
      %v3725 = vpop.permute.xlu0 %3724
      %3726 = vrot.lane.b32.xlu0 %v3474, 4
      %v3727 = vpop.permute.xlu0 %3726
      %3728 = vrot.lane.b32.xlu0 %v3475, 4
      %v3729 = vpop.permute.xlu0 %3728
      %3730 = vrot.lane.b32.xlu0 %v3476, 4
      %v3731 = vpop.permute.xlu0 %3730
      %3732 = vrot.lane.b32.xlu0 %v3477, 4
      %v3733 = vpop.permute.xlu0 %3732
      %3862 = vrot.lane.b32.xlu0 %v3478, 8
      %v3863 = vpop.permute.xlu0 %3862
      %3864 = vrot.lane.b32.xlu0 %v3479, 8
      %v3865 = vpop.permute.xlu0 %3864
      %3866 = vrot.lane.b32.xlu0 %v3480, 8
      %v3867 = vpop.permute.xlu0 %3866
      %3868 = vrot.lane.b32.xlu0 %v3481, 8
      %v3869 = vpop.permute.xlu0 %3868
      %3870 = vrot.lane.b32.xlu0 %v3482, 8
      %v3871 = vpop.permute.xlu0 %3870
      %3872 = vrot.lane.b32.xlu0 %v3483, 8
      %v3873 = vpop.permute.xlu0 %3872
      %3874 = vrot.lane.b32.xlu0 %v3484, 8
      %v3875 = vpop.permute.xlu0 %3874
      %3876 = vrot.lane.b32.xlu0 %v3485, 8
      %v3877 = vpop.permute.xlu0 %3876
      %3878 = vrot.lane.b32.xlu0 %v3486, 8
      %v3879 = vpop.permute.xlu0 %3878
      %3880 = vrot.lane.b32.xlu0 %v3487, 8
      %v3881 = vpop.permute.xlu0 %3880
      %3882 = vrot.lane.b32.xlu0 %v3488, 8
      %v3883 = vpop.permute.xlu0 %3882
      %3884 = vrot.lane.b32.xlu0 %v3489, 8
      %v3885 = vpop.permute.xlu0 %3884
      %3886 = vrot.lane.b32.xlu0 %v3490, 8
      %v3887 = vpop.permute.xlu0 %3886
      %3888 = vrot.lane.b32.xlu0 %v3491, 8
      %v3889 = vpop.permute.xlu0 %3888
      %3890 = vrot.lane.b32.xlu0 %v3492, 8
      %v3891 = vpop.permute.xlu0 %3890
      %3892 = vrot.lane.b32.xlu0 %v3493, 8
      %v3893 = vpop.permute.xlu0 %3892
      %3894 = vrot.lane.b32.xlu0 %v3494, 8
      %v3895 = vpop.permute.xlu0 %3894
      %3896 = vrot.lane.b32.xlu0 %v3495, 8
      %v3897 = vpop.permute.xlu0 %3896
      %3898 = vrot.lane.b32.xlu0 %v3496, 8
      %v3899 = vpop.permute.xlu0 %3898
      %3900 = vrot.lane.b32.xlu0 %v3497, 8
      %v3901 = vpop.permute.xlu0 %3900
      %3902 = vrot.lane.b32.xlu0 %v3498, 8
      %v3903 = vpop.permute.xlu0 %3902
      %3904 = vrot.lane.b32.xlu0 %v3499, 8
      %v3905 = vpop.permute.xlu0 %3904
      %3906 = vrot.lane.b32.xlu0 %v3500, 8
      %v3907 = vpop.permute.xlu0 %3906
      %3908 = vrot.lane.b32.xlu0 %v3501, 8
      %v3909 = vpop.permute.xlu0 %3908
      %3910 = vrot.lane.b32.xlu0 %v3502, 8
      %v3911 = vpop.permute.xlu0 %3910
      %3912 = vrot.lane.b32.xlu0 %v3503, 8
      %v3913 = vpop.permute.xlu0 %3912
      %3914 = vrot.lane.b32.xlu0 %v3504, 8
      %v3915 = vpop.permute.xlu0 %3914
      %3916 = vrot.lane.b32.xlu0 %v3505, 8
      %v3917 = vpop.permute.xlu0 %3916
      %3918 = vrot.lane.b32.xlu0 %v3506, 8
      %v3919 = vpop.permute.xlu0 %3918
      %3920 = vrot.lane.b32.xlu0 %v3507, 8
      %v3921 = vpop.permute.xlu0 %3920
      %3922 = vrot.lane.b32.xlu0 %v3508, 8
      %v3923 = vpop.permute.xlu0 %3922
      %3924 = vrot.lane.b32.xlu0 %v3509, 8
      %v3925 = vpop.permute.xlu0 %3924
      %3926 = vrot.lane.b32.xlu0 %v3510, 8
      %v3927 = vpop.permute.xlu0 %3926
      %3928 = vrot.lane.b32.xlu0 %v3511, 8
      %v3929 = vpop.permute.xlu0 %3928
      %3930 = vrot.lane.b32.xlu0 %v3512, 8
      %v3931 = vpop.permute.xlu0 %3930
      %3932 = vrot.lane.b32.xlu0 %v3513, 8
      %v3933 = vpop.permute.xlu0 %3932
      %3934 = vrot.lane.b32.xlu0 %v3514, 8
      %v3935 = vpop.permute.xlu0 %3934
      %3936 = vrot.lane.b32.xlu0 %v3515, 8
      %v3937 = vpop.permute.xlu0 %3936
      %3938 = vrot.lane.b32.xlu0 %v3516, 8
      %v3939 = vpop.permute.xlu0 %3938
      %3940 = vrot.lane.b32.xlu0 %v3517, 8
      %v3941 = vpop.permute.xlu0 %3940
      %3942 = vrot.lane.b32.xlu0 %v3518, 8
      %v3943 = vpop.permute.xlu0 %3942
      %3944 = vrot.lane.b32.xlu0 %v3519, 8
      %v3945 = vpop.permute.xlu0 %3944
      %3946 = vrot.lane.b32.xlu0 %v3520, 8
      %v3947 = vpop.permute.xlu0 %3946
      %3948 = vrot.lane.b32.xlu0 %v3521, 8
      %v3949 = vpop.permute.xlu0 %3948
      %3950 = vrot.lane.b32.xlu0 %v3522, 8
      %v3951 = vpop.permute.xlu0 %3950
      %3952 = vrot.lane.b32.xlu0 %v3523, 8
      %v3953 = vpop.permute.xlu0 %3952
      %3954 = vrot.lane.b32.xlu0 %v3524, 8
      %v3955 = vpop.permute.xlu0 %3954
      %3956 = vrot.lane.b32.xlu0 %v3525, 8
      %v3957 = vpop.permute.xlu0 %3956
      %3958 = vrot.lane.b32.xlu0 %v3526, 8
      %v3959 = vpop.permute.xlu0 %3958
      %3960 = vrot.lane.b32.xlu0 %v3527, 8
      %v3961 = vpop.permute.xlu0 %3960
      %3962 = vrot.lane.b32.xlu0 %v3528, 8
      %v3963 = vpop.permute.xlu0 %3962
      %3964 = vrot.lane.b32.xlu0 %v3529, 8
      %v3965 = vpop.permute.xlu0 %3964
      %3966 = vrot.lane.b32.xlu0 %v3530, 8
      %v3967 = vpop.permute.xlu0 %3966
      %3968 = vrot.lane.b32.xlu0 %v3531, 8
      %v3969 = vpop.permute.xlu0 %3968
      %3970 = vrot.lane.b32.xlu0 %v3532, 8
      %v3971 = vpop.permute.xlu0 %3970
      %3972 = vrot.lane.b32.xlu0 %v3533, 8
      %v3973 = vpop.permute.xlu0 %3972
      %3974 = vrot.lane.b32.xlu0 %v3534, 8
      %v3975 = vpop.permute.xlu0 %3974
      %3976 = vrot.lane.b32.xlu0 %v3535, 8
      %v3977 = vpop.permute.xlu0 %3976
      %3978 = vrot.lane.b32.xlu0 %v3536, 8
      %v3979 = vpop.permute.xlu0 %3978
      %3980 = vrot.lane.b32.xlu0 %v3537, 8
      %v3981 = vpop.permute.xlu0 %3980
      %3982 = vrot.lane.b32.xlu0 %v3538, 8
      %v3983 = vpop.permute.xlu0 %3982
      %3984 = vrot.lane.b32.xlu0 %v3539, 8
      %v3985 = vpop.permute.xlu0 %3984
      %3986 = vrot.lane.b32.xlu0 %v3540, 8
      %v3987 = vpop.permute.xlu0 %3986
      %3988 = vrot.lane.b32.xlu0 %v3541, 8
      %v3989 = vpop.permute.xlu0 %3988
      %v4054 = vsel %vm846, %v3350, %v3607
      %v4055 = vsel %vm846, %v3351, %v3609
      %v4056 = vsel %vm846, %v3352, %v3611
      %v4057 = vsel %vm846, %v3353, %v3613
      %v4058 = vsel %vm846, %v3354, %v3615
      %v4059 = vsel %vm846, %v3355, %v3617
      %v4060 = vsel %vm846, %v3356, %v3619
      %v4061 = vsel %vm846, %v3357, %v3621
      %v4062 = vsel %vm846, %v3358, %v3623
      %v4063 = vsel %vm846, %v3359, %v3625
      %v4064 = vsel %vm846, %v3360, %v3627
      %v4065 = vsel %vm846, %v3361, %v3629
      %v4066 = vsel %vm846, %v3362, %v3631
      %v4067 = vsel %vm846, %v3363, %v3633
      %v4068 = vsel %vm846, %v3364, %v3635
      %v4069 = vsel %vm846, %v3365, %v3637
      %v4070 = vsel %vm846, %v3366, %v3639
      %v4071 = vsel %vm846, %v3367, %v3641
      %v4072 = vsel %vm846, %v3368, %v3643
      %v4073 = vsel %vm846, %v3369, %v3645
      %v4074 = vsel %vm846, %v3370, %v3647
      %v4075 = vsel %vm846, %v3371, %v3649
      %v4076 = vsel %vm846, %v3372, %v3651
      %v4077 = vsel %vm846, %v3373, %v3653
      %v4078 = vsel %vm846, %v3374, %v3655
      %v4079 = vsel %vm846, %v3375, %v3657
      %v4080 = vsel %vm846, %v3376, %v3659
      %v4081 = vsel %vm846, %v3377, %v3661
      %v4082 = vsel %vm846, %v3378, %v3663
      %v4083 = vsel %vm846, %v3379, %v3665
      %v4084 = vsel %vm846, %v3380, %v3667
      %v4085 = vsel %vm846, %v3381, %v3669
      %v4086 = vsel %vm846, %v3382, %v3671
      %v4087 = vsel %vm846, %v3383, %v3673
      %v4088 = vsel %vm846, %v3384, %v3675
      %v4089 = vsel %vm846, %v3385, %v3677
      %v4090 = vsel %vm846, %v3386, %v3679
      %v4091 = vsel %vm846, %v3387, %v3681
      %v4092 = vsel %vm846, %v3388, %v3683
      %v4093 = vsel %vm846, %v3389, %v3685
      %v4094 = vsel %vm846, %v3390, %v3687
      %v4095 = vsel %vm846, %v3391, %v3689
      %v4096 = vsel %vm846, %v3392, %v3691
      %v4097 = vsel %vm846, %v3393, %v3693
      %v4098 = vsel %vm846, %v3394, %v3695
      %v4099 = vsel %vm846, %v3395, %v3697
      %v4100 = vsel %vm846, %v3396, %v3699
      %v4101 = vsel %vm846, %v3397, %v3701
      %v4102 = vsel %vm846, %v3398, %v3703
      %v4103 = vsel %vm846, %v3399, %v3705
      %v4104 = vsel %vm846, %v3400, %v3707
      %v4105 = vsel %vm846, %v3401, %v3709
      %v4106 = vsel %vm846, %v3402, %v3711
      %v4107 = vsel %vm846, %v3403, %v3713
      %v4108 = vsel %vm846, %v3404, %v3715
      %v4109 = vsel %vm846, %v3405, %v3717
      %v4110 = vsel %vm846, %v3406, %v3719
      %v4111 = vsel %vm846, %v3407, %v3721
      %v4112 = vsel %vm846, %v3408, %v3723
      %v4113 = vsel %vm846, %v3409, %v3725
      %v4114 = vsel %vm846, %v3410, %v3727
      %v4115 = vsel %vm846, %v3411, %v3729
      %v4116 = vsel %vm846, %v3412, %v3731
      %v4117 = vsel %vm846, %v3413, %v3733
      %v4118 = vsel %vm911, %v4054, %v3863
      %v4119 = vsel %vm911, %v4055, %v3865
      %v4120 = vsel %vm911, %v4056, %v3867
      %v4121 = vsel %vm911, %v4057, %v3869
      %v4122 = vsel %vm911, %v4058, %v3871
      %v4123 = vsel %vm911, %v4059, %v3873
      %v4124 = vsel %vm911, %v4060, %v3875
      %v4125 = vsel %vm911, %v4061, %v3877
      %v4126 = vsel %vm911, %v4062, %v3879
      %v4127 = vsel %vm911, %v4063, %v3881
      %v4128 = vsel %vm911, %v4064, %v3883
      %v4129 = vsel %vm911, %v4065, %v3885
      %v4130 = vsel %vm911, %v4066, %v3887
      %v4131 = vsel %vm911, %v4067, %v3889
      %v4132 = vsel %vm911, %v4068, %v3891
      %v4133 = vsel %vm911, %v4069, %v3893
      %v4134 = vsel %vm911, %v4070, %v3895
      %v4135 = vsel %vm911, %v4071, %v3897
      %v4136 = vsel %vm911, %v4072, %v3899
      %v4137 = vsel %vm911, %v4073, %v3901
      %v4138 = vsel %vm911, %v4074, %v3903
      %v4139 = vsel %vm911, %v4075, %v3905
      %v4140 = vsel %vm911, %v4076, %v3907
      %v4141 = vsel %vm911, %v4077, %v3909
      %v4142 = vsel %vm911, %v4078, %v3911
      %v4143 = vsel %vm911, %v4079, %v3913
      %v4144 = vsel %vm911, %v4080, %v3915
      %v4145 = vsel %vm911, %v4081, %v3917
      %v4146 = vsel %vm911, %v4082, %v3919
      %v4147 = vsel %vm911, %v4083, %v3921
      %v4148 = vsel %vm911, %v4084, %v3923
      %v4149 = vsel %vm911, %v4085, %v3925
      %v4150 = vsel %vm911, %v4086, %v3927
      %v4151 = vsel %vm911, %v4087, %v3929
      %v4152 = vsel %vm911, %v4088, %v3931
      %v4153 = vsel %vm911, %v4089, %v3933
      %v4154 = vsel %vm911, %v4090, %v3935
      %v4155 = vsel %vm911, %v4091, %v3937
      %v4156 = vsel %vm911, %v4092, %v3939
      %v4157 = vsel %vm911, %v4093, %v3941
      %v4158 = vsel %vm911, %v4094, %v3943
      %v4159 = vsel %vm911, %v4095, %v3945
      %v4160 = vsel %vm911, %v4096, %v3947
      %v4161 = vsel %vm911, %v4097, %v3949
      %v4162 = vsel %vm911, %v4098, %v3951
      %v4163 = vsel %vm911, %v4099, %v3953
      %v4164 = vsel %vm911, %v4100, %v3955
      %v4165 = vsel %vm911, %v4101, %v3957
      %v4166 = vsel %vm911, %v4102, %v3959
      %v4167 = vsel %vm911, %v4103, %v3961
      %v4168 = vsel %vm911, %v4104, %v3963
      %v4169 = vsel %vm911, %v4105, %v3965
      %v4170 = vsel %vm911, %v4106, %v3967
      %v4171 = vsel %vm911, %v4107, %v3969
      %v4172 = vsel %vm911, %v4108, %v3971
      %v4173 = vsel %vm911, %v4109, %v3973
      %v4174 = vsel %vm911, %v4110, %v3975
      %v4175 = vsel %vm911, %v4111, %v3977
      %v4176 = vsel %vm911, %v4112, %v3979
      %v4177 = vsel %vm911, %v4113, %v3981
      %v4178 = vsel %vm911, %v4114, %v3983
      %v4179 = vsel %vm911, %v4115, %v3985
      %v4180 = vsel %vm911, %v4116, %v3987
      %v4181 = vsel %vm911, %v4117, %v3989
      %4246 = vrot.lane.b32.xlu0 %v4118, 36
      %v4247 = vpop.permute.xlu0 %4246
      %4248 = vrot.lane.b32.xlu0 %v4119, 36
      %v4249 = vpop.permute.xlu0 %4248
      %4250 = vrot.lane.b32.xlu0 %v4120, 36
      %v4251 = vpop.permute.xlu0 %4250
      %4252 = vrot.lane.b32.xlu0 %v4121, 36
      %v4253 = vpop.permute.xlu0 %4252
      %4254 = vrot.lane.b32.xlu0 %v4122, 36
      %v4255 = vpop.permute.xlu0 %4254
      %4256 = vrot.lane.b32.xlu0 %v4123, 36
      %v4257 = vpop.permute.xlu0 %4256
      %4258 = vrot.lane.b32.xlu0 %v4124, 36
      %v4259 = vpop.permute.xlu0 %4258
      %4260 = vrot.lane.b32.xlu0 %v4125, 36
      %v4261 = vpop.permute.xlu0 %4260
      %4262 = vrot.lane.b32.xlu0 %v4126, 36
      %v4263 = vpop.permute.xlu0 %4262
      %4264 = vrot.lane.b32.xlu0 %v4127, 36
      %v4265 = vpop.permute.xlu0 %4264
      %4266 = vrot.lane.b32.xlu0 %v4128, 36
      %v4267 = vpop.permute.xlu0 %4266
      %4268 = vrot.lane.b32.xlu0 %v4129, 36
      %v4269 = vpop.permute.xlu0 %4268
      %4270 = vrot.lane.b32.xlu0 %v4130, 36
      %v4271 = vpop.permute.xlu0 %4270
      %4272 = vrot.lane.b32.xlu0 %v4131, 36
      %v4273 = vpop.permute.xlu0 %4272
      %4274 = vrot.lane.b32.xlu0 %v4132, 36
      %v4275 = vpop.permute.xlu0 %4274
      %4276 = vrot.lane.b32.xlu0 %v4133, 36
      %v4277 = vpop.permute.xlu0 %4276
      %4278 = vrot.lane.b32.xlu0 %v4134, 36
      %v4279 = vpop.permute.xlu0 %4278
      %4280 = vrot.lane.b32.xlu0 %v4135, 36
      %v4281 = vpop.permute.xlu0 %4280
      %4282 = vrot.lane.b32.xlu0 %v4136, 36
      %v4283 = vpop.permute.xlu0 %4282
      %4284 = vrot.lane.b32.xlu0 %v4137, 36
      %v4285 = vpop.permute.xlu0 %4284
      %4286 = vrot.lane.b32.xlu0 %v4138, 36
      %v4287 = vpop.permute.xlu0 %4286
      %4288 = vrot.lane.b32.xlu0 %v4139, 36
      %v4289 = vpop.permute.xlu0 %4288
      %4290 = vrot.lane.b32.xlu0 %v4140, 36
      %v4291 = vpop.permute.xlu0 %4290
      %4292 = vrot.lane.b32.xlu0 %v4141, 36
      %v4293 = vpop.permute.xlu0 %4292
      %4294 = vrot.lane.b32.xlu0 %v4142, 36
      %v4295 = vpop.permute.xlu0 %4294
      %4296 = vrot.lane.b32.xlu0 %v4143, 36
      %v4297 = vpop.permute.xlu0 %4296
      %4298 = vrot.lane.b32.xlu0 %v4144, 36
      %v4299 = vpop.permute.xlu0 %4298
      %4300 = vrot.lane.b32.xlu0 %v4145, 36
      %v4301 = vpop.permute.xlu0 %4300
      %4302 = vrot.lane.b32.xlu0 %v4146, 36
      %v4303 = vpop.permute.xlu0 %4302
      %4304 = vrot.lane.b32.xlu0 %v4147, 36
      %v4305 = vpop.permute.xlu0 %4304
      %4306 = vrot.lane.b32.xlu0 %v4148, 36
      %v4307 = vpop.permute.xlu0 %4306
      %4308 = vrot.lane.b32.xlu0 %v4149, 36
      %v4309 = vpop.permute.xlu0 %4308
      %4310 = vrot.lane.b32.xlu0 %v4150, 36
      %v4311 = vpop.permute.xlu0 %4310
      %4312 = vrot.lane.b32.xlu0 %v4151, 36
      %v4313 = vpop.permute.xlu0 %4312
      %4314 = vrot.lane.b32.xlu0 %v4152, 36
      %v4315 = vpop.permute.xlu0 %4314
      %4316 = vrot.lane.b32.xlu0 %v4153, 36
      %v4317 = vpop.permute.xlu0 %4316
      %4318 = vrot.lane.b32.xlu0 %v4154, 36
      %v4319 = vpop.permute.xlu0 %4318
      %4320 = vrot.lane.b32.xlu0 %v4155, 36
      %v4321 = vpop.permute.xlu0 %4320
      %4322 = vrot.lane.b32.xlu0 %v4156, 36
      %v4323 = vpop.permute.xlu0 %4322
      %4324 = vrot.lane.b32.xlu0 %v4157, 36
      %v4325 = vpop.permute.xlu0 %4324
      %4326 = vrot.lane.b32.xlu0 %v4158, 36
      %v4327 = vpop.permute.xlu0 %4326
      %4328 = vrot.lane.b32.xlu0 %v4159, 36
      %v4329 = vpop.permute.xlu0 %4328
      %4330 = vrot.lane.b32.xlu0 %v4160, 36
      %v4331 = vpop.permute.xlu0 %4330
      %4332 = vrot.lane.b32.xlu0 %v4161, 36
      %v4333 = vpop.permute.xlu0 %4332
      %4334 = vrot.lane.b32.xlu0 %v4162, 36
      %v4335 = vpop.permute.xlu0 %4334
      %4336 = vrot.lane.b32.xlu0 %v4163, 36
      %v4337 = vpop.permute.xlu0 %4336
      %4338 = vrot.lane.b32.xlu0 %v4164, 36
      %v4339 = vpop.permute.xlu0 %4338
      %4340 = vrot.lane.b32.xlu0 %v4165, 36
      %v4341 = vpop.permute.xlu0 %4340
      %4342 = vrot.lane.b32.xlu0 %v4166, 36
      %v4343 = vpop.permute.xlu0 %4342
      %4344 = vrot.lane.b32.xlu0 %v4167, 36
      %v4345 = vpop.permute.xlu0 %4344
      %4346 = vrot.lane.b32.xlu0 %v4168, 36
      %v4347 = vpop.permute.xlu0 %4346
      %4348 = vrot.lane.b32.xlu0 %v4169, 36
      %v4349 = vpop.permute.xlu0 %4348
      %4350 = vrot.lane.b32.xlu0 %v4170, 36
      %v4351 = vpop.permute.xlu0 %4350
      %4352 = vrot.lane.b32.xlu0 %v4171, 36
      %v4353 = vpop.permute.xlu0 %4352
      %4354 = vrot.lane.b32.xlu0 %v4172, 36
      %v4355 = vpop.permute.xlu0 %4354
      %4356 = vrot.lane.b32.xlu0 %v4173, 36
      %v4357 = vpop.permute.xlu0 %4356
      %4358 = vrot.lane.b32.xlu0 %v4174, 36
      %v4359 = vpop.permute.xlu0 %4358
      %4360 = vrot.lane.b32.xlu0 %v4175, 36
      %v4361 = vpop.permute.xlu0 %4360
      %4362 = vrot.lane.b32.xlu0 %v4176, 36
      %v4363 = vpop.permute.xlu0 %4362
      %4364 = vrot.lane.b32.xlu0 %v4177, 36
      %v4365 = vpop.permute.xlu0 %4364
      %4366 = vrot.lane.b32.xlu0 %v4178, 36
      %v4367 = vpop.permute.xlu0 %4366
      %4368 = vrot.lane.b32.xlu0 %v4179, 36
      %v4369 = vpop.permute.xlu0 %4368
      %4370 = vrot.lane.b32.xlu0 %v4180, 36
      %v4371 = vpop.permute.xlu0 %4370
      %4372 = vrot.lane.b32.xlu0 %v4181, 36
      %v4373 = vpop.permute.xlu0 %4372
      %vm4438 = vcmask 392480
      %4439 = vst.msk [vmem:[#allocation2] sm:$0xff] %vm4438, %v4247
      %4440 = vst.msk [vmem:[#allocation2 + $0x8] sm:$0xff] %vm4438, %v4249
      %4441 = vst.msk [vmem:[#allocation2 + $0x10] sm:$0xff] %vm4438, %v4251
      %4442 = vst.msk [vmem:[#allocation2 + $0x18] sm:$0xff] %vm4438, %v4253
      %4443 = vst.msk [vmem:[#allocation2 + $0x20] sm:$0xff] %vm4438, %v4255
      %4444 = vst.msk [vmem:[#allocation2 + $0x28] sm:$0xff] %vm4438, %v4257
      %4445 = vst.msk [vmem:[#allocation2 + $0x30] sm:$0xff] %vm4438, %v4259
      %4446 = vst.msk [vmem:[#allocation2 + $0x38] sm:$0xff] %vm4438, %v4261
      %4447 = vst.msk [vmem:[#allocation2 + $0x40] sm:$0xff] %vm4438, %v4263
      %4448 = vst.msk [vmem:[#allocation2 + $0x48] sm:$0xff] %vm4438, %v4265
      %4449 = vst.msk [vmem:[#allocation2 + $0x50] sm:$0xff] %vm4438, %v4267
      %4450 = vst.msk [vmem:[#allocation2 + $0x58] sm:$0xff] %vm4438, %v4269
      %4451 = vst.msk [vmem:[#allocation2 + $0x60] sm:$0xff] %vm4438, %v4271
      %4452 = vst.msk [vmem:[#allocation2 + $0x68] sm:$0xff] %vm4438, %v4273
      %4453 = vst.msk [vmem:[#allocation2 + $0x70] sm:$0xff] %vm4438, %v4275
      %4454 = vst.msk [vmem:[#allocation2 + $0x78] sm:$0xff] %vm4438, %v4277
      %4455 = vst.msk [vmem:[#allocation2 + $0x80] sm:$0xff] %vm4438, %v4279
      %4456 = vst.msk [vmem:[#allocation2 + $0x88] sm:$0xff] %vm4438, %v4281
      %4457 = vst.msk [vmem:[#allocation2 + $0x90] sm:$0xff] %vm4438, %v4283
      %4458 = vst.msk [vmem:[#allocation2 + $0x98] sm:$0xff] %vm4438, %v4285
      %4459 = vst.msk [vmem:[#allocation2 + $0xa0] sm:$0xff] %vm4438, %v4287
      %4460 = vst.msk [vmem:[#allocation2 + $0xa8] sm:$0xff] %vm4438, %v4289
      %4461 = vst.msk [vmem:[#allocation2 + $0xb0] sm:$0xff] %vm4438, %v4291
      %4462 = vst.msk [vmem:[#allocation2 + $0xb8] sm:$0xff] %vm4438, %v4293
      %4463 = vst.msk [vmem:[#allocation2 + $0xc0] sm:$0xff] %vm4438, %v4295
      %4464 = vst.msk [vmem:[#allocation2 + $0xc8] sm:$0xff] %vm4438, %v4297
      %4465 = vst.msk [vmem:[#allocation2 + $0xd0] sm:$0xff] %vm4438, %v4299
      %4466 = vst.msk [vmem:[#allocation2 + $0xd8] sm:$0xff] %vm4438, %v4301
      %4467 = vst.msk [vmem:[#allocation2 + $0xe0] sm:$0xff] %vm4438, %v4303
      %4468 = vst.msk [vmem:[#allocation2 + $0xe8] sm:$0xff] %vm4438, %v4305
      %4469 = vst.msk [vmem:[#allocation2 + $0xf0] sm:$0xff] %vm4438, %v4307
      %4470 = vst.msk [vmem:[#allocation2 + $0xf8] sm:$0xff] %vm4438, %v4309
      %4471 = vst.msk [vmem:[#allocation2 + $0x100] sm:$0xff] %vm4438, %v4311
      %4472 = vst.msk [vmem:[#allocation2 + $0x108] sm:$0xff] %vm4438, %v4313
      %4473 = vst.msk [vmem:[#allocation2 + $0x110] sm:$0xff] %vm4438, %v4315
      %4474 = vst.msk [vmem:[#allocation2 + $0x118] sm:$0xff] %vm4438, %v4317
      %4475 = vst.msk [vmem:[#allocation2 + $0x120] sm:$0xff] %vm4438, %v4319
      %4476 = vst.msk [vmem:[#allocation2 + $0x128] sm:$0xff] %vm4438, %v4321
      %4477 = vst.msk [vmem:[#allocation2 + $0x130] sm:$0xff] %vm4438, %v4323
      %4478 = vst.msk [vmem:[#allocation2 + $0x138] sm:$0xff] %vm4438, %v4325
      %4479 = vst.msk [vmem:[#allocation2 + $0x140] sm:$0xff] %vm4438, %v4327
      %4480 = vst.msk [vmem:[#allocation2 + $0x148] sm:$0xff] %vm4438, %v4329
      %4481 = vst.msk [vmem:[#allocation2 + $0x150] sm:$0xff] %vm4438, %v4331
      %4482 = vst.msk [vmem:[#allocation2 + $0x158] sm:$0xff] %vm4438, %v4333
      %4483 = vst.msk [vmem:[#allocation2 + $0x160] sm:$0xff] %vm4438, %v4335
      %4484 = vst.msk [vmem:[#allocation2 + $0x168] sm:$0xff] %vm4438, %v4337
      %4485 = vst.msk [vmem:[#allocation2 + $0x170] sm:$0xff] %vm4438, %v4339
      %4486 = vst.msk [vmem:[#allocation2 + $0x178] sm:$0xff] %vm4438, %v4341
      %4487 = vst.msk [vmem:[#allocation2 + $0x180] sm:$0xff] %vm4438, %v4343
      %4488 = vst.msk [vmem:[#allocation2 + $0x188] sm:$0xff] %vm4438, %v4345
      %4489 = vst.msk [vmem:[#allocation2 + $0x190] sm:$0xff] %vm4438, %v4347
      %4490 = vst.msk [vmem:[#allocation2 + $0x198] sm:$0xff] %vm4438, %v4349
      %4491 = vst.msk [vmem:[#allocation2 + $0x1a0] sm:$0xff] %vm4438, %v4351
      %4492 = vst.msk [vmem:[#allocation2 + $0x1a8] sm:$0xff] %vm4438, %v4353
      %4493 = vst.msk [vmem:[#allocation2 + $0x1b0] sm:$0xff] %vm4438, %v4355
      %4494 = vst.msk [vmem:[#allocation2 + $0x1b8] sm:$0xff] %vm4438, %v4357
      %4495 = vst.msk [vmem:[#allocation2 + $0x1c0] sm:$0xff] %vm4438, %v4359
      %4496 = vst.msk [vmem:[#allocation2 + $0x1c8] sm:$0xff] %vm4438, %v4361
      %4497 = vst.msk [vmem:[#allocation2 + $0x1d0] sm:$0xff] %vm4438, %v4363
      %4498 = vst.msk [vmem:[#allocation2 + $0x1d8] sm:$0xff] %vm4438, %v4365
      %4499 = vst.msk [vmem:[#allocation2 + $0x1e0] sm:$0xff] %vm4438, %v4367
      %4500 = vst.msk [vmem:[#allocation2 + $0x1e8] sm:$0xff] %vm4438, %v4369
      %4501 = vst.msk [vmem:[#allocation2 + $0x1f0] sm:$0xff] %vm4438, %v4371
      %4502 = vst.msk [vmem:[#allocation2 + $0x1f8] sm:$0xff] %vm4438, %v4373
      %s4503 = scalar_lea.vmem %s137, 176
      %v4504 = vld [vmem:[%s4503] sm:$0xff]
      %v4505 = vld [vmem:[%s4503 + $0x10] sm:$0xff]
      %v4506 = vld [vmem:[%s4503 + $0x20] sm:$0xff]
      %v4507 = vld [vmem:[%s4503 + $0x30] sm:$0xff]
      %v4508 = vld [vmem:[%s4503 + $0x40] sm:$0xff]
      %v4509 = vld [vmem:[%s4503 + $0x50] sm:$0xff]
      %v4510 = vld [vmem:[%s4503 + $0x60] sm:$0xff]
      %v4511 = vld [vmem:[%s4503 + $0x70] sm:$0xff]
      %v4512 = vld [vmem:[%s4503 + $0xa0] sm:$0xff]
      %v4513 = vld [vmem:[%s4503 + $0xb0] sm:$0xff]
      %v4514 = vld [vmem:[%s4503 + $0xc0] sm:$0xff]
      %v4515 = vld [vmem:[%s4503 + $0xd0] sm:$0xff]
      %v4516 = vld [vmem:[%s4503 + $0xe0] sm:$0xff]
      %v4517 = vld [vmem:[%s4503 + $0xf0] sm:$0xff]
      %v4518 = vld [vmem:[%s4503 + $0x100] sm:$0xff]
      %v4519 = vld [vmem:[%s4503 + $0x110] sm:$0xff]
      %v4520 = vld [vmem:[%s4503 + $0x140] sm:$0xff]
      %v4521 = vld [vmem:[%s4503 + $0x150] sm:$0xff]
      %v4522 = vld [vmem:[%s4503 + $0x160] sm:$0xff]
      %v4523 = vld [vmem:[%s4503 + $0x170] sm:$0xff]
      %v4524 = vld [vmem:[%s4503 + $0x180] sm:$0xff]
      %v4525 = vld [vmem:[%s4503 + $0x190] sm:$0xff]
      %v4526 = vld [vmem:[%s4503 + $0x1a0] sm:$0xff]
      %v4527 = vld [vmem:[%s4503 + $0x1b0] sm:$0xff]
      %v4528 = vld [vmem:[%s4503 + $0x1e0] sm:$0xff]
      %v4529 = vld [vmem:[%s4503 + $0x1f0] sm:$0xff]
      %v4530 = vld [vmem:[%s4503 + $0x200] sm:$0xff]
      %v4531 = vld [vmem:[%s4503 + $0x210] sm:$0xff]
      %v4532 = vld [vmem:[%s4503 + $0x220] sm:$0xff]
      %v4533 = vld [vmem:[%s4503 + $0x230] sm:$0xff]
      %v4534 = vld [vmem:[%s4503 + $0x240] sm:$0xff]
      %v4535 = vld [vmem:[%s4503 + $0x250] sm:$0xff]
      %v4536 = vld [vmem:[%s4503 + $0x280] sm:$0xff]
      %v4537 = vld [vmem:[%s4503 + $0x290] sm:$0xff]
      %v4538 = vld [vmem:[%s4503 + $0x2a0] sm:$0xff]
      %v4539 = vld [vmem:[%s4503 + $0x2b0] sm:$0xff]
      %v4540 = vld [vmem:[%s4503 + $0x2c0] sm:$0xff]
      %v4541 = vld [vmem:[%s4503 + $0x2d0] sm:$0xff]
      %v4542 = vld [vmem:[%s4503 + $0x2e0] sm:$0xff]
      %v4543 = vld [vmem:[%s4503 + $0x2f0] sm:$0xff]
      %v4544 = vld [vmem:[%s4503 + $0x320] sm:$0xff]
      %v4545 = vld [vmem:[%s4503 + $0x330] sm:$0xff]
      %v4546 = vld [vmem:[%s4503 + $0x340] sm:$0xff]
      %v4547 = vld [vmem:[%s4503 + $0x350] sm:$0xff]
      %v4548 = vld [vmem:[%s4503 + $0x360] sm:$0xff]
      %v4549 = vld [vmem:[%s4503 + $0x370] sm:$0xff]
      %v4550 = vld [vmem:[%s4503 + $0x380] sm:$0xff]
      %v4551 = vld [vmem:[%s4503 + $0x390] sm:$0xff]
      %v4552 = vld [vmem:[%s4503 + $0x3c0] sm:$0xff]
      %v4553 = vld [vmem:[%s4503 + $0x3d0] sm:$0xff]
      %v4554 = vld [vmem:[%s4503 + $0x3e0] sm:$0xff]
      %v4555 = vld [vmem:[%s4503 + $0x3f0] sm:$0xff]
      %v4556 = vld [vmem:[%s4503 + $0x400] sm:$0xff]
      %v4557 = vld [vmem:[%s4503 + $0x410] sm:$0xff]
      %v4558 = vld [vmem:[%s4503 + $0x420] sm:$0xff]
      %v4559 = vld [vmem:[%s4503 + $0x430] sm:$0xff]
      %v4560 = vld [vmem:[%s4503 + $0x460] sm:$0xff]
      %v4561 = vld [vmem:[%s4503 + $0x470] sm:$0xff]
      %v4562 = vld [vmem:[%s4503 + $0x480] sm:$0xff]
      %v4563 = vld [vmem:[%s4503 + $0x490] sm:$0xff]
      %v4564 = vld [vmem:[%s4503 + $0x4a0] sm:$0xff]
      %v4565 = vld [vmem:[%s4503 + $0x4b0] sm:$0xff]
      %v4566 = vld [vmem:[%s4503 + $0x4c0] sm:$0xff]
      %v4567 = vld [vmem:[%s4503 + $0x4d0] sm:$0xff]
      %v4568 = vld [vmem:[%s4503 + $0x1] sm:$0xff]
      %v4569 = vld [vmem:[%s4503 + $0x11] sm:$0xff]
      %v4570 = vld [vmem:[%s4503 + $0x21] sm:$0xff]
      %v4571 = vld [vmem:[%s4503 + $0x31] sm:$0xff]
      %v4572 = vld [vmem:[%s4503 + $0x41] sm:$0xff]
      %v4573 = vld [vmem:[%s4503 + $0x51] sm:$0xff]
      %v4574 = vld [vmem:[%s4503 + $0x61] sm:$0xff]
      %v4575 = vld [vmem:[%s4503 + $0x71] sm:$0xff]
      %v4576 = vld [vmem:[%s4503 + $0xa1] sm:$0xff]
      %v4577 = vld [vmem:[%s4503 + $0xb1] sm:$0xff]
      %v4578 = vld [vmem:[%s4503 + $0xc1] sm:$0xff]
      %v4579 = vld [vmem:[%s4503 + $0xd1] sm:$0xff]
      %v4580 = vld [vmem:[%s4503 + $0xe1] sm:$0xff]
      %v4581 = vld [vmem:[%s4503 + $0xf1] sm:$0xff]
      %v4582 = vld [vmem:[%s4503 + $0x101] sm:$0xff]
      %v4583 = vld [vmem:[%s4503 + $0x111] sm:$0xff]
      %v4584 = vld [vmem:[%s4503 + $0x141] sm:$0xff]
      %v4585 = vld [vmem:[%s4503 + $0x151] sm:$0xff]
      %v4586 = vld [vmem:[%s4503 + $0x161] sm:$0xff]
      %v4587 = vld [vmem:[%s4503 + $0x171] sm:$0xff]
      %v4588 = vld [vmem:[%s4503 + $0x181] sm:$0xff]
      %v4589 = vld [vmem:[%s4503 + $0x191] sm:$0xff]
      %v4590 = vld [vmem:[%s4503 + $0x1a1] sm:$0xff]
      %v4591 = vld [vmem:[%s4503 + $0x1b1] sm:$0xff]
      %v4592 = vld [vmem:[%s4503 + $0x1e1] sm:$0xff]
      %v4593 = vld [vmem:[%s4503 + $0x1f1] sm:$0xff]
      %v4594 = vld [vmem:[%s4503 + $0x201] sm:$0xff]
      %v4595 = vld [vmem:[%s4503 + $0x211] sm:$0xff]
      %v4596 = vld [vmem:[%s4503 + $0x221] sm:$0xff]
      %v4597 = vld [vmem:[%s4503 + $0x231] sm:$0xff]
      %v4598 = vld [vmem:[%s4503 + $0x241] sm:$0xff]
      %v4599 = vld [vmem:[%s4503 + $0x251] sm:$0xff]
      %v4600 = vld [vmem:[%s4503 + $0x281] sm:$0xff]
      %v4601 = vld [vmem:[%s4503 + $0x291] sm:$0xff]
      %v4602 = vld [vmem:[%s4503 + $0x2a1] sm:$0xff]
      %v4603 = vld [vmem:[%s4503 + $0x2b1] sm:$0xff]
      %v4604 = vld [vmem:[%s4503 + $0x2c1] sm:$0xff]
      %v4605 = vld [vmem:[%s4503 + $0x2d1] sm:$0xff]
      %v4606 = vld [vmem:[%s4503 + $0x2e1] sm:$0xff]
      %v4607 = vld [vmem:[%s4503 + $0x2f1] sm:$0xff]
      %v4608 = vld [vmem:[%s4503 + $0x321] sm:$0xff]
      %v4609 = vld [vmem:[%s4503 + $0x331] sm:$0xff]
      %v4610 = vld [vmem:[%s4503 + $0x341] sm:$0xff]
      %v4611 = vld [vmem:[%s4503 + $0x351] sm:$0xff]
      %v4612 = vld [vmem:[%s4503 + $0x361] sm:$0xff]
      %v4613 = vld [vmem:[%s4503 + $0x371] sm:$0xff]
      %v4614 = vld [vmem:[%s4503 + $0x381] sm:$0xff]
      %v4615 = vld [vmem:[%s4503 + $0x391] sm:$0xff]
      %v4616 = vld [vmem:[%s4503 + $0x3c1] sm:$0xff]
      %v4617 = vld [vmem:[%s4503 + $0x3d1] sm:$0xff]
      %v4618 = vld [vmem:[%s4503 + $0x3e1] sm:$0xff]
      %v4619 = vld [vmem:[%s4503 + $0x3f1] sm:$0xff]
      %v4620 = vld [vmem:[%s4503 + $0x401] sm:$0xff]
      %v4621 = vld [vmem:[%s4503 + $0x411] sm:$0xff]
      %v4622 = vld [vmem:[%s4503 + $0x421] sm:$0xff]
      %v4623 = vld [vmem:[%s4503 + $0x431] sm:$0xff]
      %v4624 = vld [vmem:[%s4503 + $0x461] sm:$0xff]
      %v4625 = vld [vmem:[%s4503 + $0x471] sm:$0xff]
      %v4626 = vld [vmem:[%s4503 + $0x481] sm:$0xff]
      %v4627 = vld [vmem:[%s4503 + $0x491] sm:$0xff]
      %v4628 = vld [vmem:[%s4503 + $0x4a1] sm:$0xff]
      %v4629 = vld [vmem:[%s4503 + $0x4b1] sm:$0xff]
      %v4630 = vld [vmem:[%s4503 + $0x4c1] sm:$0xff]
      %v4631 = vld [vmem:[%s4503 + $0x4d1] sm:$0xff]
      %v4632 = vld [vmem:[%s4503 + $0x2] sm:$0xff]
      %v4633 = vld [vmem:[%s4503 + $0x12] sm:$0xff]
      %v4634 = vld [vmem:[%s4503 + $0x22] sm:$0xff]
      %v4635 = vld [vmem:[%s4503 + $0x32] sm:$0xff]
      %v4636 = vld [vmem:[%s4503 + $0x42] sm:$0xff]
      %v4637 = vld [vmem:[%s4503 + $0x52] sm:$0xff]
      %v4638 = vld [vmem:[%s4503 + $0x62] sm:$0xff]
      %v4639 = vld [vmem:[%s4503 + $0x72] sm:$0xff]
      %v4640 = vld [vmem:[%s4503 + $0xa2] sm:$0xff]
      %v4641 = vld [vmem:[%s4503 + $0xb2] sm:$0xff]
      %v4642 = vld [vmem:[%s4503 + $0xc2] sm:$0xff]
      %v4643 = vld [vmem:[%s4503 + $0xd2] sm:$0xff]
      %v4644 = vld [vmem:[%s4503 + $0xe2] sm:$0xff]
      %v4645 = vld [vmem:[%s4503 + $0xf2] sm:$0xff]
      %v4646 = vld [vmem:[%s4503 + $0x102] sm:$0xff]
      %v4647 = vld [vmem:[%s4503 + $0x112] sm:$0xff]
      %v4648 = vld [vmem:[%s4503 + $0x142] sm:$0xff]
      %v4649 = vld [vmem:[%s4503 + $0x152] sm:$0xff]
      %v4650 = vld [vmem:[%s4503 + $0x162] sm:$0xff]
      %v4651 = vld [vmem:[%s4503 + $0x172] sm:$0xff]
      %v4652 = vld [vmem:[%s4503 + $0x182] sm:$0xff]
      %v4653 = vld [vmem:[%s4503 + $0x192] sm:$0xff]
      %v4654 = vld [vmem:[%s4503 + $0x1a2] sm:$0xff]
      %v4655 = vld [vmem:[%s4503 + $0x1b2] sm:$0xff]
      %v4656 = vld [vmem:[%s4503 + $0x1e2] sm:$0xff]
      %v4657 = vld [vmem:[%s4503 + $0x1f2] sm:$0xff]
      %v4658 = vld [vmem:[%s4503 + $0x202] sm:$0xff]
      %v4659 = vld [vmem:[%s4503 + $0x212] sm:$0xff]
      %v4660 = vld [vmem:[%s4503 + $0x222] sm:$0xff]
      %v4661 = vld [vmem:[%s4503 + $0x232] sm:$0xff]
      %v4662 = vld [vmem:[%s4503 + $0x242] sm:$0xff]
      %v4663 = vld [vmem:[%s4503 + $0x252] sm:$0xff]
      %v4664 = vld [vmem:[%s4503 + $0x282] sm:$0xff]
      %v4665 = vld [vmem:[%s4503 + $0x292] sm:$0xff]
      %v4666 = vld [vmem:[%s4503 + $0x2a2] sm:$0xff]
      %v4667 = vld [vmem:[%s4503 + $0x2b2] sm:$0xff]
      %v4668 = vld [vmem:[%s4503 + $0x2c2] sm:$0xff]
      %v4669 = vld [vmem:[%s4503 + $0x2d2] sm:$0xff]
      %v4670 = vld [vmem:[%s4503 + $0x2e2] sm:$0xff]
      %v4671 = vld [vmem:[%s4503 + $0x2f2] sm:$0xff]
      %v4672 = vld [vmem:[%s4503 + $0x322] sm:$0xff]
      %v4673 = vld [vmem:[%s4503 + $0x332] sm:$0xff]
      %v4674 = vld [vmem:[%s4503 + $0x342] sm:$0xff]
      %v4675 = vld [vmem:[%s4503 + $0x352] sm:$0xff]
      %v4676 = vld [vmem:[%s4503 + $0x362] sm:$0xff]
      %v4677 = vld [vmem:[%s4503 + $0x372] sm:$0xff]
      %v4678 = vld [vmem:[%s4503 + $0x382] sm:$0xff]
      %v4679 = vld [vmem:[%s4503 + $0x392] sm:$0xff]
      %v4680 = vld [vmem:[%s4503 + $0x3c2] sm:$0xff]
      %v4681 = vld [vmem:[%s4503 + $0x3d2] sm:$0xff]
      %v4682 = vld [vmem:[%s4503 + $0x3e2] sm:$0xff]
      %v4683 = vld [vmem:[%s4503 + $0x3f2] sm:$0xff]
      %v4684 = vld [vmem:[%s4503 + $0x402] sm:$0xff]
      %v4685 = vld [vmem:[%s4503 + $0x412] sm:$0xff]
      %v4686 = vld [vmem:[%s4503 + $0x422] sm:$0xff]
      %v4687 = vld [vmem:[%s4503 + $0x432] sm:$0xff]
      %v4688 = vld [vmem:[%s4503 + $0x462] sm:$0xff]
      %v4689 = vld [vmem:[%s4503 + $0x472] sm:$0xff]
      %v4690 = vld [vmem:[%s4503 + $0x482] sm:$0xff]
      %v4691 = vld [vmem:[%s4503 + $0x492] sm:$0xff]
      %v4692 = vld [vmem:[%s4503 + $0x4a2] sm:$0xff]
      %v4693 = vld [vmem:[%s4503 + $0x4b2] sm:$0xff]
      %v4694 = vld [vmem:[%s4503 + $0x4c2] sm:$0xff]
      %v4695 = vld [vmem:[%s4503 + $0x4d2] sm:$0xff]
      %4760 = vrot.lane.b32.xlu0 %v4568, 4
      %v4761 = vpop.permute.xlu0 %4760
      %4762 = vrot.lane.b32.xlu0 %v4569, 4
      %v4763 = vpop.permute.xlu0 %4762
      %4764 = vrot.lane.b32.xlu0 %v4570, 4
      %v4765 = vpop.permute.xlu0 %4764
      %4766 = vrot.lane.b32.xlu0 %v4571, 4
      %v4767 = vpop.permute.xlu0 %4766
      %4768 = vrot.lane.b32.xlu0 %v4572, 4
      %v4769 = vpop.permute.xlu0 %4768
      %4770 = vrot.lane.b32.xlu0 %v4573, 4
      %v4771 = vpop.permute.xlu0 %4770
      %4772 = vrot.lane.b32.xlu0 %v4574, 4
      %v4773 = vpop.permute.xlu0 %4772
      %4774 = vrot.lane.b32.xlu0 %v4575, 4
      %v4775 = vpop.permute.xlu0 %4774
      %4776 = vrot.lane.b32.xlu0 %v4576, 4
      %v4777 = vpop.permute.xlu0 %4776
      %4778 = vrot.lane.b32.xlu0 %v4577, 4
      %v4779 = vpop.permute.xlu0 %4778
      %4780 = vrot.lane.b32.xlu0 %v4578, 4
      %v4781 = vpop.permute.xlu0 %4780
      %4782 = vrot.lane.b32.xlu0 %v4579, 4
      %v4783 = vpop.permute.xlu0 %4782
      %4784 = vrot.lane.b32.xlu0 %v4580, 4
      %v4785 = vpop.permute.xlu0 %4784
      %4786 = vrot.lane.b32.xlu0 %v4581, 4
      %v4787 = vpop.permute.xlu0 %4786
      %4788 = vrot.lane.b32.xlu0 %v4582, 4
      %v4789 = vpop.permute.xlu0 %4788
      %4790 = vrot.lane.b32.xlu0 %v4583, 4
      %v4791 = vpop.permute.xlu0 %4790
      %4792 = vrot.lane.b32.xlu0 %v4584, 4
      %v4793 = vpop.permute.xlu0 %4792
      %4794 = vrot.lane.b32.xlu0 %v4585, 4
      %v4795 = vpop.permute.xlu0 %4794
      %4796 = vrot.lane.b32.xlu0 %v4586, 4
      %v4797 = vpop.permute.xlu0 %4796
      %4798 = vrot.lane.b32.xlu0 %v4587, 4
      %v4799 = vpop.permute.xlu0 %4798
      %4800 = vrot.lane.b32.xlu0 %v4588, 4
      %v4801 = vpop.permute.xlu0 %4800
      %4802 = vrot.lane.b32.xlu0 %v4589, 4
      %v4803 = vpop.permute.xlu0 %4802
      %4804 = vrot.lane.b32.xlu0 %v4590, 4
      %v4805 = vpop.permute.xlu0 %4804
      %4806 = vrot.lane.b32.xlu0 %v4591, 4
      %v4807 = vpop.permute.xlu0 %4806
      %4808 = vrot.lane.b32.xlu0 %v4592, 4
      %v4809 = vpop.permute.xlu0 %4808
      %4810 = vrot.lane.b32.xlu0 %v4593, 4
      %v4811 = vpop.permute.xlu0 %4810
      %4812 = vrot.lane.b32.xlu0 %v4594, 4
      %v4813 = vpop.permute.xlu0 %4812
      %4814 = vrot.lane.b32.xlu0 %v4595, 4
      %v4815 = vpop.permute.xlu0 %4814
      %4816 = vrot.lane.b32.xlu0 %v4596, 4
      %v4817 = vpop.permute.xlu0 %4816
      %4818 = vrot.lane.b32.xlu0 %v4597, 4
      %v4819 = vpop.permute.xlu0 %4818
      %4820 = vrot.lane.b32.xlu0 %v4598, 4
      %v4821 = vpop.permute.xlu0 %4820
      %4822 = vrot.lane.b32.xlu0 %v4599, 4
      %v4823 = vpop.permute.xlu0 %4822
      %4824 = vrot.lane.b32.xlu0 %v4600, 4
      %v4825 = vpop.permute.xlu0 %4824
      %4826 = vrot.lane.b32.xlu0 %v4601, 4
      %v4827 = vpop.permute.xlu0 %4826
      %4828 = vrot.lane.b32.xlu0 %v4602, 4
      %v4829 = vpop.permute.xlu0 %4828
      %4830 = vrot.lane.b32.xlu0 %v4603, 4
      %v4831 = vpop.permute.xlu0 %4830
      %4832 = vrot.lane.b32.xlu0 %v4604, 4
      %v4833 = vpop.permute.xlu0 %4832
      %4834 = vrot.lane.b32.xlu0 %v4605, 4
      %v4835 = vpop.permute.xlu0 %4834
      %4836 = vrot.lane.b32.xlu0 %v4606, 4
      %v4837 = vpop.permute.xlu0 %4836
      %4838 = vrot.lane.b32.xlu0 %v4607, 4
      %v4839 = vpop.permute.xlu0 %4838
      %4840 = vrot.lane.b32.xlu0 %v4608, 4
      %v4841 = vpop.permute.xlu0 %4840
      %4842 = vrot.lane.b32.xlu0 %v4609, 4
      %v4843 = vpop.permute.xlu0 %4842
      %4844 = vrot.lane.b32.xlu0 %v4610, 4
      %v4845 = vpop.permute.xlu0 %4844
      %4846 = vrot.lane.b32.xlu0 %v4611, 4
      %v4847 = vpop.permute.xlu0 %4846
      %4848 = vrot.lane.b32.xlu0 %v4612, 4
      %v4849 = vpop.permute.xlu0 %4848
      %4850 = vrot.lane.b32.xlu0 %v4613, 4
      %v4851 = vpop.permute.xlu0 %4850
      %4852 = vrot.lane.b32.xlu0 %v4614, 4
      %v4853 = vpop.permute.xlu0 %4852
      %4854 = vrot.lane.b32.xlu0 %v4615, 4
      %v4855 = vpop.permute.xlu0 %4854
      %4856 = vrot.lane.b32.xlu0 %v4616, 4
      %v4857 = vpop.permute.xlu0 %4856
      %4858 = vrot.lane.b32.xlu0 %v4617, 4
      %v4859 = vpop.permute.xlu0 %4858
      %4860 = vrot.lane.b32.xlu0 %v4618, 4
      %v4861 = vpop.permute.xlu0 %4860
      %4862 = vrot.lane.b32.xlu0 %v4619, 4
      %v4863 = vpop.permute.xlu0 %4862
      %4864 = vrot.lane.b32.xlu0 %v4620, 4
      %v4865 = vpop.permute.xlu0 %4864
      %4866 = vrot.lane.b32.xlu0 %v4621, 4
      %v4867 = vpop.permute.xlu0 %4866
      %4868 = vrot.lane.b32.xlu0 %v4622, 4
      %v4869 = vpop.permute.xlu0 %4868
      %4870 = vrot.lane.b32.xlu0 %v4623, 4
      %v4871 = vpop.permute.xlu0 %4870
      %4872 = vrot.lane.b32.xlu0 %v4624, 4
      %v4873 = vpop.permute.xlu0 %4872
      %4874 = vrot.lane.b32.xlu0 %v4625, 4
      %v4875 = vpop.permute.xlu0 %4874
      %4876 = vrot.lane.b32.xlu0 %v4626, 4
      %v4877 = vpop.permute.xlu0 %4876
      %4878 = vrot.lane.b32.xlu0 %v4627, 4
      %v4879 = vpop.permute.xlu0 %4878
      %4880 = vrot.lane.b32.xlu0 %v4628, 4
      %v4881 = vpop.permute.xlu0 %4880
      %4882 = vrot.lane.b32.xlu0 %v4629, 4
      %v4883 = vpop.permute.xlu0 %4882
      %4884 = vrot.lane.b32.xlu0 %v4630, 4
      %v4885 = vpop.permute.xlu0 %4884
      %4886 = vrot.lane.b32.xlu0 %v4631, 4
      %v4887 = vpop.permute.xlu0 %4886
      %5016 = vrot.lane.b32.xlu0 %v4632, 8
      %v5017 = vpop.permute.xlu0 %5016
      %5018 = vrot.lane.b32.xlu0 %v4633, 8
      %v5019 = vpop.permute.xlu0 %5018
      %5020 = vrot.lane.b32.xlu0 %v4634, 8
      %v5021 = vpop.permute.xlu0 %5020
      %5022 = vrot.lane.b32.xlu0 %v4635, 8
      %v5023 = vpop.permute.xlu0 %5022
      %5024 = vrot.lane.b32.xlu0 %v4636, 8
      %v5025 = vpop.permute.xlu0 %5024
      %5026 = vrot.lane.b32.xlu0 %v4637, 8
      %v5027 = vpop.permute.xlu0 %5026
      %5028 = vrot.lane.b32.xlu0 %v4638, 8
      %v5029 = vpop.permute.xlu0 %5028
      %5030 = vrot.lane.b32.xlu0 %v4639, 8
      %v5031 = vpop.permute.xlu0 %5030
      %5032 = vrot.lane.b32.xlu0 %v4640, 8
      %v5033 = vpop.permute.xlu0 %5032
      %5034 = vrot.lane.b32.xlu0 %v4641, 8
      %v5035 = vpop.permute.xlu0 %5034
      %5036 = vrot.lane.b32.xlu0 %v4642, 8
      %v5037 = vpop.permute.xlu0 %5036
      %5038 = vrot.lane.b32.xlu0 %v4643, 8
      %v5039 = vpop.permute.xlu0 %5038
      %5040 = vrot.lane.b32.xlu0 %v4644, 8
      %v5041 = vpop.permute.xlu0 %5040
      %5042 = vrot.lane.b32.xlu0 %v4645, 8
      %v5043 = vpop.permute.xlu0 %5042
      %5044 = vrot.lane.b32.xlu0 %v4646, 8
      %v5045 = vpop.permute.xlu0 %5044
      %5046 = vrot.lane.b32.xlu0 %v4647, 8
      %v5047 = vpop.permute.xlu0 %5046
      %5048 = vrot.lane.b32.xlu0 %v4648, 8
      %v5049 = vpop.permute.xlu0 %5048
      %5050 = vrot.lane.b32.xlu0 %v4649, 8
      %v5051 = vpop.permute.xlu0 %5050
      %5052 = vrot.lane.b32.xlu0 %v4650, 8
      %v5053 = vpop.permute.xlu0 %5052
      %5054 = vrot.lane.b32.xlu0 %v4651, 8
      %v5055 = vpop.permute.xlu0 %5054
      %5056 = vrot.lane.b32.xlu0 %v4652, 8
      %v5057 = vpop.permute.xlu0 %5056
      %5058 = vrot.lane.b32.xlu0 %v4653, 8
      %v5059 = vpop.permute.xlu0 %5058
      %5060 = vrot.lane.b32.xlu0 %v4654, 8
      %v5061 = vpop.permute.xlu0 %5060
      %5062 = vrot.lane.b32.xlu0 %v4655, 8
      %v5063 = vpop.permute.xlu0 %5062
      %5064 = vrot.lane.b32.xlu0 %v4656, 8
      %v5065 = vpop.permute.xlu0 %5064
      %5066 = vrot.lane.b32.xlu0 %v4657, 8
      %v5067 = vpop.permute.xlu0 %5066
      %5068 = vrot.lane.b32.xlu0 %v4658, 8
      %v5069 = vpop.permute.xlu0 %5068
      %5070 = vrot.lane.b32.xlu0 %v4659, 8
      %v5071 = vpop.permute.xlu0 %5070
      %5072 = vrot.lane.b32.xlu0 %v4660, 8
      %v5073 = vpop.permute.xlu0 %5072
      %5074 = vrot.lane.b32.xlu0 %v4661, 8
      %v5075 = vpop.permute.xlu0 %5074
      %5076 = vrot.lane.b32.xlu0 %v4662, 8
      %v5077 = vpop.permute.xlu0 %5076
      %5078 = vrot.lane.b32.xlu0 %v4663, 8
      %v5079 = vpop.permute.xlu0 %5078
      %5080 = vrot.lane.b32.xlu0 %v4664, 8
      %v5081 = vpop.permute.xlu0 %5080
      %5082 = vrot.lane.b32.xlu0 %v4665, 8
      %v5083 = vpop.permute.xlu0 %5082
      %5084 = vrot.lane.b32.xlu0 %v4666, 8
      %v5085 = vpop.permute.xlu0 %5084
      %5086 = vrot.lane.b32.xlu0 %v4667, 8
      %v5087 = vpop.permute.xlu0 %5086
      %5088 = vrot.lane.b32.xlu0 %v4668, 8
      %v5089 = vpop.permute.xlu0 %5088
      %5090 = vrot.lane.b32.xlu0 %v4669, 8
      %v5091 = vpop.permute.xlu0 %5090
      %5092 = vrot.lane.b32.xlu0 %v4670, 8
      %v5093 = vpop.permute.xlu0 %5092
      %5094 = vrot.lane.b32.xlu0 %v4671, 8
      %v5095 = vpop.permute.xlu0 %5094
      %5096 = vrot.lane.b32.xlu0 %v4672, 8
      %v5097 = vpop.permute.xlu0 %5096
      %5098 = vrot.lane.b32.xlu0 %v4673, 8
      %v5099 = vpop.permute.xlu0 %5098
      %5100 = vrot.lane.b32.xlu0 %v4674, 8
      %v5101 = vpop.permute.xlu0 %5100
      %5102 = vrot.lane.b32.xlu0 %v4675, 8
      %v5103 = vpop.permute.xlu0 %5102
      %5104 = vrot.lane.b32.xlu0 %v4676, 8
      %v5105 = vpop.permute.xlu0 %5104
      %5106 = vrot.lane.b32.xlu0 %v4677, 8
      %v5107 = vpop.permute.xlu0 %5106
      %5108 = vrot.lane.b32.xlu0 %v4678, 8
      %v5109 = vpop.permute.xlu0 %5108
      %5110 = vrot.lane.b32.xlu0 %v4679, 8
      %v5111 = vpop.permute.xlu0 %5110
      %5112 = vrot.lane.b32.xlu0 %v4680, 8
      %v5113 = vpop.permute.xlu0 %5112
      %5114 = vrot.lane.b32.xlu0 %v4681, 8
      %v5115 = vpop.permute.xlu0 %5114
      %5116 = vrot.lane.b32.xlu0 %v4682, 8
      %v5117 = vpop.permute.xlu0 %5116
      %5118 = vrot.lane.b32.xlu0 %v4683, 8
      %v5119 = vpop.permute.xlu0 %5118
      %5120 = vrot.lane.b32.xlu0 %v4684, 8
      %v5121 = vpop.permute.xlu0 %5120
      %5122 = vrot.lane.b32.xlu0 %v4685, 8
      %v5123 = vpop.permute.xlu0 %5122
      %5124 = vrot.lane.b32.xlu0 %v4686, 8
      %v5125 = vpop.permute.xlu0 %5124
      %5126 = vrot.lane.b32.xlu0 %v4687, 8
      %v5127 = vpop.permute.xlu0 %5126
      %5128 = vrot.lane.b32.xlu0 %v4688, 8
      %v5129 = vpop.permute.xlu0 %5128
      %5130 = vrot.lane.b32.xlu0 %v4689, 8
      %v5131 = vpop.permute.xlu0 %5130
      %5132 = vrot.lane.b32.xlu0 %v4690, 8
      %v5133 = vpop.permute.xlu0 %5132
      %5134 = vrot.lane.b32.xlu0 %v4691, 8
      %v5135 = vpop.permute.xlu0 %5134
      %5136 = vrot.lane.b32.xlu0 %v4692, 8
      %v5137 = vpop.permute.xlu0 %5136
      %5138 = vrot.lane.b32.xlu0 %v4693, 8
      %v5139 = vpop.permute.xlu0 %5138
      %5140 = vrot.lane.b32.xlu0 %v4694, 8
      %v5141 = vpop.permute.xlu0 %5140
      %5142 = vrot.lane.b32.xlu0 %v4695, 8
      %v5143 = vpop.permute.xlu0 %5142
      %v5208 = vsel %vm846, %v4504, %v4761
      %v5209 = vsel %vm846, %v4505, %v4763
      %v5210 = vsel %vm846, %v4506, %v4765
      %v5211 = vsel %vm846, %v4507, %v4767
      %v5212 = vsel %vm846, %v4508, %v4769
      %v5213 = vsel %vm846, %v4509, %v4771
      %v5214 = vsel %vm846, %v4510, %v4773
      %v5215 = vsel %vm846, %v4511, %v4775
      %v5216 = vsel %vm846, %v4512, %v4777
      %v5217 = vsel %vm846, %v4513, %v4779
      %v5218 = vsel %vm846, %v4514, %v4781
      %v5219 = vsel %vm846, %v4515, %v4783
      %v5220 = vsel %vm846, %v4516, %v4785
      %v5221 = vsel %vm846, %v4517, %v4787
      %v5222 = vsel %vm846, %v4518, %v4789
      %v5223 = vsel %vm846, %v4519, %v4791
      %v5224 = vsel %vm846, %v4520, %v4793
      %v5225 = vsel %vm846, %v4521, %v4795
      %v5226 = vsel %vm846, %v4522, %v4797
      %v5227 = vsel %vm846, %v4523, %v4799
      %v5228 = vsel %vm846, %v4524, %v4801
      %v5229 = vsel %vm846, %v4525, %v4803
      %v5230 = vsel %vm846, %v4526, %v4805
      %v5231 = vsel %vm846, %v4527, %v4807
      %v5232 = vsel %vm846, %v4528, %v4809
      %v5233 = vsel %vm846, %v4529, %v4811
      %v5234 = vsel %vm846, %v4530, %v4813
      %v5235 = vsel %vm846, %v4531, %v4815
      %v5236 = vsel %vm846, %v4532, %v4817
      %v5237 = vsel %vm846, %v4533, %v4819
      %v5238 = vsel %vm846, %v4534, %v4821
      %v5239 = vsel %vm846, %v4535, %v4823
      %v5240 = vsel %vm846, %v4536, %v4825
      %v5241 = vsel %vm846, %v4537, %v4827
      %v5242 = vsel %vm846, %v4538, %v4829
      %v5243 = vsel %vm846, %v4539, %v4831
      %v5244 = vsel %vm846, %v4540, %v4833
      %v5245 = vsel %vm846, %v4541, %v4835
      %v5246 = vsel %vm846, %v4542, %v4837
      %v5247 = vsel %vm846, %v4543, %v4839
      %v5248 = vsel %vm846, %v4544, %v4841
      %v5249 = vsel %vm846, %v4545, %v4843
      %v5250 = vsel %vm846, %v4546, %v4845
      %v5251 = vsel %vm846, %v4547, %v4847
      %v5252 = vsel %vm846, %v4548, %v4849
      %v5253 = vsel %vm846, %v4549, %v4851
      %v5254 = vsel %vm846, %v4550, %v4853
      %v5255 = vsel %vm846, %v4551, %v4855
      %v5256 = vsel %vm846, %v4552, %v4857
      %v5257 = vsel %vm846, %v4553, %v4859
      %v5258 = vsel %vm846, %v4554, %v4861
      %v5259 = vsel %vm846, %v4555, %v4863
      %v5260 = vsel %vm846, %v4556, %v4865
      %v5261 = vsel %vm846, %v4557, %v4867
      %v5262 = vsel %vm846, %v4558, %v4869
      %v5263 = vsel %vm846, %v4559, %v4871
      %v5264 = vsel %vm846, %v4560, %v4873
      %v5265 = vsel %vm846, %v4561, %v4875
      %v5266 = vsel %vm846, %v4562, %v4877
      %v5267 = vsel %vm846, %v4563, %v4879
      %v5268 = vsel %vm846, %v4564, %v4881
      %v5269 = vsel %vm846, %v4565, %v4883
      %v5270 = vsel %vm846, %v4566, %v4885
      %v5271 = vsel %vm846, %v4567, %v4887
      %v5272 = vsel %vm911, %v5208, %v5017
      %v5273 = vsel %vm911, %v5209, %v5019
      %v5274 = vsel %vm911, %v5210, %v5021
      %v5275 = vsel %vm911, %v5211, %v5023
      %v5276 = vsel %vm911, %v5212, %v5025
      %v5277 = vsel %vm911, %v5213, %v5027
      %v5278 = vsel %vm911, %v5214, %v5029
      %v5279 = vsel %vm911, %v5215, %v5031
      %v5280 = vsel %vm911, %v5216, %v5033
      %v5281 = vsel %vm911, %v5217, %v5035
      %v5282 = vsel %vm911, %v5218, %v5037
      %v5283 = vsel %vm911, %v5219, %v5039
      %v5284 = vsel %vm911, %v5220, %v5041
      %v5285 = vsel %vm911, %v5221, %v5043
      %v5286 = vsel %vm911, %v5222, %v5045
      %v5287 = vsel %vm911, %v5223, %v5047
      %v5288 = vsel %vm911, %v5224, %v5049
      %v5289 = vsel %vm911, %v5225, %v5051
      %v5290 = vsel %vm911, %v5226, %v5053
      %v5291 = vsel %vm911, %v5227, %v5055
      %v5292 = vsel %vm911, %v5228, %v5057
      %v5293 = vsel %vm911, %v5229, %v5059
      %v5294 = vsel %vm911, %v5230, %v5061
      %v5295 = vsel %vm911, %v5231, %v5063
      %v5296 = vsel %vm911, %v5232, %v5065
      %v5297 = vsel %vm911, %v5233, %v5067
      %v5298 = vsel %vm911, %v5234, %v5069
      %v5299 = vsel %vm911, %v5235, %v5071
      %v5300 = vsel %vm911, %v5236, %v5073
      %v5301 = vsel %vm911, %v5237, %v5075
      %v5302 = vsel %vm911, %v5238, %v5077
      %v5303 = vsel %vm911, %v5239, %v5079
      %v5304 = vsel %vm911, %v5240, %v5081
      %v5305 = vsel %vm911, %v5241, %v5083
      %v5306 = vsel %vm911, %v5242, %v5085
      %v5307 = vsel %vm911, %v5243, %v5087
      %v5308 = vsel %vm911, %v5244, %v5089
      %v5309 = vsel %vm911, %v5245, %v5091
      %v5310 = vsel %vm911, %v5246, %v5093
      %v5311 = vsel %vm911, %v5247, %v5095
      %v5312 = vsel %vm911, %v5248, %v5097
      %v5313 = vsel %vm911, %v5249, %v5099
      %v5314 = vsel %vm911, %v5250, %v5101
      %v5315 = vsel %vm911, %v5251, %v5103
      %v5316 = vsel %vm911, %v5252, %v5105
      %v5317 = vsel %vm911, %v5253, %v5107
      %v5318 = vsel %vm911, %v5254, %v5109
      %v5319 = vsel %vm911, %v5255, %v5111
      %v5320 = vsel %vm911, %v5256, %v5113
      %v5321 = vsel %vm911, %v5257, %v5115
      %v5322 = vsel %vm911, %v5258, %v5117
      %v5323 = vsel %vm911, %v5259, %v5119
      %v5324 = vsel %vm911, %v5260, %v5121
      %v5325 = vsel %vm911, %v5261, %v5123
      %v5326 = vsel %vm911, %v5262, %v5125
      %v5327 = vsel %vm911, %v5263, %v5127
      %v5328 = vsel %vm911, %v5264, %v5129
      %v5329 = vsel %vm911, %v5265, %v5131
      %v5330 = vsel %vm911, %v5266, %v5133
      %v5331 = vsel %vm911, %v5267, %v5135
      %v5332 = vsel %vm911, %v5268, %v5137
      %v5333 = vsel %vm911, %v5269, %v5139
      %v5334 = vsel %vm911, %v5270, %v5141
      %v5335 = vsel %vm911, %v5271, %v5143
      %5400 = vrot.lane.b32.xlu0 %v5272, 48
      %v5401 = vpop.permute.xlu0 %5400
      %5402 = vrot.lane.b32.xlu0 %v5273, 48
      %v5403 = vpop.permute.xlu0 %5402
      %5404 = vrot.lane.b32.xlu0 %v5274, 48
      %v5405 = vpop.permute.xlu0 %5404
      %5406 = vrot.lane.b32.xlu0 %v5275, 48
      %v5407 = vpop.permute.xlu0 %5406
      %5408 = vrot.lane.b32.xlu0 %v5276, 48
      %v5409 = vpop.permute.xlu0 %5408
      %5410 = vrot.lane.b32.xlu0 %v5277, 48
      %v5411 = vpop.permute.xlu0 %5410
      %5412 = vrot.lane.b32.xlu0 %v5278, 48
      %v5413 = vpop.permute.xlu0 %5412
      %5414 = vrot.lane.b32.xlu0 %v5279, 48
      %v5415 = vpop.permute.xlu0 %5414
      %5416 = vrot.lane.b32.xlu0 %v5280, 48
      %v5417 = vpop.permute.xlu0 %5416
      %5418 = vrot.lane.b32.xlu0 %v5281, 48
      %v5419 = vpop.permute.xlu0 %5418
      %5420 = vrot.lane.b32.xlu0 %v5282, 48
      %v5421 = vpop.permute.xlu0 %5420
      %5422 = vrot.lane.b32.xlu0 %v5283, 48
      %v5423 = vpop.permute.xlu0 %5422
      %5424 = vrot.lane.b32.xlu0 %v5284, 48
      %v5425 = vpop.permute.xlu0 %5424
      %5426 = vrot.lane.b32.xlu0 %v5285, 48
      %v5427 = vpop.permute.xlu0 %5426
      %5428 = vrot.lane.b32.xlu0 %v5286, 48
      %v5429 = vpop.permute.xlu0 %5428
      %5430 = vrot.lane.b32.xlu0 %v5287, 48
      %v5431 = vpop.permute.xlu0 %5430
      %5432 = vrot.lane.b32.xlu0 %v5288, 48
      %v5433 = vpop.permute.xlu0 %5432
      %5434 = vrot.lane.b32.xlu0 %v5289, 48
      %v5435 = vpop.permute.xlu0 %5434
      %5436 = vrot.lane.b32.xlu0 %v5290, 48
      %v5437 = vpop.permute.xlu0 %5436
      %5438 = vrot.lane.b32.xlu0 %v5291, 48
      %v5439 = vpop.permute.xlu0 %5438
      %5440 = vrot.lane.b32.xlu0 %v5292, 48
      %v5441 = vpop.permute.xlu0 %5440
      %5442 = vrot.lane.b32.xlu0 %v5293, 48
      %v5443 = vpop.permute.xlu0 %5442
      %5444 = vrot.lane.b32.xlu0 %v5294, 48
      %v5445 = vpop.permute.xlu0 %5444
      %5446 = vrot.lane.b32.xlu0 %v5295, 48
      %v5447 = vpop.permute.xlu0 %5446
      %5448 = vrot.lane.b32.xlu0 %v5296, 48
      %v5449 = vpop.permute.xlu0 %5448
      %5450 = vrot.lane.b32.xlu0 %v5297, 48
      %v5451 = vpop.permute.xlu0 %5450
      %5452 = vrot.lane.b32.xlu0 %v5298, 48
      %v5453 = vpop.permute.xlu0 %5452
      %5454 = vrot.lane.b32.xlu0 %v5299, 48
      %v5455 = vpop.permute.xlu0 %5454
      %5456 = vrot.lane.b32.xlu0 %v5300, 48
      %v5457 = vpop.permute.xlu0 %5456
      %5458 = vrot.lane.b32.xlu0 %v5301, 48
      %v5459 = vpop.permute.xlu0 %5458
      %5460 = vrot.lane.b32.xlu0 %v5302, 48
      %v5461 = vpop.permute.xlu0 %5460
      %5462 = vrot.lane.b32.xlu0 %v5303, 48
      %v5463 = vpop.permute.xlu0 %5462
      %5464 = vrot.lane.b32.xlu0 %v5304, 48
      %v5465 = vpop.permute.xlu0 %5464
      %5466 = vrot.lane.b32.xlu0 %v5305, 48
      %v5467 = vpop.permute.xlu0 %5466
      %5468 = vrot.lane.b32.xlu0 %v5306, 48
      %v5469 = vpop.permute.xlu0 %5468
      %5470 = vrot.lane.b32.xlu0 %v5307, 48
      %v5471 = vpop.permute.xlu0 %5470
      %5472 = vrot.lane.b32.xlu0 %v5308, 48
      %v5473 = vpop.permute.xlu0 %5472
      %5474 = vrot.lane.b32.xlu0 %v5309, 48
      %v5475 = vpop.permute.xlu0 %5474
      %5476 = vrot.lane.b32.xlu0 %v5310, 48
      %v5477 = vpop.permute.xlu0 %5476
      %5478 = vrot.lane.b32.xlu0 %v5311, 48
      %v5479 = vpop.permute.xlu0 %5478
      %5480 = vrot.lane.b32.xlu0 %v5312, 48
      %v5481 = vpop.permute.xlu0 %5480
      %5482 = vrot.lane.b32.xlu0 %v5313, 48
      %v5483 = vpop.permute.xlu0 %5482
      %5484 = vrot.lane.b32.xlu0 %v5314, 48
      %v5485 = vpop.permute.xlu0 %5484
      %5486 = vrot.lane.b32.xlu0 %v5315, 48
      %v5487 = vpop.permute.xlu0 %5486
      %5488 = vrot.lane.b32.xlu0 %v5316, 48
      %v5489 = vpop.permute.xlu0 %5488
      %5490 = vrot.lane.b32.xlu0 %v5317, 48
      %v5491 = vpop.permute.xlu0 %5490
      %5492 = vrot.lane.b32.xlu0 %v5318, 48
      %v5493 = vpop.permute.xlu0 %5492
      %5494 = vrot.lane.b32.xlu0 %v5319, 48
      %v5495 = vpop.permute.xlu0 %5494
      %5496 = vrot.lane.b32.xlu0 %v5320, 48
      %v5497 = vpop.permute.xlu0 %5496
      %5498 = vrot.lane.b32.xlu0 %v5321, 48
      %v5499 = vpop.permute.xlu0 %5498
      %5500 = vrot.lane.b32.xlu0 %v5322, 48
      %v5501 = vpop.permute.xlu0 %5500
      %5502 = vrot.lane.b32.xlu0 %v5323, 48
      %v5503 = vpop.permute.xlu0 %5502
      %5504 = vrot.lane.b32.xlu0 %v5324, 48
      %v5505 = vpop.permute.xlu0 %5504
      %5506 = vrot.lane.b32.xlu0 %v5325, 48
      %v5507 = vpop.permute.xlu0 %5506
      %5508 = vrot.lane.b32.xlu0 %v5326, 48
      %v5509 = vpop.permute.xlu0 %5508
      %5510 = vrot.lane.b32.xlu0 %v5327, 48
      %v5511 = vpop.permute.xlu0 %5510
      %5512 = vrot.lane.b32.xlu0 %v5328, 48
      %v5513 = vpop.permute.xlu0 %5512
      %5514 = vrot.lane.b32.xlu0 %v5329, 48
      %v5515 = vpop.permute.xlu0 %5514
      %5516 = vrot.lane.b32.xlu0 %v5330, 48
      %v5517 = vpop.permute.xlu0 %5516
      %5518 = vrot.lane.b32.xlu0 %v5331, 48
      %v5519 = vpop.permute.xlu0 %5518
      %5520 = vrot.lane.b32.xlu0 %v5332, 48
      %v5521 = vpop.permute.xlu0 %5520
      %5522 = vrot.lane.b32.xlu0 %v5333, 48
      %v5523 = vpop.permute.xlu0 %5522
      %5524 = vrot.lane.b32.xlu0 %v5334, 48
      %v5525 = vpop.permute.xlu0 %5524
      %5526 = vrot.lane.b32.xlu0 %v5335, 48
      %v5527 = vpop.permute.xlu0 %5526
      %vm5592 = vcmask 490880
      %5593 = vst.msk [vmem:[#allocation2] sm:$0xff] %vm5592, %v5401
      %5594 = vst.msk [vmem:[#allocation2 + $0x8] sm:$0xff] %vm5592, %v5403
      %5595 = vst.msk [vmem:[#allocation2 + $0x10] sm:$0xff] %vm5592, %v5405
      %5596 = vst.msk [vmem:[#allocation2 + $0x18] sm:$0xff] %vm5592, %v5407
      %5597 = vst.msk [vmem:[#allocation2 + $0x20] sm:$0xff] %vm5592, %v5409
      %5598 = vst.msk [vmem:[#allocation2 + $0x28] sm:$0xff] %vm5592, %v5411
      %5599 = vst.msk [vmem:[#allocation2 + $0x30] sm:$0xff] %vm5592, %v5413
      %5600 = vst.msk [vmem:[#allocation2 + $0x38] sm:$0xff] %vm5592, %v5415
      %5601 = vst.msk [vmem:[#allocation2 + $0x40] sm:$0xff] %vm5592, %v5417
      %5602 = vst.msk [vmem:[#allocation2 + $0x48] sm:$0xff] %vm5592, %v5419
      %5603 = vst.msk [vmem:[#allocation2 + $0x50] sm:$0xff] %vm5592, %v5421
      %5604 = vst.msk [vmem:[#allocation2 + $0x58] sm:$0xff] %vm5592, %v5423
      %5605 = vst.msk [vmem:[#allocation2 + $0x60] sm:$0xff] %vm5592, %v5425
      %5606 = vst.msk [vmem:[#allocation2 + $0x68] sm:$0xff] %vm5592, %v5427
      %5607 = vst.msk [vmem:[#allocation2 + $0x70] sm:$0xff] %vm5592, %v5429
      %5608 = vst.msk [vmem:[#allocation2 + $0x78] sm:$0xff] %vm5592, %v5431
      %5609 = vst.msk [vmem:[#allocation2 + $0x80] sm:$0xff] %vm5592, %v5433
      %5610 = vst.msk [vmem:[#allocation2 + $0x88] sm:$0xff] %vm5592, %v5435
      %5611 = vst.msk [vmem:[#allocation2 + $0x90] sm:$0xff] %vm5592, %v5437
      %5612 = vst.msk [vmem:[#allocation2 + $0x98] sm:$0xff] %vm5592, %v5439
      %5613 = vst.msk [vmem:[#allocation2 + $0xa0] sm:$0xff] %vm5592, %v5441
      %5614 = vst.msk [vmem:[#allocation2 + $0xa8] sm:$0xff] %vm5592, %v5443
      %5615 = vst.msk [vmem:[#allocation2 + $0xb0] sm:$0xff] %vm5592, %v5445
      %5616 = vst.msk [vmem:[#allocation2 + $0xb8] sm:$0xff] %vm5592, %v5447
      %5617 = vst.msk [vmem:[#allocation2 + $0xc0] sm:$0xff] %vm5592, %v5449
      %5618 = vst.msk [vmem:[#allocation2 + $0xc8] sm:$0xff] %vm5592, %v5451
      %5619 = vst.msk [vmem:[#allocation2 + $0xd0] sm:$0xff] %vm5592, %v5453
      %5620 = vst.msk [vmem:[#allocation2 + $0xd8] sm:$0xff] %vm5592, %v5455
      %5621 = vst.msk [vmem:[#allocation2 + $0xe0] sm:$0xff] %vm5592, %v5457
      %5622 = vst.msk [vmem:[#allocation2 + $0xe8] sm:$0xff] %vm5592, %v5459
      %5623 = vst.msk [vmem:[#allocation2 + $0xf0] sm:$0xff] %vm5592, %v5461
      %5624 = vst.msk [vmem:[#allocation2 + $0xf8] sm:$0xff] %vm5592, %v5463
      %5625 = vst.msk [vmem:[#allocation2 + $0x100] sm:$0xff] %vm5592, %v5465
      %5626 = vst.msk [vmem:[#allocation2 + $0x108] sm:$0xff] %vm5592, %v5467
      %5627 = vst.msk [vmem:[#allocation2 + $0x110] sm:$0xff] %vm5592, %v5469
      %5628 = vst.msk [vmem:[#allocation2 + $0x118] sm:$0xff] %vm5592, %v5471
      %5629 = vst.msk [vmem:[#allocation2 + $0x120] sm:$0xff] %vm5592, %v5473
      %5630 = vst.msk [vmem:[#allocation2 + $0x128] sm:$0xff] %vm5592, %v5475
      %5631 = vst.msk [vmem:[#allocation2 + $0x130] sm:$0xff] %vm5592, %v5477
      %5632 = vst.msk [vmem:[#allocation2 + $0x138] sm:$0xff] %vm5592, %v5479
      %5633 = vst.msk [vmem:[#allocation2 + $0x140] sm:$0xff] %vm5592, %v5481
      %5634 = vst.msk [vmem:[#allocation2 + $0x148] sm:$0xff] %vm5592, %v5483
      %5635 = vst.msk [vmem:[#allocation2 + $0x150] sm:$0xff] %vm5592, %v5485
      %5636 = vst.msk [vmem:[#allocation2 + $0x158] sm:$0xff] %vm5592, %v5487
      %5637 = vst.msk [vmem:[#allocation2 + $0x160] sm:$0xff] %vm5592, %v5489
      %5638 = vst.msk [vmem:[#allocation2 + $0x168] sm:$0xff] %vm5592, %v5491
      %5639 = vst.msk [vmem:[#allocation2 + $0x170] sm:$0xff] %vm5592, %v5493
      %5640 = vst.msk [vmem:[#allocation2 + $0x178] sm:$0xff] %vm5592, %v5495
      %5641 = vst.msk [vmem:[#allocation2 + $0x180] sm:$0xff] %vm5592, %v5497
      %5642 = vst.msk [vmem:[#allocation2 + $0x188] sm:$0xff] %vm5592, %v5499
      %5643 = vst.msk [vmem:[#allocation2 + $0x190] sm:$0xff] %vm5592, %v5501
      %5644 = vst.msk [vmem:[#allocation2 + $0x198] sm:$0xff] %vm5592, %v5503
      %5645 = vst.msk [vmem:[#allocation2 + $0x1a0] sm:$0xff] %vm5592, %v5505
      %5646 = vst.msk [vmem:[#allocation2 + $0x1a8] sm:$0xff] %vm5592, %v5507
      %5647 = vst.msk [vmem:[#allocation2 + $0x1b0] sm:$0xff] %vm5592, %v5509
      %5648 = vst.msk [vmem:[#allocation2 + $0x1b8] sm:$0xff] %vm5592, %v5511
      %5649 = vst.msk [vmem:[#allocation2 + $0x1c0] sm:$0xff] %vm5592, %v5513
      %5650 = vst.msk [vmem:[#allocation2 + $0x1c8] sm:$0xff] %vm5592, %v5515
      %5651 = vst.msk [vmem:[#allocation2 + $0x1d0] sm:$0xff] %vm5592, %v5517
      %5652 = vst.msk [vmem:[#allocation2 + $0x1d8] sm:$0xff] %vm5592, %v5519
      %5653 = vst.msk [vmem:[#allocation2 + $0x1e0] sm:$0xff] %vm5592, %v5521
      %5654 = vst.msk [vmem:[#allocation2 + $0x1e8] sm:$0xff] %vm5592, %v5523
      %5655 = vst.msk [vmem:[#allocation2 + $0x1f0] sm:$0xff] %vm5592, %v5525
      %5656 = vst.msk [vmem:[#allocation2 + $0x1f8] sm:$0xff] %vm5592, %v5527
      %s5657 = scalar_lea.vmem %s137, 192
      %v5658 = vld [vmem:[%s5657] sm:$0xff]
      %v5659 = vld [vmem:[%s5657 + $0x10] sm:$0xff]
      %v5660 = vld [vmem:[%s5657 + $0x20] sm:$0xff]
      %v5661 = vld [vmem:[%s5657 + $0x30] sm:$0xff]
      %v5662 = vld [vmem:[%s5657 + $0x40] sm:$0xff]
      %v5663 = vld [vmem:[%s5657 + $0x50] sm:$0xff]
      %v5664 = vld [vmem:[%s5657 + $0x60] sm:$0xff]
      %v5665 = vld [vmem:[%s5657 + $0x70] sm:$0xff]
      %v5666 = vld [vmem:[%s5657 + $0xa0] sm:$0xff]
      %v5667 = vld [vmem:[%s5657 + $0xb0] sm:$0xff]
      %v5668 = vld [vmem:[%s5657 + $0xc0] sm:$0xff]
      %v5669 = vld [vmem:[%s5657 + $0xd0] sm:$0xff]
      %v5670 = vld [vmem:[%s5657 + $0xe0] sm:$0xff]
      %v5671 = vld [vmem:[%s5657 + $0xf0] sm:$0xff]
      %v5672 = vld [vmem:[%s5657 + $0x100] sm:$0xff]
      %v5673 = vld [vmem:[%s5657 + $0x110] sm:$0xff]
      %v5674 = vld [vmem:[%s5657 + $0x140] sm:$0xff]
      %v5675 = vld [vmem:[%s5657 + $0x150] sm:$0xff]
      %v5676 = vld [vmem:[%s5657 + $0x160] sm:$0xff]
      %v5677 = vld [vmem:[%s5657 + $0x170] sm:$0xff]
      %v5678 = vld [vmem:[%s5657 + $0x180] sm:$0xff]
      %v5679 = vld [vmem:[%s5657 + $0x190] sm:$0xff]
      %v5680 = vld [vmem:[%s5657 + $0x1a0] sm:$0xff]
      %v5681 = vld [vmem:[%s5657 + $0x1b0] sm:$0xff]
      %v5682 = vld [vmem:[%s5657 + $0x1e0] sm:$0xff]
      %v5683 = vld [vmem:[%s5657 + $0x1f0] sm:$0xff]
      %v5684 = vld [vmem:[%s5657 + $0x200] sm:$0xff]
      %v5685 = vld [vmem:[%s5657 + $0x210] sm:$0xff]
      %v5686 = vld [vmem:[%s5657 + $0x220] sm:$0xff]
      %v5687 = vld [vmem:[%s5657 + $0x230] sm:$0xff]
      %v5688 = vld [vmem:[%s5657 + $0x240] sm:$0xff]
      %v5689 = vld [vmem:[%s5657 + $0x250] sm:$0xff]
      %v5690 = vld [vmem:[%s5657 + $0x280] sm:$0xff]
      %v5691 = vld [vmem:[%s5657 + $0x290] sm:$0xff]
      %v5692 = vld [vmem:[%s5657 + $0x2a0] sm:$0xff]
      %v5693 = vld [vmem:[%s5657 + $0x2b0] sm:$0xff]
      %v5694 = vld [vmem:[%s5657 + $0x2c0] sm:$0xff]
      %v5695 = vld [vmem:[%s5657 + $0x2d0] sm:$0xff]
      %v5696 = vld [vmem:[%s5657 + $0x2e0] sm:$0xff]
      %v5697 = vld [vmem:[%s5657 + $0x2f0] sm:$0xff]
      %v5698 = vld [vmem:[%s5657 + $0x320] sm:$0xff]
      %v5699 = vld [vmem:[%s5657 + $0x330] sm:$0xff]
      %v5700 = vld [vmem:[%s5657 + $0x340] sm:$0xff]
      %v5701 = vld [vmem:[%s5657 + $0x350] sm:$0xff]
      %v5702 = vld [vmem:[%s5657 + $0x360] sm:$0xff]
      %v5703 = vld [vmem:[%s5657 + $0x370] sm:$0xff]
      %v5704 = vld [vmem:[%s5657 + $0x380] sm:$0xff]
      %v5705 = vld [vmem:[%s5657 + $0x390] sm:$0xff]
      %v5706 = vld [vmem:[%s5657 + $0x3c0] sm:$0xff]
      %v5707 = vld [vmem:[%s5657 + $0x3d0] sm:$0xff]
      %v5708 = vld [vmem:[%s5657 + $0x3e0] sm:$0xff]
      %v5709 = vld [vmem:[%s5657 + $0x3f0] sm:$0xff]
      %v5710 = vld [vmem:[%s5657 + $0x400] sm:$0xff]
      %v5711 = vld [vmem:[%s5657 + $0x410] sm:$0xff]
      %v5712 = vld [vmem:[%s5657 + $0x420] sm:$0xff]
      %v5713 = vld [vmem:[%s5657 + $0x430] sm:$0xff]
      %v5714 = vld [vmem:[%s5657 + $0x460] sm:$0xff]
      %v5715 = vld [vmem:[%s5657 + $0x470] sm:$0xff]
      %v5716 = vld [vmem:[%s5657 + $0x480] sm:$0xff]
      %v5717 = vld [vmem:[%s5657 + $0x490] sm:$0xff]
      %v5718 = vld [vmem:[%s5657 + $0x4a0] sm:$0xff]
      %v5719 = vld [vmem:[%s5657 + $0x4b0] sm:$0xff]
      %v5720 = vld [vmem:[%s5657 + $0x4c0] sm:$0xff]
      %v5721 = vld [vmem:[%s5657 + $0x4d0] sm:$0xff]
      %v5722 = vld [vmem:[%s5657 + $0x1] sm:$0xff]
      %v5723 = vld [vmem:[%s5657 + $0x11] sm:$0xff]
      %v5724 = vld [vmem:[%s5657 + $0x21] sm:$0xff]
      %v5725 = vld [vmem:[%s5657 + $0x31] sm:$0xff]
      %v5726 = vld [vmem:[%s5657 + $0x41] sm:$0xff]
      %v5727 = vld [vmem:[%s5657 + $0x51] sm:$0xff]
      %v5728 = vld [vmem:[%s5657 + $0x61] sm:$0xff]
      %v5729 = vld [vmem:[%s5657 + $0x71] sm:$0xff]
      %v5730 = vld [vmem:[%s5657 + $0xa1] sm:$0xff]
      %v5731 = vld [vmem:[%s5657 + $0xb1] sm:$0xff]
      %v5732 = vld [vmem:[%s5657 + $0xc1] sm:$0xff]
      %v5733 = vld [vmem:[%s5657 + $0xd1] sm:$0xff]
      %v5734 = vld [vmem:[%s5657 + $0xe1] sm:$0xff]
      %v5735 = vld [vmem:[%s5657 + $0xf1] sm:$0xff]
      %v5736 = vld [vmem:[%s5657 + $0x101] sm:$0xff]
      %v5737 = vld [vmem:[%s5657 + $0x111] sm:$0xff]
      %v5738 = vld [vmem:[%s5657 + $0x141] sm:$0xff]
      %v5739 = vld [vmem:[%s5657 + $0x151] sm:$0xff]
      %v5740 = vld [vmem:[%s5657 + $0x161] sm:$0xff]
      %v5741 = vld [vmem:[%s5657 + $0x171] sm:$0xff]
      %v5742 = vld [vmem:[%s5657 + $0x181] sm:$0xff]
      %v5743 = vld [vmem:[%s5657 + $0x191] sm:$0xff]
      %v5744 = vld [vmem:[%s5657 + $0x1a1] sm:$0xff]
      %v5745 = vld [vmem:[%s5657 + $0x1b1] sm:$0xff]
      %v5746 = vld [vmem:[%s5657 + $0x1e1] sm:$0xff]
      %v5747 = vld [vmem:[%s5657 + $0x1f1] sm:$0xff]
      %v5748 = vld [vmem:[%s5657 + $0x201] sm:$0xff]
      %v5749 = vld [vmem:[%s5657 + $0x211] sm:$0xff]
      %v5750 = vld [vmem:[%s5657 + $0x221] sm:$0xff]
      %v5751 = vld [vmem:[%s5657 + $0x231] sm:$0xff]
      %v5752 = vld [vmem:[%s5657 + $0x241] sm:$0xff]
      %v5753 = vld [vmem:[%s5657 + $0x251] sm:$0xff]
      %v5754 = vld [vmem:[%s5657 + $0x281] sm:$0xff]
      %v5755 = vld [vmem:[%s5657 + $0x291] sm:$0xff]
      %v5756 = vld [vmem:[%s5657 + $0x2a1] sm:$0xff]
      %v5757 = vld [vmem:[%s5657 + $0x2b1] sm:$0xff]
      %v5758 = vld [vmem:[%s5657 + $0x2c1] sm:$0xff]
      %v5759 = vld [vmem:[%s5657 + $0x2d1] sm:$0xff]
      %v5760 = vld [vmem:[%s5657 + $0x2e1] sm:$0xff]
      %v5761 = vld [vmem:[%s5657 + $0x2f1] sm:$0xff]
      %v5762 = vld [vmem:[%s5657 + $0x321] sm:$0xff]
      %v5763 = vld [vmem:[%s5657 + $0x331] sm:$0xff]
      %v5764 = vld [vmem:[%s5657 + $0x341] sm:$0xff]
      %v5765 = vld [vmem:[%s5657 + $0x351] sm:$0xff]
      %v5766 = vld [vmem:[%s5657 + $0x361] sm:$0xff]
      %v5767 = vld [vmem:[%s5657 + $0x371] sm:$0xff]
      %v5768 = vld [vmem:[%s5657 + $0x381] sm:$0xff]
      %v5769 = vld [vmem:[%s5657 + $0x391] sm:$0xff]
      %v5770 = vld [vmem:[%s5657 + $0x3c1] sm:$0xff]
      %v5771 = vld [vmem:[%s5657 + $0x3d1] sm:$0xff]
      %v5772 = vld [vmem:[%s5657 + $0x3e1] sm:$0xff]
      %v5773 = vld [vmem:[%s5657 + $0x3f1] sm:$0xff]
      %v5774 = vld [vmem:[%s5657 + $0x401] sm:$0xff]
      %v5775 = vld [vmem:[%s5657 + $0x411] sm:$0xff]
      %v5776 = vld [vmem:[%s5657 + $0x421] sm:$0xff]
      %v5777 = vld [vmem:[%s5657 + $0x431] sm:$0xff]
      %v5778 = vld [vmem:[%s5657 + $0x461] sm:$0xff]
      %v5779 = vld [vmem:[%s5657 + $0x471] sm:$0xff]
      %v5780 = vld [vmem:[%s5657 + $0x481] sm:$0xff]
      %v5781 = vld [vmem:[%s5657 + $0x491] sm:$0xff]
      %v5782 = vld [vmem:[%s5657 + $0x4a1] sm:$0xff]
      %v5783 = vld [vmem:[%s5657 + $0x4b1] sm:$0xff]
      %v5784 = vld [vmem:[%s5657 + $0x4c1] sm:$0xff]
      %v5785 = vld [vmem:[%s5657 + $0x4d1] sm:$0xff]
      %v5786 = vld [vmem:[%s5657 + $0x2] sm:$0xff]
      %v5787 = vld [vmem:[%s5657 + $0x12] sm:$0xff]
      %v5788 = vld [vmem:[%s5657 + $0x22] sm:$0xff]
      %v5789 = vld [vmem:[%s5657 + $0x32] sm:$0xff]
      %v5790 = vld [vmem:[%s5657 + $0x42] sm:$0xff]
      %v5791 = vld [vmem:[%s5657 + $0x52] sm:$0xff]
      %v5792 = vld [vmem:[%s5657 + $0x62] sm:$0xff]
      %v5793 = vld [vmem:[%s5657 + $0x72] sm:$0xff]
      %v5794 = vld [vmem:[%s5657 + $0xa2] sm:$0xff]
      %v5795 = vld [vmem:[%s5657 + $0xb2] sm:$0xff]
      %v5796 = vld [vmem:[%s5657 + $0xc2] sm:$0xff]
      %v5797 = vld [vmem:[%s5657 + $0xd2] sm:$0xff]
      %v5798 = vld [vmem:[%s5657 + $0xe2] sm:$0xff]
      %v5799 = vld [vmem:[%s5657 + $0xf2] sm:$0xff]
      %v5800 = vld [vmem:[%s5657 + $0x102] sm:$0xff]
      %v5801 = vld [vmem:[%s5657 + $0x112] sm:$0xff]
      %v5802 = vld [vmem:[%s5657 + $0x142] sm:$0xff]
      %v5803 = vld [vmem:[%s5657 + $0x152] sm:$0xff]
      %v5804 = vld [vmem:[%s5657 + $0x162] sm:$0xff]
      %v5805 = vld [vmem:[%s5657 + $0x172] sm:$0xff]
      %v5806 = vld [vmem:[%s5657 + $0x182] sm:$0xff]
      %v5807 = vld [vmem:[%s5657 + $0x192] sm:$0xff]
      %v5808 = vld [vmem:[%s5657 + $0x1a2] sm:$0xff]
      %v5809 = vld [vmem:[%s5657 + $0x1b2] sm:$0xff]
      %v5810 = vld [vmem:[%s5657 + $0x1e2] sm:$0xff]
      %v5811 = vld [vmem:[%s5657 + $0x1f2] sm:$0xff]
      %v5812 = vld [vmem:[%s5657 + $0x202] sm:$0xff]
      %v5813 = vld [vmem:[%s5657 + $0x212] sm:$0xff]
      %v5814 = vld [vmem:[%s5657 + $0x222] sm:$0xff]
      %v5815 = vld [vmem:[%s5657 + $0x232] sm:$0xff]
      %v5816 = vld [vmem:[%s5657 + $0x242] sm:$0xff]
      %v5817 = vld [vmem:[%s5657 + $0x252] sm:$0xff]
      %v5818 = vld [vmem:[%s5657 + $0x282] sm:$0xff]
      %v5819 = vld [vmem:[%s5657 + $0x292] sm:$0xff]
      %v5820 = vld [vmem:[%s5657 + $0x2a2] sm:$0xff]
      %v5821 = vld [vmem:[%s5657 + $0x2b2] sm:$0xff]
      %v5822 = vld [vmem:[%s5657 + $0x2c2] sm:$0xff]
      %v5823 = vld [vmem:[%s5657 + $0x2d2] sm:$0xff]
      %v5824 = vld [vmem:[%s5657 + $0x2e2] sm:$0xff]
      %v5825 = vld [vmem:[%s5657 + $0x2f2] sm:$0xff]
      %v5826 = vld [vmem:[%s5657 + $0x322] sm:$0xff]
      %v5827 = vld [vmem:[%s5657 + $0x332] sm:$0xff]
      %v5828 = vld [vmem:[%s5657 + $0x342] sm:$0xff]
      %v5829 = vld [vmem:[%s5657 + $0x352] sm:$0xff]
      %v5830 = vld [vmem:[%s5657 + $0x362] sm:$0xff]
      %v5831 = vld [vmem:[%s5657 + $0x372] sm:$0xff]
      %v5832 = vld [vmem:[%s5657 + $0x382] sm:$0xff]
      %v5833 = vld [vmem:[%s5657 + $0x392] sm:$0xff]
      %v5834 = vld [vmem:[%s5657 + $0x3c2] sm:$0xff]
      %v5835 = vld [vmem:[%s5657 + $0x3d2] sm:$0xff]
      %v5836 = vld [vmem:[%s5657 + $0x3e2] sm:$0xff]
      %v5837 = vld [vmem:[%s5657 + $0x3f2] sm:$0xff]
      %v5838 = vld [vmem:[%s5657 + $0x402] sm:$0xff]
      %v5839 = vld [vmem:[%s5657 + $0x412] sm:$0xff]
      %v5840 = vld [vmem:[%s5657 + $0x422] sm:$0xff]
      %v5841 = vld [vmem:[%s5657 + $0x432] sm:$0xff]
      %v5842 = vld [vmem:[%s5657 + $0x462] sm:$0xff]
      %v5843 = vld [vmem:[%s5657 + $0x472] sm:$0xff]
      %v5844 = vld [vmem:[%s5657 + $0x482] sm:$0xff]
      %v5845 = vld [vmem:[%s5657 + $0x492] sm:$0xff]
      %v5846 = vld [vmem:[%s5657 + $0x4a2] sm:$0xff]
      %v5847 = vld [vmem:[%s5657 + $0x4b2] sm:$0xff]
      %v5848 = vld [vmem:[%s5657 + $0x4c2] sm:$0xff]
      %v5849 = vld [vmem:[%s5657 + $0x4d2] sm:$0xff]
      %5914 = vrot.lane.b32.xlu0 %v5722, 4
      %v5915 = vpop.permute.xlu0 %5914
      %5916 = vrot.lane.b32.xlu0 %v5723, 4
      %v5917 = vpop.permute.xlu0 %5916
      %5918 = vrot.lane.b32.xlu0 %v5724, 4
      %v5919 = vpop.permute.xlu0 %5918
      %5920 = vrot.lane.b32.xlu0 %v5725, 4
      %v5921 = vpop.permute.xlu0 %5920
      %5922 = vrot.lane.b32.xlu0 %v5726, 4
      %v5923 = vpop.permute.xlu0 %5922
      %5924 = vrot.lane.b32.xlu0 %v5727, 4
      %v5925 = vpop.permute.xlu0 %5924
      %5926 = vrot.lane.b32.xlu0 %v5728, 4
      %v5927 = vpop.permute.xlu0 %5926
      %5928 = vrot.lane.b32.xlu0 %v5729, 4
      %v5929 = vpop.permute.xlu0 %5928
      %5930 = vrot.lane.b32.xlu0 %v5730, 4
      %v5931 = vpop.permute.xlu0 %5930
      %5932 = vrot.lane.b32.xlu0 %v5731, 4
      %v5933 = vpop.permute.xlu0 %5932
      %5934 = vrot.lane.b32.xlu0 %v5732, 4
      %v5935 = vpop.permute.xlu0 %5934
      %5936 = vrot.lane.b32.xlu0 %v5733, 4
      %v5937 = vpop.permute.xlu0 %5936
      %5938 = vrot.lane.b32.xlu0 %v5734, 4
      %v5939 = vpop.permute.xlu0 %5938
      %5940 = vrot.lane.b32.xlu0 %v5735, 4
      %v5941 = vpop.permute.xlu0 %5940
      %5942 = vrot.lane.b32.xlu0 %v5736, 4
      %v5943 = vpop.permute.xlu0 %5942
      %5944 = vrot.lane.b32.xlu0 %v5737, 4
      %v5945 = vpop.permute.xlu0 %5944
      %5946 = vrot.lane.b32.xlu0 %v5738, 4
      %v5947 = vpop.permute.xlu0 %5946
      %5948 = vrot.lane.b32.xlu0 %v5739, 4
      %v5949 = vpop.permute.xlu0 %5948
      %5950 = vrot.lane.b32.xlu0 %v5740, 4
      %v5951 = vpop.permute.xlu0 %5950
      %5952 = vrot.lane.b32.xlu0 %v5741, 4
      %v5953 = vpop.permute.xlu0 %5952
      %5954 = vrot.lane.b32.xlu0 %v5742, 4
      %v5955 = vpop.permute.xlu0 %5954
      %5956 = vrot.lane.b32.xlu0 %v5743, 4
      %v5957 = vpop.permute.xlu0 %5956
      %5958 = vrot.lane.b32.xlu0 %v5744, 4
      %v5959 = vpop.permute.xlu0 %5958
      %5960 = vrot.lane.b32.xlu0 %v5745, 4
      %v5961 = vpop.permute.xlu0 %5960
      %5962 = vrot.lane.b32.xlu0 %v5746, 4
      %v5963 = vpop.permute.xlu0 %5962
      %5964 = vrot.lane.b32.xlu0 %v5747, 4
      %v5965 = vpop.permute.xlu0 %5964
      %5966 = vrot.lane.b32.xlu0 %v5748, 4
      %v5967 = vpop.permute.xlu0 %5966
      %5968 = vrot.lane.b32.xlu0 %v5749, 4
      %v5969 = vpop.permute.xlu0 %5968
      %5970 = vrot.lane.b32.xlu0 %v5750, 4
      %v5971 = vpop.permute.xlu0 %5970
      %5972 = vrot.lane.b32.xlu0 %v5751, 4
      %v5973 = vpop.permute.xlu0 %5972
      %5974 = vrot.lane.b32.xlu0 %v5752, 4
      %v5975 = vpop.permute.xlu0 %5974
      %5976 = vrot.lane.b32.xlu0 %v5753, 4
      %v5977 = vpop.permute.xlu0 %5976
      %5978 = vrot.lane.b32.xlu0 %v5754, 4
      %v5979 = vpop.permute.xlu0 %5978
      %5980 = vrot.lane.b32.xlu0 %v5755, 4
      %v5981 = vpop.permute.xlu0 %5980
      %5982 = vrot.lane.b32.xlu0 %v5756, 4
      %v5983 = vpop.permute.xlu0 %5982
      %5984 = vrot.lane.b32.xlu0 %v5757, 4
      %v5985 = vpop.permute.xlu0 %5984
      %5986 = vrot.lane.b32.xlu0 %v5758, 4
      %v5987 = vpop.permute.xlu0 %5986
      %5988 = vrot.lane.b32.xlu0 %v5759, 4
      %v5989 = vpop.permute.xlu0 %5988
      %5990 = vrot.lane.b32.xlu0 %v5760, 4
      %v5991 = vpop.permute.xlu0 %5990
      %5992 = vrot.lane.b32.xlu0 %v5761, 4
      %v5993 = vpop.permute.xlu0 %5992
      %5994 = vrot.lane.b32.xlu0 %v5762, 4
      %v5995 = vpop.permute.xlu0 %5994
      %5996 = vrot.lane.b32.xlu0 %v5763, 4
      %v5997 = vpop.permute.xlu0 %5996
      %5998 = vrot.lane.b32.xlu0 %v5764, 4
      %v5999 = vpop.permute.xlu0 %5998
      %6000 = vrot.lane.b32.xlu0 %v5765, 4
      %v6001 = vpop.permute.xlu0 %6000
      %6002 = vrot.lane.b32.xlu0 %v5766, 4
      %v6003 = vpop.permute.xlu0 %6002
      %6004 = vrot.lane.b32.xlu0 %v5767, 4
      %v6005 = vpop.permute.xlu0 %6004
      %6006 = vrot.lane.b32.xlu0 %v5768, 4
      %v6007 = vpop.permute.xlu0 %6006
      %6008 = vrot.lane.b32.xlu0 %v5769, 4
      %v6009 = vpop.permute.xlu0 %6008
      %6010 = vrot.lane.b32.xlu0 %v5770, 4
      %v6011 = vpop.permute.xlu0 %6010
      %6012 = vrot.lane.b32.xlu0 %v5771, 4
      %v6013 = vpop.permute.xlu0 %6012
      %6014 = vrot.lane.b32.xlu0 %v5772, 4
      %v6015 = vpop.permute.xlu0 %6014
      %6016 = vrot.lane.b32.xlu0 %v5773, 4
      %v6017 = vpop.permute.xlu0 %6016
      %6018 = vrot.lane.b32.xlu0 %v5774, 4
      %v6019 = vpop.permute.xlu0 %6018
      %6020 = vrot.lane.b32.xlu0 %v5775, 4
      %v6021 = vpop.permute.xlu0 %6020
      %6022 = vrot.lane.b32.xlu0 %v5776, 4
      %v6023 = vpop.permute.xlu0 %6022
      %6024 = vrot.lane.b32.xlu0 %v5777, 4
      %v6025 = vpop.permute.xlu0 %6024
      %6026 = vrot.lane.b32.xlu0 %v5778, 4
      %v6027 = vpop.permute.xlu0 %6026
      %6028 = vrot.lane.b32.xlu0 %v5779, 4
      %v6029 = vpop.permute.xlu0 %6028
      %6030 = vrot.lane.b32.xlu0 %v5780, 4
      %v6031 = vpop.permute.xlu0 %6030
      %6032 = vrot.lane.b32.xlu0 %v5781, 4
      %v6033 = vpop.permute.xlu0 %6032
      %6034 = vrot.lane.b32.xlu0 %v5782, 4
      %v6035 = vpop.permute.xlu0 %6034
      %6036 = vrot.lane.b32.xlu0 %v5783, 4
      %v6037 = vpop.permute.xlu0 %6036
      %6038 = vrot.lane.b32.xlu0 %v5784, 4
      %v6039 = vpop.permute.xlu0 %6038
      %6040 = vrot.lane.b32.xlu0 %v5785, 4
      %v6041 = vpop.permute.xlu0 %6040
      %6170 = vrot.lane.b32.xlu0 %v5786, 8
      %v6171 = vpop.permute.xlu0 %6170
      %6172 = vrot.lane.b32.xlu0 %v5787, 8
      %v6173 = vpop.permute.xlu0 %6172
      %6174 = vrot.lane.b32.xlu0 %v5788, 8
      %v6175 = vpop.permute.xlu0 %6174
      %6176 = vrot.lane.b32.xlu0 %v5789, 8
      %v6177 = vpop.permute.xlu0 %6176
      %6178 = vrot.lane.b32.xlu0 %v5790, 8
      %v6179 = vpop.permute.xlu0 %6178
      %6180 = vrot.lane.b32.xlu0 %v5791, 8
      %v6181 = vpop.permute.xlu0 %6180
      %6182 = vrot.lane.b32.xlu0 %v5792, 8
      %v6183 = vpop.permute.xlu0 %6182
      %6184 = vrot.lane.b32.xlu0 %v5793, 8
      %v6185 = vpop.permute.xlu0 %6184
      %6186 = vrot.lane.b32.xlu0 %v5794, 8
      %v6187 = vpop.permute.xlu0 %6186
      %6188 = vrot.lane.b32.xlu0 %v5795, 8
      %v6189 = vpop.permute.xlu0 %6188
      %6190 = vrot.lane.b32.xlu0 %v5796, 8
      %v6191 = vpop.permute.xlu0 %6190
      %6192 = vrot.lane.b32.xlu0 %v5797, 8
      %v6193 = vpop.permute.xlu0 %6192
      %6194 = vrot.lane.b32.xlu0 %v5798, 8
      %v6195 = vpop.permute.xlu0 %6194
      %6196 = vrot.lane.b32.xlu0 %v5799, 8
      %v6197 = vpop.permute.xlu0 %6196
      %6198 = vrot.lane.b32.xlu0 %v5800, 8
      %v6199 = vpop.permute.xlu0 %6198
      %6200 = vrot.lane.b32.xlu0 %v5801, 8
      %v6201 = vpop.permute.xlu0 %6200
      %6202 = vrot.lane.b32.xlu0 %v5802, 8
      %v6203 = vpop.permute.xlu0 %6202
      %6204 = vrot.lane.b32.xlu0 %v5803, 8
      %v6205 = vpop.permute.xlu0 %6204
      %6206 = vrot.lane.b32.xlu0 %v5804, 8
      %v6207 = vpop.permute.xlu0 %6206
      %6208 = vrot.lane.b32.xlu0 %v5805, 8
      %v6209 = vpop.permute.xlu0 %6208
      %6210 = vrot.lane.b32.xlu0 %v5806, 8
      %v6211 = vpop.permute.xlu0 %6210
      %6212 = vrot.lane.b32.xlu0 %v5807, 8
      %v6213 = vpop.permute.xlu0 %6212
      %6214 = vrot.lane.b32.xlu0 %v5808, 8
      %v6215 = vpop.permute.xlu0 %6214
      %6216 = vrot.lane.b32.xlu0 %v5809, 8
      %v6217 = vpop.permute.xlu0 %6216
      %6218 = vrot.lane.b32.xlu0 %v5810, 8
      %v6219 = vpop.permute.xlu0 %6218
      %6220 = vrot.lane.b32.xlu0 %v5811, 8
      %v6221 = vpop.permute.xlu0 %6220
      %6222 = vrot.lane.b32.xlu0 %v5812, 8
      %v6223 = vpop.permute.xlu0 %6222
      %6224 = vrot.lane.b32.xlu0 %v5813, 8
      %v6225 = vpop.permute.xlu0 %6224
      %6226 = vrot.lane.b32.xlu0 %v5814, 8
      %v6227 = vpop.permute.xlu0 %6226
      %6228 = vrot.lane.b32.xlu0 %v5815, 8
      %v6229 = vpop.permute.xlu0 %6228
      %6230 = vrot.lane.b32.xlu0 %v5816, 8
      %v6231 = vpop.permute.xlu0 %6230
      %6232 = vrot.lane.b32.xlu0 %v5817, 8
      %v6233 = vpop.permute.xlu0 %6232
      %6234 = vrot.lane.b32.xlu0 %v5818, 8
      %v6235 = vpop.permute.xlu0 %6234
      %6236 = vrot.lane.b32.xlu0 %v5819, 8
      %v6237 = vpop.permute.xlu0 %6236
      %6238 = vrot.lane.b32.xlu0 %v5820, 8
      %v6239 = vpop.permute.xlu0 %6238
      %6240 = vrot.lane.b32.xlu0 %v5821, 8
      %v6241 = vpop.permute.xlu0 %6240
      %6242 = vrot.lane.b32.xlu0 %v5822, 8
      %v6243 = vpop.permute.xlu0 %6242
      %6244 = vrot.lane.b32.xlu0 %v5823, 8
      %v6245 = vpop.permute.xlu0 %6244
      %6246 = vrot.lane.b32.xlu0 %v5824, 8
      %v6247 = vpop.permute.xlu0 %6246
      %6248 = vrot.lane.b32.xlu0 %v5825, 8
      %v6249 = vpop.permute.xlu0 %6248
      %6250 = vrot.lane.b32.xlu0 %v5826, 8
      %v6251 = vpop.permute.xlu0 %6250
      %6252 = vrot.lane.b32.xlu0 %v5827, 8
      %v6253 = vpop.permute.xlu0 %6252
      %6254 = vrot.lane.b32.xlu0 %v5828, 8
      %v6255 = vpop.permute.xlu0 %6254
      %6256 = vrot.lane.b32.xlu0 %v5829, 8
      %v6257 = vpop.permute.xlu0 %6256
      %6258 = vrot.lane.b32.xlu0 %v5830, 8
      %v6259 = vpop.permute.xlu0 %6258
      %6260 = vrot.lane.b32.xlu0 %v5831, 8
      %v6261 = vpop.permute.xlu0 %6260
      %6262 = vrot.lane.b32.xlu0 %v5832, 8
      %v6263 = vpop.permute.xlu0 %6262
      %6264 = vrot.lane.b32.xlu0 %v5833, 8
      %v6265 = vpop.permute.xlu0 %6264
      %6266 = vrot.lane.b32.xlu0 %v5834, 8
      %v6267 = vpop.permute.xlu0 %6266
      %6268 = vrot.lane.b32.xlu0 %v5835, 8
      %v6269 = vpop.permute.xlu0 %6268
      %6270 = vrot.lane.b32.xlu0 %v5836, 8
      %v6271 = vpop.permute.xlu0 %6270
      %6272 = vrot.lane.b32.xlu0 %v5837, 8
      %v6273 = vpop.permute.xlu0 %6272
      %6274 = vrot.lane.b32.xlu0 %v5838, 8
      %v6275 = vpop.permute.xlu0 %6274
      %6276 = vrot.lane.b32.xlu0 %v5839, 8
      %v6277 = vpop.permute.xlu0 %6276
      %6278 = vrot.lane.b32.xlu0 %v5840, 8
      %v6279 = vpop.permute.xlu0 %6278
      %6280 = vrot.lane.b32.xlu0 %v5841, 8
      %v6281 = vpop.permute.xlu0 %6280
      %6282 = vrot.lane.b32.xlu0 %v5842, 8
      %v6283 = vpop.permute.xlu0 %6282
      %6284 = vrot.lane.b32.xlu0 %v5843, 8
      %v6285 = vpop.permute.xlu0 %6284
      %6286 = vrot.lane.b32.xlu0 %v5844, 8
      %v6287 = vpop.permute.xlu0 %6286
      %6288 = vrot.lane.b32.xlu0 %v5845, 8
      %v6289 = vpop.permute.xlu0 %6288
      %6290 = vrot.lane.b32.xlu0 %v5846, 8
      %v6291 = vpop.permute.xlu0 %6290
      %6292 = vrot.lane.b32.xlu0 %v5847, 8
      %v6293 = vpop.permute.xlu0 %6292
      %6294 = vrot.lane.b32.xlu0 %v5848, 8
      %v6295 = vpop.permute.xlu0 %6294
      %6296 = vrot.lane.b32.xlu0 %v5849, 8
      %v6297 = vpop.permute.xlu0 %6296
      %v6362 = vsel %vm846, %v5658, %v5915
      %v6363 = vsel %vm846, %v5659, %v5917
      %v6364 = vsel %vm846, %v5660, %v5919
      %v6365 = vsel %vm846, %v5661, %v5921
      %v6366 = vsel %vm846, %v5662, %v5923
      %v6367 = vsel %vm846, %v5663, %v5925
      %v6368 = vsel %vm846, %v5664, %v5927
      %v6369 = vsel %vm846, %v5665, %v5929
      %v6370 = vsel %vm846, %v5666, %v5931
      %v6371 = vsel %vm846, %v5667, %v5933
      %v6372 = vsel %vm846, %v5668, %v5935
      %v6373 = vsel %vm846, %v5669, %v5937
      %v6374 = vsel %vm846, %v5670, %v5939
      %v6375 = vsel %vm846, %v5671, %v5941
      %v6376 = vsel %vm846, %v5672, %v5943
      %v6377 = vsel %vm846, %v5673, %v5945
      %v6378 = vsel %vm846, %v5674, %v5947
      %v6379 = vsel %vm846, %v5675, %v5949
      %v6380 = vsel %vm846, %v5676, %v5951
      %v6381 = vsel %vm846, %v5677, %v5953
      %v6382 = vsel %vm846, %v5678, %v5955
      %v6383 = vsel %vm846, %v5679, %v5957
      %v6384 = vsel %vm846, %v5680, %v5959
      %v6385 = vsel %vm846, %v5681, %v5961
      %v6386 = vsel %vm846, %v5682, %v5963
      %v6387 = vsel %vm846, %v5683, %v5965
      %v6388 = vsel %vm846, %v5684, %v5967
      %v6389 = vsel %vm846, %v5685, %v5969
      %v6390 = vsel %vm846, %v5686, %v5971
      %v6391 = vsel %vm846, %v5687, %v5973
      %v6392 = vsel %vm846, %v5688, %v5975
      %v6393 = vsel %vm846, %v5689, %v5977
      %v6394 = vsel %vm846, %v5690, %v5979
      %v6395 = vsel %vm846, %v5691, %v5981
      %v6396 = vsel %vm846, %v5692, %v5983
      %v6397 = vsel %vm846, %v5693, %v5985
      %v6398 = vsel %vm846, %v5694, %v5987
      %v6399 = vsel %vm846, %v5695, %v5989
      %v6400 = vsel %vm846, %v5696, %v5991
      %v6401 = vsel %vm846, %v5697, %v5993
      %v6402 = vsel %vm846, %v5698, %v5995
      %v6403 = vsel %vm846, %v5699, %v5997
      %v6404 = vsel %vm846, %v5700, %v5999
      %v6405 = vsel %vm846, %v5701, %v6001
      %v6406 = vsel %vm846, %v5702, %v6003
      %v6407 = vsel %vm846, %v5703, %v6005
      %v6408 = vsel %vm846, %v5704, %v6007
      %v6409 = vsel %vm846, %v5705, %v6009
      %v6410 = vsel %vm846, %v5706, %v6011
      %v6411 = vsel %vm846, %v5707, %v6013
      %v6412 = vsel %vm846, %v5708, %v6015
      %v6413 = vsel %vm846, %v5709, %v6017
      %v6414 = vsel %vm846, %v5710, %v6019
      %v6415 = vsel %vm846, %v5711, %v6021
      %v6416 = vsel %vm846, %v5712, %v6023
      %v6417 = vsel %vm846, %v5713, %v6025
      %v6418 = vsel %vm846, %v5714, %v6027
      %v6419 = vsel %vm846, %v5715, %v6029
      %v6420 = vsel %vm846, %v5716, %v6031
      %v6421 = vsel %vm846, %v5717, %v6033
      %v6422 = vsel %vm846, %v5718, %v6035
      %v6423 = vsel %vm846, %v5719, %v6037
      %v6424 = vsel %vm846, %v5720, %v6039
      %v6425 = vsel %vm846, %v5721, %v6041
      %v6426 = vsel %vm911, %v6362, %v6171
      %v6427 = vsel %vm911, %v6363, %v6173
      %v6428 = vsel %vm911, %v6364, %v6175
      %v6429 = vsel %vm911, %v6365, %v6177
      %v6430 = vsel %vm911, %v6366, %v6179
      %v6431 = vsel %vm911, %v6367, %v6181
      %v6432 = vsel %vm911, %v6368, %v6183
      %v6433 = vsel %vm911, %v6369, %v6185
      %v6434 = vsel %vm911, %v6370, %v6187
      %v6435 = vsel %vm911, %v6371, %v6189
      %v6436 = vsel %vm911, %v6372, %v6191
      %v6437 = vsel %vm911, %v6373, %v6193
      %v6438 = vsel %vm911, %v6374, %v6195
      %v6439 = vsel %vm911, %v6375, %v6197
      %v6440 = vsel %vm911, %v6376, %v6199
      %v6441 = vsel %vm911, %v6377, %v6201
      %v6442 = vsel %vm911, %v6378, %v6203
      %v6443 = vsel %vm911, %v6379, %v6205
      %v6444 = vsel %vm911, %v6380, %v6207
      %v6445 = vsel %vm911, %v6381, %v6209
      %v6446 = vsel %vm911, %v6382, %v6211
      %v6447 = vsel %vm911, %v6383, %v6213
      %v6448 = vsel %vm911, %v6384, %v6215
      %v6449 = vsel %vm911, %v6385, %v6217
      %v6450 = vsel %vm911, %v6386, %v6219
      %v6451 = vsel %vm911, %v6387, %v6221
      %v6452 = vsel %vm911, %v6388, %v6223
      %v6453 = vsel %vm911, %v6389, %v6225
      %v6454 = vsel %vm911, %v6390, %v6227
      %v6455 = vsel %vm911, %v6391, %v6229
      %v6456 = vsel %vm911, %v6392, %v6231
      %v6457 = vsel %vm911, %v6393, %v6233
      %v6458 = vsel %vm911, %v6394, %v6235
      %v6459 = vsel %vm911, %v6395, %v6237
      %v6460 = vsel %vm911, %v6396, %v6239
      %v6461 = vsel %vm911, %v6397, %v6241
      %v6462 = vsel %vm911, %v6398, %v6243
      %v6463 = vsel %vm911, %v6399, %v6245
      %v6464 = vsel %vm911, %v6400, %v6247
      %v6465 = vsel %vm911, %v6401, %v6249
      %v6466 = vsel %vm911, %v6402, %v6251
      %v6467 = vsel %vm911, %v6403, %v6253
      %v6468 = vsel %vm911, %v6404, %v6255
      %v6469 = vsel %vm911, %v6405, %v6257
      %v6470 = vsel %vm911, %v6406, %v6259
      %v6471 = vsel %vm911, %v6407, %v6261
      %v6472 = vsel %vm911, %v6408, %v6263
      %v6473 = vsel %vm911, %v6409, %v6265
      %v6474 = vsel %vm911, %v6410, %v6267
      %v6475 = vsel %vm911, %v6411, %v6269
      %v6476 = vsel %vm911, %v6412, %v6271
      %v6477 = vsel %vm911, %v6413, %v6273
      %v6478 = vsel %vm911, %v6414, %v6275
      %v6479 = vsel %vm911, %v6415, %v6277
      %v6480 = vsel %vm911, %v6416, %v6279
      %v6481 = vsel %vm911, %v6417, %v6281
      %v6482 = vsel %vm911, %v6418, %v6283
      %v6483 = vsel %vm911, %v6419, %v6285
      %v6484 = vsel %vm911, %v6420, %v6287
      %v6485 = vsel %vm911, %v6421, %v6289
      %v6486 = vsel %vm911, %v6422, %v6291
      %v6487 = vsel %vm911, %v6423, %v6293
      %v6488 = vsel %vm911, %v6424, %v6295
      %v6489 = vsel %vm911, %v6425, %v6297
      %6554 = vrot.lane.b32.xlu0 %v6426, 60
      %v6555 = vpop.permute.xlu0 %6554
      %6556 = vrot.lane.b32.xlu0 %v6427, 60
      %v6557 = vpop.permute.xlu0 %6556
      %6558 = vrot.lane.b32.xlu0 %v6428, 60
      %v6559 = vpop.permute.xlu0 %6558
      %6560 = vrot.lane.b32.xlu0 %v6429, 60
      %v6561 = vpop.permute.xlu0 %6560
      %6562 = vrot.lane.b32.xlu0 %v6430, 60
      %v6563 = vpop.permute.xlu0 %6562
      %6564 = vrot.lane.b32.xlu0 %v6431, 60
      %v6565 = vpop.permute.xlu0 %6564
      %6566 = vrot.lane.b32.xlu0 %v6432, 60
      %v6567 = vpop.permute.xlu0 %6566
      %6568 = vrot.lane.b32.xlu0 %v6433, 60
      %v6569 = vpop.permute.xlu0 %6568
      %6570 = vrot.lane.b32.xlu0 %v6434, 60
      %v6571 = vpop.permute.xlu0 %6570
      %6572 = vrot.lane.b32.xlu0 %v6435, 60
      %v6573 = vpop.permute.xlu0 %6572
      %6574 = vrot.lane.b32.xlu0 %v6436, 60
      %v6575 = vpop.permute.xlu0 %6574
      %6576 = vrot.lane.b32.xlu0 %v6437, 60
      %v6577 = vpop.permute.xlu0 %6576
      %6578 = vrot.lane.b32.xlu0 %v6438, 60
      %v6579 = vpop.permute.xlu0 %6578
      %6580 = vrot.lane.b32.xlu0 %v6439, 60
      %v6581 = vpop.permute.xlu0 %6580
      %6582 = vrot.lane.b32.xlu0 %v6440, 60
      %v6583 = vpop.permute.xlu0 %6582
      %6584 = vrot.lane.b32.xlu0 %v6441, 60
      %v6585 = vpop.permute.xlu0 %6584
      %6586 = vrot.lane.b32.xlu0 %v6442, 60
      %v6587 = vpop.permute.xlu0 %6586
      %6588 = vrot.lane.b32.xlu0 %v6443, 60
      %v6589 = vpop.permute.xlu0 %6588
      %6590 = vrot.lane.b32.xlu0 %v6444, 60
      %v6591 = vpop.permute.xlu0 %6590
      %6592 = vrot.lane.b32.xlu0 %v6445, 60
      %v6593 = vpop.permute.xlu0 %6592
      %6594 = vrot.lane.b32.xlu0 %v6446, 60
      %v6595 = vpop.permute.xlu0 %6594
      %6596 = vrot.lane.b32.xlu0 %v6447, 60
      %v6597 = vpop.permute.xlu0 %6596
      %6598 = vrot.lane.b32.xlu0 %v6448, 60
      %v6599 = vpop.permute.xlu0 %6598
      %6600 = vrot.lane.b32.xlu0 %v6449, 60
      %v6601 = vpop.permute.xlu0 %6600
      %6602 = vrot.lane.b32.xlu0 %v6450, 60
      %v6603 = vpop.permute.xlu0 %6602
      %6604 = vrot.lane.b32.xlu0 %v6451, 60
      %v6605 = vpop.permute.xlu0 %6604
      %6606 = vrot.lane.b32.xlu0 %v6452, 60
      %v6607 = vpop.permute.xlu0 %6606
      %6608 = vrot.lane.b32.xlu0 %v6453, 60
      %v6609 = vpop.permute.xlu0 %6608
      %6610 = vrot.lane.b32.xlu0 %v6454, 60
      %v6611 = vpop.permute.xlu0 %6610
      %6612 = vrot.lane.b32.xlu0 %v6455, 60
      %v6613 = vpop.permute.xlu0 %6612
      %6614 = vrot.lane.b32.xlu0 %v6456, 60
      %v6615 = vpop.permute.xlu0 %6614
      %6616 = vrot.lane.b32.xlu0 %v6457, 60
      %v6617 = vpop.permute.xlu0 %6616
      %6618 = vrot.lane.b32.xlu0 %v6458, 60
      %v6619 = vpop.permute.xlu0 %6618
      %6620 = vrot.lane.b32.xlu0 %v6459, 60
      %v6621 = vpop.permute.xlu0 %6620
      %6622 = vrot.lane.b32.xlu0 %v6460, 60
      %v6623 = vpop.permute.xlu0 %6622
      %6624 = vrot.lane.b32.xlu0 %v6461, 60
      %v6625 = vpop.permute.xlu0 %6624
      %6626 = vrot.lane.b32.xlu0 %v6462, 60
      %v6627 = vpop.permute.xlu0 %6626
      %6628 = vrot.lane.b32.xlu0 %v6463, 60
      %v6629 = vpop.permute.xlu0 %6628
      %6630 = vrot.lane.b32.xlu0 %v6464, 60
      %v6631 = vpop.permute.xlu0 %6630
      %6632 = vrot.lane.b32.xlu0 %v6465, 60
      %v6633 = vpop.permute.xlu0 %6632
      %6634 = vrot.lane.b32.xlu0 %v6466, 60
      %v6635 = vpop.permute.xlu0 %6634
      %6636 = vrot.lane.b32.xlu0 %v6467, 60
      %v6637 = vpop.permute.xlu0 %6636
      %6638 = vrot.lane.b32.xlu0 %v6468, 60
      %v6639 = vpop.permute.xlu0 %6638
      %6640 = vrot.lane.b32.xlu0 %v6469, 60
      %v6641 = vpop.permute.xlu0 %6640
      %6642 = vrot.lane.b32.xlu0 %v6470, 60
      %v6643 = vpop.permute.xlu0 %6642
      %6644 = vrot.lane.b32.xlu0 %v6471, 60
      %v6645 = vpop.permute.xlu0 %6644
      %6646 = vrot.lane.b32.xlu0 %v6472, 60
      %v6647 = vpop.permute.xlu0 %6646
      %6648 = vrot.lane.b32.xlu0 %v6473, 60
      %v6649 = vpop.permute.xlu0 %6648
      %6650 = vrot.lane.b32.xlu0 %v6474, 60
      %v6651 = vpop.permute.xlu0 %6650
      %6652 = vrot.lane.b32.xlu0 %v6475, 60
      %v6653 = vpop.permute.xlu0 %6652
      %6654 = vrot.lane.b32.xlu0 %v6476, 60
      %v6655 = vpop.permute.xlu0 %6654
      %6656 = vrot.lane.b32.xlu0 %v6477, 60
      %v6657 = vpop.permute.xlu0 %6656
      %6658 = vrot.lane.b32.xlu0 %v6478, 60
      %v6659 = vpop.permute.xlu0 %6658
      %6660 = vrot.lane.b32.xlu0 %v6479, 60
      %v6661 = vpop.permute.xlu0 %6660
      %6662 = vrot.lane.b32.xlu0 %v6480, 60
      %v6663 = vpop.permute.xlu0 %6662
      %6664 = vrot.lane.b32.xlu0 %v6481, 60
      %v6665 = vpop.permute.xlu0 %6664
      %6666 = vrot.lane.b32.xlu0 %v6482, 60
      %v6667 = vpop.permute.xlu0 %6666
      %6668 = vrot.lane.b32.xlu0 %v6483, 60
      %v6669 = vpop.permute.xlu0 %6668
      %6670 = vrot.lane.b32.xlu0 %v6484, 60
      %v6671 = vpop.permute.xlu0 %6670
      %6672 = vrot.lane.b32.xlu0 %v6485, 60
      %v6673 = vpop.permute.xlu0 %6672
      %6674 = vrot.lane.b32.xlu0 %v6486, 60
      %v6675 = vpop.permute.xlu0 %6674
      %6676 = vrot.lane.b32.xlu0 %v6487, 60
      %v6677 = vpop.permute.xlu0 %6676
      %6678 = vrot.lane.b32.xlu0 %v6488, 60
      %v6679 = vpop.permute.xlu0 %6678
      %6680 = vrot.lane.b32.xlu0 %v6489, 60
      %v6681 = vpop.permute.xlu0 %6680
      %vm6746 = vcmask 589280
      %6747 = vst.msk [vmem:[#allocation2] sm:$0xff] %vm6746, %v6555
      %6748 = vst.msk [vmem:[#allocation2 + $0x8] sm:$0xff] %vm6746, %v6557
      %6749 = vst.msk [vmem:[#allocation2 + $0x10] sm:$0xff] %vm6746, %v6559
      %6750 = vst.msk [vmem:[#allocation2 + $0x18] sm:$0xff] %vm6746, %v6561
      %6751 = vst.msk [vmem:[#allocation2 + $0x20] sm:$0xff] %vm6746, %v6563
      %6752 = vst.msk [vmem:[#allocation2 + $0x28] sm:$0xff] %vm6746, %v6565
      %6753 = vst.msk [vmem:[#allocation2 + $0x30] sm:$0xff] %vm6746, %v6567
      %6754 = vst.msk [vmem:[#allocation2 + $0x38] sm:$0xff] %vm6746, %v6569
      %6755 = vst.msk [vmem:[#allocation2 + $0x40] sm:$0xff] %vm6746, %v6571
      %6756 = vst.msk [vmem:[#allocation2 + $0x48] sm:$0xff] %vm6746, %v6573
      %6757 = vst.msk [vmem:[#allocation2 + $0x50] sm:$0xff] %vm6746, %v6575
      %6758 = vst.msk [vmem:[#allocation2 + $0x58] sm:$0xff] %vm6746, %v6577
      %6759 = vst.msk [vmem:[#allocation2 + $0x60] sm:$0xff] %vm6746, %v6579
      %6760 = vst.msk [vmem:[#allocation2 + $0x68] sm:$0xff] %vm6746, %v6581
      %6761 = vst.msk [vmem:[#allocation2 + $0x70] sm:$0xff] %vm6746, %v6583
      %6762 = vst.msk [vmem:[#allocation2 + $0x78] sm:$0xff] %vm6746, %v6585
      %6763 = vst.msk [vmem:[#allocation2 + $0x80] sm:$0xff] %vm6746, %v6587
      %6764 = vst.msk [vmem:[#allocation2 + $0x88] sm:$0xff] %vm6746, %v6589
      %6765 = vst.msk [vmem:[#allocation2 + $0x90] sm:$0xff] %vm6746, %v6591
      %6766 = vst.msk [vmem:[#allocation2 + $0x98] sm:$0xff] %vm6746, %v6593
      %6767 = vst.msk [vmem:[#allocation2 + $0xa0] sm:$0xff] %vm6746, %v6595
      %6768 = vst.msk [vmem:[#allocation2 + $0xa8] sm:$0xff] %vm6746, %v6597
      %6769 = vst.msk [vmem:[#allocation2 + $0xb0] sm:$0xff] %vm6746, %v6599
      %6770 = vst.msk [vmem:[#allocation2 + $0xb8] sm:$0xff] %vm6746, %v6601
      %6771 = vst.msk [vmem:[#allocation2 + $0xc0] sm:$0xff] %vm6746, %v6603
      %6772 = vst.msk [vmem:[#allocation2 + $0xc8] sm:$0xff] %vm6746, %v6605
      %6773 = vst.msk [vmem:[#allocation2 + $0xd0] sm:$0xff] %vm6746, %v6607
      %6774 = vst.msk [vmem:[#allocation2 + $0xd8] sm:$0xff] %vm6746, %v6609
      %6775 = vst.msk [vmem:[#allocation2 + $0xe0] sm:$0xff] %vm6746, %v6611
      %6776 = vst.msk [vmem:[#allocation2 + $0xe8] sm:$0xff] %vm6746, %v6613
      %6777 = vst.msk [vmem:[#allocation2 + $0xf0] sm:$0xff] %vm6746, %v6615
      %6778 = vst.msk [vmem:[#allocation2 + $0xf8] sm:$0xff] %vm6746, %v6617
      %6779 = vst.msk [vmem:[#allocation2 + $0x100] sm:$0xff] %vm6746, %v6619
      %6780 = vst.msk [vmem:[#allocation2 + $0x108] sm:$0xff] %vm6746, %v6621
      %6781 = vst.msk [vmem:[#allocation2 + $0x110] sm:$0xff] %vm6746, %v6623
      %6782 = vst.msk [vmem:[#allocation2 + $0x118] sm:$0xff] %vm6746, %v6625
      %6783 = vst.msk [vmem:[#allocation2 + $0x120] sm:$0xff] %vm6746, %v6627
      %6784 = vst.msk [vmem:[#allocation2 + $0x128] sm:$0xff] %vm6746, %v6629
      %6785 = vst.msk [vmem:[#allocation2 + $0x130] sm:$0xff] %vm6746, %v6631
      %6786 = vst.msk [vmem:[#allocation2 + $0x138] sm:$0xff] %vm6746, %v6633
      %6787 = vst.msk [vmem:[#allocation2 + $0x140] sm:$0xff] %vm6746, %v6635
      %6788 = vst.msk [vmem:[#allocation2 + $0x148] sm:$0xff] %vm6746, %v6637
      %6789 = vst.msk [vmem:[#allocation2 + $0x150] sm:$0xff] %vm6746, %v6639
      %6790 = vst.msk [vmem:[#allocation2 + $0x158] sm:$0xff] %vm6746, %v6641
      %6791 = vst.msk [vmem:[#allocation2 + $0x160] sm:$0xff] %vm6746, %v6643
      %6792 = vst.msk [vmem:[#allocation2 + $0x168] sm:$0xff] %vm6746, %v6645
      %6793 = vst.msk [vmem:[#allocation2 + $0x170] sm:$0xff] %vm6746, %v6647
      %6794 = vst.msk [vmem:[#allocation2 + $0x178] sm:$0xff] %vm6746, %v6649
      %6795 = vst.msk [vmem:[#allocation2 + $0x180] sm:$0xff] %vm6746, %v6651
      %6796 = vst.msk [vmem:[#allocation2 + $0x188] sm:$0xff] %vm6746, %v6653
      %6797 = vst.msk [vmem:[#allocation2 + $0x190] sm:$0xff] %vm6746, %v6655
      %6798 = vst.msk [vmem:[#allocation2 + $0x198] sm:$0xff] %vm6746, %v6657
      %6799 = vst.msk [vmem:[#allocation2 + $0x1a0] sm:$0xff] %vm6746, %v6659
      %6800 = vst.msk [vmem:[#allocation2 + $0x1a8] sm:$0xff] %vm6746, %v6661
      %6801 = vst.msk [vmem:[#allocation2 + $0x1b0] sm:$0xff] %vm6746, %v6663
      %6802 = vst.msk [vmem:[#allocation2 + $0x1b8] sm:$0xff] %vm6746, %v6665
      %6803 = vst.msk [vmem:[#allocation2 + $0x1c0] sm:$0xff] %vm6746, %v6667
      %6804 = vst.msk [vmem:[#allocation2 + $0x1c8] sm:$0xff] %vm6746, %v6669
      %6805 = vst.msk [vmem:[#allocation2 + $0x1d0] sm:$0xff] %vm6746, %v6671
      %6806 = vst.msk [vmem:[#allocation2 + $0x1d8] sm:$0xff] %vm6746, %v6673
      %6807 = vst.msk [vmem:[#allocation2 + $0x1e0] sm:$0xff] %vm6746, %v6675
      %6808 = vst.msk [vmem:[#allocation2 + $0x1e8] sm:$0xff] %vm6746, %v6677
      %6809 = vst.msk [vmem:[#allocation2 + $0x1f0] sm:$0xff] %vm6746, %v6679
      %6810 = vst.msk [vmem:[#allocation2 + $0x1f8] sm:$0xff] %vm6746, %v6681
      %s6811 = scalar_lea.vmem %s137, 320
      %v6812 = vld [vmem:[%s6811] sm:$0xff]
      %v6813 = vld [vmem:[%s6811 + $0x10] sm:$0xff]
      %v6814 = vld [vmem:[%s6811 + $0x20] sm:$0xff]
      %v6815 = vld [vmem:[%s6811 + $0x30] sm:$0xff]
      %v6816 = vld [vmem:[%s6811 + $0x40] sm:$0xff]
      %v6817 = vld [vmem:[%s6811 + $0x50] sm:$0xff]
      %v6818 = vld [vmem:[%s6811 + $0x60] sm:$0xff]
      %v6819 = vld [vmem:[%s6811 + $0x70] sm:$0xff]
      %v6820 = vld [vmem:[%s6811 + $0xa0] sm:$0xff]
      %v6821 = vld [vmem:[%s6811 + $0xb0] sm:$0xff]
      %v6822 = vld [vmem:[%s6811 + $0xc0] sm:$0xff]
      %v6823 = vld [vmem:[%s6811 + $0xd0] sm:$0xff]
      %v6824 = vld [vmem:[%s6811 + $0xe0] sm:$0xff]
      %v6825 = vld [vmem:[%s6811 + $0xf0] sm:$0xff]
      %v6826 = vld [vmem:[%s6811 + $0x100] sm:$0xff]
      %v6827 = vld [vmem:[%s6811 + $0x110] sm:$0xff]
      %v6828 = vld [vmem:[%s6811 + $0x140] sm:$0xff]
      %v6829 = vld [vmem:[%s6811 + $0x150] sm:$0xff]
      %v6830 = vld [vmem:[%s6811 + $0x160] sm:$0xff]
      %v6831 = vld [vmem:[%s6811 + $0x170] sm:$0xff]
      %v6832 = vld [vmem:[%s6811 + $0x180] sm:$0xff]
      %v6833 = vld [vmem:[%s6811 + $0x190] sm:$0xff]
      %v6834 = vld [vmem:[%s6811 + $0x1a0] sm:$0xff]
      %v6835 = vld [vmem:[%s6811 + $0x1b0] sm:$0xff]
      %v6836 = vld [vmem:[%s6811 + $0x1e0] sm:$0xff]
      %v6837 = vld [vmem:[%s6811 + $0x1f0] sm:$0xff]
      %v6838 = vld [vmem:[%s6811 + $0x200] sm:$0xff]
      %v6839 = vld [vmem:[%s6811 + $0x210] sm:$0xff]
      %v6840 = vld [vmem:[%s6811 + $0x220] sm:$0xff]
      %v6841 = vld [vmem:[%s6811 + $0x230] sm:$0xff]
      %v6842 = vld [vmem:[%s6811 + $0x240] sm:$0xff]
      %v6843 = vld [vmem:[%s6811 + $0x250] sm:$0xff]
      %v6844 = vld [vmem:[%s6811 + $0x280] sm:$0xff]
      %v6845 = vld [vmem:[%s6811 + $0x290] sm:$0xff]
      %v6846 = vld [vmem:[%s6811 + $0x2a0] sm:$0xff]
      %v6847 = vld [vmem:[%s6811 + $0x2b0] sm:$0xff]
      %v6848 = vld [vmem:[%s6811 + $0x2c0] sm:$0xff]
      %v6849 = vld [vmem:[%s6811 + $0x2d0] sm:$0xff]
      %v6850 = vld [vmem:[%s6811 + $0x2e0] sm:$0xff]
      %v6851 = vld [vmem:[%s6811 + $0x2f0] sm:$0xff]
      %v6852 = vld [vmem:[%s6811 + $0x320] sm:$0xff]
      %v6853 = vld [vmem:[%s6811 + $0x330] sm:$0xff]
      %v6854 = vld [vmem:[%s6811 + $0x340] sm:$0xff]
      %v6855 = vld [vmem:[%s6811 + $0x350] sm:$0xff]
      %v6856 = vld [vmem:[%s6811 + $0x360] sm:$0xff]
      %v6857 = vld [vmem:[%s6811 + $0x370] sm:$0xff]
      %v6858 = vld [vmem:[%s6811 + $0x380] sm:$0xff]
      %v6859 = vld [vmem:[%s6811 + $0x390] sm:$0xff]
      %v6860 = vld [vmem:[%s6811 + $0x3c0] sm:$0xff]
      %v6861 = vld [vmem:[%s6811 + $0x3d0] sm:$0xff]
      %v6862 = vld [vmem:[%s6811 + $0x3e0] sm:$0xff]
      %v6863 = vld [vmem:[%s6811 + $0x3f0] sm:$0xff]
      %v6864 = vld [vmem:[%s6811 + $0x400] sm:$0xff]
      %v6865 = vld [vmem:[%s6811 + $0x410] sm:$0xff]
      %v6866 = vld [vmem:[%s6811 + $0x420] sm:$0xff]
      %v6867 = vld [vmem:[%s6811 + $0x430] sm:$0xff]
      %v6868 = vld [vmem:[%s6811 + $0x460] sm:$0xff]
      %v6869 = vld [vmem:[%s6811 + $0x470] sm:$0xff]
      %v6870 = vld [vmem:[%s6811 + $0x480] sm:$0xff]
      %v6871 = vld [vmem:[%s6811 + $0x490] sm:$0xff]
      %v6872 = vld [vmem:[%s6811 + $0x4a0] sm:$0xff]
      %v6873 = vld [vmem:[%s6811 + $0x4b0] sm:$0xff]
      %v6874 = vld [vmem:[%s6811 + $0x4c0] sm:$0xff]
      %v6875 = vld [vmem:[%s6811 + $0x4d0] sm:$0xff]
      %v6876 = vld [vmem:[%s6811 + $0x1] sm:$0xff]
      %v6877 = vld [vmem:[%s6811 + $0x11] sm:$0xff]
      %v6878 = vld [vmem:[%s6811 + $0x21] sm:$0xff]
      %v6879 = vld [vmem:[%s6811 + $0x31] sm:$0xff]
      %v6880 = vld [vmem:[%s6811 + $0x41] sm:$0xff]
      %v6881 = vld [vmem:[%s6811 + $0x51] sm:$0xff]
      %v6882 = vld [vmem:[%s6811 + $0x61] sm:$0xff]
      %v6883 = vld [vmem:[%s6811 + $0x71] sm:$0xff]
      %v6884 = vld [vmem:[%s6811 + $0xa1] sm:$0xff]
      %v6885 = vld [vmem:[%s6811 + $0xb1] sm:$0xff]
      %v6886 = vld [vmem:[%s6811 + $0xc1] sm:$0xff]
      %v6887 = vld [vmem:[%s6811 + $0xd1] sm:$0xff]
      %v6888 = vld [vmem:[%s6811 + $0xe1] sm:$0xff]
      %v6889 = vld [vmem:[%s6811 + $0xf1] sm:$0xff]
      %v6890 = vld [vmem:[%s6811 + $0x101] sm:$0xff]
      %v6891 = vld [vmem:[%s6811 + $0x111] sm:$0xff]
      %v6892 = vld [vmem:[%s6811 + $0x141] sm:$0xff]
      %v6893 = vld [vmem:[%s6811 + $0x151] sm:$0xff]
      %v6894 = vld [vmem:[%s6811 + $0x161] sm:$0xff]
      %v6895 = vld [vmem:[%s6811 + $0x171] sm:$0xff]
      %v6896 = vld [vmem:[%s6811 + $0x181] sm:$0xff]
      %v6897 = vld [vmem:[%s6811 + $0x191] sm:$0xff]
      %v6898 = vld [vmem:[%s6811 + $0x1a1] sm:$0xff]
      %v6899 = vld [vmem:[%s6811 + $0x1b1] sm:$0xff]
      %v6900 = vld [vmem:[%s6811 + $0x1e1] sm:$0xff]
      %v6901 = vld [vmem:[%s6811 + $0x1f1] sm:$0xff]
      %v6902 = vld [vmem:[%s6811 + $0x201] sm:$0xff]
      %v6903 = vld [vmem:[%s6811 + $0x211] sm:$0xff]
      %v6904 = vld [vmem:[%s6811 + $0x221] sm:$0xff]
      %v6905 = vld [vmem:[%s6811 + $0x231] sm:$0xff]
      %v6906 = vld [vmem:[%s6811 + $0x241] sm:$0xff]
      %v6907 = vld [vmem:[%s6811 + $0x251] sm:$0xff]
      %v6908 = vld [vmem:[%s6811 + $0x281] sm:$0xff]
      %v6909 = vld [vmem:[%s6811 + $0x291] sm:$0xff]
      %v6910 = vld [vmem:[%s6811 + $0x2a1] sm:$0xff]
      %v6911 = vld [vmem:[%s6811 + $0x2b1] sm:$0xff]
      %v6912 = vld [vmem:[%s6811 + $0x2c1] sm:$0xff]
      %v6913 = vld [vmem:[%s6811 + $0x2d1] sm:$0xff]
      %v6914 = vld [vmem:[%s6811 + $0x2e1] sm:$0xff]
      %v6915 = vld [vmem:[%s6811 + $0x2f1] sm:$0xff]
      %v6916 = vld [vmem:[%s6811 + $0x321] sm:$0xff]
      %v6917 = vld [vmem:[%s6811 + $0x331] sm:$0xff]
      %v6918 = vld [vmem:[%s6811 + $0x341] sm:$0xff]
      %v6919 = vld [vmem:[%s6811 + $0x351] sm:$0xff]
      %v6920 = vld [vmem:[%s6811 + $0x361] sm:$0xff]
      %v6921 = vld [vmem:[%s6811 + $0x371] sm:$0xff]
      %v6922 = vld [vmem:[%s6811 + $0x381] sm:$0xff]
      %v6923 = vld [vmem:[%s6811 + $0x391] sm:$0xff]
      %v6924 = vld [vmem:[%s6811 + $0x3c1] sm:$0xff]
      %v6925 = vld [vmem:[%s6811 + $0x3d1] sm:$0xff]
      %v6926 = vld [vmem:[%s6811 + $0x3e1] sm:$0xff]
      %v6927 = vld [vmem:[%s6811 + $0x3f1] sm:$0xff]
      %v6928 = vld [vmem:[%s6811 + $0x401] sm:$0xff]
      %v6929 = vld [vmem:[%s6811 + $0x411] sm:$0xff]
      %v6930 = vld [vmem:[%s6811 + $0x421] sm:$0xff]
      %v6931 = vld [vmem:[%s6811 + $0x431] sm:$0xff]
      %v6932 = vld [vmem:[%s6811 + $0x461] sm:$0xff]
      %v6933 = vld [vmem:[%s6811 + $0x471] sm:$0xff]
      %v6934 = vld [vmem:[%s6811 + $0x481] sm:$0xff]
      %v6935 = vld [vmem:[%s6811 + $0x491] sm:$0xff]
      %v6936 = vld [vmem:[%s6811 + $0x4a1] sm:$0xff]
      %v6937 = vld [vmem:[%s6811 + $0x4b1] sm:$0xff]
      %v6938 = vld [vmem:[%s6811 + $0x4c1] sm:$0xff]
      %v6939 = vld [vmem:[%s6811 + $0x4d1] sm:$0xff]
      %v6940 = vld [vmem:[%s6811 + $0x2] sm:$0xff]
      %v6941 = vld [vmem:[%s6811 + $0x12] sm:$0xff]
      %v6942 = vld [vmem:[%s6811 + $0x22] sm:$0xff]
      %v6943 = vld [vmem:[%s6811 + $0x32] sm:$0xff]
      %v6944 = vld [vmem:[%s6811 + $0x42] sm:$0xff]
      %v6945 = vld [vmem:[%s6811 + $0x52] sm:$0xff]
      %v6946 = vld [vmem:[%s6811 + $0x62] sm:$0xff]
      %v6947 = vld [vmem:[%s6811 + $0x72] sm:$0xff]
      %v6948 = vld [vmem:[%s6811 + $0xa2] sm:$0xff]
      %v6949 = vld [vmem:[%s6811 + $0xb2] sm:$0xff]
      %v6950 = vld [vmem:[%s6811 + $0xc2] sm:$0xff]
      %v6951 = vld [vmem:[%s6811 + $0xd2] sm:$0xff]
      %v6952 = vld [vmem:[%s6811 + $0xe2] sm:$0xff]
      %v6953 = vld [vmem:[%s6811 + $0xf2] sm:$0xff]
      %v6954 = vld [vmem:[%s6811 + $0x102] sm:$0xff]
      %v6955 = vld [vmem:[%s6811 + $0x112] sm:$0xff]
      %v6956 = vld [vmem:[%s6811 + $0x142] sm:$0xff]
      %v6957 = vld [vmem:[%s6811 + $0x152] sm:$0xff]
      %v6958 = vld [vmem:[%s6811 + $0x162] sm:$0xff]
      %v6959 = vld [vmem:[%s6811 + $0x172] sm:$0xff]
      %v6960 = vld [vmem:[%s6811 + $0x182] sm:$0xff]
      %v6961 = vld [vmem:[%s6811 + $0x192] sm:$0xff]
      %v6962 = vld [vmem:[%s6811 + $0x1a2] sm:$0xff]
      %v6963 = vld [vmem:[%s6811 + $0x1b2] sm:$0xff]
      %v6964 = vld [vmem:[%s6811 + $0x1e2] sm:$0xff]
      %v6965 = vld [vmem:[%s6811 + $0x1f2] sm:$0xff]
      %v6966 = vld [vmem:[%s6811 + $0x202] sm:$0xff]
      %v6967 = vld [vmem:[%s6811 + $0x212] sm:$0xff]
      %v6968 = vld [vmem:[%s6811 + $0x222] sm:$0xff]
      %v6969 = vld [vmem:[%s6811 + $0x232] sm:$0xff]
      %v6970 = vld [vmem:[%s6811 + $0x242] sm:$0xff]
      %v6971 = vld [vmem:[%s6811 + $0x252] sm:$0xff]
      %v6972 = vld [vmem:[%s6811 + $0x282] sm:$0xff]
      %v6973 = vld [vmem:[%s6811 + $0x292] sm:$0xff]
      %v6974 = vld [vmem:[%s6811 + $0x2a2] sm:$0xff]
      %v6975 = vld [vmem:[%s6811 + $0x2b2] sm:$0xff]
      %v6976 = vld [vmem:[%s6811 + $0x2c2] sm:$0xff]
      %v6977 = vld [vmem:[%s6811 + $0x2d2] sm:$0xff]
      %v6978 = vld [vmem:[%s6811 + $0x2e2] sm:$0xff]
      %v6979 = vld [vmem:[%s6811 + $0x2f2] sm:$0xff]
      %v6980 = vld [vmem:[%s6811 + $0x322] sm:$0xff]
      %v6981 = vld [vmem:[%s6811 + $0x332] sm:$0xff]
      %v6982 = vld [vmem:[%s6811 + $0x342] sm:$0xff]
      %v6983 = vld [vmem:[%s6811 + $0x352] sm:$0xff]
      %v6984 = vld [vmem:[%s6811 + $0x362] sm:$0xff]
      %v6985 = vld [vmem:[%s6811 + $0x372] sm:$0xff]
      %v6986 = vld [vmem:[%s6811 + $0x382] sm:$0xff]
      %v6987 = vld [vmem:[%s6811 + $0x392] sm:$0xff]
      %v6988 = vld [vmem:[%s6811 + $0x3c2] sm:$0xff]
      %v6989 = vld [vmem:[%s6811 + $0x3d2] sm:$0xff]
      %v6990 = vld [vmem:[%s6811 + $0x3e2] sm:$0xff]
      %v6991 = vld [vmem:[%s6811 + $0x3f2] sm:$0xff]
      %v6992 = vld [vmem:[%s6811 + $0x402] sm:$0xff]
      %v6993 = vld [vmem:[%s6811 + $0x412] sm:$0xff]
      %v6994 = vld [vmem:[%s6811 + $0x422] sm:$0xff]
      %v6995 = vld [vmem:[%s6811 + $0x432] sm:$0xff]
      %v6996 = vld [vmem:[%s6811 + $0x462] sm:$0xff]
      %v6997 = vld [vmem:[%s6811 + $0x472] sm:$0xff]
      %v6998 = vld [vmem:[%s6811 + $0x482] sm:$0xff]
      %v6999 = vld [vmem:[%s6811 + $0x492] sm:$0xff]
      %v7000 = vld [vmem:[%s6811 + $0x4a2] sm:$0xff]
      %v7001 = vld [vmem:[%s6811 + $0x4b2] sm:$0xff]
      %v7002 = vld [vmem:[%s6811 + $0x4c2] sm:$0xff]
      %v7003 = vld [vmem:[%s6811 + $0x4d2] sm:$0xff]
      %7068 = vrot.lane.b32.xlu0 %v6876, 4
      %v7069 = vpop.permute.xlu0 %7068
      %7070 = vrot.lane.b32.xlu0 %v6877, 4
      %v7071 = vpop.permute.xlu0 %7070
      %7072 = vrot.lane.b32.xlu0 %v6878, 4
      %v7073 = vpop.permute.xlu0 %7072
      %7074 = vrot.lane.b32.xlu0 %v6879, 4
      %v7075 = vpop.permute.xlu0 %7074
      %7076 = vrot.lane.b32.xlu0 %v6880, 4
      %v7077 = vpop.permute.xlu0 %7076
      %7078 = vrot.lane.b32.xlu0 %v6881, 4
      %v7079 = vpop.permute.xlu0 %7078
      %7080 = vrot.lane.b32.xlu0 %v6882, 4
      %v7081 = vpop.permute.xlu0 %7080
      %7082 = vrot.lane.b32.xlu0 %v6883, 4
      %v7083 = vpop.permute.xlu0 %7082
      %7084 = vrot.lane.b32.xlu0 %v6884, 4
      %v7085 = vpop.permute.xlu0 %7084
      %7086 = vrot.lane.b32.xlu0 %v6885, 4
      %v7087 = vpop.permute.xlu0 %7086
      %7088 = vrot.lane.b32.xlu0 %v6886, 4
      %v7089 = vpop.permute.xlu0 %7088
      %7090 = vrot.lane.b32.xlu0 %v6887, 4
      %v7091 = vpop.permute.xlu0 %7090
      %7092 = vrot.lane.b32.xlu0 %v6888, 4
      %v7093 = vpop.permute.xlu0 %7092
      %7094 = vrot.lane.b32.xlu0 %v6889, 4
      %v7095 = vpop.permute.xlu0 %7094
      %7096 = vrot.lane.b32.xlu0 %v6890, 4
      %v7097 = vpop.permute.xlu0 %7096
      %7098 = vrot.lane.b32.xlu0 %v6891, 4
      %v7099 = vpop.permute.xlu0 %7098
      %7100 = vrot.lane.b32.xlu0 %v6892, 4
      %v7101 = vpop.permute.xlu0 %7100
      %7102 = vrot.lane.b32.xlu0 %v6893, 4
      %v7103 = vpop.permute.xlu0 %7102
      %7104 = vrot.lane.b32.xlu0 %v6894, 4
      %v7105 = vpop.permute.xlu0 %7104
      %7106 = vrot.lane.b32.xlu0 %v6895, 4
      %v7107 = vpop.permute.xlu0 %7106
      %7108 = vrot.lane.b32.xlu0 %v6896, 4
      %v7109 = vpop.permute.xlu0 %7108
      %7110 = vrot.lane.b32.xlu0 %v6897, 4
      %v7111 = vpop.permute.xlu0 %7110
      %7112 = vrot.lane.b32.xlu0 %v6898, 4
      %v7113 = vpop.permute.xlu0 %7112
      %7114 = vrot.lane.b32.xlu0 %v6899, 4
      %v7115 = vpop.permute.xlu0 %7114
      %7116 = vrot.lane.b32.xlu0 %v6900, 4
      %v7117 = vpop.permute.xlu0 %7116
      %7118 = vrot.lane.b32.xlu0 %v6901, 4
      %v7119 = vpop.permute.xlu0 %7118
      %7120 = vrot.lane.b32.xlu0 %v6902, 4
      %v7121 = vpop.permute.xlu0 %7120
      %7122 = vrot.lane.b32.xlu0 %v6903, 4
      %v7123 = vpop.permute.xlu0 %7122
      %7124 = vrot.lane.b32.xlu0 %v6904, 4
      %v7125 = vpop.permute.xlu0 %7124
      %7126 = vrot.lane.b32.xlu0 %v6905, 4
      %v7127 = vpop.permute.xlu0 %7126
      %7128 = vrot.lane.b32.xlu0 %v6906, 4
      %v7129 = vpop.permute.xlu0 %7128
      %7130 = vrot.lane.b32.xlu0 %v6907, 4
      %v7131 = vpop.permute.xlu0 %7130
      %7132 = vrot.lane.b32.xlu0 %v6908, 4
      %v7133 = vpop.permute.xlu0 %7132
      %7134 = vrot.lane.b32.xlu0 %v6909, 4
      %v7135 = vpop.permute.xlu0 %7134
      %7136 = vrot.lane.b32.xlu0 %v6910, 4
      %v7137 = vpop.permute.xlu0 %7136
      %7138 = vrot.lane.b32.xlu0 %v6911, 4
      %v7139 = vpop.permute.xlu0 %7138
      %7140 = vrot.lane.b32.xlu0 %v6912, 4
      %v7141 = vpop.permute.xlu0 %7140
      %7142 = vrot.lane.b32.xlu0 %v6913, 4
      %v7143 = vpop.permute.xlu0 %7142
      %7144 = vrot.lane.b32.xlu0 %v6914, 4
      %v7145 = vpop.permute.xlu0 %7144
      %7146 = vrot.lane.b32.xlu0 %v6915, 4
      %v7147 = vpop.permute.xlu0 %7146
      %7148 = vrot.lane.b32.xlu0 %v6916, 4
      %v7149 = vpop.permute.xlu0 %7148
      %7150 = vrot.lane.b32.xlu0 %v6917, 4
      %v7151 = vpop.permute.xlu0 %7150
      %7152 = vrot.lane.b32.xlu0 %v6918, 4
      %v7153 = vpop.permute.xlu0 %7152
      %7154 = vrot.lane.b32.xlu0 %v6919, 4
      %v7155 = vpop.permute.xlu0 %7154
      %7156 = vrot.lane.b32.xlu0 %v6920, 4
      %v7157 = vpop.permute.xlu0 %7156
      %7158 = vrot.lane.b32.xlu0 %v6921, 4
      %v7159 = vpop.permute.xlu0 %7158
      %7160 = vrot.lane.b32.xlu0 %v6922, 4
      %v7161 = vpop.permute.xlu0 %7160
      %7162 = vrot.lane.b32.xlu0 %v6923, 4
      %v7163 = vpop.permute.xlu0 %7162
      %7164 = vrot.lane.b32.xlu0 %v6924, 4
      %v7165 = vpop.permute.xlu0 %7164
      %7166 = vrot.lane.b32.xlu0 %v6925, 4
      %v7167 = vpop.permute.xlu0 %7166
      %7168 = vrot.lane.b32.xlu0 %v6926, 4
      %v7169 = vpop.permute.xlu0 %7168
      %7170 = vrot.lane.b32.xlu0 %v6927, 4
      %v7171 = vpop.permute.xlu0 %7170
      %7172 = vrot.lane.b32.xlu0 %v6928, 4
      %v7173 = vpop.permute.xlu0 %7172
      %7174 = vrot.lane.b32.xlu0 %v6929, 4
      %v7175 = vpop.permute.xlu0 %7174
      %7176 = vrot.lane.b32.xlu0 %v6930, 4
      %v7177 = vpop.permute.xlu0 %7176
      %7178 = vrot.lane.b32.xlu0 %v6931, 4
      %v7179 = vpop.permute.xlu0 %7178
      %7180 = vrot.lane.b32.xlu0 %v6932, 4
      %v7181 = vpop.permute.xlu0 %7180
      %7182 = vrot.lane.b32.xlu0 %v6933, 4
      %v7183 = vpop.permute.xlu0 %7182
      %7184 = vrot.lane.b32.xlu0 %v6934, 4
      %v7185 = vpop.permute.xlu0 %7184
      %7186 = vrot.lane.b32.xlu0 %v6935, 4
      %v7187 = vpop.permute.xlu0 %7186
      %7188 = vrot.lane.b32.xlu0 %v6936, 4
      %v7189 = vpop.permute.xlu0 %7188
      %7190 = vrot.lane.b32.xlu0 %v6937, 4
      %v7191 = vpop.permute.xlu0 %7190
      %7192 = vrot.lane.b32.xlu0 %v6938, 4
      %v7193 = vpop.permute.xlu0 %7192
      %7194 = vrot.lane.b32.xlu0 %v6939, 4
      %v7195 = vpop.permute.xlu0 %7194
      %7324 = vrot.lane.b32.xlu0 %v6940, 8
      %v7325 = vpop.permute.xlu0 %7324
      %7326 = vrot.lane.b32.xlu0 %v6941, 8
      %v7327 = vpop.permute.xlu0 %7326
      %7328 = vrot.lane.b32.xlu0 %v6942, 8
      %v7329 = vpop.permute.xlu0 %7328
      %7330 = vrot.lane.b32.xlu0 %v6943, 8
      %v7331 = vpop.permute.xlu0 %7330
      %7332 = vrot.lane.b32.xlu0 %v6944, 8
      %v7333 = vpop.permute.xlu0 %7332
      %7334 = vrot.lane.b32.xlu0 %v6945, 8
      %v7335 = vpop.permute.xlu0 %7334
      %7336 = vrot.lane.b32.xlu0 %v6946, 8
      %v7337 = vpop.permute.xlu0 %7336
      %7338 = vrot.lane.b32.xlu0 %v6947, 8
      %v7339 = vpop.permute.xlu0 %7338
      %7340 = vrot.lane.b32.xlu0 %v6948, 8
      %v7341 = vpop.permute.xlu0 %7340
      %7342 = vrot.lane.b32.xlu0 %v6949, 8
      %v7343 = vpop.permute.xlu0 %7342
      %7344 = vrot.lane.b32.xlu0 %v6950, 8
      %v7345 = vpop.permute.xlu0 %7344
      %7346 = vrot.lane.b32.xlu0 %v6951, 8
      %v7347 = vpop.permute.xlu0 %7346
      %7348 = vrot.lane.b32.xlu0 %v6952, 8
      %v7349 = vpop.permute.xlu0 %7348
      %7350 = vrot.lane.b32.xlu0 %v6953, 8
      %v7351 = vpop.permute.xlu0 %7350
      %7352 = vrot.lane.b32.xlu0 %v6954, 8
      %v7353 = vpop.permute.xlu0 %7352
      %7354 = vrot.lane.b32.xlu0 %v6955, 8
      %v7355 = vpop.permute.xlu0 %7354
      %7356 = vrot.lane.b32.xlu0 %v6956, 8
      %v7357 = vpop.permute.xlu0 %7356
      %7358 = vrot.lane.b32.xlu0 %v6957, 8
      %v7359 = vpop.permute.xlu0 %7358
      %7360 = vrot.lane.b32.xlu0 %v6958, 8
      %v7361 = vpop.permute.xlu0 %7360
      %7362 = vrot.lane.b32.xlu0 %v6959, 8
      %v7363 = vpop.permute.xlu0 %7362
      %7364 = vrot.lane.b32.xlu0 %v6960, 8
      %v7365 = vpop.permute.xlu0 %7364
      %7366 = vrot.lane.b32.xlu0 %v6961, 8
      %v7367 = vpop.permute.xlu0 %7366
      %7368 = vrot.lane.b32.xlu0 %v6962, 8
      %v7369 = vpop.permute.xlu0 %7368
      %7370 = vrot.lane.b32.xlu0 %v6963, 8
      %v7371 = vpop.permute.xlu0 %7370
      %7372 = vrot.lane.b32.xlu0 %v6964, 8
      %v7373 = vpop.permute.xlu0 %7372
      %7374 = vrot.lane.b32.xlu0 %v6965, 8
      %v7375 = vpop.permute.xlu0 %7374
      %7376 = vrot.lane.b32.xlu0 %v6966, 8
      %v7377 = vpop.permute.xlu0 %7376
      %7378 = vrot.lane.b32.xlu0 %v6967, 8
      %v7379 = vpop.permute.xlu0 %7378
      %7380 = vrot.lane.b32.xlu0 %v6968, 8
      %v7381 = vpop.permute.xlu0 %7380
      %7382 = vrot.lane.b32.xlu0 %v6969, 8
      %v7383 = vpop.permute.xlu0 %7382
      %7384 = vrot.lane.b32.xlu0 %v6970, 8
      %v7385 = vpop.permute.xlu0 %7384
      %7386 = vrot.lane.b32.xlu0 %v6971, 8
      %v7387 = vpop.permute.xlu0 %7386
      %7388 = vrot.lane.b32.xlu0 %v6972, 8
      %v7389 = vpop.permute.xlu0 %7388
      %7390 = vrot.lane.b32.xlu0 %v6973, 8
      %v7391 = vpop.permute.xlu0 %7390
      %7392 = vrot.lane.b32.xlu0 %v6974, 8
      %v7393 = vpop.permute.xlu0 %7392
      %7394 = vrot.lane.b32.xlu0 %v6975, 8
      %v7395 = vpop.permute.xlu0 %7394
      %7396 = vrot.lane.b32.xlu0 %v6976, 8
      %v7397 = vpop.permute.xlu0 %7396
      %7398 = vrot.lane.b32.xlu0 %v6977, 8
      %v7399 = vpop.permute.xlu0 %7398
      %7400 = vrot.lane.b32.xlu0 %v6978, 8
      %v7401 = vpop.permute.xlu0 %7400
      %7402 = vrot.lane.b32.xlu0 %v6979, 8
      %v7403 = vpop.permute.xlu0 %7402
      %7404 = vrot.lane.b32.xlu0 %v6980, 8
      %v7405 = vpop.permute.xlu0 %7404
      %7406 = vrot.lane.b32.xlu0 %v6981, 8
      %v7407 = vpop.permute.xlu0 %7406
      %7408 = vrot.lane.b32.xlu0 %v6982, 8
      %v7409 = vpop.permute.xlu0 %7408
      %7410 = vrot.lane.b32.xlu0 %v6983, 8
      %v7411 = vpop.permute.xlu0 %7410
      %7412 = vrot.lane.b32.xlu0 %v6984, 8
      %v7413 = vpop.permute.xlu0 %7412
      %7414 = vrot.lane.b32.xlu0 %v6985, 8
      %v7415 = vpop.permute.xlu0 %7414
      %7416 = vrot.lane.b32.xlu0 %v6986, 8
      %v7417 = vpop.permute.xlu0 %7416
      %7418 = vrot.lane.b32.xlu0 %v6987, 8
      %v7419 = vpop.permute.xlu0 %7418
      %7420 = vrot.lane.b32.xlu0 %v6988, 8
      %v7421 = vpop.permute.xlu0 %7420
      %7422 = vrot.lane.b32.xlu0 %v6989, 8
      %v7423 = vpop.permute.xlu0 %7422
      %7424 = vrot.lane.b32.xlu0 %v6990, 8
      %v7425 = vpop.permute.xlu0 %7424
      %7426 = vrot.lane.b32.xlu0 %v6991, 8
      %v7427 = vpop.permute.xlu0 %7426
      %7428 = vrot.lane.b32.xlu0 %v6992, 8
      %v7429 = vpop.permute.xlu0 %7428
      %7430 = vrot.lane.b32.xlu0 %v6993, 8
      %v7431 = vpop.permute.xlu0 %7430
      %7432 = vrot.lane.b32.xlu0 %v6994, 8
      %v7433 = vpop.permute.xlu0 %7432
      %7434 = vrot.lane.b32.xlu0 %v6995, 8
      %v7435 = vpop.permute.xlu0 %7434
      %7436 = vrot.lane.b32.xlu0 %v6996, 8
      %v7437 = vpop.permute.xlu0 %7436
      %7438 = vrot.lane.b32.xlu0 %v6997, 8
      %v7439 = vpop.permute.xlu0 %7438
      %7440 = vrot.lane.b32.xlu0 %v6998, 8
      %v7441 = vpop.permute.xlu0 %7440
      %7442 = vrot.lane.b32.xlu0 %v6999, 8
      %v7443 = vpop.permute.xlu0 %7442
      %7444 = vrot.lane.b32.xlu0 %v7000, 8
      %v7445 = vpop.permute.xlu0 %7444
      %7446 = vrot.lane.b32.xlu0 %v7001, 8
      %v7447 = vpop.permute.xlu0 %7446
      %7448 = vrot.lane.b32.xlu0 %v7002, 8
      %v7449 = vpop.permute.xlu0 %7448
      %7450 = vrot.lane.b32.xlu0 %v7003, 8
      %v7451 = vpop.permute.xlu0 %7450
      %v7516 = vsel %vm846, %v6812, %v7069
      %v7517 = vsel %vm846, %v6813, %v7071
      %v7518 = vsel %vm846, %v6814, %v7073
      %v7519 = vsel %vm846, %v6815, %v7075
      %v7520 = vsel %vm846, %v6816, %v7077
      %v7521 = vsel %vm846, %v6817, %v7079
      %v7522 = vsel %vm846, %v6818, %v7081
      %v7523 = vsel %vm846, %v6819, %v7083
      %v7524 = vsel %vm846, %v6820, %v7085
      %v7525 = vsel %vm846, %v6821, %v7087
      %v7526 = vsel %vm846, %v6822, %v7089
      %v7527 = vsel %vm846, %v6823, %v7091
      %v7528 = vsel %vm846, %v6824, %v7093
      %v7529 = vsel %vm846, %v6825, %v7095
      %v7530 = vsel %vm846, %v6826, %v7097
      %v7531 = vsel %vm846, %v6827, %v7099
      %v7532 = vsel %vm846, %v6828, %v7101
      %v7533 = vsel %vm846, %v6829, %v7103
      %v7534 = vsel %vm846, %v6830, %v7105
      %v7535 = vsel %vm846, %v6831, %v7107
      %v7536 = vsel %vm846, %v6832, %v7109
      %v7537 = vsel %vm846, %v6833, %v7111
      %v7538 = vsel %vm846, %v6834, %v7113
      %v7539 = vsel %vm846, %v6835, %v7115
      %v7540 = vsel %vm846, %v6836, %v7117
      %v7541 = vsel %vm846, %v6837, %v7119
      %v7542 = vsel %vm846, %v6838, %v7121
      %v7543 = vsel %vm846, %v6839, %v7123
      %v7544 = vsel %vm846, %v6840, %v7125
      %v7545 = vsel %vm846, %v6841, %v7127
      %v7546 = vsel %vm846, %v6842, %v7129
      %v7547 = vsel %vm846, %v6843, %v7131
      %v7548 = vsel %vm846, %v6844, %v7133
      %v7549 = vsel %vm846, %v6845, %v7135
      %v7550 = vsel %vm846, %v6846, %v7137
      %v7551 = vsel %vm846, %v6847, %v7139
      %v7552 = vsel %vm846, %v6848, %v7141
      %v7553 = vsel %vm846, %v6849, %v7143
      %v7554 = vsel %vm846, %v6850, %v7145
      %v7555 = vsel %vm846, %v6851, %v7147
      %v7556 = vsel %vm846, %v6852, %v7149
      %v7557 = vsel %vm846, %v6853, %v7151
      %v7558 = vsel %vm846, %v6854, %v7153
      %v7559 = vsel %vm846, %v6855, %v7155
      %v7560 = vsel %vm846, %v6856, %v7157
      %v7561 = vsel %vm846, %v6857, %v7159
      %v7562 = vsel %vm846, %v6858, %v7161
      %v7563 = vsel %vm846, %v6859, %v7163
      %v7564 = vsel %vm846, %v6860, %v7165
      %v7565 = vsel %vm846, %v6861, %v7167
      %v7566 = vsel %vm846, %v6862, %v7169
      %v7567 = vsel %vm846, %v6863, %v7171
      %v7568 = vsel %vm846, %v6864, %v7173
      %v7569 = vsel %vm846, %v6865, %v7175
      %v7570 = vsel %vm846, %v6866, %v7177
      %v7571 = vsel %vm846, %v6867, %v7179
      %v7572 = vsel %vm846, %v6868, %v7181
      %v7573 = vsel %vm846, %v6869, %v7183
      %v7574 = vsel %vm846, %v6870, %v7185
      %v7575 = vsel %vm846, %v6871, %v7187
      %v7576 = vsel %vm846, %v6872, %v7189
      %v7577 = vsel %vm846, %v6873, %v7191
      %v7578 = vsel %vm846, %v6874, %v7193
      %v7579 = vsel %vm846, %v6875, %v7195
      %v7580 = vsel %vm911, %v7516, %v7325
      %v7581 = vsel %vm911, %v7517, %v7327
      %v7582 = vsel %vm911, %v7518, %v7329
      %v7583 = vsel %vm911, %v7519, %v7331
      %v7584 = vsel %vm911, %v7520, %v7333
      %v7585 = vsel %vm911, %v7521, %v7335
      %v7586 = vsel %vm911, %v7522, %v7337
      %v7587 = vsel %vm911, %v7523, %v7339
      %v7588 = vsel %vm911, %v7524, %v7341
      %v7589 = vsel %vm911, %v7525, %v7343
      %v7590 = vsel %vm911, %v7526, %v7345
      %v7591 = vsel %vm911, %v7527, %v7347
      %v7592 = vsel %vm911, %v7528, %v7349
      %v7593 = vsel %vm911, %v7529, %v7351
      %v7594 = vsel %vm911, %v7530, %v7353
      %v7595 = vsel %vm911, %v7531, %v7355
      %v7596 = vsel %vm911, %v7532, %v7357
      %v7597 = vsel %vm911, %v7533, %v7359
      %v7598 = vsel %vm911, %v7534, %v7361
      %v7599 = vsel %vm911, %v7535, %v7363
      %v7600 = vsel %vm911, %v7536, %v7365
      %v7601 = vsel %vm911, %v7537, %v7367
      %v7602 = vsel %vm911, %v7538, %v7369
      %v7603 = vsel %vm911, %v7539, %v7371
      %v7604 = vsel %vm911, %v7540, %v7373
      %v7605 = vsel %vm911, %v7541, %v7375
      %v7606 = vsel %vm911, %v7542, %v7377
      %v7607 = vsel %vm911, %v7543, %v7379
      %v7608 = vsel %vm911, %v7544, %v7381
      %v7609 = vsel %vm911, %v7545, %v7383
      %v7610 = vsel %vm911, %v7546, %v7385
      %v7611 = vsel %vm911, %v7547, %v7387
      %v7612 = vsel %vm911, %v7548, %v7389
      %v7613 = vsel %vm911, %v7549, %v7391
      %v7614 = vsel %vm911, %v7550, %v7393
      %v7615 = vsel %vm911, %v7551, %v7395
      %v7616 = vsel %vm911, %v7552, %v7397
      %v7617 = vsel %vm911, %v7553, %v7399
      %v7618 = vsel %vm911, %v7554, %v7401
      %v7619 = vsel %vm911, %v7555, %v7403
      %v7620 = vsel %vm911, %v7556, %v7405
      %v7621 = vsel %vm911, %v7557, %v7407
      %v7622 = vsel %vm911, %v7558, %v7409
      %v7623 = vsel %vm911, %v7559, %v7411
      %v7624 = vsel %vm911, %v7560, %v7413
      %v7625 = vsel %vm911, %v7561, %v7415
      %v7626 = vsel %vm911, %v7562, %v7417
      %v7627 = vsel %vm911, %v7563, %v7419
      %v7628 = vsel %vm911, %v7564, %v7421
      %v7629 = vsel %vm911, %v7565, %v7423
      %v7630 = vsel %vm911, %v7566, %v7425
      %v7631 = vsel %vm911, %v7567, %v7427
      %v7632 = vsel %vm911, %v7568, %v7429
      %v7633 = vsel %vm911, %v7569, %v7431
      %v7634 = vsel %vm911, %v7570, %v7433
      %v7635 = vsel %vm911, %v7571, %v7435
      %v7636 = vsel %vm911, %v7572, %v7437
      %v7637 = vsel %vm911, %v7573, %v7439
      %v7638 = vsel %vm911, %v7574, %v7441
      %v7639 = vsel %vm911, %v7575, %v7443
      %v7640 = vsel %vm911, %v7576, %v7445
      %v7641 = vsel %vm911, %v7577, %v7447
      %v7642 = vsel %vm911, %v7578, %v7449
      %v7643 = vsel %vm911, %v7579, %v7451
      %7708 = vrot.lane.b32.xlu0 %v7580, 72
      %v7709 = vpop.permute.xlu0 %7708
      %7710 = vrot.lane.b32.xlu0 %v7581, 72
      %v7711 = vpop.permute.xlu0 %7710
      %7712 = vrot.lane.b32.xlu0 %v7582, 72
      %v7713 = vpop.permute.xlu0 %7712
      %7714 = vrot.lane.b32.xlu0 %v7583, 72
      %v7715 = vpop.permute.xlu0 %7714
      %7716 = vrot.lane.b32.xlu0 %v7584, 72
      %v7717 = vpop.permute.xlu0 %7716
      %7718 = vrot.lane.b32.xlu0 %v7585, 72
      %v7719 = vpop.permute.xlu0 %7718
      %7720 = vrot.lane.b32.xlu0 %v7586, 72
      %v7721 = vpop.permute.xlu0 %7720
      %7722 = vrot.lane.b32.xlu0 %v7587, 72
      %v7723 = vpop.permute.xlu0 %7722
      %7724 = vrot.lane.b32.xlu0 %v7588, 72
      %v7725 = vpop.permute.xlu0 %7724
      %7726 = vrot.lane.b32.xlu0 %v7589, 72
      %v7727 = vpop.permute.xlu0 %7726
      %7728 = vrot.lane.b32.xlu0 %v7590, 72
      %v7729 = vpop.permute.xlu0 %7728
      %7730 = vrot.lane.b32.xlu0 %v7591, 72
      %v7731 = vpop.permute.xlu0 %7730
      %7732 = vrot.lane.b32.xlu0 %v7592, 72
      %v7733 = vpop.permute.xlu0 %7732
      %7734 = vrot.lane.b32.xlu0 %v7593, 72
      %v7735 = vpop.permute.xlu0 %7734
      %7736 = vrot.lane.b32.xlu0 %v7594, 72
      %v7737 = vpop.permute.xlu0 %7736
      %7738 = vrot.lane.b32.xlu0 %v7595, 72
      %v7739 = vpop.permute.xlu0 %7738
      %7740 = vrot.lane.b32.xlu0 %v7596, 72
      %v7741 = vpop.permute.xlu0 %7740
      %7742 = vrot.lane.b32.xlu0 %v7597, 72
      %v7743 = vpop.permute.xlu0 %7742
      %7744 = vrot.lane.b32.xlu0 %v7598, 72
      %v7745 = vpop.permute.xlu0 %7744
      %7746 = vrot.lane.b32.xlu0 %v7599, 72
      %v7747 = vpop.permute.xlu0 %7746
      %7748 = vrot.lane.b32.xlu0 %v7600, 72
      %v7749 = vpop.permute.xlu0 %7748
      %7750 = vrot.lane.b32.xlu0 %v7601, 72
      %v7751 = vpop.permute.xlu0 %7750
      %7752 = vrot.lane.b32.xlu0 %v7602, 72
      %v7753 = vpop.permute.xlu0 %7752
      %7754 = vrot.lane.b32.xlu0 %v7603, 72
      %v7755 = vpop.permute.xlu0 %7754
      %7756 = vrot.lane.b32.xlu0 %v7604, 72
      %v7757 = vpop.permute.xlu0 %7756
      %7758 = vrot.lane.b32.xlu0 %v7605, 72
      %v7759 = vpop.permute.xlu0 %7758
      %7760 = vrot.lane.b32.xlu0 %v7606, 72
      %v7761 = vpop.permute.xlu0 %7760
      %7762 = vrot.lane.b32.xlu0 %v7607, 72
      %v7763 = vpop.permute.xlu0 %7762
      %7764 = vrot.lane.b32.xlu0 %v7608, 72
      %v7765 = vpop.permute.xlu0 %7764
      %7766 = vrot.lane.b32.xlu0 %v7609, 72
      %v7767 = vpop.permute.xlu0 %7766
      %7768 = vrot.lane.b32.xlu0 %v7610, 72
      %v7769 = vpop.permute.xlu0 %7768
      %7770 = vrot.lane.b32.xlu0 %v7611, 72
      %v7771 = vpop.permute.xlu0 %7770
      %7772 = vrot.lane.b32.xlu0 %v7612, 72
      %v7773 = vpop.permute.xlu0 %7772
      %7774 = vrot.lane.b32.xlu0 %v7613, 72
      %v7775 = vpop.permute.xlu0 %7774
      %7776 = vrot.lane.b32.xlu0 %v7614, 72
      %v7777 = vpop.permute.xlu0 %7776
      %7778 = vrot.lane.b32.xlu0 %v7615, 72
      %v7779 = vpop.permute.xlu0 %7778
      %7780 = vrot.lane.b32.xlu0 %v7616, 72
      %v7781 = vpop.permute.xlu0 %7780
      %7782 = vrot.lane.b32.xlu0 %v7617, 72
      %v7783 = vpop.permute.xlu0 %7782
      %7784 = vrot.lane.b32.xlu0 %v7618, 72
      %v7785 = vpop.permute.xlu0 %7784
      %7786 = vrot.lane.b32.xlu0 %v7619, 72
      %v7787 = vpop.permute.xlu0 %7786
      %7788 = vrot.lane.b32.xlu0 %v7620, 72
      %v7789 = vpop.permute.xlu0 %7788
      %7790 = vrot.lane.b32.xlu0 %v7621, 72
      %v7791 = vpop.permute.xlu0 %7790
      %7792 = vrot.lane.b32.xlu0 %v7622, 72
      %v7793 = vpop.permute.xlu0 %7792
      %7794 = vrot.lane.b32.xlu0 %v7623, 72
      %v7795 = vpop.permute.xlu0 %7794
      %7796 = vrot.lane.b32.xlu0 %v7624, 72
      %v7797 = vpop.permute.xlu0 %7796
      %7798 = vrot.lane.b32.xlu0 %v7625, 72
      %v7799 = vpop.permute.xlu0 %7798
      %7800 = vrot.lane.b32.xlu0 %v7626, 72
      %v7801 = vpop.permute.xlu0 %7800
      %7802 = vrot.lane.b32.xlu0 %v7627, 72
      %v7803 = vpop.permute.xlu0 %7802
      %7804 = vrot.lane.b32.xlu0 %v7628, 72
      %v7805 = vpop.permute.xlu0 %7804
      %7806 = vrot.lane.b32.xlu0 %v7629, 72
      %v7807 = vpop.permute.xlu0 %7806
      %7808 = vrot.lane.b32.xlu0 %v7630, 72
      %v7809 = vpop.permute.xlu0 %7808
      %7810 = vrot.lane.b32.xlu0 %v7631, 72
      %v7811 = vpop.permute.xlu0 %7810
      %7812 = vrot.lane.b32.xlu0 %v7632, 72
      %v7813 = vpop.permute.xlu0 %7812
      %7814 = vrot.lane.b32.xlu0 %v7633, 72
      %v7815 = vpop.permute.xlu0 %7814
      %7816 = vrot.lane.b32.xlu0 %v7634, 72
      %v7817 = vpop.permute.xlu0 %7816
      %7818 = vrot.lane.b32.xlu0 %v7635, 72
      %v7819 = vpop.permute.xlu0 %7818
      %7820 = vrot.lane.b32.xlu0 %v7636, 72
      %v7821 = vpop.permute.xlu0 %7820
      %7822 = vrot.lane.b32.xlu0 %v7637, 72
      %v7823 = vpop.permute.xlu0 %7822
      %7824 = vrot.lane.b32.xlu0 %v7638, 72
      %v7825 = vpop.permute.xlu0 %7824
      %7826 = vrot.lane.b32.xlu0 %v7639, 72
      %v7827 = vpop.permute.xlu0 %7826
      %7828 = vrot.lane.b32.xlu0 %v7640, 72
      %v7829 = vpop.permute.xlu0 %7828
      %7830 = vrot.lane.b32.xlu0 %v7641, 72
      %v7831 = vpop.permute.xlu0 %7830
      %7832 = vrot.lane.b32.xlu0 %v7642, 72
      %v7833 = vpop.permute.xlu0 %7832
      %7834 = vrot.lane.b32.xlu0 %v7643, 72
      %v7835 = vpop.permute.xlu0 %7834
      %vm7900 = vcmask 687680
      %7901 = vst.msk [vmem:[#allocation2] sm:$0xff] %vm7900, %v7709
      %7902 = vst.msk [vmem:[#allocation2 + $0x8] sm:$0xff] %vm7900, %v7711
      %7903 = vst.msk [vmem:[#allocation2 + $0x10] sm:$0xff] %vm7900, %v7713
      %7904 = vst.msk [vmem:[#allocation2 + $0x18] sm:$0xff] %vm7900, %v7715
      %7905 = vst.msk [vmem:[#allocation2 + $0x20] sm:$0xff] %vm7900, %v7717
      %7906 = vst.msk [vmem:[#allocation2 + $0x28] sm:$0xff] %vm7900, %v7719
      %7907 = vst.msk [vmem:[#allocation2 + $0x30] sm:$0xff] %vm7900, %v7721
      %7908 = vst.msk [vmem:[#allocation2 + $0x38] sm:$0xff] %vm7900, %v7723
      %7909 = vst.msk [vmem:[#allocation2 + $0x40] sm:$0xff] %vm7900, %v7725
      %7910 = vst.msk [vmem:[#allocation2 + $0x48] sm:$0xff] %vm7900, %v7727
      %7911 = vst.msk [vmem:[#allocation2 + $0x50] sm:$0xff] %vm7900, %v7729
      %7912 = vst.msk [vmem:[#allocation2 + $0x58] sm:$0xff] %vm7900, %v7731
      %7913 = vst.msk [vmem:[#allocation2 + $0x60] sm:$0xff] %vm7900, %v7733
      %7914 = vst.msk [vmem:[#allocation2 + $0x68] sm:$0xff] %vm7900, %v7735
      %7915 = vst.msk [vmem:[#allocation2 + $0x70] sm:$0xff] %vm7900, %v7737
      %7916 = vst.msk [vmem:[#allocation2 + $0x78] sm:$0xff] %vm7900, %v7739
      %7917 = vst.msk [vmem:[#allocation2 + $0x80] sm:$0xff] %vm7900, %v7741
      %7918 = vst.msk [vmem:[#allocation2 + $0x88] sm:$0xff] %vm7900, %v7743
      %7919 = vst.msk [vmem:[#allocation2 + $0x90] sm:$0xff] %vm7900, %v7745
      %7920 = vst.msk [vmem:[#allocation2 + $0x98] sm:$0xff] %vm7900, %v7747
      %7921 = vst.msk [vmem:[#allocation2 + $0xa0] sm:$0xff] %vm7900, %v7749
      %7922 = vst.msk [vmem:[#allocation2 + $0xa8] sm:$0xff] %vm7900, %v7751
      %7923 = vst.msk [vmem:[#allocation2 + $0xb0] sm:$0xff] %vm7900, %v7753
      %7924 = vst.msk [vmem:[#allocation2 + $0xb8] sm:$0xff] %vm7900, %v7755
      %7925 = vst.msk [vmem:[#allocation2 + $0xc0] sm:$0xff] %vm7900, %v7757
      %7926 = vst.msk [vmem:[#allocation2 + $0xc8] sm:$0xff] %vm7900, %v7759
      %7927 = vst.msk [vmem:[#allocation2 + $0xd0] sm:$0xff] %vm7900, %v7761
      %7928 = vst.msk [vmem:[#allocation2 + $0xd8] sm:$0xff] %vm7900, %v7763
      %7929 = vst.msk [vmem:[#allocation2 + $0xe0] sm:$0xff] %vm7900, %v7765
      %7930 = vst.msk [vmem:[#allocation2 + $0xe8] sm:$0xff] %vm7900, %v7767
      %7931 = vst.msk [vmem:[#allocation2 + $0xf0] sm:$0xff] %vm7900, %v7769
      %7932 = vst.msk [vmem:[#allocation2 + $0xf8] sm:$0xff] %vm7900, %v7771
      %7933 = vst.msk [vmem:[#allocation2 + $0x100] sm:$0xff] %vm7900, %v7773
      %7934 = vst.msk [vmem:[#allocation2 + $0x108] sm:$0xff] %vm7900, %v7775
      %7935 = vst.msk [vmem:[#allocation2 + $0x110] sm:$0xff] %vm7900, %v7777
      %7936 = vst.msk [vmem:[#allocation2 + $0x118] sm:$0xff] %vm7900, %v7779
      %7937 = vst.msk [vmem:[#allocation2 + $0x120] sm:$0xff] %vm7900, %v7781
      %7938 = vst.msk [vmem:[#allocation2 + $0x128] sm:$0xff] %vm7900, %v7783
      %7939 = vst.msk [vmem:[#allocation2 + $0x130] sm:$0xff] %vm7900, %v7785
      %7940 = vst.msk [vmem:[#allocation2 + $0x138] sm:$0xff] %vm7900, %v7787
      %7941 = vst.msk [vmem:[#allocation2 + $0x140] sm:$0xff] %vm7900, %v7789
      %7942 = vst.msk [vmem:[#allocation2 + $0x148] sm:$0xff] %vm7900, %v7791
      %7943 = vst.msk [vmem:[#allocation2 + $0x150] sm:$0xff] %vm7900, %v7793
      %7944 = vst.msk [vmem:[#allocation2 + $0x158] sm:$0xff] %vm7900, %v7795
      %7945 = vst.msk [vmem:[#allocation2 + $0x160] sm:$0xff] %vm7900, %v7797
      %7946 = vst.msk [vmem:[#allocation2 + $0x168] sm:$0xff] %vm7900, %v7799
      %7947 = vst.msk [vmem:[#allocation2 + $0x170] sm:$0xff] %vm7900, %v7801
      %7948 = vst.msk [vmem:[#allocation2 + $0x178] sm:$0xff] %vm7900, %v7803
      %7949 = vst.msk [vmem:[#allocation2 + $0x180] sm:$0xff] %vm7900, %v7805
      %7950 = vst.msk [vmem:[#allocation2 + $0x188] sm:$0xff] %vm7900, %v7807
      %7951 = vst.msk [vmem:[#allocation2 + $0x190] sm:$0xff] %vm7900, %v7809
      %7952 = vst.msk [vmem:[#allocation2 + $0x198] sm:$0xff] %vm7900, %v7811
      %7953 = vst.msk [vmem:[#allocation2 + $0x1a0] sm:$0xff] %vm7900, %v7813
      %7954 = vst.msk [vmem:[#allocation2 + $0x1a8] sm:$0xff] %vm7900, %v7815
      %7955 = vst.msk [vmem:[#allocation2 + $0x1b0] sm:$0xff] %vm7900, %v7817
      %7956 = vst.msk [vmem:[#allocation2 + $0x1b8] sm:$0xff] %vm7900, %v7819
      %7957 = vst.msk [vmem:[#allocation2 + $0x1c0] sm:$0xff] %vm7900, %v7821
      %7958 = vst.msk [vmem:[#allocation2 + $0x1c8] sm:$0xff] %vm7900, %v7823
      %7959 = vst.msk [vmem:[#allocation2 + $0x1d0] sm:$0xff] %vm7900, %v7825
      %7960 = vst.msk [vmem:[#allocation2 + $0x1d8] sm:$0xff] %vm7900, %v7827
      %7961 = vst.msk [vmem:[#allocation2 + $0x1e0] sm:$0xff] %vm7900, %v7829
      %7962 = vst.msk [vmem:[#allocation2 + $0x1e8] sm:$0xff] %vm7900, %v7831
      %7963 = vst.msk [vmem:[#allocation2 + $0x1f0] sm:$0xff] %vm7900, %v7833
      %7964 = vst.msk [vmem:[#allocation2 + $0x1f8] sm:$0xff] %vm7900, %v7835
      %s7965 = scalar_lea.vmem %s137, 336
      %v7966 = vld [vmem:[%s7965] sm:$0xff]
      %v7967 = vld [vmem:[%s7965 + $0x10] sm:$0xff]
      %v7968 = vld [vmem:[%s7965 + $0x20] sm:$0xff]
      %v7969 = vld [vmem:[%s7965 + $0x30] sm:$0xff]
      %v7970 = vld [vmem:[%s7965 + $0x40] sm:$0xff]
      %v7971 = vld [vmem:[%s7965 + $0x50] sm:$0xff]
      %v7972 = vld [vmem:[%s7965 + $0x60] sm:$0xff]
      %v7973 = vld [vmem:[%s7965 + $0x70] sm:$0xff]
      %v7974 = vld [vmem:[%s7965 + $0xa0] sm:$0xff]
      %v7975 = vld [vmem:[%s7965 + $0xb0] sm:$0xff]
      %v7976 = vld [vmem:[%s7965 + $0xc0] sm:$0xff]
      %v7977 = vld [vmem:[%s7965 + $0xd0] sm:$0xff]
      %v7978 = vld [vmem:[%s7965 + $0xe0] sm:$0xff]
      %v7979 = vld [vmem:[%s7965 + $0xf0] sm:$0xff]
      %v7980 = vld [vmem:[%s7965 + $0x100] sm:$0xff]
      %v7981 = vld [vmem:[%s7965 + $0x110] sm:$0xff]
      %v7982 = vld [vmem:[%s7965 + $0x140] sm:$0xff]
      %v7983 = vld [vmem:[%s7965 + $0x150] sm:$0xff]
      %v7984 = vld [vmem:[%s7965 + $0x160] sm:$0xff]
      %v7985 = vld [vmem:[%s7965 + $0x170] sm:$0xff]
      %v7986 = vld [vmem:[%s7965 + $0x180] sm:$0xff]
      %v7987 = vld [vmem:[%s7965 + $0x190] sm:$0xff]
      %v7988 = vld [vmem:[%s7965 + $0x1a0] sm:$0xff]
      %v7989 = vld [vmem:[%s7965 + $0x1b0] sm:$0xff]
      %v7990 = vld [vmem:[%s7965 + $0x1e0] sm:$0xff]
      %v7991 = vld [vmem:[%s7965 + $0x1f0] sm:$0xff]
      %v7992 = vld [vmem:[%s7965 + $0x200] sm:$0xff]
      %v7993 = vld [vmem:[%s7965 + $0x210] sm:$0xff]
      %v7994 = vld [vmem:[%s7965 + $0x220] sm:$0xff]
      %v7995 = vld [vmem:[%s7965 + $0x230] sm:$0xff]
      %v7996 = vld [vmem:[%s7965 + $0x240] sm:$0xff]
      %v7997 = vld [vmem:[%s7965 + $0x250] sm:$0xff]
      %v7998 = vld [vmem:[%s7965 + $0x280] sm:$0xff]
      %v7999 = vld [vmem:[%s7965 + $0x290] sm:$0xff]
      %v8000 = vld [vmem:[%s7965 + $0x2a0] sm:$0xff]
      %v8001 = vld [vmem:[%s7965 + $0x2b0] sm:$0xff]
      %v8002 = vld [vmem:[%s7965 + $0x2c0] sm:$0xff]
      %v8003 = vld [vmem:[%s7965 + $0x2d0] sm:$0xff]
      %v8004 = vld [vmem:[%s7965 + $0x2e0] sm:$0xff]
      %v8005 = vld [vmem:[%s7965 + $0x2f0] sm:$0xff]
      %v8006 = vld [vmem:[%s7965 + $0x320] sm:$0xff]
      %v8007 = vld [vmem:[%s7965 + $0x330] sm:$0xff]
      %v8008 = vld [vmem:[%s7965 + $0x340] sm:$0xff]
      %v8009 = vld [vmem:[%s7965 + $0x350] sm:$0xff]
      %v8010 = vld [vmem:[%s7965 + $0x360] sm:$0xff]
      %v8011 = vld [vmem:[%s7965 + $0x370] sm:$0xff]
      %v8012 = vld [vmem:[%s7965 + $0x380] sm:$0xff]
      %v8013 = vld [vmem:[%s7965 + $0x390] sm:$0xff]
      %v8014 = vld [vmem:[%s7965 + $0x3c0] sm:$0xff]
      %v8015 = vld [vmem:[%s7965 + $0x3d0] sm:$0xff]
      %v8016 = vld [vmem:[%s7965 + $0x3e0] sm:$0xff]
      %v8017 = vld [vmem:[%s7965 + $0x3f0] sm:$0xff]
      %v8018 = vld [vmem:[%s7965 + $0x400] sm:$0xff]
      %v8019 = vld [vmem:[%s7965 + $0x410] sm:$0xff]
      %v8020 = vld [vmem:[%s7965 + $0x420] sm:$0xff]
      %v8021 = vld [vmem:[%s7965 + $0x430] sm:$0xff]
      %v8022 = vld [vmem:[%s7965 + $0x460] sm:$0xff]
      %v8023 = vld [vmem:[%s7965 + $0x470] sm:$0xff]
      %v8024 = vld [vmem:[%s7965 + $0x480] sm:$0xff]
      %v8025 = vld [vmem:[%s7965 + $0x490] sm:$0xff]
      %v8026 = vld [vmem:[%s7965 + $0x4a0] sm:$0xff]
      %v8027 = vld [vmem:[%s7965 + $0x4b0] sm:$0xff]
      %v8028 = vld [vmem:[%s7965 + $0x4c0] sm:$0xff]
      %v8029 = vld [vmem:[%s7965 + $0x4d0] sm:$0xff]
      %v8030 = vld [vmem:[%s7965 + $0x1] sm:$0xff]
      %v8031 = vld [vmem:[%s7965 + $0x11] sm:$0xff]
      %v8032 = vld [vmem:[%s7965 + $0x21] sm:$0xff]
      %v8033 = vld [vmem:[%s7965 + $0x31] sm:$0xff]
      %v8034 = vld [vmem:[%s7965 + $0x41] sm:$0xff]
      %v8035 = vld [vmem:[%s7965 + $0x51] sm:$0xff]
      %v8036 = vld [vmem:[%s7965 + $0x61] sm:$0xff]
      %v8037 = vld [vmem:[%s7965 + $0x71] sm:$0xff]
      %v8038 = vld [vmem:[%s7965 + $0xa1] sm:$0xff]
      %v8039 = vld [vmem:[%s7965 + $0xb1] sm:$0xff]
      %v8040 = vld [vmem:[%s7965 + $0xc1] sm:$0xff]
      %v8041 = vld [vmem:[%s7965 + $0xd1] sm:$0xff]
      %v8042 = vld [vmem:[%s7965 + $0xe1] sm:$0xff]
      %v8043 = vld [vmem:[%s7965 + $0xf1] sm:$0xff]
      %v8044 = vld [vmem:[%s7965 + $0x101] sm:$0xff]
      %v8045 = vld [vmem:[%s7965 + $0x111] sm:$0xff]
      %v8046 = vld [vmem:[%s7965 + $0x141] sm:$0xff]
      %v8047 = vld [vmem:[%s7965 + $0x151] sm:$0xff]
      %v8048 = vld [vmem:[%s7965 + $0x161] sm:$0xff]
      %v8049 = vld [vmem:[%s7965 + $0x171] sm:$0xff]
      %v8050 = vld [vmem:[%s7965 + $0x181] sm:$0xff]
      %v8051 = vld [vmem:[%s7965 + $0x191] sm:$0xff]
      %v8052 = vld [vmem:[%s7965 + $0x1a1] sm:$0xff]
      %v8053 = vld [vmem:[%s7965 + $0x1b1] sm:$0xff]
      %v8054 = vld [vmem:[%s7965 + $0x1e1] sm:$0xff]
      %v8055 = vld [vmem:[%s7965 + $0x1f1] sm:$0xff]
      %v8056 = vld [vmem:[%s7965 + $0x201] sm:$0xff]
      %v8057 = vld [vmem:[%s7965 + $0x211] sm:$0xff]
      %v8058 = vld [vmem:[%s7965 + $0x221] sm:$0xff]
      %v8059 = vld [vmem:[%s7965 + $0x231] sm:$0xff]
      %v8060 = vld [vmem:[%s7965 + $0x241] sm:$0xff]
      %v8061 = vld [vmem:[%s7965 + $0x251] sm:$0xff]
      %v8062 = vld [vmem:[%s7965 + $0x281] sm:$0xff]
      %v8063 = vld [vmem:[%s7965 + $0x291] sm:$0xff]
      %v8064 = vld [vmem:[%s7965 + $0x2a1] sm:$0xff]
      %v8065 = vld [vmem:[%s7965 + $0x2b1] sm:$0xff]
      %v8066 = vld [vmem:[%s7965 + $0x2c1] sm:$0xff]
      %v8067 = vld [vmem:[%s7965 + $0x2d1] sm:$0xff]
      %v8068 = vld [vmem:[%s7965 + $0x2e1] sm:$0xff]
      %v8069 = vld [vmem:[%s7965 + $0x2f1] sm:$0xff]
      %v8070 = vld [vmem:[%s7965 + $0x321] sm:$0xff]
      %v8071 = vld [vmem:[%s7965 + $0x331] sm:$0xff]
      %v8072 = vld [vmem:[%s7965 + $0x341] sm:$0xff]
      %v8073 = vld [vmem:[%s7965 + $0x351] sm:$0xff]
      %v8074 = vld [vmem:[%s7965 + $0x361] sm:$0xff]
      %v8075 = vld [vmem:[%s7965 + $0x371] sm:$0xff]
      %v8076 = vld [vmem:[%s7965 + $0x381] sm:$0xff]
      %v8077 = vld [vmem:[%s7965 + $0x391] sm:$0xff]
      %v8078 = vld [vmem:[%s7965 + $0x3c1] sm:$0xff]
      %v8079 = vld [vmem:[%s7965 + $0x3d1] sm:$0xff]
      %v8080 = vld [vmem:[%s7965 + $0x3e1] sm:$0xff]
      %v8081 = vld [vmem:[%s7965 + $0x3f1] sm:$0xff]
      %v8082 = vld [vmem:[%s7965 + $0x401] sm:$0xff]
      %v8083 = vld [vmem:[%s7965 + $0x411] sm:$0xff]
      %v8084 = vld [vmem:[%s7965 + $0x421] sm:$0xff]
      %v8085 = vld [vmem:[%s7965 + $0x431] sm:$0xff]
      %v8086 = vld [vmem:[%s7965 + $0x461] sm:$0xff]
      %v8087 = vld [vmem:[%s7965 + $0x471] sm:$0xff]
      %v8088 = vld [vmem:[%s7965 + $0x481] sm:$0xff]
      %v8089 = vld [vmem:[%s7965 + $0x491] sm:$0xff]
      %v8090 = vld [vmem:[%s7965 + $0x4a1] sm:$0xff]
      %v8091 = vld [vmem:[%s7965 + $0x4b1] sm:$0xff]
      %v8092 = vld [vmem:[%s7965 + $0x4c1] sm:$0xff]
      %v8093 = vld [vmem:[%s7965 + $0x4d1] sm:$0xff]
      %v8094 = vld [vmem:[%s7965 + $0x2] sm:$0xff]
      %v8095 = vld [vmem:[%s7965 + $0x12] sm:$0xff]
      %v8096 = vld [vmem:[%s7965 + $0x22] sm:$0xff]
      %v8097 = vld [vmem:[%s7965 + $0x32] sm:$0xff]
      %v8098 = vld [vmem:[%s7965 + $0x42] sm:$0xff]
      %v8099 = vld [vmem:[%s7965 + $0x52] sm:$0xff]
      %v8100 = vld [vmem:[%s7965 + $0x62] sm:$0xff]
      %v8101 = vld [vmem:[%s7965 + $0x72] sm:$0xff]
      %v8102 = vld [vmem:[%s7965 + $0xa2] sm:$0xff]
      %v8103 = vld [vmem:[%s7965 + $0xb2] sm:$0xff]
      %v8104 = vld [vmem:[%s7965 + $0xc2] sm:$0xff]
      %v8105 = vld [vmem:[%s7965 + $0xd2] sm:$0xff]
      %v8106 = vld [vmem:[%s7965 + $0xe2] sm:$0xff]
      %v8107 = vld [vmem:[%s7965 + $0xf2] sm:$0xff]
      %v8108 = vld [vmem:[%s7965 + $0x102] sm:$0xff]
      %v8109 = vld [vmem:[%s7965 + $0x112] sm:$0xff]
      %v8110 = vld [vmem:[%s7965 + $0x142] sm:$0xff]
      %v8111 = vld [vmem:[%s7965 + $0x152] sm:$0xff]
      %v8112 = vld [vmem:[%s7965 + $0x162] sm:$0xff]
      %v8113 = vld [vmem:[%s7965 + $0x172] sm:$0xff]
      %v8114 = vld [vmem:[%s7965 + $0x182] sm:$0xff]
      %v8115 = vld [vmem:[%s7965 + $0x192] sm:$0xff]
      %v8116 = vld [vmem:[%s7965 + $0x1a2] sm:$0xff]
      %v8117 = vld [vmem:[%s7965 + $0x1b2] sm:$0xff]
      %v8118 = vld [vmem:[%s7965 + $0x1e2] sm:$0xff]
      %v8119 = vld [vmem:[%s7965 + $0x1f2] sm:$0xff]
      %v8120 = vld [vmem:[%s7965 + $0x202] sm:$0xff]
      %v8121 = vld [vmem:[%s7965 + $0x212] sm:$0xff]
      %v8122 = vld [vmem:[%s7965 + $0x222] sm:$0xff]
      %v8123 = vld [vmem:[%s7965 + $0x232] sm:$0xff]
      %v8124 = vld [vmem:[%s7965 + $0x242] sm:$0xff]
      %v8125 = vld [vmem:[%s7965 + $0x252] sm:$0xff]
      %v8126 = vld [vmem:[%s7965 + $0x282] sm:$0xff]
      %v8127 = vld [vmem:[%s7965 + $0x292] sm:$0xff]
      %v8128 = vld [vmem:[%s7965 + $0x2a2] sm:$0xff]
      %v8129 = vld [vmem:[%s7965 + $0x2b2] sm:$0xff]
      %v8130 = vld [vmem:[%s7965 + $0x2c2] sm:$0xff]
      %v8131 = vld [vmem:[%s7965 + $0x2d2] sm:$0xff]
      %v8132 = vld [vmem:[%s7965 + $0x2e2] sm:$0xff]
      %v8133 = vld [vmem:[%s7965 + $0x2f2] sm:$0xff]
      %v8134 = vld [vmem:[%s7965 + $0x322] sm:$0xff]
      %v8135 = vld [vmem:[%s7965 + $0x332] sm:$0xff]
      %v8136 = vld [vmem:[%s7965 + $0x342] sm:$0xff]
      %v8137 = vld [vmem:[%s7965 + $0x352] sm:$0xff]
      %v8138 = vld [vmem:[%s7965 + $0x362] sm:$0xff]
      %v8139 = vld [vmem:[%s7965 + $0x372] sm:$0xff]
      %v8140 = vld [vmem:[%s7965 + $0x382] sm:$0xff]
      %v8141 = vld [vmem:[%s7965 + $0x392] sm:$0xff]
      %v8142 = vld [vmem:[%s7965 + $0x3c2] sm:$0xff]
      %v8143 = vld [vmem:[%s7965 + $0x3d2] sm:$0xff]
      %v8144 = vld [vmem:[%s7965 + $0x3e2] sm:$0xff]
      %v8145 = vld [vmem:[%s7965 + $0x3f2] sm:$0xff]
      %v8146 = vld [vmem:[%s7965 + $0x402] sm:$0xff]
      %v8147 = vld [vmem:[%s7965 + $0x412] sm:$0xff]
      %v8148 = vld [vmem:[%s7965 + $0x422] sm:$0xff]
      %v8149 = vld [vmem:[%s7965 + $0x432] sm:$0xff]
      %v8150 = vld [vmem:[%s7965 + $0x462] sm:$0xff]
      %v8151 = vld [vmem:[%s7965 + $0x472] sm:$0xff]
      %v8152 = vld [vmem:[%s7965 + $0x482] sm:$0xff]
      %v8153 = vld [vmem:[%s7965 + $0x492] sm:$0xff]
      %v8154 = vld [vmem:[%s7965 + $0x4a2] sm:$0xff]
      %v8155 = vld [vmem:[%s7965 + $0x4b2] sm:$0xff]
      %v8156 = vld [vmem:[%s7965 + $0x4c2] sm:$0xff]
      %v8157 = vld [vmem:[%s7965 + $0x4d2] sm:$0xff]
      %8222 = vrot.lane.b32.xlu0 %v8030, 4
      %v8223 = vpop.permute.xlu0 %8222
      %8224 = vrot.lane.b32.xlu0 %v8031, 4
      %v8225 = vpop.permute.xlu0 %8224
      %8226 = vrot.lane.b32.xlu0 %v8032, 4
      %v8227 = vpop.permute.xlu0 %8226
      %8228 = vrot.lane.b32.xlu0 %v8033, 4
      %v8229 = vpop.permute.xlu0 %8228
      %8230 = vrot.lane.b32.xlu0 %v8034, 4
      %v8231 = vpop.permute.xlu0 %8230
      %8232 = vrot.lane.b32.xlu0 %v8035, 4
      %v8233 = vpop.permute.xlu0 %8232
      %8234 = vrot.lane.b32.xlu0 %v8036, 4
      %v8235 = vpop.permute.xlu0 %8234
      %8236 = vrot.lane.b32.xlu0 %v8037, 4
      %v8237 = vpop.permute.xlu0 %8236
      %8238 = vrot.lane.b32.xlu0 %v8038, 4
      %v8239 = vpop.permute.xlu0 %8238
      %8240 = vrot.lane.b32.xlu0 %v8039, 4
      %v8241 = vpop.permute.xlu0 %8240
      %8242 = vrot.lane.b32.xlu0 %v8040, 4
      %v8243 = vpop.permute.xlu0 %8242
      %8244 = vrot.lane.b32.xlu0 %v8041, 4
      %v8245 = vpop.permute.xlu0 %8244
      %8246 = vrot.lane.b32.xlu0 %v8042, 4
      %v8247 = vpop.permute.xlu0 %8246
      %8248 = vrot.lane.b32.xlu0 %v8043, 4
      %v8249 = vpop.permute.xlu0 %8248
      %8250 = vrot.lane.b32.xlu0 %v8044, 4
      %v8251 = vpop.permute.xlu0 %8250
      %8252 = vrot.lane.b32.xlu0 %v8045, 4
      %v8253 = vpop.permute.xlu0 %8252
      %8254 = vrot.lane.b32.xlu0 %v8046, 4
      %v8255 = vpop.permute.xlu0 %8254
      %8256 = vrot.lane.b32.xlu0 %v8047, 4
      %v8257 = vpop.permute.xlu0 %8256
      %8258 = vrot.lane.b32.xlu0 %v8048, 4
      %v8259 = vpop.permute.xlu0 %8258
      %8260 = vrot.lane.b32.xlu0 %v8049, 4
      %v8261 = vpop.permute.xlu0 %8260
      %8262 = vrot.lane.b32.xlu0 %v8050, 4
      %v8263 = vpop.permute.xlu0 %8262
      %8264 = vrot.lane.b32.xlu0 %v8051, 4
      %v8265 = vpop.permute.xlu0 %8264
      %8266 = vrot.lane.b32.xlu0 %v8052, 4
      %v8267 = vpop.permute.xlu0 %8266
      %8268 = vrot.lane.b32.xlu0 %v8053, 4
      %v8269 = vpop.permute.xlu0 %8268
      %8270 = vrot.lane.b32.xlu0 %v8054, 4
      %v8271 = vpop.permute.xlu0 %8270
      %8272 = vrot.lane.b32.xlu0 %v8055, 4
      %v8273 = vpop.permute.xlu0 %8272
      %8274 = vrot.lane.b32.xlu0 %v8056, 4
      %v8275 = vpop.permute.xlu0 %8274
      %8276 = vrot.lane.b32.xlu0 %v8057, 4
      %v8277 = vpop.permute.xlu0 %8276
      %8278 = vrot.lane.b32.xlu0 %v8058, 4
      %v8279 = vpop.permute.xlu0 %8278
      %8280 = vrot.lane.b32.xlu0 %v8059, 4
      %v8281 = vpop.permute.xlu0 %8280
      %8282 = vrot.lane.b32.xlu0 %v8060, 4
      %v8283 = vpop.permute.xlu0 %8282
      %8284 = vrot.lane.b32.xlu0 %v8061, 4
      %v8285 = vpop.permute.xlu0 %8284
      %8286 = vrot.lane.b32.xlu0 %v8062, 4
      %v8287 = vpop.permute.xlu0 %8286
      %8288 = vrot.lane.b32.xlu0 %v8063, 4
      %v8289 = vpop.permute.xlu0 %8288
      %8290 = vrot.lane.b32.xlu0 %v8064, 4
      %v8291 = vpop.permute.xlu0 %8290
      %8292 = vrot.lane.b32.xlu0 %v8065, 4
      %v8293 = vpop.permute.xlu0 %8292
      %8294 = vrot.lane.b32.xlu0 %v8066, 4
      %v8295 = vpop.permute.xlu0 %8294
      %8296 = vrot.lane.b32.xlu0 %v8067, 4
      %v8297 = vpop.permute.xlu0 %8296
      %8298 = vrot.lane.b32.xlu0 %v8068, 4
      %v8299 = vpop.permute.xlu0 %8298
      %8300 = vrot.lane.b32.xlu0 %v8069, 4
      %v8301 = vpop.permute.xlu0 %8300
      %8302 = vrot.lane.b32.xlu0 %v8070, 4
      %v8303 = vpop.permute.xlu0 %8302
      %8304 = vrot.lane.b32.xlu0 %v8071, 4
      %v8305 = vpop.permute.xlu0 %8304
      %8306 = vrot.lane.b32.xlu0 %v8072, 4
      %v8307 = vpop.permute.xlu0 %8306
      %8308 = vrot.lane.b32.xlu0 %v8073, 4
      %v8309 = vpop.permute.xlu0 %8308
      %8310 = vrot.lane.b32.xlu0 %v8074, 4
      %v8311 = vpop.permute.xlu0 %8310
      %8312 = vrot.lane.b32.xlu0 %v8075, 4
      %v8313 = vpop.permute.xlu0 %8312
      %8314 = vrot.lane.b32.xlu0 %v8076, 4
      %v8315 = vpop.permute.xlu0 %8314
      %8316 = vrot.lane.b32.xlu0 %v8077, 4
      %v8317 = vpop.permute.xlu0 %8316
      %8318 = vrot.lane.b32.xlu0 %v8078, 4
      %v8319 = vpop.permute.xlu0 %8318
      %8320 = vrot.lane.b32.xlu0 %v8079, 4
      %v8321 = vpop.permute.xlu0 %8320
      %8322 = vrot.lane.b32.xlu0 %v8080, 4
      %v8323 = vpop.permute.xlu0 %8322
      %8324 = vrot.lane.b32.xlu0 %v8081, 4
      %v8325 = vpop.permute.xlu0 %8324
      %8326 = vrot.lane.b32.xlu0 %v8082, 4
      %v8327 = vpop.permute.xlu0 %8326
      %8328 = vrot.lane.b32.xlu0 %v8083, 4
      %v8329 = vpop.permute.xlu0 %8328
      %8330 = vrot.lane.b32.xlu0 %v8084, 4
      %v8331 = vpop.permute.xlu0 %8330
      %8332 = vrot.lane.b32.xlu0 %v8085, 4
      %v8333 = vpop.permute.xlu0 %8332
      %8334 = vrot.lane.b32.xlu0 %v8086, 4
      %v8335 = vpop.permute.xlu0 %8334
      %8336 = vrot.lane.b32.xlu0 %v8087, 4
      %v8337 = vpop.permute.xlu0 %8336
      %8338 = vrot.lane.b32.xlu0 %v8088, 4
      %v8339 = vpop.permute.xlu0 %8338
      %8340 = vrot.lane.b32.xlu0 %v8089, 4
      %v8341 = vpop.permute.xlu0 %8340
      %8342 = vrot.lane.b32.xlu0 %v8090, 4
      %v8343 = vpop.permute.xlu0 %8342
      %8344 = vrot.lane.b32.xlu0 %v8091, 4
      %v8345 = vpop.permute.xlu0 %8344
      %8346 = vrot.lane.b32.xlu0 %v8092, 4
      %v8347 = vpop.permute.xlu0 %8346
      %8348 = vrot.lane.b32.xlu0 %v8093, 4
      %v8349 = vpop.permute.xlu0 %8348
      %8478 = vrot.lane.b32.xlu0 %v8094, 8
      %v8479 = vpop.permute.xlu0 %8478
      %8480 = vrot.lane.b32.xlu0 %v8095, 8
      %v8481 = vpop.permute.xlu0 %8480
      %8482 = vrot.lane.b32.xlu0 %v8096, 8
      %v8483 = vpop.permute.xlu0 %8482
      %8484 = vrot.lane.b32.xlu0 %v8097, 8
      %v8485 = vpop.permute.xlu0 %8484
      %8486 = vrot.lane.b32.xlu0 %v8098, 8
      %v8487 = vpop.permute.xlu0 %8486
      %8488 = vrot.lane.b32.xlu0 %v8099, 8
      %v8489 = vpop.permute.xlu0 %8488
      %8490 = vrot.lane.b32.xlu0 %v8100, 8
      %v8491 = vpop.permute.xlu0 %8490
      %8492 = vrot.lane.b32.xlu0 %v8101, 8
      %v8493 = vpop.permute.xlu0 %8492
      %8494 = vrot.lane.b32.xlu0 %v8102, 8
      %v8495 = vpop.permute.xlu0 %8494
      %8496 = vrot.lane.b32.xlu0 %v8103, 8
      %v8497 = vpop.permute.xlu0 %8496
      %8498 = vrot.lane.b32.xlu0 %v8104, 8
      %v8499 = vpop.permute.xlu0 %8498
      %8500 = vrot.lane.b32.xlu0 %v8105, 8
      %v8501 = vpop.permute.xlu0 %8500
      %8502 = vrot.lane.b32.xlu0 %v8106, 8
      %v8503 = vpop.permute.xlu0 %8502
      %8504 = vrot.lane.b32.xlu0 %v8107, 8
      %v8505 = vpop.permute.xlu0 %8504
      %8506 = vrot.lane.b32.xlu0 %v8108, 8
      %v8507 = vpop.permute.xlu0 %8506
      %8508 = vrot.lane.b32.xlu0 %v8109, 8
      %v8509 = vpop.permute.xlu0 %8508
      %8510 = vrot.lane.b32.xlu0 %v8110, 8
      %v8511 = vpop.permute.xlu0 %8510
      %8512 = vrot.lane.b32.xlu0 %v8111, 8
      %v8513 = vpop.permute.xlu0 %8512
      %8514 = vrot.lane.b32.xlu0 %v8112, 8
      %v8515 = vpop.permute.xlu0 %8514
      %8516 = vrot.lane.b32.xlu0 %v8113, 8
      %v8517 = vpop.permute.xlu0 %8516
      %8518 = vrot.lane.b32.xlu0 %v8114, 8
      %v8519 = vpop.permute.xlu0 %8518
      %8520 = vrot.lane.b32.xlu0 %v8115, 8
      %v8521 = vpop.permute.xlu0 %8520
      %8522 = vrot.lane.b32.xlu0 %v8116, 8
      %v8523 = vpop.permute.xlu0 %8522
      %8524 = vrot.lane.b32.xlu0 %v8117, 8
      %v8525 = vpop.permute.xlu0 %8524
      %8526 = vrot.lane.b32.xlu0 %v8118, 8
      %v8527 = vpop.permute.xlu0 %8526
      %8528 = vrot.lane.b32.xlu0 %v8119, 8
      %v8529 = vpop.permute.xlu0 %8528
      %8530 = vrot.lane.b32.xlu0 %v8120, 8
      %v8531 = vpop.permute.xlu0 %8530
      %8532 = vrot.lane.b32.xlu0 %v8121, 8
      %v8533 = vpop.permute.xlu0 %8532
      %8534 = vrot.lane.b32.xlu0 %v8122, 8
      %v8535 = vpop.permute.xlu0 %8534
      %8536 = vrot.lane.b32.xlu0 %v8123, 8
      %v8537 = vpop.permute.xlu0 %8536
      %8538 = vrot.lane.b32.xlu0 %v8124, 8
      %v8539 = vpop.permute.xlu0 %8538
      %8540 = vrot.lane.b32.xlu0 %v8125, 8
      %v8541 = vpop.permute.xlu0 %8540
      %8542 = vrot.lane.b32.xlu0 %v8126, 8
      %v8543 = vpop.permute.xlu0 %8542
      %8544 = vrot.lane.b32.xlu0 %v8127, 8
      %v8545 = vpop.permute.xlu0 %8544
      %8546 = vrot.lane.b32.xlu0 %v8128, 8
      %v8547 = vpop.permute.xlu0 %8546
      %8548 = vrot.lane.b32.xlu0 %v8129, 8
      %v8549 = vpop.permute.xlu0 %8548
      %8550 = vrot.lane.b32.xlu0 %v8130, 8
      %v8551 = vpop.permute.xlu0 %8550
      %8552 = vrot.lane.b32.xlu0 %v8131, 8
      %v8553 = vpop.permute.xlu0 %8552
      %8554 = vrot.lane.b32.xlu0 %v8132, 8
      %v8555 = vpop.permute.xlu0 %8554
      %8556 = vrot.lane.b32.xlu0 %v8133, 8
      %v8557 = vpop.permute.xlu0 %8556
      %8558 = vrot.lane.b32.xlu0 %v8134, 8
      %v8559 = vpop.permute.xlu0 %8558
      %8560 = vrot.lane.b32.xlu0 %v8135, 8
      %v8561 = vpop.permute.xlu0 %8560
      %8562 = vrot.lane.b32.xlu0 %v8136, 8
      %v8563 = vpop.permute.xlu0 %8562
      %8564 = vrot.lane.b32.xlu0 %v8137, 8
      %v8565 = vpop.permute.xlu0 %8564
      %8566 = vrot.lane.b32.xlu0 %v8138, 8
      %v8567 = vpop.permute.xlu0 %8566
      %8568 = vrot.lane.b32.xlu0 %v8139, 8
      %v8569 = vpop.permute.xlu0 %8568
      %8570 = vrot.lane.b32.xlu0 %v8140, 8
      %v8571 = vpop.permute.xlu0 %8570
      %8572 = vrot.lane.b32.xlu0 %v8141, 8
      %v8573 = vpop.permute.xlu0 %8572
      %8574 = vrot.lane.b32.xlu0 %v8142, 8
      %v8575 = vpop.permute.xlu0 %8574
      %8576 = vrot.lane.b32.xlu0 %v8143, 8
      %v8577 = vpop.permute.xlu0 %8576
      %8578 = vrot.lane.b32.xlu0 %v8144, 8
      %v8579 = vpop.permute.xlu0 %8578
      %8580 = vrot.lane.b32.xlu0 %v8145, 8
      %v8581 = vpop.permute.xlu0 %8580
      %8582 = vrot.lane.b32.xlu0 %v8146, 8
      %v8583 = vpop.permute.xlu0 %8582
      %8584 = vrot.lane.b32.xlu0 %v8147, 8
      %v8585 = vpop.permute.xlu0 %8584
      %8586 = vrot.lane.b32.xlu0 %v8148, 8
      %v8587 = vpop.permute.xlu0 %8586
      %8588 = vrot.lane.b32.xlu0 %v8149, 8
      %v8589 = vpop.permute.xlu0 %8588
      %8590 = vrot.lane.b32.xlu0 %v8150, 8
      %v8591 = vpop.permute.xlu0 %8590
      %8592 = vrot.lane.b32.xlu0 %v8151, 8
      %v8593 = vpop.permute.xlu0 %8592
      %8594 = vrot.lane.b32.xlu0 %v8152, 8
      %v8595 = vpop.permute.xlu0 %8594
      %8596 = vrot.lane.b32.xlu0 %v8153, 8
      %v8597 = vpop.permute.xlu0 %8596
      %8598 = vrot.lane.b32.xlu0 %v8154, 8
      %v8599 = vpop.permute.xlu0 %8598
      %8600 = vrot.lane.b32.xlu0 %v8155, 8
      %v8601 = vpop.permute.xlu0 %8600
      %8602 = vrot.lane.b32.xlu0 %v8156, 8
      %v8603 = vpop.permute.xlu0 %8602
      %8604 = vrot.lane.b32.xlu0 %v8157, 8
      %v8605 = vpop.permute.xlu0 %8604
      %v8670 = vsel %vm846, %v7966, %v8223
      %v8671 = vsel %vm846, %v7967, %v8225
      %v8672 = vsel %vm846, %v7968, %v8227
      %v8673 = vsel %vm846, %v7969, %v8229
      %v8674 = vsel %vm846, %v7970, %v8231
      %v8675 = vsel %vm846, %v7971, %v8233
      %v8676 = vsel %vm846, %v7972, %v8235
      %v8677 = vsel %vm846, %v7973, %v8237
      %v8678 = vsel %vm846, %v7974, %v8239
      %v8679 = vsel %vm846, %v7975, %v8241
      %v8680 = vsel %vm846, %v7976, %v8243
      %v8681 = vsel %vm846, %v7977, %v8245
      %v8682 = vsel %vm846, %v7978, %v8247
      %v8683 = vsel %vm846, %v7979, %v8249
      %v8684 = vsel %vm846, %v7980, %v8251
      %v8685 = vsel %vm846, %v7981, %v8253
      %v8686 = vsel %vm846, %v7982, %v8255
      %v8687 = vsel %vm846, %v7983, %v8257
      %v8688 = vsel %vm846, %v7984, %v8259
      %v8689 = vsel %vm846, %v7985, %v8261
      %v8690 = vsel %vm846, %v7986, %v8263
      %v8691 = vsel %vm846, %v7987, %v8265
      %v8692 = vsel %vm846, %v7988, %v8267
      %v8693 = vsel %vm846, %v7989, %v8269
      %v8694 = vsel %vm846, %v7990, %v8271
      %v8695 = vsel %vm846, %v7991, %v8273
      %v8696 = vsel %vm846, %v7992, %v8275
      %v8697 = vsel %vm846, %v7993, %v8277
      %v8698 = vsel %vm846, %v7994, %v8279
      %v8699 = vsel %vm846, %v7995, %v8281
      %v8700 = vsel %vm846, %v7996, %v8283
      %v8701 = vsel %vm846, %v7997, %v8285
      %v8702 = vsel %vm846, %v7998, %v8287
      %v8703 = vsel %vm846, %v7999, %v8289
      %v8704 = vsel %vm846, %v8000, %v8291
      %v8705 = vsel %vm846, %v8001, %v8293
      %v8706 = vsel %vm846, %v8002, %v8295
      %v8707 = vsel %vm846, %v8003, %v8297
      %v8708 = vsel %vm846, %v8004, %v8299
      %v8709 = vsel %vm846, %v8005, %v8301
      %v8710 = vsel %vm846, %v8006, %v8303
      %v8711 = vsel %vm846, %v8007, %v8305
      %v8712 = vsel %vm846, %v8008, %v8307
      %v8713 = vsel %vm846, %v8009, %v8309
      %v8714 = vsel %vm846, %v8010, %v8311
      %v8715 = vsel %vm846, %v8011, %v8313
      %v8716 = vsel %vm846, %v8012, %v8315
      %v8717 = vsel %vm846, %v8013, %v8317
      %v8718 = vsel %vm846, %v8014, %v8319
      %v8719 = vsel %vm846, %v8015, %v8321
      %v8720 = vsel %vm846, %v8016, %v8323
      %v8721 = vsel %vm846, %v8017, %v8325
      %v8722 = vsel %vm846, %v8018, %v8327
      %v8723 = vsel %vm846, %v8019, %v8329
      %v8724 = vsel %vm846, %v8020, %v8331
      %v8725 = vsel %vm846, %v8021, %v8333
      %v8726 = vsel %vm846, %v8022, %v8335
      %v8727 = vsel %vm846, %v8023, %v8337
      %v8728 = vsel %vm846, %v8024, %v8339
      %v8729 = vsel %vm846, %v8025, %v8341
      %v8730 = vsel %vm846, %v8026, %v8343
      %v8731 = vsel %vm846, %v8027, %v8345
      %v8732 = vsel %vm846, %v8028, %v8347
      %v8733 = vsel %vm846, %v8029, %v8349
      %v8734 = vsel %vm911, %v8670, %v8479
      %v8735 = vsel %vm911, %v8671, %v8481
      %v8736 = vsel %vm911, %v8672, %v8483
      %v8737 = vsel %vm911, %v8673, %v8485
      %v8738 = vsel %vm911, %v8674, %v8487
      %v8739 = vsel %vm911, %v8675, %v8489
      %v8740 = vsel %vm911, %v8676, %v8491
      %v8741 = vsel %vm911, %v8677, %v8493
      %v8742 = vsel %vm911, %v8678, %v8495
      %v8743 = vsel %vm911, %v8679, %v8497
      %v8744 = vsel %vm911, %v8680, %v8499
      %v8745 = vsel %vm911, %v8681, %v8501
      %v8746 = vsel %vm911, %v8682, %v8503
      %v8747 = vsel %vm911, %v8683, %v8505
      %v8748 = vsel %vm911, %v8684, %v8507
      %v8749 = vsel %vm911, %v8685, %v8509
      %v8750 = vsel %vm911, %v8686, %v8511
      %v8751 = vsel %vm911, %v8687, %v8513
      %v8752 = vsel %vm911, %v8688, %v8515
      %v8753 = vsel %vm911, %v8689, %v8517
      %v8754 = vsel %vm911, %v8690, %v8519
      %v8755 = vsel %vm911, %v8691, %v8521
      %v8756 = vsel %vm911, %v8692, %v8523
      %v8757 = vsel %vm911, %v8693, %v8525
      %v8758 = vsel %vm911, %v8694, %v8527
      %v8759 = vsel %vm911, %v8695, %v8529
      %v8760 = vsel %vm911, %v8696, %v8531
      %v8761 = vsel %vm911, %v8697, %v8533
      %v8762 = vsel %vm911, %v8698, %v8535
      %v8763 = vsel %vm911, %v8699, %v8537
      %v8764 = vsel %vm911, %v8700, %v8539
      %v8765 = vsel %vm911, %v8701, %v8541
      %v8766 = vsel %vm911, %v8702, %v8543
      %v8767 = vsel %vm911, %v8703, %v8545
      %v8768 = vsel %vm911, %v8704, %v8547
      %v8769 = vsel %vm911, %v8705, %v8549
      %v8770 = vsel %vm911, %v8706, %v8551
      %v8771 = vsel %vm911, %v8707, %v8553
      %v8772 = vsel %vm911, %v8708, %v8555
      %v8773 = vsel %vm911, %v8709, %v8557
      %v8774 = vsel %vm911, %v8710, %v8559
      %v8775 = vsel %vm911, %v8711, %v8561
      %v8776 = vsel %vm911, %v8712, %v8563
      %v8777 = vsel %vm911, %v8713, %v8565
      %v8778 = vsel %vm911, %v8714, %v8567
      %v8779 = vsel %vm911, %v8715, %v8569
      %v8780 = vsel %vm911, %v8716, %v8571
      %v8781 = vsel %vm911, %v8717, %v8573
      %v8782 = vsel %vm911, %v8718, %v8575
      %v8783 = vsel %vm911, %v8719, %v8577
      %v8784 = vsel %vm911, %v8720, %v8579
      %v8785 = vsel %vm911, %v8721, %v8581
      %v8786 = vsel %vm911, %v8722, %v8583
      %v8787 = vsel %vm911, %v8723, %v8585
      %v8788 = vsel %vm911, %v8724, %v8587
      %v8789 = vsel %vm911, %v8725, %v8589
      %v8790 = vsel %vm911, %v8726, %v8591
      %v8791 = vsel %vm911, %v8727, %v8593
      %v8792 = vsel %vm911, %v8728, %v8595
      %v8793 = vsel %vm911, %v8729, %v8597
      %v8794 = vsel %vm911, %v8730, %v8599
      %v8795 = vsel %vm911, %v8731, %v8601
      %v8796 = vsel %vm911, %v8732, %v8603
      %v8797 = vsel %vm911, %v8733, %v8605
      %8862 = vrot.lane.b32.xlu0 %v8734, 84
      %v8863 = vpop.permute.xlu0 %8862
      %8864 = vrot.lane.b32.xlu0 %v8735, 84
      %v8865 = vpop.permute.xlu0 %8864
      %8866 = vrot.lane.b32.xlu0 %v8736, 84
      %v8867 = vpop.permute.xlu0 %8866
      %8868 = vrot.lane.b32.xlu0 %v8737, 84
      %v8869 = vpop.permute.xlu0 %8868
      %8870 = vrot.lane.b32.xlu0 %v8738, 84
      %v8871 = vpop.permute.xlu0 %8870
      %8872 = vrot.lane.b32.xlu0 %v8739, 84
      %v8873 = vpop.permute.xlu0 %8872
      %8874 = vrot.lane.b32.xlu0 %v8740, 84
      %v8875 = vpop.permute.xlu0 %8874
      %8876 = vrot.lane.b32.xlu0 %v8741, 84
      %v8877 = vpop.permute.xlu0 %8876
      %8878 = vrot.lane.b32.xlu0 %v8742, 84
      %v8879 = vpop.permute.xlu0 %8878
      %8880 = vrot.lane.b32.xlu0 %v8743, 84
      %v8881 = vpop.permute.xlu0 %8880
      %8882 = vrot.lane.b32.xlu0 %v8744, 84
      %v8883 = vpop.permute.xlu0 %8882
      %8884 = vrot.lane.b32.xlu0 %v8745, 84
      %v8885 = vpop.permute.xlu0 %8884
      %8886 = vrot.lane.b32.xlu0 %v8746, 84
      %v8887 = vpop.permute.xlu0 %8886
      %8888 = vrot.lane.b32.xlu0 %v8747, 84
      %v8889 = vpop.permute.xlu0 %8888
      %8890 = vrot.lane.b32.xlu0 %v8748, 84
      %v8891 = vpop.permute.xlu0 %8890
      %8892 = vrot.lane.b32.xlu0 %v8749, 84
      %v8893 = vpop.permute.xlu0 %8892
      %8894 = vrot.lane.b32.xlu0 %v8750, 84
      %v8895 = vpop.permute.xlu0 %8894
      %8896 = vrot.lane.b32.xlu0 %v8751, 84
      %v8897 = vpop.permute.xlu0 %8896
      %8898 = vrot.lane.b32.xlu0 %v8752, 84
      %v8899 = vpop.permute.xlu0 %8898
      %8900 = vrot.lane.b32.xlu0 %v8753, 84
      %v8901 = vpop.permute.xlu0 %8900
      %8902 = vrot.lane.b32.xlu0 %v8754, 84
      %v8903 = vpop.permute.xlu0 %8902
      %8904 = vrot.lane.b32.xlu0 %v8755, 84
      %v8905 = vpop.permute.xlu0 %8904
      %8906 = vrot.lane.b32.xlu0 %v8756, 84
      %v8907 = vpop.permute.xlu0 %8906
      %8908 = vrot.lane.b32.xlu0 %v8757, 84
      %v8909 = vpop.permute.xlu0 %8908
      %8910 = vrot.lane.b32.xlu0 %v8758, 84
      %v8911 = vpop.permute.xlu0 %8910
      %8912 = vrot.lane.b32.xlu0 %v8759, 84
      %v8913 = vpop.permute.xlu0 %8912
      %8914 = vrot.lane.b32.xlu0 %v8760, 84
      %v8915 = vpop.permute.xlu0 %8914
      %8916 = vrot.lane.b32.xlu0 %v8761, 84
      %v8917 = vpop.permute.xlu0 %8916
      %8918 = vrot.lane.b32.xlu0 %v8762, 84
      %v8919 = vpop.permute.xlu0 %8918
      %8920 = vrot.lane.b32.xlu0 %v8763, 84
      %v8921 = vpop.permute.xlu0 %8920
      %8922 = vrot.lane.b32.xlu0 %v8764, 84
      %v8923 = vpop.permute.xlu0 %8922
      %8924 = vrot.lane.b32.xlu0 %v8765, 84
      %v8925 = vpop.permute.xlu0 %8924
      %8926 = vrot.lane.b32.xlu0 %v8766, 84
      %v8927 = vpop.permute.xlu0 %8926
      %8928 = vrot.lane.b32.xlu0 %v8767, 84
      %v8929 = vpop.permute.xlu0 %8928
      %8930 = vrot.lane.b32.xlu0 %v8768, 84
      %v8931 = vpop.permute.xlu0 %8930
      %8932 = vrot.lane.b32.xlu0 %v8769, 84
      %v8933 = vpop.permute.xlu0 %8932
      %8934 = vrot.lane.b32.xlu0 %v8770, 84
      %v8935 = vpop.permute.xlu0 %8934
      %8936 = vrot.lane.b32.xlu0 %v8771, 84
      %v8937 = vpop.permute.xlu0 %8936
      %8938 = vrot.lane.b32.xlu0 %v8772, 84
      %v8939 = vpop.permute.xlu0 %8938
      %8940 = vrot.lane.b32.xlu0 %v8773, 84
      %v8941 = vpop.permute.xlu0 %8940
      %8942 = vrot.lane.b32.xlu0 %v8774, 84
      %v8943 = vpop.permute.xlu0 %8942
      %8944 = vrot.lane.b32.xlu0 %v8775, 84
      %v8945 = vpop.permute.xlu0 %8944
      %8946 = vrot.lane.b32.xlu0 %v8776, 84
      %v8947 = vpop.permute.xlu0 %8946
      %8948 = vrot.lane.b32.xlu0 %v8777, 84
      %v8949 = vpop.permute.xlu0 %8948
      %8950 = vrot.lane.b32.xlu0 %v8778, 84
      %v8951 = vpop.permute.xlu0 %8950
      %8952 = vrot.lane.b32.xlu0 %v8779, 84
      %v8953 = vpop.permute.xlu0 %8952
      %8954 = vrot.lane.b32.xlu0 %v8780, 84
      %v8955 = vpop.permute.xlu0 %8954
      %8956 = vrot.lane.b32.xlu0 %v8781, 84
      %v8957 = vpop.permute.xlu0 %8956
      %8958 = vrot.lane.b32.xlu0 %v8782, 84
      %v8959 = vpop.permute.xlu0 %8958
      %8960 = vrot.lane.b32.xlu0 %v8783, 84
      %v8961 = vpop.permute.xlu0 %8960
      %8962 = vrot.lane.b32.xlu0 %v8784, 84
      %v8963 = vpop.permute.xlu0 %8962
      %8964 = vrot.lane.b32.xlu0 %v8785, 84
      %v8965 = vpop.permute.xlu0 %8964
      %8966 = vrot.lane.b32.xlu0 %v8786, 84
      %v8967 = vpop.permute.xlu0 %8966
      %8968 = vrot.lane.b32.xlu0 %v8787, 84
      %v8969 = vpop.permute.xlu0 %8968
      %8970 = vrot.lane.b32.xlu0 %v8788, 84
      %v8971 = vpop.permute.xlu0 %8970
      %8972 = vrot.lane.b32.xlu0 %v8789, 84
      %v8973 = vpop.permute.xlu0 %8972
      %8974 = vrot.lane.b32.xlu0 %v8790, 84
      %v8975 = vpop.permute.xlu0 %8974
      %8976 = vrot.lane.b32.xlu0 %v8791, 84
      %v8977 = vpop.permute.xlu0 %8976
      %8978 = vrot.lane.b32.xlu0 %v8792, 84
      %v8979 = vpop.permute.xlu0 %8978
      %8980 = vrot.lane.b32.xlu0 %v8793, 84
      %v8981 = vpop.permute.xlu0 %8980
      %8982 = vrot.lane.b32.xlu0 %v8794, 84
      %v8983 = vpop.permute.xlu0 %8982
      %8984 = vrot.lane.b32.xlu0 %v8795, 84
      %v8985 = vpop.permute.xlu0 %8984
      %8986 = vrot.lane.b32.xlu0 %v8796, 84
      %v8987 = vpop.permute.xlu0 %8986
      %8988 = vrot.lane.b32.xlu0 %v8797, 84
      %v8989 = vpop.permute.xlu0 %8988
      %vm9054 = vcmask 786080
      %9055 = vst.msk [vmem:[#allocation2] sm:$0xff] %vm9054, %v8863
      %9056 = vst.msk [vmem:[#allocation2 + $0x8] sm:$0xff] %vm9054, %v8865
      %9057 = vst.msk [vmem:[#allocation2 + $0x10] sm:$0xff] %vm9054, %v8867
      %9058 = vst.msk [vmem:[#allocation2 + $0x18] sm:$0xff] %vm9054, %v8869
      %9059 = vst.msk [vmem:[#allocation2 + $0x20] sm:$0xff] %vm9054, %v8871
      %9060 = vst.msk [vmem:[#allocation2 + $0x28] sm:$0xff] %vm9054, %v8873
      %9061 = vst.msk [vmem:[#allocation2 + $0x30] sm:$0xff] %vm9054, %v8875
      %9062 = vst.msk [vmem:[#allocation2 + $0x38] sm:$0xff] %vm9054, %v8877
      %9063 = vst.msk [vmem:[#allocation2 + $0x40] sm:$0xff] %vm9054, %v8879
      %9064 = vst.msk [vmem:[#allocation2 + $0x48] sm:$0xff] %vm9054, %v8881
      %9065 = vst.msk [vmem:[#allocation2 + $0x50] sm:$0xff] %vm9054, %v8883
      %9066 = vst.msk [vmem:[#allocation2 + $0x58] sm:$0xff] %vm9054, %v8885
      %9067 = vst.msk [vmem:[#allocation2 + $0x60] sm:$0xff] %vm9054, %v8887
      %9068 = vst.msk [vmem:[#allocation2 + $0x68] sm:$0xff] %vm9054, %v8889
      %9069 = vst.msk [vmem:[#allocation2 + $0x70] sm:$0xff] %vm9054, %v8891
      %9070 = vst.msk [vmem:[#allocation2 + $0x78] sm:$0xff] %vm9054, %v8893
      %9071 = vst.msk [vmem:[#allocation2 + $0x80] sm:$0xff] %vm9054, %v8895
      %9072 = vst.msk [vmem:[#allocation2 + $0x88] sm:$0xff] %vm9054, %v8897
      %9073 = vst.msk [vmem:[#allocation2 + $0x90] sm:$0xff] %vm9054, %v8899
      %9074 = vst.msk [vmem:[#allocation2 + $0x98] sm:$0xff] %vm9054, %v8901
      %9075 = vst.msk [vmem:[#allocation2 + $0xa0] sm:$0xff] %vm9054, %v8903
      %9076 = vst.msk [vmem:[#allocation2 + $0xa8] sm:$0xff] %vm9054, %v8905
      %9077 = vst.msk [vmem:[#allocation2 + $0xb0] sm:$0xff] %vm9054, %v8907
      %9078 = vst.msk [vmem:[#allocation2 + $0xb8] sm:$0xff] %vm9054, %v8909
      %9079 = vst.msk [vmem:[#allocation2 + $0xc0] sm:$0xff] %vm9054, %v8911
      %9080 = vst.msk [vmem:[#allocation2 + $0xc8] sm:$0xff] %vm9054, %v8913
      %9081 = vst.msk [vmem:[#allocation2 + $0xd0] sm:$0xff] %vm9054, %v8915
      %9082 = vst.msk [vmem:[#allocation2 + $0xd8] sm:$0xff] %vm9054, %v8917
      %9083 = vst.msk [vmem:[#allocation2 + $0xe0] sm:$0xff] %vm9054, %v8919
      %9084 = vst.msk [vmem:[#allocation2 + $0xe8] sm:$0xff] %vm9054, %v8921
      %9085 = vst.msk [vmem:[#allocation2 + $0xf0] sm:$0xff] %vm9054, %v8923
      %9086 = vst.msk [vmem:[#allocation2 + $0xf8] sm:$0xff] %vm9054, %v8925
      %9087 = vst.msk [vmem:[#allocation2 + $0x100] sm:$0xff] %vm9054, %v8927
      %9088 = vst.msk [vmem:[#allocation2 + $0x108] sm:$0xff] %vm9054, %v8929
      %9089 = vst.msk [vmem:[#allocation2 + $0x110] sm:$0xff] %vm9054, %v8931
      %9090 = vst.msk [vmem:[#allocation2 + $0x118] sm:$0xff] %vm9054, %v8933
      %9091 = vst.msk [vmem:[#allocation2 + $0x120] sm:$0xff] %vm9054, %v8935
      %9092 = vst.msk [vmem:[#allocation2 + $0x128] sm:$0xff] %vm9054, %v8937
      %9093 = vst.msk [vmem:[#allocation2 + $0x130] sm:$0xff] %vm9054, %v8939
      %9094 = vst.msk [vmem:[#allocation2 + $0x138] sm:$0xff] %vm9054, %v8941
      %9095 = vst.msk [vmem:[#allocation2 + $0x140] sm:$0xff] %vm9054, %v8943
      %9096 = vst.msk [vmem:[#allocation2 + $0x148] sm:$0xff] %vm9054, %v8945
      %9097 = vst.msk [vmem:[#allocation2 + $0x150] sm:$0xff] %vm9054, %v8947
      %9098 = vst.msk [vmem:[#allocation2 + $0x158] sm:$0xff] %vm9054, %v8949
      %9099 = vst.msk [vmem:[#allocation2 + $0x160] sm:$0xff] %vm9054, %v8951
      %9100 = vst.msk [vmem:[#allocation2 + $0x168] sm:$0xff] %vm9054, %v8953
      %9101 = vst.msk [vmem:[#allocation2 + $0x170] sm:$0xff] %vm9054, %v8955
      %9102 = vst.msk [vmem:[#allocation2 + $0x178] sm:$0xff] %vm9054, %v8957
      %9103 = vst.msk [vmem:[#allocation2 + $0x180] sm:$0xff] %vm9054, %v8959
      %9104 = vst.msk [vmem:[#allocation2 + $0x188] sm:$0xff] %vm9054, %v8961
      %9105 = vst.msk [vmem:[#allocation2 + $0x190] sm:$0xff] %vm9054, %v8963
      %9106 = vst.msk [vmem:[#allocation2 + $0x198] sm:$0xff] %vm9054, %v8965
      %9107 = vst.msk [vmem:[#allocation2 + $0x1a0] sm:$0xff] %vm9054, %v8967
      %9108 = vst.msk [vmem:[#allocation2 + $0x1a8] sm:$0xff] %vm9054, %v8969
      %9109 = vst.msk [vmem:[#allocation2 + $0x1b0] sm:$0xff] %vm9054, %v8971
      %9110 = vst.msk [vmem:[#allocation2 + $0x1b8] sm:$0xff] %vm9054, %v8973
      %9111 = vst.msk [vmem:[#allocation2 + $0x1c0] sm:$0xff] %vm9054, %v8975
      %9112 = vst.msk [vmem:[#allocation2 + $0x1c8] sm:$0xff] %vm9054, %v8977
      %9113 = vst.msk [vmem:[#allocation2 + $0x1d0] sm:$0xff] %vm9054, %v8979
      %9114 = vst.msk [vmem:[#allocation2 + $0x1d8] sm:$0xff] %vm9054, %v8981
      %9115 = vst.msk [vmem:[#allocation2 + $0x1e0] sm:$0xff] %vm9054, %v8983
      %9116 = vst.msk [vmem:[#allocation2 + $0x1e8] sm:$0xff] %vm9054, %v8985
      %9117 = vst.msk [vmem:[#allocation2 + $0x1f0] sm:$0xff] %vm9054, %v8987
      %9118 = vst.msk [vmem:[#allocation2 + $0x1f8] sm:$0xff] %vm9054, %v8989
      %s9119 = scalar_lea.vmem %s137, 352
      %v9120 = vld [vmem:[%s9119] sm:$0xff]
      %v9121 = vld [vmem:[%s9119 + $0x10] sm:$0xff]
      %v9122 = vld [vmem:[%s9119 + $0x20] sm:$0xff]
      %v9123 = vld [vmem:[%s9119 + $0x30] sm:$0xff]
      %v9124 = vld [vmem:[%s9119 + $0x40] sm:$0xff]
      %v9125 = vld [vmem:[%s9119 + $0x50] sm:$0xff]
      %v9126 = vld [vmem:[%s9119 + $0x60] sm:$0xff]
      %v9127 = vld [vmem:[%s9119 + $0x70] sm:$0xff]
      %v9128 = vld [vmem:[%s9119 + $0xa0] sm:$0xff]
      %v9129 = vld [vmem:[%s9119 + $0xb0] sm:$0xff]
      %v9130 = vld [vmem:[%s9119 + $0xc0] sm:$0xff]
      %v9131 = vld [vmem:[%s9119 + $0xd0] sm:$0xff]
      %v9132 = vld [vmem:[%s9119 + $0xe0] sm:$0xff]
      %v9133 = vld [vmem:[%s9119 + $0xf0] sm:$0xff]
      %v9134 = vld [vmem:[%s9119 + $0x100] sm:$0xff]
      %v9135 = vld [vmem:[%s9119 + $0x110] sm:$0xff]
      %v9136 = vld [vmem:[%s9119 + $0x140] sm:$0xff]
      %v9137 = vld [vmem:[%s9119 + $0x150] sm:$0xff]
      %v9138 = vld [vmem:[%s9119 + $0x160] sm:$0xff]
      %v9139 = vld [vmem:[%s9119 + $0x170] sm:$0xff]
      %v9140 = vld [vmem:[%s9119 + $0x180] sm:$0xff]
      %v9141 = vld [vmem:[%s9119 + $0x190] sm:$0xff]
      %v9142 = vld [vmem:[%s9119 + $0x1a0] sm:$0xff]
      %v9143 = vld [vmem:[%s9119 + $0x1b0] sm:$0xff]
      %v9144 = vld [vmem:[%s9119 + $0x1e0] sm:$0xff]
      %v9145 = vld [vmem:[%s9119 + $0x1f0] sm:$0xff]
      %v9146 = vld [vmem:[%s9119 + $0x200] sm:$0xff]
      %v9147 = vld [vmem:[%s9119 + $0x210] sm:$0xff]
      %v9148 = vld [vmem:[%s9119 + $0x220] sm:$0xff]
      %v9149 = vld [vmem:[%s9119 + $0x230] sm:$0xff]
      %v9150 = vld [vmem:[%s9119 + $0x240] sm:$0xff]
      %v9151 = vld [vmem:[%s9119 + $0x250] sm:$0xff]
      %v9152 = vld [vmem:[%s9119 + $0x280] sm:$0xff]
      %v9153 = vld [vmem:[%s9119 + $0x290] sm:$0xff]
      %v9154 = vld [vmem:[%s9119 + $0x2a0] sm:$0xff]
      %v9155 = vld [vmem:[%s9119 + $0x2b0] sm:$0xff]
      %v9156 = vld [vmem:[%s9119 + $0x2c0] sm:$0xff]
      %v9157 = vld [vmem:[%s9119 + $0x2d0] sm:$0xff]
      %v9158 = vld [vmem:[%s9119 + $0x2e0] sm:$0xff]
      %v9159 = vld [vmem:[%s9119 + $0x2f0] sm:$0xff]
      %v9160 = vld [vmem:[%s9119 + $0x320] sm:$0xff]
      %v9161 = vld [vmem:[%s9119 + $0x330] sm:$0xff]
      %v9162 = vld [vmem:[%s9119 + $0x340] sm:$0xff]
      %v9163 = vld [vmem:[%s9119 + $0x350] sm:$0xff]
      %v9164 = vld [vmem:[%s9119 + $0x360] sm:$0xff]
      %v9165 = vld [vmem:[%s9119 + $0x370] sm:$0xff]
      %v9166 = vld [vmem:[%s9119 + $0x380] sm:$0xff]
      %v9167 = vld [vmem:[%s9119 + $0x390] sm:$0xff]
      %v9168 = vld [vmem:[%s9119 + $0x3c0] sm:$0xff]
      %v9169 = vld [vmem:[%s9119 + $0x3d0] sm:$0xff]
      %v9170 = vld [vmem:[%s9119 + $0x3e0] sm:$0xff]
      %v9171 = vld [vmem:[%s9119 + $0x3f0] sm:$0xff]
      %v9172 = vld [vmem:[%s9119 + $0x400] sm:$0xff]
      %v9173 = vld [vmem:[%s9119 + $0x410] sm:$0xff]
      %v9174 = vld [vmem:[%s9119 + $0x420] sm:$0xff]
      %v9175 = vld [vmem:[%s9119 + $0x430] sm:$0xff]
      %v9176 = vld [vmem:[%s9119 + $0x460] sm:$0xff]
      %v9177 = vld [vmem:[%s9119 + $0x470] sm:$0xff]
      %v9178 = vld [vmem:[%s9119 + $0x480] sm:$0xff]
      %v9179 = vld [vmem:[%s9119 + $0x490] sm:$0xff]
      %v9180 = vld [vmem:[%s9119 + $0x4a0] sm:$0xff]
      %v9181 = vld [vmem:[%s9119 + $0x4b0] sm:$0xff]
      %v9182 = vld [vmem:[%s9119 + $0x4c0] sm:$0xff]
      %v9183 = vld [vmem:[%s9119 + $0x4d0] sm:$0xff]
      %v9184 = vld [vmem:[%s9119 + $0x1] sm:$0xff]
      %v9185 = vld [vmem:[%s9119 + $0x11] sm:$0xff]
      %v9186 = vld [vmem:[%s9119 + $0x21] sm:$0xff]
      %v9187 = vld [vmem:[%s9119 + $0x31] sm:$0xff]
      %v9188 = vld [vmem:[%s9119 + $0x41] sm:$0xff]
      %v9189 = vld [vmem:[%s9119 + $0x51] sm:$0xff]
      %v9190 = vld [vmem:[%s9119 + $0x61] sm:$0xff]
      %v9191 = vld [vmem:[%s9119 + $0x71] sm:$0xff]
      %v9192 = vld [vmem:[%s9119 + $0xa1] sm:$0xff]
      %v9193 = vld [vmem:[%s9119 + $0xb1] sm:$0xff]
      %v9194 = vld [vmem:[%s9119 + $0xc1] sm:$0xff]
      %v9195 = vld [vmem:[%s9119 + $0xd1] sm:$0xff]
      %v9196 = vld [vmem:[%s9119 + $0xe1] sm:$0xff]
      %v9197 = vld [vmem:[%s9119 + $0xf1] sm:$0xff]
      %v9198 = vld [vmem:[%s9119 + $0x101] sm:$0xff]
      %v9199 = vld [vmem:[%s9119 + $0x111] sm:$0xff]
      %v9200 = vld [vmem:[%s9119 + $0x141] sm:$0xff]
      %v9201 = vld [vmem:[%s9119 + $0x151] sm:$0xff]
      %v9202 = vld [vmem:[%s9119 + $0x161] sm:$0xff]
      %v9203 = vld [vmem:[%s9119 + $0x171] sm:$0xff]
      %v9204 = vld [vmem:[%s9119 + $0x181] sm:$0xff]
      %v9205 = vld [vmem:[%s9119 + $0x191] sm:$0xff]
      %v9206 = vld [vmem:[%s9119 + $0x1a1] sm:$0xff]
      %v9207 = vld [vmem:[%s9119 + $0x1b1] sm:$0xff]
      %v9208 = vld [vmem:[%s9119 + $0x1e1] sm:$0xff]
      %v9209 = vld [vmem:[%s9119 + $0x1f1] sm:$0xff]
      %v9210 = vld [vmem:[%s9119 + $0x201] sm:$0xff]
      %v9211 = vld [vmem:[%s9119 + $0x211] sm:$0xff]
      %v9212 = vld [vmem:[%s9119 + $0x221] sm:$0xff]
      %v9213 = vld [vmem:[%s9119 + $0x231] sm:$0xff]
      %v9214 = vld [vmem:[%s9119 + $0x241] sm:$0xff]
      %v9215 = vld [vmem:[%s9119 + $0x251] sm:$0xff]
      %v9216 = vld [vmem:[%s9119 + $0x281] sm:$0xff]
      %v9217 = vld [vmem:[%s9119 + $0x291] sm:$0xff]
      %v9218 = vld [vmem:[%s9119 + $0x2a1] sm:$0xff]
      %v9219 = vld [vmem:[%s9119 + $0x2b1] sm:$0xff]
      %v9220 = vld [vmem:[%s9119 + $0x2c1] sm:$0xff]
      %v9221 = vld [vmem:[%s9119 + $0x2d1] sm:$0xff]
      %v9222 = vld [vmem:[%s9119 + $0x2e1] sm:$0xff]
      %v9223 = vld [vmem:[%s9119 + $0x2f1] sm:$0xff]
      %v9224 = vld [vmem:[%s9119 + $0x321] sm:$0xff]
      %v9225 = vld [vmem:[%s9119 + $0x331] sm:$0xff]
      %v9226 = vld [vmem:[%s9119 + $0x341] sm:$0xff]
      %v9227 = vld [vmem:[%s9119 + $0x351] sm:$0xff]
      %v9228 = vld [vmem:[%s9119 + $0x361] sm:$0xff]
      %v9229 = vld [vmem:[%s9119 + $0x371] sm:$0xff]
      %v9230 = vld [vmem:[%s9119 + $0x381] sm:$0xff]
      %v9231 = vld [vmem:[%s9119 + $0x391] sm:$0xff]
      %v9232 = vld [vmem:[%s9119 + $0x3c1] sm:$0xff]
      %v9233 = vld [vmem:[%s9119 + $0x3d1] sm:$0xff]
      %v9234 = vld [vmem:[%s9119 + $0x3e1] sm:$0xff]
      %v9235 = vld [vmem:[%s9119 + $0x3f1] sm:$0xff]
      %v9236 = vld [vmem:[%s9119 + $0x401] sm:$0xff]
      %v9237 = vld [vmem:[%s9119 + $0x411] sm:$0xff]
      %v9238 = vld [vmem:[%s9119 + $0x421] sm:$0xff]
      %v9239 = vld [vmem:[%s9119 + $0x431] sm:$0xff]
      %v9240 = vld [vmem:[%s9119 + $0x461] sm:$0xff]
      %v9241 = vld [vmem:[%s9119 + $0x471] sm:$0xff]
      %v9242 = vld [vmem:[%s9119 + $0x481] sm:$0xff]
      %v9243 = vld [vmem:[%s9119 + $0x491] sm:$0xff]
      %v9244 = vld [vmem:[%s9119 + $0x4a1] sm:$0xff]
      %v9245 = vld [vmem:[%s9119 + $0x4b1] sm:$0xff]
      %v9246 = vld [vmem:[%s9119 + $0x4c1] sm:$0xff]
      %v9247 = vld [vmem:[%s9119 + $0x4d1] sm:$0xff]
      %v9248 = vld [vmem:[%s9119 + $0x2] sm:$0xff]
      %v9249 = vld [vmem:[%s9119 + $0x12] sm:$0xff]
      %v9250 = vld [vmem:[%s9119 + $0x22] sm:$0xff]
      %v9251 = vld [vmem:[%s9119 + $0x32] sm:$0xff]
      %v9252 = vld [vmem:[%s9119 + $0x42] sm:$0xff]
      %v9253 = vld [vmem:[%s9119 + $0x52] sm:$0xff]
      %v9254 = vld [vmem:[%s9119 + $0x62] sm:$0xff]
      %v9255 = vld [vmem:[%s9119 + $0x72] sm:$0xff]
      %v9256 = vld [vmem:[%s9119 + $0xa2] sm:$0xff]
      %v9257 = vld [vmem:[%s9119 + $0xb2] sm:$0xff]
      %v9258 = vld [vmem:[%s9119 + $0xc2] sm:$0xff]
      %v9259 = vld [vmem:[%s9119 + $0xd2] sm:$0xff]
      %v9260 = vld [vmem:[%s9119 + $0xe2] sm:$0xff]
      %v9261 = vld [vmem:[%s9119 + $0xf2] sm:$0xff]
      %v9262 = vld [vmem:[%s9119 + $0x102] sm:$0xff]
      %v9263 = vld [vmem:[%s9119 + $0x112] sm:$0xff]
      %v9264 = vld [vmem:[%s9119 + $0x142] sm:$0xff]
      %v9265 = vld [vmem:[%s9119 + $0x152] sm:$0xff]
      %v9266 = vld [vmem:[%s9119 + $0x162] sm:$0xff]
      %v9267 = vld [vmem:[%s9119 + $0x172] sm:$0xff]
      %v9268 = vld [vmem:[%s9119 + $0x182] sm:$0xff]
      %v9269 = vld [vmem:[%s9119 + $0x192] sm:$0xff]
      %v9270 = vld [vmem:[%s9119 + $0x1a2] sm:$0xff]
      %v9271 = vld [vmem:[%s9119 + $0x1b2] sm:$0xff]
      %v9272 = vld [vmem:[%s9119 + $0x1e2] sm:$0xff]
      %v9273 = vld [vmem:[%s9119 + $0x1f2] sm:$0xff]
      %v9274 = vld [vmem:[%s9119 + $0x202] sm:$0xff]
      %v9275 = vld [vmem:[%s9119 + $0x212] sm:$0xff]
      %v9276 = vld [vmem:[%s9119 + $0x222] sm:$0xff]
      %v9277 = vld [vmem:[%s9119 + $0x232] sm:$0xff]
      %v9278 = vld [vmem:[%s9119 + $0x242] sm:$0xff]
      %v9279 = vld [vmem:[%s9119 + $0x252] sm:$0xff]
      %v9280 = vld [vmem:[%s9119 + $0x282] sm:$0xff]
      %v9281 = vld [vmem:[%s9119 + $0x292] sm:$0xff]
      %v9282 = vld [vmem:[%s9119 + $0x2a2] sm:$0xff]
      %v9283 = vld [vmem:[%s9119 + $0x2b2] sm:$0xff]
      %v9284 = vld [vmem:[%s9119 + $0x2c2] sm:$0xff]
      %v9285 = vld [vmem:[%s9119 + $0x2d2] sm:$0xff]
      %v9286 = vld [vmem:[%s9119 + $0x2e2] sm:$0xff]
      %v9287 = vld [vmem:[%s9119 + $0x2f2] sm:$0xff]
      %v9288 = vld [vmem:[%s9119 + $0x322] sm:$0xff]
      %v9289 = vld [vmem:[%s9119 + $0x332] sm:$0xff]
      %v9290 = vld [vmem:[%s9119 + $0x342] sm:$0xff]
      %v9291 = vld [vmem:[%s9119 + $0x352] sm:$0xff]
      %v9292 = vld [vmem:[%s9119 + $0x362] sm:$0xff]
      %v9293 = vld [vmem:[%s9119 + $0x372] sm:$0xff]
      %v9294 = vld [vmem:[%s9119 + $0x382] sm:$0xff]
      %v9295 = vld [vmem:[%s9119 + $0x392] sm:$0xff]
      %v9296 = vld [vmem:[%s9119 + $0x3c2] sm:$0xff]
      %v9297 = vld [vmem:[%s9119 + $0x3d2] sm:$0xff]
      %v9298 = vld [vmem:[%s9119 + $0x3e2] sm:$0xff]
      %v9299 = vld [vmem:[%s9119 + $0x3f2] sm:$0xff]
      %v9300 = vld [vmem:[%s9119 + $0x402] sm:$0xff]
      %v9301 = vld [vmem:[%s9119 + $0x412] sm:$0xff]
      %v9302 = vld [vmem:[%s9119 + $0x422] sm:$0xff]
      %v9303 = vld [vmem:[%s9119 + $0x432] sm:$0xff]
      %v9304 = vld [vmem:[%s9119 + $0x462] sm:$0xff]
      %v9305 = vld [vmem:[%s9119 + $0x472] sm:$0xff]
      %v9306 = vld [vmem:[%s9119 + $0x482] sm:$0xff]
      %v9307 = vld [vmem:[%s9119 + $0x492] sm:$0xff]
      %v9308 = vld [vmem:[%s9119 + $0x4a2] sm:$0xff]
      %v9309 = vld [vmem:[%s9119 + $0x4b2] sm:$0xff]
      %v9310 = vld [vmem:[%s9119 + $0x4c2] sm:$0xff]
      %v9311 = vld [vmem:[%s9119 + $0x4d2] sm:$0xff]
      %9376 = vrot.lane.b32.xlu0 %v9184, 4
      %v9377 = vpop.permute.xlu0 %9376
      %9378 = vrot.lane.b32.xlu0 %v9185, 4
      %v9379 = vpop.permute.xlu0 %9378
      %9380 = vrot.lane.b32.xlu0 %v9186, 4
      %v9381 = vpop.permute.xlu0 %9380
      %9382 = vrot.lane.b32.xlu0 %v9187, 4
      %v9383 = vpop.permute.xlu0 %9382
      %9384 = vrot.lane.b32.xlu0 %v9188, 4
      %v9385 = vpop.permute.xlu0 %9384
      %9386 = vrot.lane.b32.xlu0 %v9189, 4
      %v9387 = vpop.permute.xlu0 %9386
      %9388 = vrot.lane.b32.xlu0 %v9190, 4
      %v9389 = vpop.permute.xlu0 %9388
      %9390 = vrot.lane.b32.xlu0 %v9191, 4
      %v9391 = vpop.permute.xlu0 %9390
      %9392 = vrot.lane.b32.xlu0 %v9192, 4
      %v9393 = vpop.permute.xlu0 %9392
      %9394 = vrot.lane.b32.xlu0 %v9193, 4
      %v9395 = vpop.permute.xlu0 %9394
      %9396 = vrot.lane.b32.xlu0 %v9194, 4
      %v9397 = vpop.permute.xlu0 %9396
      %9398 = vrot.lane.b32.xlu0 %v9195, 4
      %v9399 = vpop.permute.xlu0 %9398
      %9400 = vrot.lane.b32.xlu0 %v9196, 4
      %v9401 = vpop.permute.xlu0 %9400
      %9402 = vrot.lane.b32.xlu0 %v9197, 4
      %v9403 = vpop.permute.xlu0 %9402
      %9404 = vrot.lane.b32.xlu0 %v9198, 4
      %v9405 = vpop.permute.xlu0 %9404
      %9406 = vrot.lane.b32.xlu0 %v9199, 4
      %v9407 = vpop.permute.xlu0 %9406
      %9408 = vrot.lane.b32.xlu0 %v9200, 4
      %v9409 = vpop.permute.xlu0 %9408
      %9410 = vrot.lane.b32.xlu0 %v9201, 4
      %v9411 = vpop.permute.xlu0 %9410
      %9412 = vrot.lane.b32.xlu0 %v9202, 4
      %v9413 = vpop.permute.xlu0 %9412
      %9414 = vrot.lane.b32.xlu0 %v9203, 4
      %v9415 = vpop.permute.xlu0 %9414
      %9416 = vrot.lane.b32.xlu0 %v9204, 4
      %v9417 = vpop.permute.xlu0 %9416
      %9418 = vrot.lane.b32.xlu0 %v9205, 4
      %v9419 = vpop.permute.xlu0 %9418
      %9420 = vrot.lane.b32.xlu0 %v9206, 4
      %v9421 = vpop.permute.xlu0 %9420
      %9422 = vrot.lane.b32.xlu0 %v9207, 4
      %v9423 = vpop.permute.xlu0 %9422
      %9424 = vrot.lane.b32.xlu0 %v9208, 4
      %v9425 = vpop.permute.xlu0 %9424
      %9426 = vrot.lane.b32.xlu0 %v9209, 4
      %v9427 = vpop.permute.xlu0 %9426
      %9428 = vrot.lane.b32.xlu0 %v9210, 4
      %v9429 = vpop.permute.xlu0 %9428
      %9430 = vrot.lane.b32.xlu0 %v9211, 4
      %v9431 = vpop.permute.xlu0 %9430
      %9432 = vrot.lane.b32.xlu0 %v9212, 4
      %v9433 = vpop.permute.xlu0 %9432
      %9434 = vrot.lane.b32.xlu0 %v9213, 4
      %v9435 = vpop.permute.xlu0 %9434
      %9436 = vrot.lane.b32.xlu0 %v9214, 4
      %v9437 = vpop.permute.xlu0 %9436
      %9438 = vrot.lane.b32.xlu0 %v9215, 4
      %v9439 = vpop.permute.xlu0 %9438
      %9440 = vrot.lane.b32.xlu0 %v9216, 4
      %v9441 = vpop.permute.xlu0 %9440
      %9442 = vrot.lane.b32.xlu0 %v9217, 4
      %v9443 = vpop.permute.xlu0 %9442
      %9444 = vrot.lane.b32.xlu0 %v9218, 4
      %v9445 = vpop.permute.xlu0 %9444
      %9446 = vrot.lane.b32.xlu0 %v9219, 4
      %v9447 = vpop.permute.xlu0 %9446
      %9448 = vrot.lane.b32.xlu0 %v9220, 4
      %v9449 = vpop.permute.xlu0 %9448
      %9450 = vrot.lane.b32.xlu0 %v9221, 4
      %v9451 = vpop.permute.xlu0 %9450
      %9452 = vrot.lane.b32.xlu0 %v9222, 4
      %v9453 = vpop.permute.xlu0 %9452
      %9454 = vrot.lane.b32.xlu0 %v9223, 4
      %v9455 = vpop.permute.xlu0 %9454
      %9456 = vrot.lane.b32.xlu0 %v9224, 4
      %v9457 = vpop.permute.xlu0 %9456
      %9458 = vrot.lane.b32.xlu0 %v9225, 4
      %v9459 = vpop.permute.xlu0 %9458
      %9460 = vrot.lane.b32.xlu0 %v9226, 4
      %v9461 = vpop.permute.xlu0 %9460
      %9462 = vrot.lane.b32.xlu0 %v9227, 4
      %v9463 = vpop.permute.xlu0 %9462
      %9464 = vrot.lane.b32.xlu0 %v9228, 4
      %v9465 = vpop.permute.xlu0 %9464
      %9466 = vrot.lane.b32.xlu0 %v9229, 4
      %v9467 = vpop.permute.xlu0 %9466
      %9468 = vrot.lane.b32.xlu0 %v9230, 4
      %v9469 = vpop.permute.xlu0 %9468
      %9470 = vrot.lane.b32.xlu0 %v9231, 4
      %v9471 = vpop.permute.xlu0 %9470
      %9472 = vrot.lane.b32.xlu0 %v9232, 4
      %v9473 = vpop.permute.xlu0 %9472
      %9474 = vrot.lane.b32.xlu0 %v9233, 4
      %v9475 = vpop.permute.xlu0 %9474
      %9476 = vrot.lane.b32.xlu0 %v9234, 4
      %v9477 = vpop.permute.xlu0 %9476
      %9478 = vrot.lane.b32.xlu0 %v9235, 4
      %v9479 = vpop.permute.xlu0 %9478
      %9480 = vrot.lane.b32.xlu0 %v9236, 4
      %v9481 = vpop.permute.xlu0 %9480
      %9482 = vrot.lane.b32.xlu0 %v9237, 4
      %v9483 = vpop.permute.xlu0 %9482
      %9484 = vrot.lane.b32.xlu0 %v9238, 4
      %v9485 = vpop.permute.xlu0 %9484
      %9486 = vrot.lane.b32.xlu0 %v9239, 4
      %v9487 = vpop.permute.xlu0 %9486
      %9488 = vrot.lane.b32.xlu0 %v9240, 4
      %v9489 = vpop.permute.xlu0 %9488
      %9490 = vrot.lane.b32.xlu0 %v9241, 4
      %v9491 = vpop.permute.xlu0 %9490
      %9492 = vrot.lane.b32.xlu0 %v9242, 4
      %v9493 = vpop.permute.xlu0 %9492
      %9494 = vrot.lane.b32.xlu0 %v9243, 4
      %v9495 = vpop.permute.xlu0 %9494
      %9496 = vrot.lane.b32.xlu0 %v9244, 4
      %v9497 = vpop.permute.xlu0 %9496
      %9498 = vrot.lane.b32.xlu0 %v9245, 4
      %v9499 = vpop.permute.xlu0 %9498
      %9500 = vrot.lane.b32.xlu0 %v9246, 4
      %v9501 = vpop.permute.xlu0 %9500
      %9502 = vrot.lane.b32.xlu0 %v9247, 4
      %v9503 = vpop.permute.xlu0 %9502
      %9632 = vrot.lane.b32.xlu0 %v9248, 8
      %v9633 = vpop.permute.xlu0 %9632
      %9634 = vrot.lane.b32.xlu0 %v9249, 8
      %v9635 = vpop.permute.xlu0 %9634
      %9636 = vrot.lane.b32.xlu0 %v9250, 8
      %v9637 = vpop.permute.xlu0 %9636
      %9638 = vrot.lane.b32.xlu0 %v9251, 8
      %v9639 = vpop.permute.xlu0 %9638
      %9640 = vrot.lane.b32.xlu0 %v9252, 8
      %v9641 = vpop.permute.xlu0 %9640
      %9642 = vrot.lane.b32.xlu0 %v9253, 8
      %v9643 = vpop.permute.xlu0 %9642
      %9644 = vrot.lane.b32.xlu0 %v9254, 8
      %v9645 = vpop.permute.xlu0 %9644
      %9646 = vrot.lane.b32.xlu0 %v9255, 8
      %v9647 = vpop.permute.xlu0 %9646
      %9648 = vrot.lane.b32.xlu0 %v9256, 8
      %v9649 = vpop.permute.xlu0 %9648
      %9650 = vrot.lane.b32.xlu0 %v9257, 8
      %v9651 = vpop.permute.xlu0 %9650
      %9652 = vrot.lane.b32.xlu0 %v9258, 8
      %v9653 = vpop.permute.xlu0 %9652
      %9654 = vrot.lane.b32.xlu0 %v9259, 8
      %v9655 = vpop.permute.xlu0 %9654
      %9656 = vrot.lane.b32.xlu0 %v9260, 8
      %v9657 = vpop.permute.xlu0 %9656
      %9658 = vrot.lane.b32.xlu0 %v9261, 8
      %v9659 = vpop.permute.xlu0 %9658
      %9660 = vrot.lane.b32.xlu0 %v9262, 8
      %v9661 = vpop.permute.xlu0 %9660
      %9662 = vrot.lane.b32.xlu0 %v9263, 8
      %v9663 = vpop.permute.xlu0 %9662
      %9664 = vrot.lane.b32.xlu0 %v9264, 8
      %v9665 = vpop.permute.xlu0 %9664
      %9666 = vrot.lane.b32.xlu0 %v9265, 8
      %v9667 = vpop.permute.xlu0 %9666
      %9668 = vrot.lane.b32.xlu0 %v9266, 8
      %v9669 = vpop.permute.xlu0 %9668
      %9670 = vrot.lane.b32.xlu0 %v9267, 8
      %v9671 = vpop.permute.xlu0 %9670
      %9672 = vrot.lane.b32.xlu0 %v9268, 8
      %v9673 = vpop.permute.xlu0 %9672
      %9674 = vrot.lane.b32.xlu0 %v9269, 8
      %v9675 = vpop.permute.xlu0 %9674
      %9676 = vrot.lane.b32.xlu0 %v9270, 8
      %v9677 = vpop.permute.xlu0 %9676
      %9678 = vrot.lane.b32.xlu0 %v9271, 8
      %v9679 = vpop.permute.xlu0 %9678
      %9680 = vrot.lane.b32.xlu0 %v9272, 8
      %v9681 = vpop.permute.xlu0 %9680
      %9682 = vrot.lane.b32.xlu0 %v9273, 8
      %v9683 = vpop.permute.xlu0 %9682
      %9684 = vrot.lane.b32.xlu0 %v9274, 8
      %v9685 = vpop.permute.xlu0 %9684
      %9686 = vrot.lane.b32.xlu0 %v9275, 8
      %v9687 = vpop.permute.xlu0 %9686
      %9688 = vrot.lane.b32.xlu0 %v9276, 8
      %v9689 = vpop.permute.xlu0 %9688
      %9690 = vrot.lane.b32.xlu0 %v9277, 8
      %v9691 = vpop.permute.xlu0 %9690
      %9692 = vrot.lane.b32.xlu0 %v9278, 8
      %v9693 = vpop.permute.xlu0 %9692
      %9694 = vrot.lane.b32.xlu0 %v9279, 8
      %v9695 = vpop.permute.xlu0 %9694
      %9696 = vrot.lane.b32.xlu0 %v9280, 8
      %v9697 = vpop.permute.xlu0 %9696
      %9698 = vrot.lane.b32.xlu0 %v9281, 8
      %v9699 = vpop.permute.xlu0 %9698
      %9700 = vrot.lane.b32.xlu0 %v9282, 8
      %v9701 = vpop.permute.xlu0 %9700
      %9702 = vrot.lane.b32.xlu0 %v9283, 8
      %v9703 = vpop.permute.xlu0 %9702
      %9704 = vrot.lane.b32.xlu0 %v9284, 8
      %v9705 = vpop.permute.xlu0 %9704
      %9706 = vrot.lane.b32.xlu0 %v9285, 8
      %v9707 = vpop.permute.xlu0 %9706
      %9708 = vrot.lane.b32.xlu0 %v9286, 8
      %v9709 = vpop.permute.xlu0 %9708
      %9710 = vrot.lane.b32.xlu0 %v9287, 8
      %v9711 = vpop.permute.xlu0 %9710
      %9712 = vrot.lane.b32.xlu0 %v9288, 8
      %v9713 = vpop.permute.xlu0 %9712
      %9714 = vrot.lane.b32.xlu0 %v9289, 8
      %v9715 = vpop.permute.xlu0 %9714
      %9716 = vrot.lane.b32.xlu0 %v9290, 8
      %v9717 = vpop.permute.xlu0 %9716
      %9718 = vrot.lane.b32.xlu0 %v9291, 8
      %v9719 = vpop.permute.xlu0 %9718
      %9720 = vrot.lane.b32.xlu0 %v9292, 8
      %v9721 = vpop.permute.xlu0 %9720
      %9722 = vrot.lane.b32.xlu0 %v9293, 8
      %v9723 = vpop.permute.xlu0 %9722
      %9724 = vrot.lane.b32.xlu0 %v9294, 8
      %v9725 = vpop.permute.xlu0 %9724
      %9726 = vrot.lane.b32.xlu0 %v9295, 8
      %v9727 = vpop.permute.xlu0 %9726
      %9728 = vrot.lane.b32.xlu0 %v9296, 8
      %v9729 = vpop.permute.xlu0 %9728
      %9730 = vrot.lane.b32.xlu0 %v9297, 8
      %v9731 = vpop.permute.xlu0 %9730
      %9732 = vrot.lane.b32.xlu0 %v9298, 8
      %v9733 = vpop.permute.xlu0 %9732
      %9734 = vrot.lane.b32.xlu0 %v9299, 8
      %v9735 = vpop.permute.xlu0 %9734
      %9736 = vrot.lane.b32.xlu0 %v9300, 8
      %v9737 = vpop.permute.xlu0 %9736
      %9738 = vrot.lane.b32.xlu0 %v9301, 8
      %v9739 = vpop.permute.xlu0 %9738
      %9740 = vrot.lane.b32.xlu0 %v9302, 8
      %v9741 = vpop.permute.xlu0 %9740
      %9742 = vrot.lane.b32.xlu0 %v9303, 8
      %v9743 = vpop.permute.xlu0 %9742
      %9744 = vrot.lane.b32.xlu0 %v9304, 8
      %v9745 = vpop.permute.xlu0 %9744
      %9746 = vrot.lane.b32.xlu0 %v9305, 8
      %v9747 = vpop.permute.xlu0 %9746
      %9748 = vrot.lane.b32.xlu0 %v9306, 8
      %v9749 = vpop.permute.xlu0 %9748
      %9750 = vrot.lane.b32.xlu0 %v9307, 8
      %v9751 = vpop.permute.xlu0 %9750
      %9752 = vrot.lane.b32.xlu0 %v9308, 8
      %v9753 = vpop.permute.xlu0 %9752
      %9754 = vrot.lane.b32.xlu0 %v9309, 8
      %v9755 = vpop.permute.xlu0 %9754
      %9756 = vrot.lane.b32.xlu0 %v9310, 8
      %v9757 = vpop.permute.xlu0 %9756
      %9758 = vrot.lane.b32.xlu0 %v9311, 8
      %v9759 = vpop.permute.xlu0 %9758
      %v9824 = vsel %vm846, %v9120, %v9377
      %v9825 = vsel %vm846, %v9121, %v9379
      %v9826 = vsel %vm846, %v9122, %v9381
      %v9827 = vsel %vm846, %v9123, %v9383
      %v9828 = vsel %vm846, %v9124, %v9385
      %v9829 = vsel %vm846, %v9125, %v9387
      %v9830 = vsel %vm846, %v9126, %v9389
      %v9831 = vsel %vm846, %v9127, %v9391
      %v9832 = vsel %vm846, %v9128, %v9393
      %v9833 = vsel %vm846, %v9129, %v9395
      %v9834 = vsel %vm846, %v9130, %v9397
      %v9835 = vsel %vm846, %v9131, %v9399
      %v9836 = vsel %vm846, %v9132, %v9401
      %v9837 = vsel %vm846, %v9133, %v9403
      %v9838 = vsel %vm846, %v9134, %v9405
      %v9839 = vsel %vm846, %v9135, %v9407
      %v9840 = vsel %vm846, %v9136, %v9409
      %v9841 = vsel %vm846, %v9137, %v9411
      %v9842 = vsel %vm846, %v9138, %v9413
      %v9843 = vsel %vm846, %v9139, %v9415
      %v9844 = vsel %vm846, %v9140, %v9417
      %v9845 = vsel %vm846, %v9141, %v9419
      %v9846 = vsel %vm846, %v9142, %v9421
      %v9847 = vsel %vm846, %v9143, %v9423
      %v9848 = vsel %vm846, %v9144, %v9425
      %v9849 = vsel %vm846, %v9145, %v9427
      %v9850 = vsel %vm846, %v9146, %v9429
      %v9851 = vsel %vm846, %v9147, %v9431
      %v9852 = vsel %vm846, %v9148, %v9433
      %v9853 = vsel %vm846, %v9149, %v9435
      %v9854 = vsel %vm846, %v9150, %v9437
      %v9855 = vsel %vm846, %v9151, %v9439
      %v9856 = vsel %vm846, %v9152, %v9441
      %v9857 = vsel %vm846, %v9153, %v9443
      %v9858 = vsel %vm846, %v9154, %v9445
      %v9859 = vsel %vm846, %v9155, %v9447
      %v9860 = vsel %vm846, %v9156, %v9449
      %v9861 = vsel %vm846, %v9157, %v9451
      %v9862 = vsel %vm846, %v9158, %v9453
      %v9863 = vsel %vm846, %v9159, %v9455
      %v9864 = vsel %vm846, %v9160, %v9457
      %v9865 = vsel %vm846, %v9161, %v9459
      %v9866 = vsel %vm846, %v9162, %v9461
      %v9867 = vsel %vm846, %v9163, %v9463
      %v9868 = vsel %vm846, %v9164, %v9465
      %v9869 = vsel %vm846, %v9165, %v9467
      %v9870 = vsel %vm846, %v9166, %v9469
      %v9871 = vsel %vm846, %v9167, %v9471
      %v9872 = vsel %vm846, %v9168, %v9473
      %v9873 = vsel %vm846, %v9169, %v9475
      %v9874 = vsel %vm846, %v9170, %v9477
      %v9875 = vsel %vm846, %v9171, %v9479
      %v9876 = vsel %vm846, %v9172, %v9481
      %v9877 = vsel %vm846, %v9173, %v9483
      %v9878 = vsel %vm846, %v9174, %v9485
      %v9879 = vsel %vm846, %v9175, %v9487
      %v9880 = vsel %vm846, %v9176, %v9489
      %v9881 = vsel %vm846, %v9177, %v9491
      %v9882 = vsel %vm846, %v9178, %v9493
      %v9883 = vsel %vm846, %v9179, %v9495
      %v9884 = vsel %vm846, %v9180, %v9497
      %v9885 = vsel %vm846, %v9181, %v9499
      %v9886 = vsel %vm846, %v9182, %v9501
      %v9887 = vsel %vm846, %v9183, %v9503
      %v9888 = vsel %vm911, %v9824, %v9633
      %v9889 = vsel %vm911, %v9825, %v9635
      %v9890 = vsel %vm911, %v9826, %v9637
      %v9891 = vsel %vm911, %v9827, %v9639
      %v9892 = vsel %vm911, %v9828, %v9641
      %v9893 = vsel %vm911, %v9829, %v9643
      %v9894 = vsel %vm911, %v9830, %v9645
      %v9895 = vsel %vm911, %v9831, %v9647
      %v9896 = vsel %vm911, %v9832, %v9649
      %v9897 = vsel %vm911, %v9833, %v9651
      %v9898 = vsel %vm911, %v9834, %v9653
      %v9899 = vsel %vm911, %v9835, %v9655
      %v9900 = vsel %vm911, %v9836, %v9657
      %v9901 = vsel %vm911, %v9837, %v9659
      %v9902 = vsel %vm911, %v9838, %v9661
      %v9903 = vsel %vm911, %v9839, %v9663
      %v9904 = vsel %vm911, %v9840, %v9665
      %v9905 = vsel %vm911, %v9841, %v9667
      %v9906 = vsel %vm911, %v9842, %v9669
      %v9907 = vsel %vm911, %v9843, %v9671
      %v9908 = vsel %vm911, %v9844, %v9673
      %v9909 = vsel %vm911, %v9845, %v9675
      %v9910 = vsel %vm911, %v9846, %v9677
      %v9911 = vsel %vm911, %v9847, %v9679
      %v9912 = vsel %vm911, %v9848, %v9681
      %v9913 = vsel %vm911, %v9849, %v9683
      %v9914 = vsel %vm911, %v9850, %v9685
      %v9915 = vsel %vm911, %v9851, %v9687
      %v9916 = vsel %vm911, %v9852, %v9689
      %v9917 = vsel %vm911, %v9853, %v9691
      %v9918 = vsel %vm911, %v9854, %v9693
      %v9919 = vsel %vm911, %v9855, %v9695
      %v9920 = vsel %vm911, %v9856, %v9697
      %v9921 = vsel %vm911, %v9857, %v9699
      %v9922 = vsel %vm911, %v9858, %v9701
      %v9923 = vsel %vm911, %v9859, %v9703
      %v9924 = vsel %vm911, %v9860, %v9705
      %v9925 = vsel %vm911, %v9861, %v9707
      %v9926 = vsel %vm911, %v9862, %v9709
      %v9927 = vsel %vm911, %v9863, %v9711
      %v9928 = vsel %vm911, %v9864, %v9713
      %v9929 = vsel %vm911, %v9865, %v9715
      %v9930 = vsel %vm911, %v9866, %v9717
      %v9931 = vsel %vm911, %v9867, %v9719
      %v9932 = vsel %vm911, %v9868, %v9721
      %v9933 = vsel %vm911, %v9869, %v9723
      %v9934 = vsel %vm911, %v9870, %v9725
      %v9935 = vsel %vm911, %v9871, %v9727
      %v9936 = vsel %vm911, %v9872, %v9729
      %v9937 = vsel %vm911, %v9873, %v9731
      %v9938 = vsel %vm911, %v9874, %v9733
      %v9939 = vsel %vm911, %v9875, %v9735
      %v9940 = vsel %vm911, %v9876, %v9737
      %v9941 = vsel %vm911, %v9877, %v9739
      %v9942 = vsel %vm911, %v9878, %v9741
      %v9943 = vsel %vm911, %v9879, %v9743
      %v9944 = vsel %vm911, %v9880, %v9745
      %v9945 = vsel %vm911, %v9881, %v9747
      %v9946 = vsel %vm911, %v9882, %v9749
      %v9947 = vsel %vm911, %v9883, %v9751
      %v9948 = vsel %vm911, %v9884, %v9753
      %v9949 = vsel %vm911, %v9885, %v9755
      %v9950 = vsel %vm911, %v9886, %v9757
      %v9951 = vsel %vm911, %v9887, %v9759
      %v9952 = vsel %vm976, %v9888, 0.0
      %v9953 = vsel %vm976, %v9889, 0.0
      %v9954 = vsel %vm976, %v9890, 0.0
      %v9955 = vsel %vm976, %v9891, 0.0
      %v9956 = vsel %vm976, %v9892, 0.0
      %v9957 = vsel %vm976, %v9893, 0.0
      %v9958 = vsel %vm976, %v9894, 0.0
      %v9959 = vsel %vm976, %v9895, 0.0
      %v9960 = vsel %vm976, %v9896, 0.0
      %v9961 = vsel %vm976, %v9897, 0.0
      %v9962 = vsel %vm976, %v9898, 0.0
      %v9963 = vsel %vm976, %v9899, 0.0
      %v9964 = vsel %vm976, %v9900, 0.0
      %v9965 = vsel %vm976, %v9901, 0.0
      %v9966 = vsel %vm976, %v9902, 0.0
      %v9967 = vsel %vm976, %v9903, 0.0
      %v9968 = vsel %vm976, %v9904, 0.0
      %v9969 = vsel %vm976, %v9905, 0.0
      %v9970 = vsel %vm976, %v9906, 0.0
      %v9971 = vsel %vm976, %v9907, 0.0
      %v9972 = vsel %vm976, %v9908, 0.0
      %v9973 = vsel %vm976, %v9909, 0.0
      %v9974 = vsel %vm976, %v9910, 0.0
      %v9975 = vsel %vm976, %v9911, 0.0
      %v9976 = vsel %vm976, %v9912, 0.0
      %v9977 = vsel %vm976, %v9913, 0.0
      %v9978 = vsel %vm976, %v9914, 0.0
      %v9979 = vsel %vm976, %v9915, 0.0
      %v9980 = vsel %vm976, %v9916, 0.0
      %v9981 = vsel %vm976, %v9917, 0.0
      %v9982 = vsel %vm976, %v9918, 0.0
      %v9983 = vsel %vm976, %v9919, 0.0
      %v9984 = vsel %vm976, %v9920, 0.0
      %v9985 = vsel %vm976, %v9921, 0.0
      %v9986 = vsel %vm976, %v9922, 0.0
      %v9987 = vsel %vm976, %v9923, 0.0
      %v9988 = vsel %vm976, %v9924, 0.0
      %v9989 = vsel %vm976, %v9925, 0.0
      %v9990 = vsel %vm976, %v9926, 0.0
      %v9991 = vsel %vm976, %v9927, 0.0
      %v9992 = vsel %vm976, %v9928, 0.0
      %v9993 = vsel %vm976, %v9929, 0.0
      %v9994 = vsel %vm976, %v9930, 0.0
      %v9995 = vsel %vm976, %v9931, 0.0
      %v9996 = vsel %vm976, %v9932, 0.0
      %v9997 = vsel %vm976, %v9933, 0.0
      %v9998 = vsel %vm976, %v9934, 0.0
      %v9999 = vsel %vm976, %v9935, 0.0
      %v10000 = vsel %vm976, %v9936, 0.0
      %v10001 = vsel %vm976, %v9937, 0.0
      %v10002 = vsel %vm976, %v9938, 0.0
      %v10003 = vsel %vm976, %v9939, 0.0
      %v10004 = vsel %vm976, %v9940, 0.0
      %v10005 = vsel %vm976, %v9941, 0.0
      %v10006 = vsel %vm976, %v9942, 0.0
      %v10007 = vsel %vm976, %v9943, 0.0
      %v10008 = vsel %vm976, %v9944, 0.0
      %v10009 = vsel %vm976, %v9945, 0.0
      %v10010 = vsel %vm976, %v9946, 0.0
      %v10011 = vsel %vm976, %v9947, 0.0
      %v10012 = vsel %vm976, %v9948, 0.0
      %v10013 = vsel %vm976, %v9949, 0.0
      %v10014 = vsel %vm976, %v9950, 0.0
      %v10015 = vsel %vm976, %v9951, 0.0
      %10080 = vrot.lane.b32.xlu0 %v9952, 96
      %v10081 = vpop.permute.xlu0 %10080
      %10082 = vrot.lane.b32.xlu0 %v9953, 96
      %v10083 = vpop.permute.xlu0 %10082
      %10084 = vrot.lane.b32.xlu0 %v9954, 96
      %v10085 = vpop.permute.xlu0 %10084
      %10086 = vrot.lane.b32.xlu0 %v9955, 96
      %v10087 = vpop.permute.xlu0 %10086
      %10088 = vrot.lane.b32.xlu0 %v9956, 96
      %v10089 = vpop.permute.xlu0 %10088
      %10090 = vrot.lane.b32.xlu0 %v9957, 96
      %v10091 = vpop.permute.xlu0 %10090
      %10092 = vrot.lane.b32.xlu0 %v9958, 96
      %v10093 = vpop.permute.xlu0 %10092
      %10094 = vrot.lane.b32.xlu0 %v9959, 96
      %v10095 = vpop.permute.xlu0 %10094
      %10096 = vrot.lane.b32.xlu0 %v9960, 96
      %v10097 = vpop.permute.xlu0 %10096
      %10098 = vrot.lane.b32.xlu0 %v9961, 96
      %v10099 = vpop.permute.xlu0 %10098
      %10100 = vrot.lane.b32.xlu0 %v9962, 96
      %v10101 = vpop.permute.xlu0 %10100
      %10102 = vrot.lane.b32.xlu0 %v9963, 96
      %v10103 = vpop.permute.xlu0 %10102
      %10104 = vrot.lane.b32.xlu0 %v9964, 96
      %v10105 = vpop.permute.xlu0 %10104
      %10106 = vrot.lane.b32.xlu0 %v9965, 96
      %v10107 = vpop.permute.xlu0 %10106
      %10108 = vrot.lane.b32.xlu0 %v9966, 96
      %v10109 = vpop.permute.xlu0 %10108
      %10110 = vrot.lane.b32.xlu0 %v9967, 96
      %v10111 = vpop.permute.xlu0 %10110
      %10112 = vrot.lane.b32.xlu0 %v9968, 96
      %v10113 = vpop.permute.xlu0 %10112
      %10114 = vrot.lane.b32.xlu0 %v9969, 96
      %v10115 = vpop.permute.xlu0 %10114
      %10116 = vrot.lane.b32.xlu0 %v9970, 96
      %v10117 = vpop.permute.xlu0 %10116
      %10118 = vrot.lane.b32.xlu0 %v9971, 96
      %v10119 = vpop.permute.xlu0 %10118
      %10120 = vrot.lane.b32.xlu0 %v9972, 96
      %v10121 = vpop.permute.xlu0 %10120
      %10122 = vrot.lane.b32.xlu0 %v9973, 96
      %v10123 = vpop.permute.xlu0 %10122
      %10124 = vrot.lane.b32.xlu0 %v9974, 96
      %v10125 = vpop.permute.xlu0 %10124
      %10126 = vrot.lane.b32.xlu0 %v9975, 96
      %v10127 = vpop.permute.xlu0 %10126
      %10128 = vrot.lane.b32.xlu0 %v9976, 96
      %v10129 = vpop.permute.xlu0 %10128
      %10130 = vrot.lane.b32.xlu0 %v9977, 96
      %v10131 = vpop.permute.xlu0 %10130
      %10132 = vrot.lane.b32.xlu0 %v9978, 96
      %v10133 = vpop.permute.xlu0 %10132
      %10134 = vrot.lane.b32.xlu0 %v9979, 96
      %v10135 = vpop.permute.xlu0 %10134
      %10136 = vrot.lane.b32.xlu0 %v9980, 96
      %v10137 = vpop.permute.xlu0 %10136
      %10138 = vrot.lane.b32.xlu0 %v9981, 96
      %v10139 = vpop.permute.xlu0 %10138
      %10140 = vrot.lane.b32.xlu0 %v9982, 96
      %v10141 = vpop.permute.xlu0 %10140
      %10142 = vrot.lane.b32.xlu0 %v9983, 96
      %v10143 = vpop.permute.xlu0 %10142
      %10144 = vrot.lane.b32.xlu0 %v9984, 96
      %v10145 = vpop.permute.xlu0 %10144
      %10146 = vrot.lane.b32.xlu0 %v9985, 96
      %v10147 = vpop.permute.xlu0 %10146
      %10148 = vrot.lane.b32.xlu0 %v9986, 96
      %v10149 = vpop.permute.xlu0 %10148
      %10150 = vrot.lane.b32.xlu0 %v9987, 96
      %v10151 = vpop.permute.xlu0 %10150
      %10152 = vrot.lane.b32.xlu0 %v9988, 96
      %v10153 = vpop.permute.xlu0 %10152
      %10154 = vrot.lane.b32.xlu0 %v9989, 96
      %v10155 = vpop.permute.xlu0 %10154
      %10156 = vrot.lane.b32.xlu0 %v9990, 96
      %v10157 = vpop.permute.xlu0 %10156
      %10158 = vrot.lane.b32.xlu0 %v9991, 96
      %v10159 = vpop.permute.xlu0 %10158
      %10160 = vrot.lane.b32.xlu0 %v9992, 96
      %v10161 = vpop.permute.xlu0 %10160
      %10162 = vrot.lane.b32.xlu0 %v9993, 96
      %v10163 = vpop.permute.xlu0 %10162
      %10164 = vrot.lane.b32.xlu0 %v9994, 96
      %v10165 = vpop.permute.xlu0 %10164
      %10166 = vrot.lane.b32.xlu0 %v9995, 96
      %v10167 = vpop.permute.xlu0 %10166
      %10168 = vrot.lane.b32.xlu0 %v9996, 96
      %v10169 = vpop.permute.xlu0 %10168
      %10170 = vrot.lane.b32.xlu0 %v9997, 96
      %v10171 = vpop.permute.xlu0 %10170
      %10172 = vrot.lane.b32.xlu0 %v9998, 96
      %v10173 = vpop.permute.xlu0 %10172
      %10174 = vrot.lane.b32.xlu0 %v9999, 96
      %v10175 = vpop.permute.xlu0 %10174
      %10176 = vrot.lane.b32.xlu0 %v10000, 96
      %v10177 = vpop.permute.xlu0 %10176
      %10178 = vrot.lane.b32.xlu0 %v10001, 96
      %v10179 = vpop.permute.xlu0 %10178
      %10180 = vrot.lane.b32.xlu0 %v10002, 96
      %v10181 = vpop.permute.xlu0 %10180
      %10182 = vrot.lane.b32.xlu0 %v10003, 96
      %v10183 = vpop.permute.xlu0 %10182
      %10184 = vrot.lane.b32.xlu0 %v10004, 96
      %v10185 = vpop.permute.xlu0 %10184
      %10186 = vrot.lane.b32.xlu0 %v10005, 96
      %v10187 = vpop.permute.xlu0 %10186
      %10188 = vrot.lane.b32.xlu0 %v10006, 96
      %v10189 = vpop.permute.xlu0 %10188
      %10190 = vrot.lane.b32.xlu0 %v10007, 96
      %v10191 = vpop.permute.xlu0 %10190
      %10192 = vrot.lane.b32.xlu0 %v10008, 96
      %v10193 = vpop.permute.xlu0 %10192
      %10194 = vrot.lane.b32.xlu0 %v10009, 96
      %v10195 = vpop.permute.xlu0 %10194
      %10196 = vrot.lane.b32.xlu0 %v10010, 96
      %v10197 = vpop.permute.xlu0 %10196
      %10198 = vrot.lane.b32.xlu0 %v10011, 96
      %v10199 = vpop.permute.xlu0 %10198
      %10200 = vrot.lane.b32.xlu0 %v10012, 96
      %v10201 = vpop.permute.xlu0 %10200
      %10202 = vrot.lane.b32.xlu0 %v10013, 96
      %v10203 = vpop.permute.xlu0 %10202
      %10204 = vrot.lane.b32.xlu0 %v10014, 96
      %v10205 = vpop.permute.xlu0 %10204
      %10206 = vrot.lane.b32.xlu0 %v10015, 96
      %v10207 = vpop.permute.xlu0 %10206
      %vm10272 = vcmask 1048320
      %10273 = vst.msk [vmem:[#allocation2] sm:$0xff] %vm10272, %v10081
      %10274 = vst.msk [vmem:[#allocation2 + $0x8] sm:$0xff] %vm10272, %v10083
      %10275 = vst.msk [vmem:[#allocation2 + $0x10] sm:$0xff] %vm10272, %v10085
      %10276 = vst.msk [vmem:[#allocation2 + $0x18] sm:$0xff] %vm10272, %v10087
      %10277 = vst.msk [vmem:[#allocation2 + $0x20] sm:$0xff] %vm10272, %v10089
      %10278 = vst.msk [vmem:[#allocation2 + $0x28] sm:$0xff] %vm10272, %v10091
      %10279 = vst.msk [vmem:[#allocation2 + $0x30] sm:$0xff] %vm10272, %v10093
      %10280 = vst.msk [vmem:[#allocation2 + $0x38] sm:$0xff] %vm10272, %v10095
      %10281 = vst.msk [vmem:[#allocation2 + $0x40] sm:$0xff] %vm10272, %v10097
      %10282 = vst.msk [vmem:[#allocation2 + $0x48] sm:$0xff] %vm10272, %v10099
      %10283 = vst.msk [vmem:[#allocation2 + $0x50] sm:$0xff] %vm10272, %v10101
      %10284 = vst.msk [vmem:[#allocation2 + $0x58] sm:$0xff] %vm10272, %v10103
      %10285 = vst.msk [vmem:[#allocation2 + $0x60] sm:$0xff] %vm10272, %v10105
      %10286 = vst.msk [vmem:[#allocation2 + $0x68] sm:$0xff] %vm10272, %v10107
      %10287 = vst.msk [vmem:[#allocation2 + $0x70] sm:$0xff] %vm10272, %v10109
      %10288 = vst.msk [vmem:[#allocation2 + $0x78] sm:$0xff] %vm10272, %v10111
      %10289 = vst.msk [vmem:[#allocation2 + $0x80] sm:$0xff] %vm10272, %v10113
      %10290 = vst.msk [vmem:[#allocation2 + $0x88] sm:$0xff] %vm10272, %v10115
      %10291 = vst.msk [vmem:[#allocation2 + $0x90] sm:$0xff] %vm10272, %v10117
      %10292 = vst.msk [vmem:[#allocation2 + $0x98] sm:$0xff] %vm10272, %v10119
      %10293 = vst.msk [vmem:[#allocation2 + $0xa0] sm:$0xff] %vm10272, %v10121
      %10294 = vst.msk [vmem:[#allocation2 + $0xa8] sm:$0xff] %vm10272, %v10123
      %10295 = vst.msk [vmem:[#allocation2 + $0xb0] sm:$0xff] %vm10272, %v10125
      %10296 = vst.msk [vmem:[#allocation2 + $0xb8] sm:$0xff] %vm10272, %v10127
      %10297 = vst.msk [vmem:[#allocation2 + $0xc0] sm:$0xff] %vm10272, %v10129
      %10298 = vst.msk [vmem:[#allocation2 + $0xc8] sm:$0xff] %vm10272, %v10131
      %10299 = vst.msk [vmem:[#allocation2 + $0xd0] sm:$0xff] %vm10272, %v10133
      %10300 = vst.msk [vmem:[#allocation2 + $0xd8] sm:$0xff] %vm10272, %v10135
      %10301 = vst.msk [vmem:[#allocation2 + $0xe0] sm:$0xff] %vm10272, %v10137
      %10302 = vst.msk [vmem:[#allocation2 + $0xe8] sm:$0xff] %vm10272, %v10139
      %10303 = vst.msk [vmem:[#allocation2 + $0xf0] sm:$0xff] %vm10272, %v10141
      %10304 = vst.msk [vmem:[#allocation2 + $0xf8] sm:$0xff] %vm10272, %v10143
      %10305 = vst.msk [vmem:[#allocation2 + $0x100] sm:$0xff] %vm10272, %v10145
      %10306 = vst.msk [vmem:[#allocation2 + $0x108] sm:$0xff] %vm10272, %v10147
      %10307 = vst.msk [vmem:[#allocation2 + $0x110] sm:$0xff] %vm10272, %v10149
      %10308 = vst.msk [vmem:[#allocation2 + $0x118] sm:$0xff] %vm10272, %v10151
      %10309 = vst.msk [vmem:[#allocation2 + $0x120] sm:$0xff] %vm10272, %v10153
      %10310 = vst.msk [vmem:[#allocation2 + $0x128] sm:$0xff] %vm10272, %v10155
      %10311 = vst.msk [vmem:[#allocation2 + $0x130] sm:$0xff] %vm10272, %v10157
      %10312 = vst.msk [vmem:[#allocation2 + $0x138] sm:$0xff] %vm10272, %v10159
      %10313 = vst.msk [vmem:[#allocation2 + $0x140] sm:$0xff] %vm10272, %v10161
      %10314 = vst.msk [vmem:[#allocation2 + $0x148] sm:$0xff] %vm10272, %v10163
      %10315 = vst.msk [vmem:[#allocation2 + $0x150] sm:$0xff] %vm10272, %v10165
      %10316 = vst.msk [vmem:[#allocation2 + $0x158] sm:$0xff] %vm10272, %v10167
      %10317 = vst.msk [vmem:[#allocation2 + $0x160] sm:$0xff] %vm10272, %v10169
      %10318 = vst.msk [vmem:[#allocation2 + $0x168] sm:$0xff] %vm10272, %v10171
      %10319 = vst.msk [vmem:[#allocation2 + $0x170] sm:$0xff] %vm10272, %v10173
      %10320 = vst.msk [vmem:[#allocation2 + $0x178] sm:$0xff] %vm10272, %v10175
      %10321 = vst.msk [vmem:[#allocation2 + $0x180] sm:$0xff] %vm10272, %v10177
      %10322 = vst.msk [vmem:[#allocation2 + $0x188] sm:$0xff] %vm10272, %v10179
      %10323 = vst.msk [vmem:[#allocation2 + $0x190] sm:$0xff] %vm10272, %v10181
      %10324 = vst.msk [vmem:[#allocation2 + $0x198] sm:$0xff] %vm10272, %v10183
      %10325 = vst.msk [vmem:[#allocation2 + $0x1a0] sm:$0xff] %vm10272, %v10185
      %10326 = vst.msk [vmem:[#allocation2 + $0x1a8] sm:$0xff] %vm10272, %v10187
      %10327 = vst.msk [vmem:[#allocation2 + $0x1b0] sm:$0xff] %vm10272, %v10189
      %10328 = vst.msk [vmem:[#allocation2 + $0x1b8] sm:$0xff] %vm10272, %v10191
      %10329 = vst.msk [vmem:[#allocation2 + $0x1c0] sm:$0xff] %vm10272, %v10193
      %10330 = vst.msk [vmem:[#allocation2 + $0x1c8] sm:$0xff] %vm10272, %v10195
      %10331 = vst.msk [vmem:[#allocation2 + $0x1d0] sm:$0xff] %vm10272, %v10197
      %10332 = vst.msk [vmem:[#allocation2 + $0x1d8] sm:$0xff] %vm10272, %v10199
      %10333 = vst.msk [vmem:[#allocation2 + $0x1e0] sm:$0xff] %vm10272, %v10201
      %10334 = vst.msk [vmem:[#allocation2 + $0x1e8] sm:$0xff] %vm10272, %v10203
      %10335 = vst.msk [vmem:[#allocation2 + $0x1f0] sm:$0xff] %vm10272, %v10205
      %10336 = vst.msk [vmem:[#allocation2 + $0x1f8] sm:$0xff] %vm10272, %v10207
      %v10337 = vld [vmem:[%s1] sm:$0xff]
      %v10338 = vld [vmem:[#allocation2] sm:$0xff]
      %v10339 = vld [vmem:[#allocation2 + $0x8] sm:$0xff]
      %v10340 = vld [vmem:[#allocation2 + $0x10] sm:$0xff]
      %v10341 = vld [vmem:[#allocation2 + $0x18] sm:$0xff]
      %v10342 = vld [vmem:[#allocation2 + $0x20] sm:$0xff]
      %v10343 = vld [vmem:[#allocation2 + $0x28] sm:$0xff]
      %v10344 = vld [vmem:[#allocation2 + $0x30] sm:$0xff]
      %v10345 = vld [vmem:[#allocation2 + $0x38] sm:$0xff]
      %v10346 = vld [vmem:[#allocation2 + $0x40] sm:$0xff]
      %v10347 = vld [vmem:[#allocation2 + $0x48] sm:$0xff]
      %v10348 = vld [vmem:[#allocation2 + $0x50] sm:$0xff]
      %v10349 = vld [vmem:[#allocation2 + $0x58] sm:$0xff]
      %v10350 = vld [vmem:[#allocation2 + $0x60] sm:$0xff]
      %v10351 = vld [vmem:[#allocation2 + $0x68] sm:$0xff]
      %v10352 = vld [vmem:[#allocation2 + $0x70] sm:$0xff]
      %v10353 = vld [vmem:[#allocation2 + $0x78] sm:$0xff]
      %v10354 = vld [vmem:[#allocation2 + $0x80] sm:$0xff]
      %v10355 = vld [vmem:[#allocation2 + $0x88] sm:$0xff]
      %v10356 = vld [vmem:[#allocation2 + $0x90] sm:$0xff]
      %v10357 = vld [vmem:[#allocation2 + $0x98] sm:$0xff]
      %v10358 = vld [vmem:[#allocation2 + $0xa0] sm:$0xff]
      %v10359 = vld [vmem:[#allocation2 + $0xa8] sm:$0xff]
      %v10360 = vld [vmem:[#allocation2 + $0xb0] sm:$0xff]
      %v10361 = vld [vmem:[#allocation2 + $0xb8] sm:$0xff]
      %v10362 = vld [vmem:[#allocation2 + $0xc0] sm:$0xff]
      %v10363 = vld [vmem:[#allocation2 + $0xc8] sm:$0xff]
      %v10364 = vld [vmem:[#allocation2 + $0xd0] sm:$0xff]
      %v10365 = vld [vmem:[#allocation2 + $0xd8] sm:$0xff]
      %v10366 = vld [vmem:[#allocation2 + $0xe0] sm:$0xff]
      %v10367 = vld [vmem:[#allocation2 + $0xe8] sm:$0xff]
      %v10368 = vld [vmem:[#allocation2 + $0xf0] sm:$0xff]
      %v10369 = vld [vmem:[#allocation2 + $0xf8] sm:$0xff]
      %v10370 = vld [vmem:[#allocation2 + $0x100] sm:$0xff]
      %v10371 = vld [vmem:[#allocation2 + $0x108] sm:$0xff]
      %v10372 = vld [vmem:[#allocation2 + $0x110] sm:$0xff]
      %v10373 = vld [vmem:[#allocation2 + $0x118] sm:$0xff]
      %v10374 = vld [vmem:[#allocation2 + $0x120] sm:$0xff]
      %v10375 = vld [vmem:[#allocation2 + $0x128] sm:$0xff]
      %v10376 = vld [vmem:[#allocation2 + $0x130] sm:$0xff]
      %v10377 = vld [vmem:[#allocation2 + $0x138] sm:$0xff]
      %v10378 = vld [vmem:[#allocation2 + $0x140] sm:$0xff]
      %v10379 = vld [vmem:[#allocation2 + $0x148] sm:$0xff]
      %v10380 = vld [vmem:[#allocation2 + $0x150] sm:$0xff]
      %v10381 = vld [vmem:[#allocation2 + $0x158] sm:$0xff]
      %v10382 = vld [vmem:[#allocation2 + $0x160] sm:$0xff]
      %v10383 = vld [vmem:[#allocation2 + $0x168] sm:$0xff]
      %v10384 = vld [vmem:[#allocation2 + $0x170] sm:$0xff]
      %v10385 = vld [vmem:[#allocation2 + $0x178] sm:$0xff]
      %v10386 = vld [vmem:[#allocation2 + $0x180] sm:$0xff]
      %v10387 = vld [vmem:[#allocation2 + $0x188] sm:$0xff]
      %v10388 = vld [vmem:[#allocation2 + $0x190] sm:$0xff]
      %v10389 = vld [vmem:[#allocation2 + $0x198] sm:$0xff]
      %v10390 = vld [vmem:[#allocation2 + $0x1a0] sm:$0xff]
      %v10391 = vld [vmem:[#allocation2 + $0x1a8] sm:$0xff]
      %v10392 = vld [vmem:[#allocation2 + $0x1b0] sm:$0xff]
      %v10393 = vld [vmem:[#allocation2 + $0x1b8] sm:$0xff]
      %v10394 = vld [vmem:[#allocation2 + $0x1c0] sm:$0xff]
      %v10395 = vld [vmem:[#allocation2 + $0x1c8] sm:$0xff]
      %v10396 = vld [vmem:[#allocation2 + $0x1d0] sm:$0xff]
      %v10397 = vld [vmem:[#allocation2 + $0x1d8] sm:$0xff]
      %v10398 = vld [vmem:[#allocation2 + $0x1e0] sm:$0xff]
      %v10399 = vld [vmem:[#allocation2 + $0x1e8] sm:$0xff]
      %v10400 = vld [vmem:[#allocation2 + $0x1f0] sm:$0xff]
      %v10401 = vld [vmem:[#allocation2 + $0x1f8] sm:$0xff]
      %10402 = vmatprep.subr.mxu0 0.0
      %10403 = vmatpush1.xpose.msra.mxu0 %v10338
      %10404 = vmatprep.subr.mxu0 0.0
      %10405 = vmatpush1.xpose.msra.mxu0 %v10339
      %10406 = vmatprep.subr.mxu0 0.0
      %10407 = vmatpush1.xpose.msra.mxu0 %v10340
      %10408 = vmatprep.subr.mxu0 0.0
      %10409 = vmatpush1.xpose.msra.mxu0 %v10341
      %10410 = vmatprep.subr.mxu0 0.0
      %10411 = vmatpush1.xpose.msra.mxu0 %v10342
      %10412 = vmatprep.subr.mxu0 0.0
      %10413 = vmatpush1.xpose.msra.mxu0 %v10343
      %10414 = vmatprep.subr.mxu0 0.0
      %10415 = vmatpush1.xpose.msra.mxu0 %v10344
      %10416 = vmatprep.subr.mxu0 0.0
      %10417 = vmatpush1.xpose.msra.mxu0 %v10345
      %10418 = vmatprep.subr.mxu0 0.0
      %10419 = vmatpush1.xpose.msra.mxu0 %v10346
      %10420 = vmatprep.subr.mxu0 0.0
      %10421 = vmatpush1.xpose.msra.mxu0 %v10347
      %10422 = vmatprep.subr.mxu0 0.0
      %10423 = vmatpush1.xpose.msra.mxu0 %v10348
      %10424 = vmatprep.subr.mxu0 0.0
      %10425 = vmatpush1.xpose.msra.mxu0 %v10349
      %10426 = vmatprep.subr.mxu0 0.0
      %10427 = vmatpush1.xpose.msra.mxu0 %v10350
      %10428 = vmatprep.subr.mxu0 0.0
      %10429 = vmatpush1.xpose.msra.mxu0 %v10351
      %10430 = vmatprep.subr.mxu0 0.0
      %10431 = vmatpush1.xpose.msra.mxu0 %v10352
      %10432 = vmatprep.subr.mxu0 0.0
      %10433 = vmatpush1.xpose.msra.mxu0 %v10353
      %10434 = vmatprep.subr.mxu0 0.0
      %10435 = vmatpush1.xpose.msra.mxu0 %v10354
      %10436 = vmatprep.subr.mxu0 0.0
      %10437 = vmatpush1.xpose.msra.mxu0 %v10355
      %10438 = vmatprep.subr.mxu0 0.0
      %10439 = vmatpush1.xpose.msra.mxu0 %v10356
      %10440 = vmatprep.subr.mxu0 0.0
      %10441 = vmatpush1.xpose.msra.mxu0 %v10357
      %10442 = vmatprep.subr.mxu0 0.0
      %10443 = vmatpush1.xpose.msra.mxu0 %v10358
      %10444 = vmatprep.subr.mxu0 0.0
      %10445 = vmatpush1.xpose.msra.mxu0 %v10359
      %10446 = vmatprep.subr.mxu0 0.0
      %10447 = vmatpush1.xpose.msra.mxu0 %v10360
      %10448 = vmatprep.subr.mxu0 0.0
      %10449 = vmatpush1.xpose.msra.mxu0 %v10361
      %10450 = vmatprep.subr.mxu0 0.0
      %10451 = vmatpush1.xpose.msra.mxu0 %v10362
      %10452 = vmatprep.subr.mxu0 0.0
      %10453 = vmatpush1.xpose.msra.mxu0 %v10363
      %10454 = vmatprep.subr.mxu0 0.0
      %10455 = vmatpush1.xpose.msra.mxu0 %v10364
      %10456 = vmatprep.subr.mxu0 0.0
      %10457 = vmatpush1.xpose.msra.mxu0 %v10365
      %10458 = vmatprep.subr.mxu0 0.0
      %10459 = vmatpush1.xpose.msra.mxu0 %v10366
      %10460 = vmatprep.subr.mxu0 0.0
      %10461 = vmatpush1.xpose.msra.mxu0 %v10367
      %10462 = vmatprep.subr.mxu0 0.0
      %10463 = vmatpush1.xpose.msra.mxu0 %v10368
      %10464 = vmatprep.subr.mxu0 0.0
      %10465 = vmatpush1.xpose.msra.mxu0 %v10369
      %10466 = vmatprep.mubr.f32.mxu0 0.0
      %10467 = vmatmul.mubr.f32.gmra.mrb[0].mxu0 %v10337
      %v10468 = vpop.f32.mrb[0].mxu0
      %v10469 = vadd.f32 0.0, %v10468
      %v10470 = vpop.f32.mrb[0].mxu0
      %v10471 = vadd.f32 0.0, %v10470
      %10472 = vdwg.mxu0
      %10473 = vmatprep.subr.mxu0 0.0
      %10474 = vmatpush1.xpose.msra.mxu0 %v10370
      %10475 = vmatprep.subr.mxu0 0.0
      %10476 = vmatpush1.xpose.msra.mxu0 %v10371
      %10477 = vmatprep.subr.mxu0 0.0
      %10478 = vmatpush1.xpose.msra.mxu0 %v10372
      %10479 = vmatprep.subr.mxu0 0.0
      %10480 = vmatpush1.xpose.msra.mxu0 %v10373
      %10481 = vmatprep.subr.mxu0 0.0
      %10482 = vmatpush1.xpose.msra.mxu0 %v10374
      %10483 = vmatprep.subr.mxu0 0.0
      %10484 = vmatpush1.xpose.msra.mxu0 %v10375
      %10485 = vmatprep.subr.mxu0 0.0
      %10486 = vmatpush1.xpose.msra.mxu0 %v10376
      %10487 = vmatprep.subr.mxu0 0.0
      %10488 = vmatpush1.xpose.msra.mxu0 %v10377
      %10489 = vmatprep.subr.mxu0 0.0
      %10490 = vmatpush1.xpose.msra.mxu0 %v10378
      %10491 = vmatprep.subr.mxu0 0.0
      %10492 = vmatpush1.xpose.msra.mxu0 %v10379
      %10493 = vmatprep.subr.mxu0 0.0
      %10494 = vmatpush1.xpose.msra.mxu0 %v10380
      %10495 = vmatprep.subr.mxu0 0.0
      %10496 = vmatpush1.xpose.msra.mxu0 %v10381
      %10497 = vmatprep.subr.mxu0 0.0
      %10498 = vmatpush1.xpose.msra.mxu0 %v10382
      %10499 = vmatprep.subr.mxu0 0.0
      %10500 = vmatpush1.xpose.msra.mxu0 %v10383
      %10501 = vmatprep.subr.mxu0 0.0
      %10502 = vmatpush1.xpose.msra.mxu0 %v10384
      %10503 = vmatprep.subr.mxu0 0.0
      %10504 = vmatpush1.xpose.msra.mxu0 %v10385
      %10505 = vmatprep.subr.mxu0 0.0
      %10506 = vmatpush1.xpose.msra.mxu0 %v10386
      %10507 = vmatprep.subr.mxu0 0.0
      %10508 = vmatpush1.xpose.msra.mxu0 %v10387
      %10509 = vmatprep.subr.mxu0 0.0
      %10510 = vmatpush1.xpose.msra.mxu0 %v10388
      %10511 = vmatprep.subr.mxu0 0.0
      %10512 = vmatpush1.xpose.msra.mxu0 %v10389
      %10513 = vmatprep.subr.mxu0 0.0
      %10514 = vmatpush1.xpose.msra.mxu0 %v10390
      %10515 = vmatprep.subr.mxu0 0.0
      %10516 = vmatpush1.xpose.msra.mxu0 %v10391
      %10517 = vmatprep.subr.mxu0 0.0
      %10518 = vmatpush1.xpose.msra.mxu0 %v10392
      %10519 = vmatprep.subr.mxu0 0.0
      %10520 = vmatpush1.xpose.msra.mxu0 %v10393
      %10521 = vmatprep.subr.mxu0 0.0
      %10522 = vmatpush1.xpose.msra.mxu0 %v10394
      %10523 = vmatprep.subr.mxu0 0.0
      %10524 = vmatpush1.xpose.msra.mxu0 %v10395
      %10525 = vmatprep.subr.mxu0 0.0
      %10526 = vmatpush1.xpose.msra.mxu0 %v10396
      %10527 = vmatprep.subr.mxu0 0.0
      %10528 = vmatpush1.xpose.msra.mxu0 %v10397
      %10529 = vmatprep.subr.mxu0 0.0
      %10530 = vmatpush1.xpose.msra.mxu0 %v10398
      %10531 = vmatprep.subr.mxu0 0.0
      %10532 = vmatpush1.xpose.msra.mxu0 %v10399
      %10533 = vmatprep.subr.mxu0 0.0
      %10534 = vmatpush1.xpose.msra.mxu0 %v10400
      %10535 = vmatprep.subr.mxu0 0.0
      %10536 = vmatpush1.xpose.msra.mxu0 %v10401
      %10537 = vmatprep.mubr.f32.mxu0 0.0
      %10538 = vmatmul.mubr.f32.gmra.mrb[0].mxu0 %v10337
      %v10539 = vpop.f32.mrb[0].mxu0
      %v10540 = vadd.f32 0.0, %v10539
      %v10541 = vpop.f32.mrb[0].mxu0
      %v10542 = vadd.f32 0.0, %v10541
      %10543 = vdwg.mxu0
      %v10544 = vadd.f32 %v10469, %v10471
      %v10545 = vadd.f32 %v10544, %v10540
      %v10546 = vadd.f32 %v10545, %v10542
      %10547 = vadd.xlane.f32.xlu0 %v10546
      %v10548 = vpop.xlane.xlu0 %10547
      %v10549 = vrcp.pop 512.0
      %v10550 = vmul.f32 %v10548, %v10549
      %v10551 = vsub.f32 %v10469, %v10550
      %v10552 = vsub.f32 %v10471, %v10550
      %v10553 = vsub.f32 %v10540, %v10550
      %v10554 = vsub.f32 %v10542, %v10550
      %vm10555 = vcmask 7168
      %10556 = vst.msk [vmem:[%s141] sm:$0xff] %vm10555, %v10550
      %v10557 = vmul.f32 %v10551, %v10551
      %v10558 = vmul.f32 %v10552, %v10552
      %v10559 = vmul.f32 %v10553, %v10553
      %v10560 = vmul.f32 %v10554, %v10554
      %v10561 = vadd.f32 %v10557, %v10558
      %v10562 = vadd.f32 %v10561, %v10559
      %v10563 = vadd.f32 %v10562, %v10560
      %10564 = vadd.xlane.f32.xlu0 %v10563
      %v10565 = vpop.xlane.xlu0 %10564
      %vm10566 = vcmask 15368
      %10567 = vst.msk [vmem:[%s141] sm:$0xff] %vm10566, %v10565
      %p10568 = scmp.lt.s32.totalorder %s13, 1
      %s10569 = scalar_select %p10568, %s13, 1
      %s10570 = smul.addr %s10569, 8
      %s10571 = scalar_lea.vmem %s2, %s10570
      // Predicated region
      $region29: #{tpu_custom_call.1} parent=27 // pred_check
        %p10572 = pneg %p78
      $region30: #{tpu_custom_call.1} parent=27 // pred_check_branch
        %10574 = sbr.rel (%p10572) target = $region32
      $region31: #{tpu_custom_call.1} parent=27 // pred_region
        _
      $region32: #{tpu_custom_call.1} parent=27 // pred_fallthru
        _
    $region28: #{tpu_custom_call.1} parent=5 // pred_fallthru
      _
    %p10575 = scmp.le.s32.totalorder 2, %s8
    // Predicated region
    $region33: #{tpu_custom_call.1} parent=5 // pred_check
      %p10576 = pneg %p10575
    $region34: #{tpu_custom_call.1} parent=5 // pred_check_branch
      %10578 = sbr.rel (%p10576) target = $region36
    $region35: #{tpu_custom_call.1} parent=5 // pred_region
      %s10579 = ssub.s32 %s8, 2
      // Predicated region
      $region37: #{tpu_custom_call.1} parent=35 // pred_check
        %p10580 = pneg %p84
      $region38: #{tpu_custom_call.1} parent=35 // pred_check_branch
        %10582 = sbr.rel (%p10580) target = $region40
      $region39: #{tpu_custom_call.1} parent=35 // pred_region
        %p10583 = scmp.lt.s32.totalorder %s14, 1
        %s10584 = scalar_select %p10583, %s14, 1
        %s10585 = smul.addr %s10584, 8
        %s10586 = scalar_lea.vmem %s2, %s10585
      $region40: #{tpu_custom_call.1} parent=35 // pred_fallthru
        _
    $region36: #{tpu_custom_call.1} parent=5 // pred_fallthru
      _
  $region6: #{tpu_custom_call.1} parent=0 // loop_footer
    %s12 = sadd.s32 1, %s8
  $region7: #{tpu_custom_call.1} parent=0 // loop_footer_branch
    %7 = sbr.rel target = $region3
  $region8: #{tpu_custom_call.1} parent=0 // loop_exit
    _

</llo_original>
